<compile_context>
chip_gen: v6e
topology: v6e:2x2x1
jax: 0.10.0
libtpu: 0.0.40
codegen_flags: <defaults>
</compile_context>

<pallas_src>
import functools

import jax
import jax.numpy as jnp
import numpy as np
from jax.experimental import pallas as pl
from jax.experimental.pallas import tpu as pltpu


def _census_offsets(wd):
    """Reproduce the exact offset ordering from the PyTorch __init__."""
    wd_hf = wd // 2
    offsets = []
    for i in range(1, wd_hf + 1):
        temp = [(u, v)
                for v in range(wd_hf - i, wd_hf + i + 1)
                for u in range(wd_hf - i, wd_hf + i + 1)
                if not u == wd_hf == v and (not (u, v) in offsets)]
        offsets += temp
    return offsets


def _group_offsets_by_u(offsets):
    """Group (u, v) offsets by u, keeping the original output plane index i."""
    by_u = {}
    for i, (u, v) in enumerate(offsets):
        by_u.setdefault(u, []).append((v, i))
    return tuple((u, tuple(vi)) for u, vi in by_u.items())


def _round_up(x, m):
    return -(-x // m) * m


def _pick_tile_h(h, wp, wd_hf, out_bytes_per_row, plane_itemsize, budget_bytes):
    """Largest multiple-of-32 row tile whose double-buffered output block plus
    double-buffered resident plane fits the budget; never exceeds
    round_up(h, 8) so small images use a single exact tile."""
    cap = min(512, _round_up(h, 32))
    best = 32
    t = 32
    while t <= cap:
        hp_pad = _round_up(h, t) + 2 * wd_hf
        need = 2 * out_bytes_per_row * t + 2 * hp_pad * wp * plane_itemsize
        if need <= budget_bytes:
            best = t
        t += 32
    return min(best, _round_up(h, 8))


def _census_kernel(xpad_ref, out_ref, *, grouped_offsets, tile_h, w, wd_hf, pack):
    # xpad_ref: (hp_pad, wp) padded channel-mean plane (resident per batch item)
    # out_ref:  (n_planes, tile_h, w) output block for this row tile:
    #           uint8 0/1 planes (pack=False), or uint32 words with census
    #           plane i at bit (i % 32) of word (i // 32) (pack=True).
    row0 = pl.program_id(1) * tile_h
    if tile_h % 8 == 0:
        row0 = pl.multiple_of(row0, 8)

    # Center (unshifted) plane for this row tile, loaded once.
    center = xpad_ref[pl.ds(row0 + wd_hf, tile_h), wd_hf:wd_hf + w]
    halo_h = tile_h + 2 * wd_hf

    if pack:
        n_words = out_ref.shape[0]
        words = [jnp.zeros((tile_h, w), jnp.uint32) for _ in range(n_words)]

    for u, v_and_i in grouped_offsets:
        # One lane-realigning load per unique column shift u (11 total) ...
        strip = xpad_ref[pl.ds(row0, halo_h), u:u + w]            # (halo_h, w)
        for v, i in v_and_i:
            # ... then cheap static sublane slices per row shift v.
            bit = strip[v:v + tile_h, :] >= center                # (tile_h, w)
            if pack:
                words[i // 32] = words[i // 32] | (
                    bit.astype(jnp.uint32) << (i % 32))
            else:
                out_ref[i, :, :] = bit.astype(out_ref.dtype)

    if pack:
        for j in range(n_words):
            out_ref[j, :, :] = words[j]


def census_transform(x, wd=11, *, packed=False, tile_h=None, plane_dtype=None,
                     vmem_budget_bytes=24 << 20):
    """Equivalent of CensusTransform(wd).forward(x, attack=False).

    packed=False: (n, wd*wd-1, h, w) uint8 with 0/1 values (same values as the
        PyTorch torch.bool output; cast with .astype(jnp.bool_) if the exact
        dtype is required).
    packed=True:  (n, ceil((wd*wd-1)/32), h, w) uint32 bit-packed census words
        (plane i at bit i % 32 of word i // 32) -- 16 B/px of HBM writes
        instead of 120 B/px; use unpack_census() to recover the plane layout.
    plane_dtype:  optional dtype (e.g. jnp.bfloat16) for the padded mean plane;
        halves input DMA / resident VMEM but >= ties may flip vs float32.
    """
    n, c, h, w = x.shape
    wd_hf = wd // 2
    size = wd * wd - 1
    offsets = _census_offsets(wd)
    assert len(offsets) == size
    grouped = _group_offsets_by_u(offsets)

    # Glue: channel mean + reflect pad (matches F.pad(..., mode='reflect')).
    x_mean = jnp.mean(x, axis=1)                                    # (n, h, w)
    x_pad = jnp.pad(x_mean,
                    ((0, 0), (wd_hf, wd_hf), (wd_hf, wd_hf)),
                    mode="reflect")                                 # (n, h+2p, w+2p)
    if plane_dtype is not None:
        x_pad = x_pad.astype(plane_dtype)

    n_planes = -(-size // 32) if packed else size
    out_dtype = jnp.uint32 if packed else jnp.uint8
    out_itemsize = np.dtype(out_dtype).itemsize
    plane_itemsize = np.dtype(x_pad.dtype).itemsize
    wp = w + 2 * wd_hf

    if tile_h is None:
        tile_h = _pick_tile_h(h, wp, wd_hf,
                              out_bytes_per_row=n_planes * w * out_itemsize,
                              plane_itemsize=plane_itemsize,
                              budget_bytes=vmem_budget_bytes)
    assert tile_h % 8 == 0 or tile_h == h, (tile_h, h)

    n_tiles = pl.cdiv(h, tile_h)
    h_grid = n_tiles * tile_h
    hp_pad = h_grid + 2 * wd_hf
    if h_grid > h:
        # Edge-extend so halo reads for the (masked) ragged last tile stay in
        # bounds; the extra output rows are dropped by the partial-block store.
        x_pad = jnp.pad(x_pad, ((0, 0), (0, h_grid - h), (0, 0)), mode="edge")

    kernel = functools.partial(_census_kernel, grouped_offsets=grouped,
                               tile_h=tile_h, w=w, wd_hf=wd_hf, pack=packed)

    out_block_bytes = n_planes * tile_h * w * out_itemsize
    plane_block_bytes = hp_pad * wp * plane_itemsize
    # 2x out block (double-buffered) + 2x plane (double-buffered by default)
    # + ~1 out block worth of in-kernel temporaries/accumulators + slack.
    vmem_need = 3 * out_block_bytes + 2 * plane_block_bytes + (4 << 20)
    vmem_limit = int(min(max(vmem_need, 32 << 20), 64 << 20))

    out_bytes = n * n_planes * h * w * out_itemsize
    cost = pl.CostEstimate(flops=3 * n * size * h * w, transcendentals=0,
                           bytes_accessed=int(n * plane_block_bytes + out_bytes))

    out = pl.pallas_call(
        kernel,
        out_shape=jax.ShapeDtypeStruct((n, n_planes, h, w), out_dtype),
        grid_spec=pltpu.PrefetchScalarGridSpec(
            num_scalar_prefetch=0,
            grid=(n, n_tiles),
            in_specs=[
                # Full padded plane; its block index ignores the row-tile axis,
                # so it is only re-DMA'd when the batch index changes.
                pl.BlockSpec((None, hp_pad, wp), lambda b, t: (b, 0, 0)),
            ],
            out_specs=pl.BlockSpec((None, n_planes, tile_h, w),
                                   lambda b, t: (b, 0, t, 0)),
        ),
        compiler_params=pltpu.CompilerParams(
            dimension_semantics=("parallel", "parallel"),
            vmem_limit_bytes=vmem_limit),
        cost_estimate=cost,
    )(x_pad)
    return out


def unpack_census(packed, size):
    """Unpack (n, n_words, h, w) uint32 census words to (n, size, h, w) uint8."""
    n, n_words, h, w = packed.shape
    shifts = jnp.arange(32, dtype=jnp.uint32)
    bits = (packed[:, :, None, :, :] >> shifts[None, None, :, None, None]) \
        & jnp.uint32(1)
    return bits.reshape(n, n_words * 32, h, w)[:, :size].astype(jnp.uint8)


def _census_reference(x, wd=11):
    """Pure-JAX reference mirroring the PyTorch loop, for verification."""
    n, c, h, w = x.shape
    wd_hf = wd // 2
    offsets = _census_offsets(wd)
    xm = jnp.mean(x, axis=1)
    xp = jnp.pad(xm, ((0, 0), (wd_hf, wd_hf), (wd_hf, wd_hf)), mode="reflect")
    planes = [xp[:, v:v + h, u:u + w] >= xm for (u, v) in offsets]
    return jnp.stack(planes, axis=1)


if __name__ == "__main__":
    key = jax.random.PRNGKey(0)

    # Small demo shape (single exact row tile).
    x = jax.random.normal(key, (2, 4, 16, 16), dtype=jnp.float32)
    ref = _census_reference(x, wd=11)

    out = jax.block_until_ready(census_transform(x, wd=11))
    assert out.shape == (2, 120, 16, 16), out.shape
    assert out.dtype == jnp.uint8, out.dtype
    assert bool(jnp.all((out != 0) == ref)), "mismatch: uint8 planes (small)"

    out_p = jax.block_until_ready(census_transform(x, wd=11, packed=True))
    assert out_p.shape == (2, 4, 16, 16) and out_p.dtype == jnp.uint32
    assert bool(jnp.all((unpack_census(out_p, 120) != 0) == ref)), \
        "mismatch: packed (small)"

    # Multi-tile path: h=96 -> three 32-row tiles, lane-dense W=128.
    x2 = jax.random.normal(jax.random.PRNGKey(0), (1, 3, 96, 128),
                           dtype=jnp.float32)
    ref2 = _census_reference(x2, wd=11)
    out2 = jax.block_until_ready(census_transform(x2, wd=11, tile_h=32))
    assert bool(jnp.all((out2 != 0) == ref2)), "mismatch: uint8 planes (tiled)"
    out2_p = jax.block_until_ready(
        census_transform(x2, wd=11, tile_h=32, packed=True))
    assert bool(jnp.all((unpack_census(out2_p, 120) != 0) == ref2)), \
        "mismatch: packed (tiled)"

    # Ragged path: h=72 with tile_h=32 -> ceil-div grid, masked last tile.
    x3 = jax.random.normal(jax.random.PRNGKey(0), (1, 2, 72, 128),
                           dtype=jnp.float32)
    ref3 = _census_reference(x3, wd=11)
    out3_p = jax.block_until_ready(
        census_transform(x3, wd=11, tile_h=32, packed=True))
    assert bool(jnp.all((unpack_census(out3_p, 120) != 0) == ref3)), \
        "mismatch: packed (ragged)"
    out3 = jax.block_until_ready(census_transform(x3, wd=11, tile_h=32))
    assert bool(jnp.all((out3 != 0) == ref3)), "mismatch: uint8 planes (ragged)"

    print("KERNEL_OK")
</pallas_src>

<mosaic_0001>
module attributes {stable_mosaic.version = 11 : i64} {
  func.func @_census_kernel(%arg0: i32, %arg1: i32, %arg2: memref<1x26x26xf32, #tpu.memory_space<vmem>>, %arg3: memref<1x120x16x16xi8, #tpu.memory_space<vmem>>) attributes {dimension_semantics = [#tpu.dimension_semantics<parallel>, #tpu.dimension_semantics<parallel>], iteration_bounds = array<i64: 2, 1>, scalar_prefetch = 0 : i64, scratch_operands = 0 : i64, tpu.core_type = #tpu.core_type<tc>, window_params = [{transform_indices = @transform_0, window_bounds = array<i64: 1, 26, 26>}, {transform_indices = @transform_1, window_bounds = array<i64: 1, 120, 16, 16>}]} {
    %c16_i32 = arith.constant 16 : i32
    %0 = arith.muli %arg1, %c16_i32 : i32
    %1 = tpu.assume_multiple %0, 8 : i32
    %c5_i32 = arith.constant 5 : i32
    %2 = arith.addi %1, %c5_i32 : i32
    %c0 = arith.constant 0 : index
    %3 = arith.index_cast %2 : i32 to index
    %c5 = arith.constant 5 : index
    %4 = vector.load %arg2[%c0, %3, %c5] : memref<1x26x26xf32, #tpu.memory_space<vmem>>, vector<1x16x16xf32>
    %5 = vector.shape_cast %4 : vector<1x16x16xf32> to vector<16x16xf32>
    %c0_0 = arith.constant 0 : index
    %6 = arith.index_cast %1 : i32 to index
    %c4 = arith.constant 4 : index
    %7 = vector.load %arg2[%c0_0, %6, %c4] : memref<1x26x26xf32, #tpu.memory_space<vmem>>, vector<1x26x16xf32>
    %8 = vector.shape_cast %7 : vector<1x26x16xf32> to vector<26x16xf32>
    %9 = vector.extract_strided_slice %8 {offsets = [4, 0], sizes = [16, 16], strides = [1, 1]} : vector<26x16xf32> to vector<16x16xf32>
    %10 = arith.cmpf oge, %9, %5 : vector<16x16xf32>
    %11 = arith.extui %10 : vector<16x16xi1> to vector<16x16xi8>
    %c0_1 = arith.constant 0 : index
    %c0_2 = arith.constant 0 : index
    %c0_3 = arith.constant 0 : index
    %c0_4 = arith.constant 0 : index
    %12 = vector.load %arg3[%c0_1, %c0_2, %c0_3, %c0_4] : memref<1x120x16x16xi8, #tpu.memory_space<vmem>>, vector<1x1x16x16xi8>
    %13 = vector.shape_cast %12 : vector<1x1x16x16xi8> to vector<16x16xi8>
    %14 = vector.shape_cast %11 : vector<16x16xi8> to vector<1x1x16x16xi8>
    tpu.vector_store %arg3[%c0_1, %c0_2, %c0_3, %c0_4], %14 {strides = array<i32>} : memref<1x120x16x16xi8, #tpu.memory_space<vmem>>, vector<1x1x16x16xi8>,
    %15 = vector.extract_strided_slice %8 {offsets = [5, 0], sizes = [16, 16], strides = [1, 1]} : vector<26x16xf32> to vector<16x16xf32>
    %16 = arith.cmpf oge, %15, %5 : vector<16x16xf32>
    %17 = arith.extui %16 : vector<16x16xi1> to vector<16x16xi8>
    %c0_5 = arith.constant 0 : index
    %c3 = arith.constant 3 : index
    %c0_6 = arith.constant 0 : index
    %c0_7 = arith.constant 0 : index
    %18 = vector.load %arg3[%c0_5, %c3, %c0_6, %c0_7] : memref<1x120x16x16xi8, #tpu.memory_space<vmem>>, vector<1x1x16x16xi8>
    %19 = vector.shape_cast %18 : vector<1x1x16x16xi8> to vector<16x16xi8>
    %20 = vector.shape_cast %17 : vector<16x16xi8> to vector<1x1x16x16xi8>
    tpu.vector_store %arg3[%c0_5, %c3, %c0_6, %c0_7], %20 {strides = array<i32>} : memref<1x120x16x16xi8, #tpu.memory_space<vmem>>, vector<1x1x16x16xi8>,
    %21 = vector.extract_strided_slice %8 {offsets = [6, 0], sizes = [16, 16], strides = [1, 1]} : vector<26x16xf32> to vector<16x16xf32>
    %22 = arith.cmpf oge, %21, %5 : vector<16x16xf32>
    %23 = arith.extui %22 : vector<16x16xi1> to vector<16x16xi8>
    %c0_8 = arith.constant 0 : index
    %c5_9 = arith.constant 5 : index
    %c0_10 = arith.constant 0 : index
    %c0_11 = arith.constant 0 : index
    %24 = vector.load %arg3[%c0_8, %c5_9, %c0_10, %c0_11] : memref<1x120x16x16xi8, #tpu.memory_space<vmem>>, vector<1x1x16x16xi8>
    %25 = vector.shape_cast %24 : vector<1x1x16x16xi8> to vector<16x16xi8>
    %26 = vector.shape_cast %23 : vector<16x16xi8> to vector<1x1x16x16xi8>
    tpu.vector_store %arg3[%c0_8, %c5_9, %c0_10, %c0_11], %26 {strides = array<i32>} : memref<1x120x16x16xi8, #tpu.memory_space<vmem>>, vector<1x1x16x16xi8>,
    %27 = vector.extract_strided_slice %8 {offsets = [3, 0], sizes = [16, 16], strides = [1, 1]} : vector<26x16xf32> to vector<16x16xf32>
    %28 = arith.cmpf oge, %27, %5 : vector<16x16xf32>
    %29 = arith.extui %28 : vector<16x16xi1> to vector<16x16xi8>
    %c0_12 = arith.constant 0 : index
    %c9 = arith.constant 9 : index
    %c0_13 = arith.constant 0 : index
    %c0_14 = arith.constant 0 : index
    %30 = vector.load %arg3[%c0_12, %c9, %c0_13, %c0_14] : memref<1x120x16x16xi8, #tpu.memory_space<vmem>>, vector<1x1x16x16xi8>
    %31 = vector.shape_cast %30 : vector<1x1x16x16xi8> to vector<16x16xi8>
    %32 = vector.shape_cast %29 : vector<16x16xi8> to vector<1x1x16x16xi8>
    tpu.vector_store %arg3[%c0_12, %c9, %c0_13, %c0_14], %32 {strides = array<i32>} : memref<1x120x16x16xi8, #tpu.memory_space<vmem>>, vector<1x1x16x16xi8>,
    %33 = vector.extract_strided_slice %8 {offsets = [7, 0], sizes = [16, 16], strides = [1, 1]} : vector<26x16xf32> to vector<16x16xf32>
    %34 = arith.cmpf oge, %33, %5 : vector<16x16xf32>
    %35 = arith.extui %34 : vector<16x16xi1> to vector<16x16xi8>
    %c0_15 = arith.constant 0 : index
    %c20 = arith.constant 20 : index
    %c0_16 = arith.constant 0 : index
    %c0_17 = arith.constant 0 : index
    %36 = vector.load %arg3[%c0_15, %c20, %c0_16, %c0_17] : memref<1x120x16x16xi8, #tpu.memory_space<vmem>>, vector<1x1x16x16xi8>
    %37 = vector.shape_cast %36 : vector<1x1x16x16xi8> to vector<16x16xi8>
    %38 = vector.shape_cast %35 : vector<16x16xi8> to vector<1x1x16x16xi8>
    tpu.vector_store %arg3[%c0_15, %c20, %c0_16, %c0_17], %38 {strides = array<i32>} : memref<1x120x16x16xi8, #tpu.memory_space<vmem>>, vector<1x1x16x16xi8>,
    %39 = vector.extract_strided_slice %8 {offsets = [2, 0], sizes = [16, 16], strides = [1, 1]} : vector<26x16xf32> to vector<16x16xf32>
    %40 = arith.cmpf oge, %39, %5 : vector<16x16xf32>
    %41 = arith.extui %40 : vector<16x16xi1> to vector<16x16xi8>
    %c0_18 = arith.constant 0 : index
    %c26 = arith.constant 26 : index
    %c0_19 = arith.constant 0 : index
    %c0_20 = arith.constant 0 : index
    %42 = vector.load %arg3[%c0_18, %c26, %c0_19, %c0_20] : memref<1x120x16x16xi8, #tpu.memory_space<vmem>>, vector<1x1x16x16xi8>
    %43 = vector.shape_cast %42 : vector<1x1x16x16xi8> to vector<16x16xi8>
    %44 = vector.shape_cast %41 : vector<16x16xi8> to vector<1x1x16x16xi8>
    tpu.vector_store %arg3[%c0_18, %c26, %c0_19, %c0_20], %44 {strides = array<i32>} : memref<1x120x16x16xi8, #tpu.memory_space<vmem>>, vector<1x1x16x16xi8>,
    %45 = vector.extract_strided_slice %8 {offsets = [8, 0], sizes = [16, 16], strides = [1, 1]} : vector<26x16xf32> to vector<16x16xf32>
    %46 = arith.cmpf oge, %45, %5 : vector<16x16xf32>
    %47 = arith.extui %46 : vector<16x16xi1> to vector<16x16xi8>
    %c0_21 = arith.constant 0 : index
    %c43 = arith.constant 43 : index
    %c0_22 = arith.constant 0 : index
    %c0_23 = arith.constant 0 : index
    %48 = vector.load %arg3[%c0_21, %c43, %c0_22, %c0_23] : memref<1x120x16x16xi8, #tpu.memory_space<vmem>>, vector<1x1x16x16xi8>
    %49 = vector.shape_cast %48 : vector<1x1x16x16xi8> to vector<16x16xi8>
    %50 = vector.shape_cast %47 : vector<16x16xi8> to vector<1x1x16x16xi8>
    tpu.vector_store %arg3[%c0_21, %c43, %c0_22, %c0_23], %50 {strides = array<i32>} : memref<1x120x16x16xi8, #tpu.memory_space<vmem>>, vector<1x1x16x16xi8>,
    %51 = vector.extract_strided_slice %8 {offsets = [1, 0], sizes = [16, 16], strides = [1, 1]} : vector<26x16xf32> to vector<16x16xf32>
    %52 = arith.cmpf oge, %51, %5 : vector<16x16xf32>
    %53 = arith.extui %52 : vector<16x16xi1> to vector<16x16xi8>
    %c0_24 = arith.constant 0 : index
    %c51 = arith.constant 51 : index
    %c0_25 = arith.constant 0 : index
    %c0_26 = arith.constant 0 : index
    %54 = vector.load %arg3[%c0_24, %c51, %c0_25, %c0_26] : memref<1x120x16x16xi8, #tpu.memory_space<vmem>>, vector<1x1x16x16xi8>
    %55 = vector.shape_cast %54 : vector<1x1x16x16xi8> to vector<16x16xi8>
    %56 = vector.shape_cast %53 : vector<16x16xi8> to vector<1x1x16x16xi8>
    tpu.vector_store %arg3[%c0_24, %c51, %c0_25, %c0_26], %56 {strides = array<i32>} : memref<1x120x16x16xi8, #tpu.memory_space<vmem>>, vector<1x1x16x16xi8>,
    %57 = vector.extract_strided_slice %8 {offsets = [9, 0], sizes = [16, 16], strides = [1, 1]} : vector<26x16xf32> to vector<16x16xf32>
    %58 = arith.cmpf oge, %57, %5 : vector<16x16xf32>
    %59 = arith.extui %58 : vector<16x16xi1> to vector<16x16xi8>
    %c0_27 = arith.constant 0 : index
    %c74 = arith.constant 74 : index
    %c0_28 = arith.constant 0 : index
    %c0_29 = arith.constant 0 : index
    %60 = vector.load %arg3[%c0_27, %c74, %c0_28, %c0_29] : memref<1x120x16x16xi8, #tpu.memory_space<vmem>>, vector<1x1x16x16xi8>
    %61 = vector.shape_cast %60 : vector<1x1x16x16xi8> to vector<16x16xi8>
    %62 = vector.shape_cast %59 : vector<16x16xi8> to vector<1x1x16x16xi8>
    tpu.vector_store %arg3[%c0_27, %c74, %c0_28, %c0_29], %62 {strides = array<i32>} : memref<1x120x16x16xi8, #tpu.memory_space<vmem>>, vector<1x1x16x16xi8>,
    %63 = vector.extract_strided_slice %8 {offsets = [0, 0], sizes = [16, 16], strides = [1, 1]} : vector<26x16xf32> to vector<16x16xf32>
    %64 = arith.cmpf oge, %63, %5 : vector<16x16xf32>
    %65 = arith.extui %64 : vector<16x16xi1> to vector<16x16xi8>
    %c0_30 = arith.constant 0 : index
    %c84 = arith.constant 84 : index
    %c0_31 = arith.constant 0 : index
    %c0_32 = arith.constant 0 : index
    %66 = vector.load %arg3[%c0_30, %c84, %c0_31, %c0_32] : memref<1x120x16x16xi8, #tpu.memory_space<vmem>>, vector<1x1x16x16xi8>
    %67 = vector.shape_cast %66 : vector<1x1x16x16xi8> to vector<16x16xi8>
    %68 = vector.shape_cast %65 : vector<16x16xi8> to vector<1x1x16x16xi8>
    tpu.vector_store %arg3[%c0_30, %c84, %c0_31, %c0_32], %68 {strides = array<i32>} : memref<1x120x16x16xi8, #tpu.memory_space<vmem>>, vector<1x1x16x16xi8>,
    %69 = vector.extract_strided_slice %8 {offsets = [10, 0], sizes = [16, 16], strides = [1, 1]} : vector<26x16xf32> to vector<16x16xf32>
    %70 = arith.cmpf oge, %69, %5 : vector<16x16xf32>
    %71 = arith.extui %70 : vector<16x16xi1> to vector<16x16xi8>
    %c0_33 = arith.constant 0 : index
    %c113 = arith.constant 113 : index
    %c0_34 = arith.constant 0 : index
    %c0_35 = arith.constant 0 : index
    %72 = vector.load %arg3[%c0_33, %c113, %c0_34, %c0_35] : memref<1x120x16x16xi8, #tpu.memory_space<vmem>>, vector<1x1x16x16xi8>
    %73 = vector.shape_cast %72 : vector<1x1x16x16xi8> to vector<16x16xi8>
    %74 = vector.shape_cast %71 : vector<16x16xi8> to vector<1x1x16x16xi8>
    tpu.vector_store %arg3[%c0_33, %c113, %c0_34, %c0_35], %74 {strides = array<i32>} : memref<1x120x16x16xi8, #tpu.memory_space<vmem>>, vector<1x1x16x16xi8>,
    %c0_36 = arith.constant 0 : index
    %75 = arith.index_cast %1 : i32 to index
    %c5_37 = arith.constant 5 : index
    %76 = vector.load %arg2[%c0_36, %75, %c5_37] : memref<1x26x26xf32, #tpu.memory_space<vmem>>, vector<1x26x16xf32>
    %77 = vector.shape_cast %76 : vector<1x26x16xf32> to vector<26x16xf32>
    %78 = vector.extract_strided_slice %77 {offsets = [4, 0], sizes = [16, 16], strides = [1, 1]} : vector<26x16xf32> to vector<16x16xf32>
    %79 = arith.cmpf oge, %78, %5 : vector<16x16xf32>
    %80 = arith.extui %79 : vector<16x16xi1> to vector<16x16xi8>
    %c0_38 = arith.constant 0 : index
    %c1 = arith.constant 1 : index
    %c0_39 = arith.constant 0 : index
    %c0_40 = arith.constant 0 : index
    %81 = vector.load %arg3[%c0_38, %c1, %c0_39, %c0_40] : memref<1x120x16x16xi8, #tpu.memory_space<vmem>>, vector<1x1x16x16xi8>
    %82 = vector.shape_cast %81 : vector<1x1x16x16xi8> to vector<16x16xi8>
    %83 = vector.shape_cast %80 : vector<16x16xi8> to vector<1x1x16x16xi8>
    tpu.vector_store %arg3[%c0_38, %c1, %c0_39, %c0_40], %83 {strides = array<i32>} : memref<1x120x16x16xi8, #tpu.memory_space<vmem>>, vector<1x1x16x16xi8>,
    %84 = vector.extract_strided_slice %77 {offsets = [6, 0], sizes = [16, 16], strides = [1, 1]} : vector<26x16xf32> to vector<16x16xf32>
    %85 = arith.cmpf oge, %84, %5 : vector<16x16xf32>
    %86 = arith.extui %85 : vector<16x16xi1> to vector<16x16xi8>
    %c0_41 = arith.constant 0 : index
    %c6 = arith.constant 6 : index
    %c0_42 = arith.constant 0 : index
    %c0_43 = arith.constant 0 : index
    %87 = vector.load %arg3[%c0_41, %c6, %c0_42, %c0_43] : memref<1x120x16x16xi8, #tpu.memory_space<vmem>>, vector<1x1x16x16xi8>
    %88 = vector.shape_cast %87 : vector<1x1x16x16xi8> to vector<16x16xi8>
    %89 = vector.shape_cast %86 : vector<16x16xi8> to vector<1x1x16x16xi8>
    tpu.vector_store %arg3[%c0_41, %c6, %c0_42, %c0_43], %89 {strides = array<i32>} : memref<1x120x16x16xi8, #tpu.memory_space<vmem>>, vector<1x1x16x16xi8>,
    %90 = vector.extract_strided_slice %77 {offsets = [3, 0], sizes = [16, 16], strides = [1, 1]} : vector<26x16xf32> to vector<16x16xf32>
    %91 = arith.cmpf oge, %90, %5 : vector<16x16xf32>
    %92 = arith.extui %91 : vector<16x16xi1> to vector<16x16xi8>
    %c0_44 = arith.constant 0 : index
    %c10 = arith.constant 10 : index
    %c0_45 = arith.constant 0 : index
    %c0_46 = arith.constant 0 : index
    %93 = vector.load %arg3[%c0_44, %c10, %c0_45, %c0_46] : memref<1x120x16x16xi8, #tpu.memory_space<vmem>>, vector<1x1x16x16xi8>
    %94 = vector.shape_cast %93 : vector<1x1x16x16xi8> to vector<16x16xi8>
    %95 = vector.shape_cast %92 : vector<16x16xi8> to vector<1x1x16x16xi8>
    tpu.vector_store %arg3[%c0_44, %c10, %c0_45, %c0_46], %95 {strides = array<i32>} : memref<1x120x16x16xi8, #tpu.memory_space<vmem>>, vector<1x1x16x16xi8>,
    %96 = vector.extract_strided_slice %77 {offsets = [7, 0], sizes = [16, 16], strides = [1, 1]} : vector<26x16xf32> to vector<16x16xf32>
    %97 = arith.cmpf oge, %96, %5 : vector<16x16xf32>
    %98 = arith.extui %97 : vector<16x16xi1> to vector<16x16xi8>
    %c0_47 = arith.constant 0 : index
    %c21 = arith.constant 21 : index
    %c0_48 = arith.constant 0 : index
    %c0_49 = arith.constant 0 : index
    %99 = vector.load %arg3[%c0_47, %c21, %c0_48, %c0_49] : memref<1x120x16x16xi8, #tpu.memory_space<vmem>>, vector<1x1x16x16xi8>
    %100 = vector.shape_cast %99 : vector<1x1x16x16xi8> to vector<16x16xi8>
    %101 = vector.shape_cast %98 : vector<16x16xi8> to vector<1x1x16x16xi8>
    tpu.vector_store %arg3[%c0_47, %c21, %c0_48, %c0_49], %101 {strides = array<i32>} : memref<1x120x16x16xi8, #tpu.memory_space<vmem>>, vector<1x1x16x16xi8>,
    %102 = vector.extract_strided_slice %77 {offsets = [2, 0], sizes = [16, 16], strides = [1, 1]} : vector<26x16xf32> to vector<16x16xf32>
    %103 = arith.cmpf oge, %102, %5 : vector<16x16xf32>
    %104 = arith.extui %103 : vector<16x16xi1> to vector<16x16xi8>
    %c0_50 = arith.constant 0 : index
    %c27 = arith.constant 27 : index
    %c0_51 = arith.constant 0 : index
    %c0_52 = arith.constant 0 : index
    %105 = vector.load %arg3[%c0_50, %c27, %c0_51, %c0_52] : memref<1x120x16x16xi8, #tpu.memory_space<vmem>>, vector<1x1x16x16xi8>
    %106 = vector.shape_cast %105 : vector<1x1x16x16xi8> to vector<16x16xi8>
    %107 = vector.shape_cast %104 : vector<16x16xi8> to vector<1x1x16x16xi8>
    tpu.vector_store %arg3[%c0_50, %c27, %c0_51, %c0_52], %107 {strides = array<i32>} : memref<1x120x16x16xi8, #tpu.memory_space<vmem>>, vector<1x1x16x16xi8>,
    %108 = vector.extract_strided_slice %77 {offsets = [8, 0], sizes = [16, 16], strides = [1, 1]} : vector<26x16xf32> to vector<16x16xf32>
    %109 = arith.cmpf oge, %108, %5 : vector<16x16xf32>
    %110 = arith.extui %109 : vector<16x16xi1> to vector<16x16xi8>
    %c0_53 = arith.constant 0 : index
    %c44 = arith.constant 44 : index
    %c0_54 = arith.constant 0 : index
    %c0_55 = arith.constant 0 : index
    %111 = vector.load %arg3[%c0_53, %c44, %c0_54, %c0_55] : memref<1x120x16x16xi8, #tpu.memory_space<vmem>>, vector<1x1x16x16xi8>
    %112 = vector.shape_cast %111 : vector<1x1x16x16xi8> to vector<16x16xi8>
    %113 = vector.shape_cast %110 : vector<16x16xi8> to vector<1x1x16x16xi8>
    tpu.vector_store %arg3[%c0_53, %c44, %c0_54, %c0_55], %113 {strides = array<i32>} : memref<1x120x16x16xi8, #tpu.memory_space<vmem>>, vector<1x1x16x16xi8>,
    %114 = vector.extract_strided_slice %77 {offsets = [1, 0], sizes = [16, 16], strides = [1, 1]} : vector<26x16xf32> to vector<16x16xf32>
    %115 = arith.cmpf oge, %114, %5 : vector<16x16xf32>
    %116 = arith.extui %115 : vector<16x16xi1> to vector<16x16xi8>
    %c0_56 = arith.constant 0 : index
    %c52 = arith.constant 52 : index
    %c0_57 = arith.constant 0 : index
    %c0_58 = arith.constant 0 : index
    %117 = vector.load %arg3[%c0_56, %c52, %c0_57, %c0_58] : memref<1x120x16x16xi8, #tpu.memory_space<vmem>>, vector<1x1x16x16xi8>
    %118 = vector.shape_cast %117 : vector<1x1x16x16xi8> to vector<16x16xi8>
    %119 = vector.shape_cast %116 : vector<16x16xi8> to vector<1x1x16x16xi8>
    tpu.vector_store %arg3[%c0_56, %c52, %c0_57, %c0_58], %119 {strides = array<i32>} : memref<1x120x16x16xi8, #tpu.memory_space<vmem>>, vector<1x1x16x16xi8>,
    %120 = vector.extract_strided_slice %77 {offsets = [9, 0], sizes = [16, 16], strides = [1, 1]} : vector<26x16xf32> to vector<16x16xf32>
    %121 = arith.cmpf oge, %120, %5 : vector<16x16xf32>
    %122 = arith.extui %121 : vector<16x16xi1> to vector<16x16xi8>
    %c0_59 = arith.constant 0 : index
    %c75 = arith.constant 75 : index
    %c0_60 = arith.constant 0 : index
    %c0_61 = arith.constant 0 : index
    %123 = vector.load %arg3[%c0_59, %c75, %c0_60, %c0_61] : memref<1x120x16x16xi8, #tpu.memory_space<vmem>>, vector<1x1x16x16xi8>
    %124 = vector.shape_cast %123 : vector<1x1x16x16xi8> to vector<16x16xi8>
    %125 = vector.shape_cast %122 : vector<16x16xi8> to vector<1x1x16x16xi8>
    tpu.vector_store %arg3[%c0_59, %c75, %c0_60, %c0_61], %125 {strides = array<i32>} : memref<1x120x16x16xi8, #tpu.memory_space<vmem>>, vector<1x1x16x16xi8>,
    %126 = vector.extract_strided_slice %77 {offsets = [0, 0], sizes = [16, 16], strides = [1, 1]} : vector<26x16xf32> to vector<16x16xf32>
    %127 = arith.cmpf oge, %126, %5 : vector<16x16xf32>
    %128 = arith.extui %127 : vector<16x16xi1> to vector<16x16xi8>
    %c0_62 = arith.constant 0 : index
    %c85 = arith.constant 85 : index
    %c0_63 = arith.constant 0 : index
    %c0_64 = arith.constant 0 : index
    %129 = vector.load %arg3[%c0_62, %c85, %c0_63, %c0_64] : memref<1x120x16x16xi8, #tpu.memory_space<vmem>>, vector<1x1x16x16xi8>
    %130 = vector.shape_cast %129 : vector<1x1x16x16xi8> to vector<16x16xi8>
    %131 = vector.shape_cast %128 : vector<16x16xi8> to vector<1x1x16x16xi8>
    tpu.vector_store %arg3[%c0_62, %c85, %c0_63, %c0_64], %131 {strides = array<i32>} : memref<1x120x16x16xi8, #tpu.memory_space<vmem>>, vector<1x1x16x16xi8>,
    %132 = vector.extract_strided_slice %77 {offsets = [10, 0], sizes = [16, 16], strides = [1, 1]} : vector<26x16xf32> to vector<16x16xf32>
    %133 = arith.cmpf oge, %132, %5 : vector<16x16xf32>
    %134 = arith.extui %133 : vector<16x16xi1> to vector<16x16xi8>
    %c0_65 = arith.constant 0 : index
    %c114 = arith.constant 114 : index
    %c0_66 = arith.constant 0 : index
    %c0_67 = arith.constant 0 : index
    %135 = vector.load %arg3[%c0_65, %c114, %c0_66, %c0_67] : memref<1x120x16x16xi8, #tpu.memory_space<vmem>>, vector<1x1x16x16xi8>
    %136 = vector.shape_cast %135 : vector<1x1x16x16xi8> to vector<16x16xi8>
    %137 = vector.shape_cast %134 : vector<16x16xi8> to vector<1x1x16x16xi8>
    tpu.vector_store %arg3[%c0_65, %c114, %c0_66, %c0_67], %137 {strides = array<i32>} : memref<1x120x16x16xi8, #tpu.memory_space<vmem>>, vector<1x1x16x16xi8>,
    %c0_68 = arith.constant 0 : index
    %138 = arith.index_cast %1 : i32 to index
    %c6_69 = arith.constant 6 : index
    %139 = vector.load %arg2[%c0_68, %138, %c6_69] : memref<1x26x26xf32, #tpu.memory_space<vmem>>, vector<1x26x16xf32>
    %140 = vector.shape_cast %139 : vector<1x26x16xf32> to vector<26x16xf32>
    %141 = vector.extract_strided_slice %140 {offsets = [4, 0], sizes = [16, 16], strides = [1, 1]} : vector<26x16xf32> to vector<16x16xf32>
    %142 = arith.cmpf oge, %141, %5 : vector<16x16xf32>
    %143 = arith.extui %142 : vector<16x16xi1> to vector<16x16xi8>
    %c0_70 = arith.constant 0 : index
    %c2 = arith.constant 2 : index
    %c0_71 = arith.constant 0 : index
    %c0_72 = arith.constant 0 : index
    %144 = vector.load %arg3[%c0_70, %c2, %c0_71, %c0_72] : memref<1x120x16x16xi8, #tpu.memory_space<vmem>>, vector<1x1x16x16xi8>
    %145 = vector.shape_cast %144 : vector<1x1x16x16xi8> to vector<16x16xi8>
    %146 = vector.shape_cast %143 : vector<16x16xi8> to vector<1x1x16x16xi8>
    tpu.vector_store %arg3[%c0_70, %c2, %c0_71, %c0_72], %146 {strides = array<i32>} : memref<1x120x16x16xi8, #tpu.memory_space<vmem>>, vector<1x1x16x16xi8>,
    %147 = vector.extract_strided_slice %140 {offsets = [5, 0], sizes = [16, 16], strides = [1, 1]} : vector<26x16xf32> to vector<16x16xf32>
    %148 = arith.cmpf oge, %147, %5 : vector<16x16xf32>
    %149 = arith.extui %148 : vector<16x16xi1> to vector<16x16xi8>
    %c0_73 = arith.constant 0 : index
    %c4_74 = arith.constant 4 : index
    %c0_75 = arith.constant 0 : index
    %c0_76 = arith.constant 0 : index
    %150 = vector.load %arg3[%c0_73, %c4_74, %c0_75, %c0_76] : memref<1x120x16x16xi8, #tpu.memory_space<vmem>>, vector<1x1x16x16xi8>
    %151 = vector.shape_cast %150 : vector<1x1x16x16xi8> to vector<16x16xi8>
    %152 = vector.shape_cast %149 : vector<16x16xi8> to vector<1x1x16x16xi8>
    tpu.vector_store %arg3[%c0_73, %c4_74, %c0_75, %c0_76], %152 {strides = array<i32>} : memref<1x120x16x16xi8, #tpu.memory_space<vmem>>, vector<1x1x16x16xi8>,
    %153 = vector.extract_strided_slice %140 {offsets = [6, 0], sizes = [16, 16], strides = [1, 1]} : vector<26x16xf32> to vector<16x16xf32>
    %154 = arith.cmpf oge, %153, %5 : vector<16x16xf32>
    %155 = arith.extui %154 : vector<16x16xi1> to vector<16x16xi8>
    %c0_77 = arith.constant 0 : index
    %c7 = arith.constant 7 : index
    %c0_78 = arith.constant 0 : index
    %c0_79 = arith.constant 0 : index
    %156 = vector.load %arg3[%c0_77, %c7, %c0_78, %c0_79] : memref<1x120x16x16xi8, #tpu.memory_space<vmem>>, vector<1x1x16x16xi8>
    %157 = vector.shape_cast %156 : vector<1x1x16x16xi8> to vector<16x16xi8>
    %158 = vector.shape_cast %155 : vector<16x16xi8> to vector<1x1x16x16xi8>
    tpu.vector_store %arg3[%c0_77, %c7, %c0_78, %c0_79], %158 {strides = array<i32>} : memref<1x120x16x16xi8, #tpu.memory_space<vmem>>, vector<1x1x16x16xi8>,
    %159 = vector.extract_strided_slice %140 {offsets = [3, 0], sizes = [16, 16], strides = [1, 1]} : vector<26x16xf32> to vector<16x16xf32>
    %160 = arith.cmpf oge, %159, %5 : vector<16x16xf32>
    %161 = arith.extui %160 : vector<16x16xi1> to vector<16x16xi8>
    %c0_80 = arith.constant 0 : index
    %c11 = arith.constant 11 : index
    %c0_81 = arith.constant 0 : index
    %c0_82 = arith.constant 0 : index
    %162 = vector.load %arg3[%c0_80, %c11, %c0_81, %c0_82] : memref<1x120x16x16xi8, #tpu.memory_space<vmem>>, vector<1x1x16x16xi8>
    %163 = vector.shape_cast %162 : vector<1x1x16x16xi8> to vector<16x16xi8>
    %164 = vector.shape_cast %161 : vector<16x16xi8> to vector<1x1x16x16xi8>
    tpu.vector_store %arg3[%c0_80, %c11, %c0_81, %c0_82], %164 {strides = array<i32>} : memref<1x120x16x16xi8, #tpu.memory_space<vmem>>, vector<1x1x16x16xi8>,
    %165 = vector.extract_strided_slice %140 {offsets = [7, 0], sizes = [16, 16], strides = [1, 1]} : vector<26x16xf32> to vector<16x16xf32>
    %166 = arith.cmpf oge, %165, %5 : vector<16x16xf32>
    %167 = arith.extui %166 : vector<16x16xi1> to vector<16x16xi8>
    %c0_83 = arith.constant 0 : index
    %c22 = arith.constant 22 : index
    %c0_84 = arith.constant 0 : index
    %c0_85 = arith.constant 0 : index
    %168 = vector.load %arg3[%c0_83, %c22, %c0_84, %c0_85] : memref<1x120x16x16xi8, #tpu.memory_space<vmem>>, vector<1x1x16x16xi8>
    %169 = vector.shape_cast %168 : vector<1x1x16x16xi8> to vector<16x16xi8>
    %170 = vector.shape_cast %167 : vector<16x16xi8> to vector<1x1x16x16xi8>
    tpu.vector_store %arg3[%c0_83, %c22, %c0_84, %c0_85], %170 {strides = array<i32>} : memref<1x120x16x16xi8, #tpu.memory_space<vmem>>, vector<1x1x16x16xi8>,
    %171 = vector.extract_strided_slice %140 {offsets = [2, 0], sizes = [16, 16], strides = [1, 1]} : vector<26x16xf32> to vector<16x16xf32>
    %172 = arith.cmpf oge, %171, %5 : vector<16x16xf32>
    %173 = arith.extui %172 : vector<16x16xi1> to vector<16x16xi8>
    %c0_86 = arith.constant 0 : index
    %c28 = arith.constant 28 : index
    %c0_87 = arith.constant 0 : index
    %c0_88 = arith.constant 0 : index
    %174 = vector.load %arg3[%c0_86, %c28, %c0_87, %c0_88] : memref<1x120x16x16xi8, #tpu.memory_space<vmem>>, vector<1x1x16x16xi8>
    %175 = vector.shape_cast %174 : vector<1x1x16x16xi8> to vector<16x16xi8>
    %176 = vector.shape_cast %173 : vector<16x16xi8> to vector<1x1x16x16xi8>
    tpu.vector_store %arg3[%c0_86, %c28, %c0_87, %c0_88], %176 {strides = array<i32>} : memref<1x120x16x16xi8, #tpu.memory_space<vmem>>, vector<1x1x16x16xi8>,
    %177 = vector.extract_strided_slice %140 {offsets = [8, 0], sizes = [16, 16], strides = [1, 1]} : vector<26x16xf32> to vector<16x16xf32>
    %178 = arith.cmpf oge, %177, %5 : vector<16x16xf32>
    %179 = arith.extui %178 : vector<16x16xi1> to vector<16x16xi8>
    %c0_89 = arith.constant 0 : index
    %c45 = arith.constant 45 : index
    %c0_90 = arith.constant 0 : index
    %c0_91 = arith.constant 0 : index
    %180 = vector.load %arg3[%c0_89, %c45, %c0_90, %c0_91] : memref<1x120x16x16xi8, #tpu.memory_space<vmem>>, vector<1x1x16x16xi8>
    %181 = vector.shape_cast %180 : vector<1x1x16x16xi8> to vector<16x16xi8>
    %182 = vector.shape_cast %179 : vector<16x16xi8> to vector<1x1x16x16xi8>
    tpu.vector_store %arg3[%c0_89, %c45, %c0_90, %c0_91], %182 {strides = array<i32>} : memref<1x120x16x16xi8, #tpu.memory_space<vmem>>, vector<1x1x16x16xi8>,
    %183 = vector.extract_strided_slice %140 {offsets = [1, 0], sizes = [16, 16], strides = [1, 1]} : vector<26x16xf32> to vector<16x16xf32>
    %184 = arith.cmpf oge, %183, %5 : vector<16x16xf32>
    %185 = arith.extui %184 : vector<16x16xi1> to vector<16x16xi8>
    %c0_92 = arith.constant 0 : index
    %c53 = arith.constant 53 : index
    %c0_93 = arith.constant 0 : index
    %c0_94 = arith.constant 0 : index
    %186 = vector.load %arg3[%c0_92, %c53, %c0_93, %c0_94] : memref<1x120x16x16xi8, #tpu.memory_space<vmem>>, vector<1x1x16x16xi8>
    %187 = vector.shape_cast %186 : vector<1x1x16x16xi8> to vector<16x16xi8>
    %188 = vector.shape_cast %185 : vector<16x16xi8> to vector<1x1x16x16xi8>
    tpu.vector_store %arg3[%c0_92, %c53, %c0_93, %c0_94], %188 {strides = array<i32>} : memref<1x120x16x16xi8, #tpu.memory_space<vmem>>, vector<1x1x16x16xi8>,
    %189 = vector.extract_strided_slice %140 {offsets = [9, 0], sizes = [16, 16], strides = [1, 1]} : vector<26x16xf32> to vector<16x16xf32>
    %190 = arith.cmpf oge, %189, %5 : vector<16x16xf32>
    %191 = arith.extui %190 : vector<16x16xi1> to vector<16x16xi8>
    %c0_95 = arith.constant 0 : index
    %c76 = arith.constant 76 : index
    %c0_96 = arith.constant 0 : index
    %c0_97 = arith.constant 0 : index
    %192 = vector.load %arg3[%c0_95, %c76, %c0_96, %c0_97] : memref<1x120x16x16xi8, #tpu.memory_space<vmem>>, vector<1x1x16x16xi8>
    %193 = vector.shape_cast %192 : vector<1x1x16x16xi8> to vector<16x16xi8>
    %194 = vector.shape_cast %191 : vector<16x16xi8> to vector<1x1x16x16xi8>
    tpu.vector_store %arg3[%c0_95, %c76, %c0_96, %c0_97], %194 {strides = array<i32>} : memref<1x120x16x16xi8, #tpu.memory_space<vmem>>, vector<1x1x16x16xi8>,
    %195 = vector.extract_strided_slice %140 {offsets = [0, 0], sizes = [16, 16], strides = [1, 1]} : vector<26x16xf32> to vector<16x16xf32>
    %196 = arith.cmpf oge, %195, %5 : vector<16x16xf32>
    %197 = arith.extui %196 : vector<16x16xi1> to vector<16x16xi8>
    %c0_98 = arith.constant 0 : index
    %c86 = arith.constant 86 : index
    %c0_99 = arith.constant 0 : index
    %c0_100 = arith.constant 0 : index
    %198 = vector.load %arg3[%c0_98, %c86, %c0_99, %c0_100] : memref<1x120x16x16xi8, #tpu.memory_space<vmem>>, vector<1x1x16x16xi8>
    %199 = vector.shape_cast %198 : vector<1x1x16x16xi8> to vector<16x16xi8>
    %200 = vector.shape_cast %197 : vector<16x16xi8> to vector<1x1x16x16xi8>
    tpu.vector_store %arg3[%c0_98, %c86, %c0_99, %c0_100], %200 {strides = array<i32>} : memref<1x120x16x16xi8, #tpu.memory_space<vmem>>, vector<1x1x16x16xi8>,
    %201 = vector.extract_strided_slice %140 {offsets = [10, 0], sizes = [16, 16], strides = [1, 1]} : vector<26x16xf32> to vector<16x16xf32>
    %202 = arith.cmpf oge, %201, %5 : vector<16x16xf32>
    %203 = arith.extui %202 : vector<16x16xi1> to vector<16x16xi8>
    %c0_101 = arith.constant 0 : index
    %c115 = arith.constant 115 : index
    %c0_102 = arith.constant 0 : index
    %c0_103 = arith.constant 0 : index
    %204 = vector.load %arg3[%c0_101, %c115, %c0_102, %c0_103] : memref<1x120x16x16xi8, #tpu.memory_space<vmem>>, vector<1x1x16x16xi8>
    %205 = vector.shape_cast %204 : vector<1x1x16x16xi8> to vector<16x16xi8>
    %206 = vector.shape_cast %203 : vector<16x16xi8> to vector<1x1x16x16xi8>
    tpu.vector_store %arg3[%c0_101, %c115, %c0_102, %c0_103], %206 {strides = array<i32>} : memref<1x120x16x16xi8, #tpu.memory_space<vmem>>, vector<1x1x16x16xi8>,
    %c0_104 = arith.constant 0 : index
    %207 = arith.index_cast %1 : i32 to index
    %c3_105 = arith.constant 3 : index
    %208 = vector.load %arg2[%c0_104, %207, %c3_105] : memref<1x26x26xf32, #tpu.memory_space<vmem>>, vector<1x26x16xf32>
    %209 = vector.shape_cast %208 : vector<1x26x16xf32> to vector<26x16xf32>
    %210 = vector.extract_strided_slice %209 {offsets = [3, 0], sizes = [16, 16], strides = [1, 1]} : vector<26x16xf32> to vector<16x16xf32>
    %211 = arith.cmpf oge, %210, %5 : vector<16x16xf32>
    %212 = arith.extui %211 : vector<16x16xi1> to vector<16x16xi8>
    %c0_106 = arith.constant 0 : index
    %c8 = arith.constant 8 : index
    %c0_107 = arith.constant 0 : index
    %c0_108 = arith.constant 0 : index
    %213 = vector.load %arg3[%c0_106, %c8, %c0_107, %c0_108] : memref<1x120x16x16xi8, #tpu.memory_space<vmem>>, vector<1x1x16x16xi8>
    %214 = vector.shape_cast %213 : vector<1x1x16x16xi8> to vector<16x16xi8>
    %215 = vector.shape_cast %212 : vector<16x16xi8> to vector<1x1x16x16xi8>
    tpu.vector_store %arg3[%c0_106, %c8, %c0_107, %c0_108], %215 {strides = array<i32>} : memref<1x120x16x16xi8, #tpu.memory_space<vmem>>, vector<1x1x16x16xi8>,
    %216 = vector.extract_strided_slice %209 {offsets = [4, 0], sizes = [16, 16], strides = [1, 1]} : vector<26x16xf32> to vector<16x16xf32>
    %217 = arith.cmpf oge, %216, %5 : vector<16x16xf32>
    %218 = arith.extui %217 : vector<16x16xi1> to vector<16x16xi8>
    %c0_109 = arith.constant 0 : index
    %c13 = arith.constant 13 : index
    %c0_110 = arith.constant 0 : index
    %c0_111 = arith.constant 0 : index
    %219 = vector.load %arg3[%c0_109, %c13, %c0_110, %c0_111] : memref<1x120x16x16xi8, #tpu.memory_space<vmem>>, vector<1x1x16x16xi8>
    %220 = vector.shape_cast %219 : vector<1x1x16x16xi8> to vector<16x16xi8>
    %221 = vector.shape_cast %218 : vector<16x16xi8> to vector<1x1x16x16xi8>
    tpu.vector_store %arg3[%c0_109, %c13, %c0_110, %c0_111], %221 {strides = array<i32>} : memref<1x120x16x16xi8, #tpu.memory_space<vmem>>, vector<1x1x16x16xi8>,
    %222 = vector.extract_strided_slice %209 {offsets = [5, 0], sizes = [16, 16], strides = [1, 1]} : vector<26x16xf32> to vector<16x16xf32>
    %223 = arith.cmpf oge, %222, %5 : vector<16x16xf32>
    %224 = arith.extui %223 : vector<16x16xi1> to vector<16x16xi8>
    %c0_112 = arith.constant 0 : index
    %c15 = arith.constant 15 : index
    %c0_113 = arith.constant 0 : index
    %c0_114 = arith.constant 0 : index
    %225 = vector.load %arg3[%c0_112, %c15, %c0_113, %c0_114] : memref<1x120x16x16xi8, #tpu.memory_space<vmem>>, vector<1x1x16x16xi8>
    %226 = vector.shape_cast %225 : vector<1x1x16x16xi8> to vector<16x16xi8>
    %227 = vector.shape_cast %224 : vector<16x16xi8> to vector<1x1x16x16xi8>
    tpu.vector_store %arg3[%c0_112, %c15, %c0_113, %c0_114], %227 {strides = array<i32>} : memref<1x120x16x16xi8, #tpu.memory_space<vmem>>, vector<1x1x16x16xi8>,
    %228 = vector.extract_strided_slice %209 {offsets = [6, 0], sizes = [16, 16], strides = [1, 1]} : vector<26x16xf32> to vector<16x16xf32>
    %229 = arith.cmpf oge, %228, %5 : vector<16x16xf32>
    %230 = arith.extui %229 : vector<16x16xi1> to vector<16x16xi8>
    %c0_115 = arith.constant 0 : index
    %c17 = arith.constant 17 : index
    %c0_116 = arith.constant 0 : index
    %c0_117 = arith.constant 0 : index
    %231 = vector.load %arg3[%c0_115, %c17, %c0_116, %c0_117] : memref<1x120x16x16xi8, #tpu.memory_space<vmem>>, vector<1x1x16x16xi8>
    %232 = vector.shape_cast %231 : vector<1x1x16x16xi8> to vector<16x16xi8>
    %233 = vector.shape_cast %230 : vector<16x16xi8> to vector<1x1x16x16xi8>
    tpu.vector_store %arg3[%c0_115, %c17, %c0_116, %c0_117], %233 {strides = array<i32>} : memref<1x120x16x16xi8, #tpu.memory_space<vmem>>, vector<1x1x16x16xi8>,
    %234 = vector.extract_strided_slice %209 {offsets = [7, 0], sizes = [16, 16], strides = [1, 1]} : vector<26x16xf32> to vector<16x16xf32>
    %235 = arith.cmpf oge, %234, %5 : vector<16x16xf32>
    %236 = arith.extui %235 : vector<16x16xi1> to vector<16x16xi8>
    %c0_118 = arith.constant 0 : index
    %c19 = arith.constant 19 : index
    %c0_119 = arith.constant 0 : index
    %c0_120 = arith.constant 0 : index
    %237 = vector.load %arg3[%c0_118, %c19, %c0_119, %c0_120] : memref<1x120x16x16xi8, #tpu.memory_space<vmem>>, vector<1x1x16x16xi8>
    %238 = vector.shape_cast %237 : vector<1x1x16x16xi8> to vector<16x16xi8>
    %239 = vector.shape_cast %236 : vector<16x16xi8> to vector<1x1x16x16xi8>
    tpu.vector_store %arg3[%c0_118, %c19, %c0_119, %c0_120], %239 {strides = array<i32>} : memref<1x120x16x16xi8, #tpu.memory_space<vmem>>, vector<1x1x16x16xi8>,
    %240 = vector.extract_strided_slice %209 {offsets = [2, 0], sizes = [16, 16], strides = [1, 1]} : vector<26x16xf32> to vector<16x16xf32>
    %241 = arith.cmpf oge, %240, %5 : vector<16x16xf32>
    %242 = arith.extui %241 : vector<16x16xi1> to vector<16x16xi8>
    %c0_121 = arith.constant 0 : index
    %c25 = arith.constant 25 : index
    %c0_122 = arith.constant 0 : index
    %c0_123 = arith.constant 0 : index
    %243 = vector.load %arg3[%c0_121, %c25, %c0_122, %c0_123] : memref<1x120x16x16xi8, #tpu.memory_space<vmem>>, vector<1x1x16x16xi8>
    %244 = vector.shape_cast %243 : vector<1x1x16x16xi8> to vector<16x16xi8>
    %245 = vector.shape_cast %242 : vector<16x16xi8> to vector<1x1x16x16xi8>
    tpu.vector_store %arg3[%c0_121, %c25, %c0_122, %c0_123], %245 {strides = array<i32>} : memref<1x120x16x16xi8, #tpu.memory_space<vmem>>, vector<1x1x16x16xi8>,
    %246 = vector.extract_strided_slice %209 {offsets = [8, 0], sizes = [16, 16], strides = [1, 1]} : vector<26x16xf32> to vector<16x16xf32>
    %247 = arith.cmpf oge, %246, %5 : vector<16x16xf32>
    %248 = arith.extui %247 : vector<16x16xi1> to vector<16x16xi8>
    %c0_124 = arith.constant 0 : index
    %c42 = arith.constant 42 : index
    %c0_125 = arith.constant 0 : index
    %c0_126 = arith.constant 0 : index
    %249 = vector.load %arg3[%c0_124, %c42, %c0_125, %c0_126] : memref<1x120x16x16xi8, #tpu.memory_space<vmem>>, vector<1x1x16x16xi8>
    %250 = vector.shape_cast %249 : vector<1x1x16x16xi8> to vector<16x16xi8>
    %251 = vector.shape_cast %248 : vector<16x16xi8> to vector<1x1x16x16xi8>
    tpu.vector_store %arg3[%c0_124, %c42, %c0_125, %c0_126], %251 {strides = array<i32>} : memref<1x120x16x16xi8, #tpu.memory_space<vmem>>, vector<1x1x16x16xi8>,
    %252 = vector.extract_strided_slice %209 {offsets = [1, 0], sizes = [16, 16], strides = [1, 1]} : vector<26x16xf32> to vector<16x16xf32>
    %253 = arith.cmpf oge, %252, %5 : vector<16x16xf32>
    %254 = arith.extui %253 : vector<16x16xi1> to vector<16x16xi8>
    %c0_127 = arith.constant 0 : index
    %c50 = arith.constant 50 : index
    %c0_128 = arith.constant 0 : index
    %c0_129 = arith.constant 0 : index
    %255 = vector.load %arg3[%c0_127, %c50, %c0_128, %c0_129] : memref<1x120x16x16xi8, #tpu.memory_space<vmem>>, vector<1x1x16x16xi8>
    %256 = vector.shape_cast %255 : vector<1x1x16x16xi8> to vector<16x16xi8>
    %257 = vector.shape_cast %254 : vector<16x16xi8> to vector<1x1x16x16xi8>
    tpu.vector_store %arg3[%c0_127, %c50, %c0_128, %c0_129], %257 {strides = array<i32>} : memref<1x120x16x16xi8, #tpu.memory_space<vmem>>, vector<1x1x16x16xi8>,
    %258 = vector.extract_strided_slice %209 {offsets = [9, 0], sizes = [16, 16], strides = [1, 1]} : vector<26x16xf32> to vector<16x16xf32>
    %259 = arith.cmpf oge, %258, %5 : vector<16x16xf32>
    %260 = arith.extui %259 : vector<16x16xi1> to vector<16x16xi8>
    %c0_130 = arith.constant 0 : index
    %c73 = arith.constant 73 : index
    %c0_131 = arith.constant 0 : index
    %c0_132 = arith.constant 0 : index
    %261 = vector.load %arg3[%c0_130, %c73, %c0_131, %c0_132] : memref<1x120x16x16xi8, #tpu.memory_space<vmem>>, vector<1x1x16x16xi8>
    %262 = vector.shape_cast %261 : vector<1x1x16x16xi8> to vector<16x16xi8>
    %263 = vector.shape_cast %260 : vector<16x16xi8> to vector<1x1x16x16xi8>
    tpu.vector_store %arg3[%c0_130, %c73, %c0_131, %c0_132], %263 {strides = array<i32>} : memref<1x120x16x16xi8, #tpu.memory_space<vmem>>, vector<1x1x16x16xi8>,
    %264 = vector.extract_strided_slice %209 {offsets = [0, 0], sizes = [16, 16], strides = [1, 1]} : vector<26x16xf32> to vector<16x16xf32>
    %265 = arith.cmpf oge, %264, %5 : vector<16x16xf32>
    %266 = arith.extui %265 : vector<16x16xi1> to vector<16x16xi8>
    %c0_133 = arith.constant 0 : index
    %c83 = arith.constant 83 : index
    %c0_134 = arith.constant 0 : index
    %c0_135 = arith.constant 0 : index
    %267 = vector.load %arg3[%c0_133, %c83, %c0_134, %c0_135] : memref<1x120x16x16xi8, #tpu.memory_space<vmem>>, vector<1x1x16x16xi8>
    %268 = vector.shape_cast %267 : vector<1x1x16x16xi8> to vector<16x16xi8>
    %269 = vector.shape_cast %266 : vector<16x16xi8> to vector<1x1x16x16xi8>
    tpu.vector_store %arg3[%c0_133, %c83, %c0_134, %c0_135], %269 {strides = array<i32>} : memref<1x120x16x16xi8, #tpu.memory_space<vmem>>, vector<1x1x16x16xi8>,
    %270 = vector.extract_strided_slice %209 {offsets = [10, 0], sizes = [16, 16], strides = [1, 1]} : vector<26x16xf32> to vector<16x16xf32>
    %271 = arith.cmpf oge, %270, %5 : vector<16x16xf32>
    %272 = arith.extui %271 : vector<16x16xi1> to vector<16x16xi8>
    %c0_136 = arith.constant 0 : index
    %c112 = arith.constant 112 : index
    %c0_137 = arith.constant 0 : index
    %c0_138 = arith.constant 0 : index
    %273 = vector.load %arg3[%c0_136, %c112, %c0_137, %c0_138] : memref<1x120x16x16xi8, #tpu.memory_space<vmem>>, vector<1x1x16x16xi8>
    %274 = vector.shape_cast %273 : vector<1x1x16x16xi8> to vector<16x16xi8>
    %275 = vector.shape_cast %272 : vector<16x16xi8> to vector<1x1x16x16xi8>
    tpu.vector_store %arg3[%c0_136, %c112, %c0_137, %c0_138], %275 {strides = array<i32>} : memref<1x120x16x16xi8, #tpu.memory_space<vmem>>, vector<1x1x16x16xi8>,
    %c0_139 = arith.constant 0 : index
    %276 = arith.index_cast %1 : i32 to index
    %c7_140 = arith.constant 7 : index
    %277 = vector.load %arg2[%c0_139, %276, %c7_140] : memref<1x26x26xf32, #tpu.memory_space<vmem>>, vector<1x26x16xf32>
    %278 = vector.shape_cast %277 : vector<1x26x16xf32> to vector<26x16xf32>
    %279 = vector.extract_strided_slice %278 {offsets = [3, 0], sizes = [16, 16], strides = [1, 1]} : vector<26x16xf32> to vector<16x16xf32>
    %280 = arith.cmpf oge, %279, %5 : vector<16x16xf32>
    %281 = arith.extui %280 : vector<16x16xi1> to vector<16x16xi8>
    %c0_141 = arith.constant 0 : index
    %c12 = arith.constant 12 : index
    %c0_142 = arith.constant 0 : index
    %c0_143 = arith.constant 0 : index
    %282 = vector.load %arg3[%c0_141, %c12, %c0_142, %c0_143] : memref<1x120x16x16xi8, #tpu.memory_space<vmem>>, vector<1x1x16x16xi8>
    %283 = vector.shape_cast %282 : vector<1x1x16x16xi8> to vector<16x16xi8>
    %284 = vector.shape_cast %281 : vector<16x16xi8> to vector<1x1x16x16xi8>
    tpu.vector_store %arg3[%c0_141, %c12, %c0_142, %c0_143], %284 {strides = array<i32>} : memref<1x120x16x16xi8, #tpu.memory_space<vmem>>, vector<1x1x16x16xi8>,
    %285 = vector.extract_strided_slice %278 {offsets = [4, 0], sizes = [16, 16], strides = [1, 1]} : vector<26x16xf32> to vector<16x16xf32>
    %286 = arith.cmpf oge, %285, %5 : vector<16x16xf32>
    %287 = arith.extui %286 : vector<16x16xi1> to vector<16x16xi8>
    %c0_144 = arith.constant 0 : index
    %c14 = arith.constant 14 : index
    %c0_145 = arith.constant 0 : index
    %c0_146 = arith.constant 0 : index
    %288 = vector.load %arg3[%c0_144, %c14, %c0_145, %c0_146] : memref<1x120x16x16xi8, #tpu.memory_space<vmem>>, vector<1x1x16x16xi8>
    %289 = vector.shape_cast %288 : vector<1x1x16x16xi8> to vector<16x16xi8>
    %290 = vector.shape_cast %287 : vector<16x16xi8> to vector<1x1x16x16xi8>
    tpu.vector_store %arg3[%c0_144, %c14, %c0_145, %c0_146], %290 {strides = array<i32>} : memref<1x120x16x16xi8, #tpu.memory_space<vmem>>, vector<1x1x16x16xi8>,
    %291 = vector.extract_strided_slice %278 {offsets = [5, 0], sizes = [16, 16], strides = [1, 1]} : vector<26x16xf32> to vector<16x16xf32>
    %292 = arith.cmpf oge, %291, %5 : vector<16x16xf32>
    %293 = arith.extui %292 : vector<16x16xi1> to vector<16x16xi8>
    %c0_147 = arith.constant 0 : index
    %c16 = arith.constant 16 : index
    %c0_148 = arith.constant 0 : index
    %c0_149 = arith.constant 0 : index
    %294 = vector.load %arg3[%c0_147, %c16, %c0_148, %c0_149] : memref<1x120x16x16xi8, #tpu.memory_space<vmem>>, vector<1x1x16x16xi8>
    %295 = vector.shape_cast %294 : vector<1x1x16x16xi8> to vector<16x16xi8>
    %296 = vector.shape_cast %293 : vector<16x16xi8> to vector<1x1x16x16xi8>
    tpu.vector_store %arg3[%c0_147, %c16, %c0_148, %c0_149], %296 {strides = array<i32>} : memref<1x120x16x16xi8, #tpu.memory_space<vmem>>, vector<1x1x16x16xi8>,
    %297 = vector.extract_strided_slice %278 {offsets = [6, 0], sizes = [16, 16], strides = [1, 1]} : vector<26x16xf32> to vector<16x16xf32>
    %298 = arith.cmpf oge, %297, %5 : vector<16x16xf32>
    %299 = arith.extui %298 : vector<16x16xi1> to vector<16x16xi8>
    %c0_150 = arith.constant 0 : index
    %c18 = arith.constant 18 : index
    %c0_151 = arith.constant 0 : index
    %c0_152 = arith.constant 0 : index
    %300 = vector.load %arg3[%c0_150, %c18, %c0_151, %c0_152] : memref<1x120x16x16xi8, #tpu.memory_space<vmem>>, vector<1x1x16x16xi8>
    %301 = vector.shape_cast %300 : vector<1x1x16x16xi8> to vector<16x16xi8>
    %302 = vector.shape_cast %299 : vector<16x16xi8> to vector<1x1x16x16xi8>
    tpu.vector_store %arg3[%c0_150, %c18, %c0_151, %c0_152], %302 {strides = array<i32>} : memref<1x120x16x16xi8, #tpu.memory_space<vmem>>, vector<1x1x16x16xi8>,
    %303 = vector.extract_strided_slice %278 {offsets = [7, 0], sizes = [16, 16], strides = [1, 1]} : vector<26x16xf32> to vector<16x16xf32>
    %304 = arith.cmpf oge, %303, %5 : vector<16x16xf32>
    %305 = arith.extui %304 : vector<16x16xi1> to vector<16x16xi8>
    %c0_153 = arith.constant 0 : index
    %c23 = arith.constant 23 : index
    %c0_154 = arith.constant 0 : index
    %c0_155 = arith.constant 0 : index
    %306 = vector.load %arg3[%c0_153, %c23, %c0_154, %c0_155] : memref<1x120x16x16xi8, #tpu.memory_space<vmem>>, vector<1x1x16x16xi8>
    %307 = vector.shape_cast %306 : vector<1x1x16x16xi8> to vector<16x16xi8>
    %308 = vector.shape_cast %305 : vector<16x16xi8> to vector<1x1x16x16xi8>
    tpu.vector_store %arg3[%c0_153, %c23, %c0_154, %c0_155], %308 {strides = array<i32>} : memref<1x120x16x16xi8, #tpu.memory_space<vmem>>, vector<1x1x16x16xi8>,
    %309 = vector.extract_strided_slice %278 {offsets = [2, 0], sizes = [16, 16], strides = [1, 1]} : vector<26x16xf32> to vector<16x16xf32>
    %310 = arith.cmpf oge, %309, %5 : vector<16x16xf32>
    %311 = arith.extui %310 : vector<16x16xi1> to vector<16x16xi8>
    %c0_156 = arith.constant 0 : index
    %c29 = arith.constant 29 : index
    %c0_157 = arith.constant 0 : index
    %c0_158 = arith.constant 0 : index
    %312 = vector.load %arg3[%c0_156, %c29, %c0_157, %c0_158] : memref<1x120x16x16xi8, #tpu.memory_space<vmem>>, vector<1x1x16x16xi8>
    %313 = vector.shape_cast %312 : vector<1x1x16x16xi8> to vector<16x16xi8>
    %314 = vector.shape_cast %311 : vector<16x16xi8> to vector<1x1x16x16xi8>
    tpu.vector_store %arg3[%c0_156, %c29, %c0_157, %c0_158], %314 {strides = array<i32>} : memref<1x120x16x16xi8, #tpu.memory_space<vmem>>, vector<1x1x16x16xi8>,
    %315 = vector.extract_strided_slice %278 {offsets = [8, 0], sizes = [16, 16], strides = [1, 1]} : vector<26x16xf32> to vector<16x16xf32>
    %316 = arith.cmpf oge, %315, %5 : vector<16x16xf32>
    %317 = arith.extui %316 : vector<16x16xi1> to vector<16x16xi8>
    %c0_159 = arith.constant 0 : index
    %c46 = arith.constant 46 : index
    %c0_160 = arith.constant 0 : index
    %c0_161 = arith.constant 0 : index
    %318 = vector.load %arg3[%c0_159, %c46, %c0_160, %c0_161] : memref<1x120x16x16xi8, #tpu.memory_space<vmem>>, vector<1x1x16x16xi8>
    %319 = vector.shape_cast %318 : vector<1x1x16x16xi8> to vector<16x16xi8>
    %320 = vector.shape_cast %317 : vector<16x16xi8> to vector<1x1x16x16xi8>
    tpu.vector_store %arg3[%c0_159, %c46, %c0_160, %c0_161], %320 {strides = array<i32>} : memref<1x120x16x16xi8, #tpu.memory_space<vmem>>, vector<1x1x16x16xi8>,
    %321 = vector.extract_strided_slice %278 {offsets = [1, 0], sizes = [16, 16], strides = [1, 1]} : vector<26x16xf32> to vector<16x16xf32>
    %322 = arith.cmpf oge, %321, %5 : vector<16x16xf32>
    %323 = arith.extui %322 : vector<16x16xi1> to vector<16x16xi8>
    %c0_162 = arith.constant 0 : index
    %c54 = arith.constant 54 : index
    %c0_163 = arith.constant 0 : index
    %c0_164 = arith.constant 0 : index
    %324 = vector.load %arg3[%c0_162, %c54, %c0_163, %c0_164] : memref<1x120x16x16xi8, #tpu.memory_space<vmem>>, vector<1x1x16x16xi8>
    %325 = vector.shape_cast %324 : vector<1x1x16x16xi8> to vector<16x16xi8>
    %326 = vector.shape_cast %323 : vector<16x16xi8> to vector<1x1x16x16xi8>
    tpu.vector_store %arg3[%c0_162, %c54, %c0_163, %c0_164], %326 {strides = array<i32>} : memref<1x120x16x16xi8, #tpu.memory_space<vmem>>, vector<1x1x16x16xi8>,
    %327 = vector.extract_strided_slice %278 {offsets = [9, 0], sizes = [16, 16], strides = [1, 1]} : vector<26x16xf32> to vector<16x16xf32>
    %328 = arith.cmpf oge, %327, %5 : vector<16x16xf32>
    %329 = arith.extui %328 : vector<16x16xi1> to vector<16x16xi8>
    %c0_165 = arith.constant 0 : index
    %c77 = arith.constant 77 : index
    %c0_166 = arith.constant 0 : index
    %c0_167 = arith.constant 0 : index
    %330 = vector.load %arg3[%c0_165, %c77, %c0_166, %c0_167] : memref<1x120x16x16xi8, #tpu.memory_space<vmem>>, vector<1x1x16x16xi8>
    %331 = vector.shape_cast %330 : vector<1x1x16x16xi8> to vector<16x16xi8>
    %332 = vector.shape_cast %329 : vector<16x16xi8> to vector<1x1x16x16xi8>
    tpu.vector_store %arg3[%c0_165, %c77, %c0_166, %c0_167], %332 {strides = array<i32>} : memref<1x120x16x16xi8, #tpu.memory_space<vmem>>, vector<1x1x16x16xi8>,
    %333 = vector.extract_strided_slice %278 {offsets = [0, 0], sizes = [16, 16], strides = [1, 1]} : vector<26x16xf32> to vector<16x16xf32>
    %334 = arith.cmpf oge, %333, %5 : vector<16x16xf32>
    %335 = arith.extui %334 : vector<16x16xi1> to vector<16x16xi8>
    %c0_168 = arith.constant 0 : index
    %c87 = arith.constant 87 : index
    %c0_169 = arith.constant 0 : index
    %c0_170 = arith.constant 0 : index
    %336 = vector.load %arg3[%c0_168, %c87, %c0_169, %c0_170] : memref<1x120x16x16xi8, #tpu.memory_space<vmem>>, vector<1x1x16x16xi8>
    %337 = vector.shape_cast %336 : vector<1x1x16x16xi8> to vector<16x16xi8>
    %338 = vector.shape_cast %335 : vector<16x16xi8> to vector<1x1x16x16xi8>
    tpu.vector_store %arg3[%c0_168, %c87, %c0_169, %c0_170], %338 {strides = array<i32>} : memref<1x120x16x16xi8, #tpu.memory_space<vmem>>, vector<1x1x16x16xi8>,
    %339 = vector.extract_strided_slice %278 {offsets = [10, 0], sizes = [16, 16], strides = [1, 1]} : vector<26x16xf32> to vector<16x16xf32>
    %340 = arith.cmpf oge, %339, %5 : vector<16x16xf32>
    %341 = arith.extui %340 : vector<16x16xi1> to vector<16x16xi8>
    %c0_171 = arith.constant 0 : index
    %c116 = arith.constant 116 : index
    %c0_172 = arith.constant 0 : index
    %c0_173 = arith.constant 0 : index
    %342 = vector.load %arg3[%c0_171, %c116, %c0_172, %c0_173] : memref<1x120x16x16xi8, #tpu.memory_space<vmem>>, vector<1x1x16x16xi8>
    %343 = vector.shape_cast %342 : vector<1x1x16x16xi8> to vector<16x16xi8>
    %344 = vector.shape_cast %341 : vector<16x16xi8> to vector<1x1x16x16xi8>
    tpu.vector_store %arg3[%c0_171, %c116, %c0_172, %c0_173], %344 {strides = array<i32>} : memref<1x120x16x16xi8, #tpu.memory_space<vmem>>, vector<1x1x16x16xi8>,
    %c0_174 = arith.constant 0 : index
    %345 = arith.index_cast %1 : i32 to index
    %c2_175 = arith.constant 2 : index
    %346 = vector.load %arg2[%c0_174, %345, %c2_175] : memref<1x26x26xf32, #tpu.memory_space<vmem>>, vector<1x26x16xf32>
    %347 = vector.shape_cast %346 : vector<1x26x16xf32> to vector<26x16xf32>
    %348 = vector.extract_strided_slice %347 {offsets = [2, 0], sizes = [16, 16], strides = [1, 1]} : vector<26x16xf32> to vector<16x16xf32>
    %349 = arith.cmpf oge, %348, %5 : vector<16x16xf32>
    %350 = arith.extui %349 : vector<16x16xi1> to vector<16x16xi8>
    %c0_176 = arith.constant 0 : index
    %c24 = arith.constant 24 : index
    %c0_177 = arith.constant 0 : index
    %c0_178 = arith.constant 0 : index
    %351 = vector.load %arg3[%c0_176, %c24, %c0_177, %c0_178] : memref<1x120x16x16xi8, #tpu.memory_space<vmem>>, vector<1x1x16x16xi8>
    %352 = vector.shape_cast %351 : vector<1x1x16x16xi8> to vector<16x16xi8>
    %353 = vector.shape_cast %350 : vector<16x16xi8> to vector<1x1x16x16xi8>
    tpu.vector_store %arg3[%c0_176, %c24, %c0_177, %c0_178], %353 {strides = array<i32>} : memref<1x120x16x16xi8, #tpu.memory_space<vmem>>, vector<1x1x16x16xi8>,
    %354 = vector.extract_strided_slice %347 {offsets = [3, 0], sizes = [16, 16], strides = [1, 1]} : vector<26x16xf32> to vector<16x16xf32>
    %355 = arith.cmpf oge, %354, %5 : vector<16x16xf32>
    %356 = arith.extui %355 : vector<16x16xi1> to vector<16x16xi8>
    %c0_179 = arith.constant 0 : index
    %c31 = arith.constant 31 : index
    %c0_180 = arith.constant 0 : index
    %c0_181 = arith.constant 0 : index
    %357 = vector.load %arg3[%c0_179, %c31, %c0_180, %c0_181] : memref<1x120x16x16xi8, #tpu.memory_space<vmem>>, vector<1x1x16x16xi8>
    %358 = vector.shape_cast %357 : vector<1x1x16x16xi8> to vector<16x16xi8>
    %359 = vector.shape_cast %356 : vector<16x16xi8> to vector<1x1x16x16xi8>
    tpu.vector_store %arg3[%c0_179, %c31, %c0_180, %c0_181], %359 {strides = array<i32>} : memref<1x120x16x16xi8, #tpu.memory_space<vmem>>, vector<1x1x16x16xi8>,
    %360 = vector.extract_strided_slice %347 {offsets = [4, 0], sizes = [16, 16], strides = [1, 1]} : vector<26x16xf32> to vector<16x16xf32>
    %361 = arith.cmpf oge, %360, %5 : vector<16x16xf32>
    %362 = arith.extui %361 : vector<16x16xi1> to vector<16x16xi8>
    %c0_182 = arith.constant 0 : index
    %c33 = arith.constant 33 : index
    %c0_183 = arith.constant 0 : index
    %c0_184 = arith.constant 0 : index
    %363 = vector.load %arg3[%c0_182, %c33, %c0_183, %c0_184] : memref<1x120x16x16xi8, #tpu.memory_space<vmem>>, vector<1x1x16x16xi8>
    %364 = vector.shape_cast %363 : vector<1x1x16x16xi8> to vector<16x16xi8>
    %365 = vector.shape_cast %362 : vector<16x16xi8> to vector<1x1x16x16xi8>
    tpu.vector_store %arg3[%c0_182, %c33, %c0_183, %c0_184], %365 {strides = array<i32>} : memref<1x120x16x16xi8, #tpu.memory_space<vmem>>, vector<1x1x16x16xi8>,
    %366 = vector.extract_strided_slice %347 {offsets = [5, 0], sizes = [16, 16], strides = [1, 1]} : vector<26x16xf32> to vector<16x16xf32>
    %367 = arith.cmpf oge, %366, %5 : vector<16x16xf32>
    %368 = arith.extui %367 : vector<16x16xi1> to vector<16x16xi8>
    %c0_185 = arith.constant 0 : index
    %c35 = arith.constant 35 : index
    %c0_186 = arith.constant 0 : index
    %c0_187 = arith.constant 0 : index
    %369 = vector.load %arg3[%c0_185, %c35, %c0_186, %c0_187] : memref<1x120x16x16xi8, #tpu.memory_space<vmem>>, vector<1x1x16x16xi8>
    %370 = vector.shape_cast %369 : vector<1x1x16x16xi8> to vector<16x16xi8>
    %371 = vector.shape_cast %368 : vector<16x16xi8> to vector<1x1x16x16xi8>
    tpu.vector_store %arg3[%c0_185, %c35, %c0_186, %c0_187], %371 {strides = array<i32>} : memref<1x120x16x16xi8, #tpu.memory_space<vmem>>, vector<1x1x16x16xi8>,
    %372 = vector.extract_strided_slice %347 {offsets = [6, 0], sizes = [16, 16], strides = [1, 1]} : vector<26x16xf32> to vector<16x16xf32>
    %373 = arith.cmpf oge, %372, %5 : vector<16x16xf32>
    %374 = arith.extui %373 : vector<16x16xi1> to vector<16x16xi8>
    %c0_188 = arith.constant 0 : index
    %c37 = arith.constant 37 : index
    %c0_189 = arith.constant 0 : index
    %c0_190 = arith.constant 0 : index
    %375 = vector.load %arg3[%c0_188, %c37, %c0_189, %c0_190] : memref<1x120x16x16xi8, #tpu.memory_space<vmem>>, vector<1x1x16x16xi8>
    %376 = vector.shape_cast %375 : vector<1x1x16x16xi8> to vector<16x16xi8>
    %377 = vector.shape_cast %374 : vector<16x16xi8> to vector<1x1x16x16xi8>
    tpu.vector_store %arg3[%c0_188, %c37, %c0_189, %c0_190], %377 {strides = array<i32>} : memref<1x120x16x16xi8, #tpu.memory_space<vmem>>, vector<1x1x16x16xi8>,
    %378 = vector.extract_strided_slice %347 {offsets = [7, 0], sizes = [16, 16], strides = [1, 1]} : vector<26x16xf32> to vector<16x16xf32>
    %379 = arith.cmpf oge, %378, %5 : vector<16x16xf32>
    %380 = arith.extui %379 : vector<16x16xi1> to vector<16x16xi8>
    %c0_191 = arith.constant 0 : index
    %c39 = arith.constant 39 : index
    %c0_192 = arith.constant 0 : index
    %c0_193 = arith.constant 0 : index
    %381 = vector.load %arg3[%c0_191, %c39, %c0_192, %c0_193] : memref<1x120x16x16xi8, #tpu.memory_space<vmem>>, vector<1x1x16x16xi8>
    %382 = vector.shape_cast %381 : vector<1x1x16x16xi8> to vector<16x16xi8>
    %383 = vector.shape_cast %380 : vector<16x16xi8> to vector<1x1x16x16xi8>
    tpu.vector_store %arg3[%c0_191, %c39, %c0_192, %c0_193], %383 {strides = array<i32>} : memref<1x120x16x16xi8, #tpu.memory_space<vmem>>, vector<1x1x16x16xi8>,
    %384 = vector.extract_strided_slice %347 {offsets = [8, 0], sizes = [16, 16], strides = [1, 1]} : vector<26x16xf32> to vector<16x16xf32>
    %385 = arith.cmpf oge, %384, %5 : vector<16x16xf32>
    %386 = arith.extui %385 : vector<16x16xi1> to vector<16x16xi8>
    %c0_194 = arith.constant 0 : index
    %c41 = arith.constant 41 : index
    %c0_195 = arith.constant 0 : index
    %c0_196 = arith.constant 0 : index
    %387 = vector.load %arg3[%c0_194, %c41, %c0_195, %c0_196] : memref<1x120x16x16xi8, #tpu.memory_space<vmem>>, vector<1x1x16x16xi8>
    %388 = vector.shape_cast %387 : vector<1x1x16x16xi8> to vector<16x16xi8>
    %389 = vector.shape_cast %386 : vector<16x16xi8> to vector<1x1x16x16xi8>
    tpu.vector_store %arg3[%c0_194, %c41, %c0_195, %c0_196], %389 {strides = array<i32>} : memref<1x120x16x16xi8, #tpu.memory_space<vmem>>, vector<1x1x16x16xi8>,
    %390 = vector.extract_strided_slice %347 {offsets = [1, 0], sizes = [16, 16], strides = [1, 1]} : vector<26x16xf32> to vector<16x16xf32>
    %391 = arith.cmpf oge, %390, %5 : vector<16x16xf32>
    %392 = arith.extui %391 : vector<16x16xi1> to vector<16x16xi8>
    %c0_197 = arith.constant 0 : index
    %c49 = arith.constant 49 : index
    %c0_198 = arith.constant 0 : index
    %c0_199 = arith.constant 0 : index
    %393 = vector.load %arg3[%c0_197, %c49, %c0_198, %c0_199] : memref<1x120x16x16xi8, #tpu.memory_space<vmem>>, vector<1x1x16x16xi8>
    %394 = vector.shape_cast %393 : vector<1x1x16x16xi8> to vector<16x16xi8>
    %395 = vector.shape_cast %392 : vector<16x16xi8> to vector<1x1x16x16xi8>
    tpu.vector_store %arg3[%c0_197, %c49, %c0_198, %c0_199], %395 {strides = array<i32>} : memref<1x120x16x16xi8, #tpu.memory_space<vmem>>, vector<1x1x16x16xi8>,
    %396 = vector.extract_strided_slice %347 {offsets = [9, 0], sizes = [16, 16], strides = [1, 1]} : vector<26x16xf32> to vector<16x16xf32>
    %397 = arith.cmpf oge, %396, %5 : vector<16x16xf32>
    %398 = arith.extui %397 : vector<16x16xi1> to vector<16x16xi8>
    %c0_200 = arith.constant 0 : index
    %c72 = arith.constant 72 : index
    %c0_201 = arith.constant 0 : index
    %c0_202 = arith.constant 0 : index
    %399 = vector.load %arg3[%c0_200, %c72, %c0_201, %c0_202] : memref<1x120x16x16xi8, #tpu.memory_space<vmem>>, vector<1x1x16x16xi8>
    %400 = vector.shape_cast %399 : vector<1x1x16x16xi8> to vector<16x16xi8>
    %401 = vector.shape_cast %398 : vector<16x16xi8> to vector<1x1x16x16xi8>
    tpu.vector_store %arg3[%c0_200, %c72, %c0_201, %c0_202], %401 {strides = array<i32>} : memref<1x120x16x16xi8, #tpu.memory_space<vmem>>, vector<1x1x16x16xi8>,
    %402 = vector.extract_strided_slice %347 {offsets = [0, 0], sizes = [16, 16], strides = [1, 1]} : vector<26x16xf32> to vector<16x16xf32>
    %403 = arith.cmpf oge, %402, %5 : vector<16x16xf32>
    %404 = arith.extui %403 : vector<16x16xi1> to vector<16x16xi8>
    %c0_203 = arith.constant 0 : index
    %c82 = arith.constant 82 : index
    %c0_204 = arith.constant 0 : index
    %c0_205 = arith.constant 0 : index
    %405 = vector.load %arg3[%c0_203, %c82, %c0_204, %c0_205] : memref<1x120x16x16xi8, #tpu.memory_space<vmem>>, vector<1x1x16x16xi8>
    %406 = vector.shape_cast %405 : vector<1x1x16x16xi8> to vector<16x16xi8>
    %407 = vector.shape_cast %404 : vector<16x16xi8> to vector<1x1x16x16xi8>
    tpu.vector_store %arg3[%c0_203, %c82, %c0_204, %c0_205], %407 {strides = array<i32>} : memref<1x120x16x16xi8, #tpu.memory_space<vmem>>, vector<1x1x16x16xi8>,
    %408 = vector.extract_strided_slice %347 {offsets = [10, 0], sizes = [16, 16], strides = [1, 1]} : vector<26x16xf32> to vector<16x16xf32>
    %409 = arith.cmpf oge, %408, %5 : vector<16x16xf32>
    %410 = arith.extui %409 : vector<16x16xi1> to vector<16x16xi8>
    %c0_206 = arith.constant 0 : index
    %c111 = arith.constant 111 : index
    %c0_207 = arith.constant 0 : index
    %c0_208 = arith.constant 0 : index
    %411 = vector.load %arg3[%c0_206, %c111, %c0_207, %c0_208] : memref<1x120x16x16xi8, #tpu.memory_space<vmem>>, vector<1x1x16x16xi8>
    %412 = vector.shape_cast %411 : vector<1x1x16x16xi8> to vector<16x16xi8>
    %413 = vector.shape_cast %410 : vector<16x16xi8> to vector<1x1x16x16xi8>
    tpu.vector_store %arg3[%c0_206, %c111, %c0_207, %c0_208], %413 {strides = array<i32>} : memref<1x120x16x16xi8, #tpu.memory_space<vmem>>, vector<1x1x16x16xi8>,
    %c0_209 = arith.constant 0 : index
    %414 = arith.index_cast %1 : i32 to index
    %c8_210 = arith.constant 8 : index
    %415 = vector.load %arg2[%c0_209, %414, %c8_210] : memref<1x26x26xf32, #tpu.memory_space<vmem>>, vector<1x26x16xf32>
    %416 = vector.shape_cast %415 : vector<1x26x16xf32> to vector<26x16xf32>
    %417 = vector.extract_strided_slice %416 {offsets = [2, 0], sizes = [16, 16], strides = [1, 1]} : vector<26x16xf32> to vector<16x16xf32>
    %418 = arith.cmpf oge, %417, %5 : vector<16x16xf32>
    %419 = arith.extui %418 : vector<16x16xi1> to vector<16x16xi8>
    %c0_211 = arith.constant 0 : index
    %c30 = arith.constant 30 : index
    %c0_212 = arith.constant 0 : index
    %c0_213 = arith.constant 0 : index
    %420 = vector.load %arg3[%c0_211, %c30, %c0_212, %c0_213] : memref<1x120x16x16xi8, #tpu.memory_space<vmem>>, vector<1x1x16x16xi8>
    %421 = vector.shape_cast %420 : vector<1x1x16x16xi8> to vector<16x16xi8>
    %422 = vector.shape_cast %419 : vector<16x16xi8> to vector<1x1x16x16xi8>
    tpu.vector_store %arg3[%c0_211, %c30, %c0_212, %c0_213], %422 {strides = array<i32>} : memref<1x120x16x16xi8, #tpu.memory_space<vmem>>, vector<1x1x16x16xi8>,
    %423 = vector.extract_strided_slice %416 {offsets = [3, 0], sizes = [16, 16], strides = [1, 1]} : vector<26x16xf32> to vector<16x16xf32>
    %424 = arith.cmpf oge, %423, %5 : vector<16x16xf32>
    %425 = arith.extui %424 : vector<16x16xi1> to vector<16x16xi8>
    %c0_214 = arith.constant 0 : index
    %c32 = arith.constant 32 : index
    %c0_215 = arith.constant 0 : index
    %c0_216 = arith.constant 0 : index
    %426 = vector.load %arg3[%c0_214, %c32, %c0_215, %c0_216] : memref<1x120x16x16xi8, #tpu.memory_space<vmem>>, vector<1x1x16x16xi8>
    %427 = vector.shape_cast %426 : vector<1x1x16x16xi8> to vector<16x16xi8>
    %428 = vector.shape_cast %425 : vector<16x16xi8> to vector<1x1x16x16xi8>
    tpu.vector_store %arg3[%c0_214, %c32, %c0_215, %c0_216], %428 {strides = array<i32>} : memref<1x120x16x16xi8, #tpu.memory_space<vmem>>, vector<1x1x16x16xi8>,
    %429 = vector.extract_strided_slice %416 {offsets = [4, 0], sizes = [16, 16], strides = [1, 1]} : vector<26x16xf32> to vector<16x16xf32>
    %430 = arith.cmpf oge, %429, %5 : vector<16x16xf32>
    %431 = arith.extui %430 : vector<16x16xi1> to vector<16x16xi8>
    %c0_217 = arith.constant 0 : index
    %c34 = arith.constant 34 : index
    %c0_218 = arith.constant 0 : index
    %c0_219 = arith.constant 0 : index
    %432 = vector.load %arg3[%c0_217, %c34, %c0_218, %c0_219] : memref<1x120x16x16xi8, #tpu.memory_space<vmem>>, vector<1x1x16x16xi8>
    %433 = vector.shape_cast %432 : vector<1x1x16x16xi8> to vector<16x16xi8>
    %434 = vector.shape_cast %431 : vector<16x16xi8> to vector<1x1x16x16xi8>
    tpu.vector_store %arg3[%c0_217, %c34, %c0_218, %c0_219], %434 {strides = array<i32>} : memref<1x120x16x16xi8, #tpu.memory_space<vmem>>, vector<1x1x16x16xi8>,
    %435 = vector.extract_strided_slice %416 {offsets = [5, 0], sizes = [16, 16], strides = [1, 1]} : vector<26x16xf32> to vector<16x16xf32>
    %436 = arith.cmpf oge, %435, %5 : vector<16x16xf32>
    %437 = arith.extui %436 : vector<16x16xi1> to vector<16x16xi8>
    %c0_220 = arith.constant 0 : index
    %c36 = arith.constant 36 : index
    %c0_221 = arith.constant 0 : index
    %c0_222 = arith.constant 0 : index
    %438 = vector.load %arg3[%c0_220, %c36, %c0_221, %c0_222] : memref<1x120x16x16xi8, #tpu.memory_space<vmem>>, vector<1x1x16x16xi8>
    %439 = vector.shape_cast %438 : vector<1x1x16x16xi8> to vector<16x16xi8>
    %440 = vector.shape_cast %437 : vector<16x16xi8> to vector<1x1x16x16xi8>
    tpu.vector_store %arg3[%c0_220, %c36, %c0_221, %c0_222], %440 {strides = array<i32>} : memref<1x120x16x16xi8, #tpu.memory_space<vmem>>, vector<1x1x16x16xi8>,
    %441 = vector.extract_strided_slice %416 {offsets = [6, 0], sizes = [16, 16], strides = [1, 1]} : vector<26x16xf32> to vector<16x16xf32>
    %442 = arith.cmpf oge, %441, %5 : vector<16x16xf32>
    %443 = arith.extui %442 : vector<16x16xi1> to vector<16x16xi8>
    %c0_223 = arith.constant 0 : index
    %c38 = arith.constant 38 : index
    %c0_224 = arith.constant 0 : index
    %c0_225 = arith.constant 0 : index
    %444 = vector.load %arg3[%c0_223, %c38, %c0_224, %c0_225] : memref<1x120x16x16xi8, #tpu.memory_space<vmem>>, vector<1x1x16x16xi8>
    %445 = vector.shape_cast %444 : vector<1x1x16x16xi8> to vector<16x16xi8>
    %446 = vector.shape_cast %443 : vector<16x16xi8> to vector<1x1x16x16xi8>
    tpu.vector_store %arg3[%c0_223, %c38, %c0_224, %c0_225], %446 {strides = array<i32>} : memref<1x120x16x16xi8, #tpu.memory_space<vmem>>, vector<1x1x16x16xi8>,
    %447 = vector.extract_strided_slice %416 {offsets = [7, 0], sizes = [16, 16], strides = [1, 1]} : vector<26x16xf32> to vector<16x16xf32>
    %448 = arith.cmpf oge, %447, %5 : vector<16x16xf32>
    %449 = arith.extui %448 : vector<16x16xi1> to vector<16x16xi8>
    %c0_226 = arith.constant 0 : index
    %c40 = arith.constant 40 : index
    %c0_227 = arith.constant 0 : index
    %c0_228 = arith.constant 0 : index
    %450 = vector.load %arg3[%c0_226, %c40, %c0_227, %c0_228] : memref<1x120x16x16xi8, #tpu.memory_space<vmem>>, vector<1x1x16x16xi8>
    %451 = vector.shape_cast %450 : vector<1x1x16x16xi8> to vector<16x16xi8>
    %452 = vector.shape_cast %449 : vector<16x16xi8> to vector<1x1x16x16xi8>
    tpu.vector_store %arg3[%c0_226, %c40, %c0_227, %c0_228], %452 {strides = array<i32>} : memref<1x120x16x16xi8, #tpu.memory_space<vmem>>, vector<1x1x16x16xi8>,
    %453 = vector.extract_strided_slice %416 {offsets = [8, 0], sizes = [16, 16], strides = [1, 1]} : vector<26x16xf32> to vector<16x16xf32>
    %454 = arith.cmpf oge, %453, %5 : vector<16x16xf32>
    %455 = arith.extui %454 : vector<16x16xi1> to vector<16x16xi8>
    %c0_229 = arith.constant 0 : index
    %c47 = arith.constant 47 : index
    %c0_230 = arith.constant 0 : index
    %c0_231 = arith.constant 0 : index
    %456 = vector.load %arg3[%c0_229, %c47, %c0_230, %c0_231] : memref<1x120x16x16xi8, #tpu.memory_space<vmem>>, vector<1x1x16x16xi8>
    %457 = vector.shape_cast %456 : vector<1x1x16x16xi8> to vector<16x16xi8>
    %458 = vector.shape_cast %455 : vector<16x16xi8> to vector<1x1x16x16xi8>
    tpu.vector_store %arg3[%c0_229, %c47, %c0_230, %c0_231], %458 {strides = array<i32>} : memref<1x120x16x16xi8, #tpu.memory_space<vmem>>, vector<1x1x16x16xi8>,
    %459 = vector.extract_strided_slice %416 {offsets = [1, 0], sizes = [16, 16], strides = [1, 1]} : vector<26x16xf32> to vector<16x16xf32>
    %460 = arith.cmpf oge, %459, %5 : vector<16x16xf32>
    %461 = arith.extui %460 : vector<16x16xi1> to vector<16x16xi8>
    %c0_232 = arith.constant 0 : index
    %c55 = arith.constant 55 : index
    %c0_233 = arith.constant 0 : index
    %c0_234 = arith.constant 0 : index
    %462 = vector.load %arg3[%c0_232, %c55, %c0_233, %c0_234] : memref<1x120x16x16xi8, #tpu.memory_space<vmem>>, vector<1x1x16x16xi8>
    %463 = vector.shape_cast %462 : vector<1x1x16x16xi8> to vector<16x16xi8>
    %464 = vector.shape_cast %461 : vector<16x16xi8> to vector<1x1x16x16xi8>
    tpu.vector_store %arg3[%c0_232, %c55, %c0_233, %c0_234], %464 {strides = array<i32>} : memref<1x120x16x16xi8, #tpu.memory_space<vmem>>, vector<1x1x16x16xi8>,
    %465 = vector.extract_strided_slice %416 {offsets = [9, 0], sizes = [16, 16], strides = [1, 1]} : vector<26x16xf32> to vector<16x16xf32>
    %466 = arith.cmpf oge, %465, %5 : vector<16x16xf32>
    %467 = arith.extui %466 : vector<16x16xi1> to vector<16x16xi8>
    %c0_235 = arith.constant 0 : index
    %c78 = arith.constant 78 : index
    %c0_236 = arith.constant 0 : index
    %c0_237 = arith.constant 0 : index
    %468 = vector.load %arg3[%c0_235, %c78, %c0_236, %c0_237] : memref<1x120x16x16xi8, #tpu.memory_space<vmem>>, vector<1x1x16x16xi8>
    %469 = vector.shape_cast %468 : vector<1x1x16x16xi8> to vector<16x16xi8>
    %470 = vector.shape_cast %467 : vector<16x16xi8> to vector<1x1x16x16xi8>
    tpu.vector_store %arg3[%c0_235, %c78, %c0_236, %c0_237], %470 {strides = array<i32>} : memref<1x120x16x16xi8, #tpu.memory_space<vmem>>, vector<1x1x16x16xi8>,
    %471 = vector.extract_strided_slice %416 {offsets = [0, 0], sizes = [16, 16], strides = [1, 1]} : vector<26x16xf32> to vector<16x16xf32>
    %472 = arith.cmpf oge, %471, %5 : vector<16x16xf32>
    %473 = arith.extui %472 : vector<16x16xi1> to vector<16x16xi8>
    %c0_238 = arith.constant 0 : index
    %c88 = arith.constant 88 : index
    %c0_239 = arith.constant 0 : index
    %c0_240 = arith.constant 0 : index
    %474 = vector.load %arg3[%c0_238, %c88, %c0_239, %c0_240] : memref<1x120x16x16xi8, #tpu.memory_space<vmem>>, vector<1x1x16x16xi8>
    %475 = vector.shape_cast %474 : vector<1x1x16x16xi8> to vector<16x16xi8>
    %476 = vector.shape_cast %473 : vector<16x16xi8> to vector<1x1x16x16xi8>
    tpu.vector_store %arg3[%c0_238, %c88, %c0_239, %c0_240], %476 {strides = array<i32>} : memref<1x120x16x16xi8, #tpu.memory_space<vmem>>, vector<1x1x16x16xi8>,
    %477 = vector.extract_strided_slice %416 {offsets = [10, 0], sizes = [16, 16], strides = [1, 1]} : vector<26x16xf32> to vector<16x16xf32>
    %478 = arith.cmpf oge, %477, %5 : vector<16x16xf32>
    %479 = arith.extui %478 : vector<16x16xi1> to vector<16x16xi8>
    %c0_241 = arith.constant 0 : index
    %c117 = arith.constant 117 : index
    %c0_242 = arith.constant 0 : index
    %c0_243 = arith.constant 0 : index
    %480 = vector.load %arg3[%c0_241, %c117, %c0_242, %c0_243] : memref<1x120x16x16xi8, #tpu.memory_space<vmem>>, vector<1x1x16x16xi8>
    %481 = vector.shape_cast %480 : vector<1x1x16x16xi8> to vector<16x16xi8>
    %482 = vector.shape_cast %479 : vector<16x16xi8> to vector<1x1x16x16xi8>
    tpu.vector_store %arg3[%c0_241, %c117, %c0_242, %c0_243], %482 {strides = array<i32>} : memref<1x120x16x16xi8, #tpu.memory_space<vmem>>, vector<1x1x16x16xi8>,
    %c0_244 = arith.constant 0 : index
    %483 = arith.index_cast %1 : i32 to index
    %c1_245 = arith.constant 1 : index
    %484 = vector.load %arg2[%c0_244, %483, %c1_245] : memref<1x26x26xf32, #tpu.memory_space<vmem>>, vector<1x26x16xf32>
    %485 = vector.shape_cast %484 : vector<1x26x16xf32> to vector<26x16xf32>
    %486 = vector.extract_strided_slice %485 {offsets = [1, 0], sizes = [16, 16], strides = [1, 1]} : vector<26x16xf32> to vector<16x16xf32>
    %487 = arith.cmpf oge, %486, %5 : vector<16x16xf32>
    %488 = arith.extui %487 : vector<16x16xi1> to vector<16x16xi8>
    %c0_246 = arith.constant 0 : index
    %c48 = arith.constant 48 : index
    %c0_247 = arith.constant 0 : index
    %c0_248 = arith.constant 0 : index
    %489 = vector.load %arg3[%c0_246, %c48, %c0_247, %c0_248] : memref<1x120x16x16xi8, #tpu.memory_space<vmem>>, vector<1x1x16x16xi8>
    %490 = vector.shape_cast %489 : vector<1x1x16x16xi8> to vector<16x16xi8>
    %491 = vector.shape_cast %488 : vector<16x16xi8> to vector<1x1x16x16xi8>
    tpu.vector_store %arg3[%c0_246, %c48, %c0_247, %c0_248], %491 {strides = array<i32>} : memref<1x120x16x16xi8, #tpu.memory_space<vmem>>, vector<1x1x16x16xi8>,
    %492 = vector.extract_strided_slice %485 {offsets = [2, 0], sizes = [16, 16], strides = [1, 1]} : vector<26x16xf32> to vector<16x16xf32>
    %493 = arith.cmpf oge, %492, %5 : vector<16x16xf32>
    %494 = arith.extui %493 : vector<16x16xi1> to vector<16x16xi8>
    %c0_249 = arith.constant 0 : index
    %c57 = arith.constant 57 : index
    %c0_250 = arith.constant 0 : index
    %c0_251 = arith.constant 0 : index
    %495 = vector.load %arg3[%c0_249, %c57, %c0_250, %c0_251] : memref<1x120x16x16xi8, #tpu.memory_space<vmem>>, vector<1x1x16x16xi8>
    %496 = vector.shape_cast %495 : vector<1x1x16x16xi8> to vector<16x16xi8>
    %497 = vector.shape_cast %494 : vector<16x16xi8> to vector<1x1x16x16xi8>
    tpu.vector_store %arg3[%c0_249, %c57, %c0_250, %c0_251], %497 {strides = array<i32>} : memref<1x120x16x16xi8, #tpu.memory_space<vmem>>, vector<1x1x16x16xi8>,
    %498 = vector.extract_strided_slice %485 {offsets = [3, 0], sizes = [16, 16], strides = [1, 1]} : vector<26x16xf32> to vector<16x16xf32>
    %499 = arith.cmpf oge, %498, %5 : vector<16x16xf32>
    %500 = arith.extui %499 : vector<16x16xi1> to vector<16x16xi8>
    %c0_252 = arith.constant 0 : index
    %c59 = arith.constant 59 : index
    %c0_253 = arith.constant 0 : index
    %c0_254 = arith.constant 0 : index
    %501 = vector.load %arg3[%c0_252, %c59, %c0_253, %c0_254] : memref<1x120x16x16xi8, #tpu.memory_space<vmem>>, vector<1x1x16x16xi8>
    %502 = vector.shape_cast %501 : vector<1x1x16x16xi8> to vector<16x16xi8>
    %503 = vector.shape_cast %500 : vector<16x16xi8> to vector<1x1x16x16xi8>
    tpu.vector_store %arg3[%c0_252, %c59, %c0_253, %c0_254], %503 {strides = array<i32>} : memref<1x120x16x16xi8, #tpu.memory_space<vmem>>, vector<1x1x16x16xi8>,
    %504 = vector.extract_strided_slice %485 {offsets = [4, 0], sizes = [16, 16], strides = [1, 1]} : vector<26x16xf32> to vector<16x16xf32>
    %505 = arith.cmpf oge, %504, %5 : vector<16x16xf32>
    %506 = arith.extui %505 : vector<16x16xi1> to vector<16x16xi8>
    %c0_255 = arith.constant 0 : index
    %c61 = arith.constant 61 : index
    %c0_256 = arith.constant 0 : index
    %c0_257 = arith.constant 0 : index
    %507 = vector.load %arg3[%c0_255, %c61, %c0_256, %c0_257] : memref<1x120x16x16xi8, #tpu.memory_space<vmem>>, vector<1x1x16x16xi8>
    %508 = vector.shape_cast %507 : vector<1x1x16x16xi8> to vector<16x16xi8>
    %509 = vector.shape_cast %506 : vector<16x16xi8> to vector<1x1x16x16xi8>
    tpu.vector_store %arg3[%c0_255, %c61, %c0_256, %c0_257], %509 {strides = array<i32>} : memref<1x120x16x16xi8, #tpu.memory_space<vmem>>, vector<1x1x16x16xi8>,
    %510 = vector.extract_strided_slice %485 {offsets = [5, 0], sizes = [16, 16], strides = [1, 1]} : vector<26x16xf32> to vector<16x16xf32>
    %511 = arith.cmpf oge, %510, %5 : vector<16x16xf32>
    %512 = arith.extui %511 : vector<16x16xi1> to vector<16x16xi8>
    %c0_258 = arith.constant 0 : index
    %c63 = arith.constant 63 : index
    %c0_259 = arith.constant 0 : index
    %c0_260 = arith.constant 0 : index
    %513 = vector.load %arg3[%c0_258, %c63, %c0_259, %c0_260] : memref<1x120x16x16xi8, #tpu.memory_space<vmem>>, vector<1x1x16x16xi8>
    %514 = vector.shape_cast %513 : vector<1x1x16x16xi8> to vector<16x16xi8>
    %515 = vector.shape_cast %512 : vector<16x16xi8> to vector<1x1x16x16xi8>
    tpu.vector_store %arg3[%c0_258, %c63, %c0_259, %c0_260], %515 {strides = array<i32>} : memref<1x120x16x16xi8, #tpu.memory_space<vmem>>, vector<1x1x16x16xi8>,
    %516 = vector.extract_strided_slice %485 {offsets = [6, 0], sizes = [16, 16], strides = [1, 1]} : vector<26x16xf32> to vector<16x16xf32>
    %517 = arith.cmpf oge, %516, %5 : vector<16x16xf32>
    %518 = arith.extui %517 : vector<16x16xi1> to vector<16x16xi8>
    %c0_261 = arith.constant 0 : index
    %c65 = arith.constant 65 : index
    %c0_262 = arith.constant 0 : index
    %c0_263 = arith.constant 0 : index
    %519 = vector.load %arg3[%c0_261, %c65, %c0_262, %c0_263] : memref<1x120x16x16xi8, #tpu.memory_space<vmem>>, vector<1x1x16x16xi8>
    %520 = vector.shape_cast %519 : vector<1x1x16x16xi8> to vector<16x16xi8>
    %521 = vector.shape_cast %518 : vector<16x16xi8> to vector<1x1x16x16xi8>
    tpu.vector_store %arg3[%c0_261, %c65, %c0_262, %c0_263], %521 {strides = array<i32>} : memref<1x120x16x16xi8, #tpu.memory_space<vmem>>, vector<1x1x16x16xi8>,
    %522 = vector.extract_strided_slice %485 {offsets = [7, 0], sizes = [16, 16], strides = [1, 1]} : vector<26x16xf32> to vector<16x16xf32>
    %523 = arith.cmpf oge, %522, %5 : vector<16x16xf32>
    %524 = arith.extui %523 : vector<16x16xi1> to vector<16x16xi8>
    %c0_264 = arith.constant 0 : index
    %c67 = arith.constant 67 : index
    %c0_265 = arith.constant 0 : index
    %c0_266 = arith.constant 0 : index
    %525 = vector.load %arg3[%c0_264, %c67, %c0_265, %c0_266] : memref<1x120x16x16xi8, #tpu.memory_space<vmem>>, vector<1x1x16x16xi8>
    %526 = vector.shape_cast %525 : vector<1x1x16x16xi8> to vector<16x16xi8>
    %527 = vector.shape_cast %524 : vector<16x16xi8> to vector<1x1x16x16xi8>
    tpu.vector_store %arg3[%c0_264, %c67, %c0_265, %c0_266], %527 {strides = array<i32>} : memref<1x120x16x16xi8, #tpu.memory_space<vmem>>, vector<1x1x16x16xi8>,
    %528 = vector.extract_strided_slice %485 {offsets = [8, 0], sizes = [16, 16], strides = [1, 1]} : vector<26x16xf32> to vector<16x16xf32>
    %529 = arith.cmpf oge, %528, %5 : vector<16x16xf32>
    %530 = arith.extui %529 : vector<16x16xi1> to vector<16x16xi8>
    %c0_267 = arith.constant 0 : index
    %c69 = arith.constant 69 : index
    %c0_268 = arith.constant 0 : index
    %c0_269 = arith.constant 0 : index
    %531 = vector.load %arg3[%c0_267, %c69, %c0_268, %c0_269] : memref<1x120x16x16xi8, #tpu.memory_space<vmem>>, vector<1x1x16x16xi8>
    %532 = vector.shape_cast %531 : vector<1x1x16x16xi8> to vector<16x16xi8>
    %533 = vector.shape_cast %530 : vector<16x16xi8> to vector<1x1x16x16xi8>
    tpu.vector_store %arg3[%c0_267, %c69, %c0_268, %c0_269], %533 {strides = array<i32>} : memref<1x120x16x16xi8, #tpu.memory_space<vmem>>, vector<1x1x16x16xi8>,
    %534 = vector.extract_strided_slice %485 {offsets = [9, 0], sizes = [16, 16], strides = [1, 1]} : vector<26x16xf32> to vector<16x16xf32>
    %535 = arith.cmpf oge, %534, %5 : vector<16x16xf32>
    %536 = arith.extui %535 : vector<16x16xi1> to vector<16x16xi8>
    %c0_270 = arith.constant 0 : index
    %c71 = arith.constant 71 : index
    %c0_271 = arith.constant 0 : index
    %c0_272 = arith.constant 0 : index
    %537 = vector.load %arg3[%c0_270, %c71, %c0_271, %c0_272] : memref<1x120x16x16xi8, #tpu.memory_space<vmem>>, vector<1x1x16x16xi8>
    %538 = vector.shape_cast %537 : vector<1x1x16x16xi8> to vector<16x16xi8>
    %539 = vector.shape_cast %536 : vector<16x16xi8> to vector<1x1x16x16xi8>
    tpu.vector_store %arg3[%c0_270, %c71, %c0_271, %c0_272], %539 {strides = array<i32>} : memref<1x120x16x16xi8, #tpu.memory_space<vmem>>, vector<1x1x16x16xi8>,
    %540 = vector.extract_strided_slice %485 {offsets = [0, 0], sizes = [16, 16], strides = [1, 1]} : vector<26x16xf32> to vector<16x16xf32>
    %541 = arith.cmpf oge, %540, %5 : vector<16x16xf32>
    %542 = arith.extui %541 : vector<16x16xi1> to vector<16x16xi8>
    %c0_273 = arith.constant 0 : index
    %c81 = arith.constant 81 : index
    %c0_274 = arith.constant 0 : index
    %c0_275 = arith.constant 0 : index
    %543 = vector.load %arg3[%c0_273, %c81, %c0_274, %c0_275] : memref<1x120x16x16xi8, #tpu.memory_space<vmem>>, vector<1x1x16x16xi8>
    %544 = vector.shape_cast %543 : vector<1x1x16x16xi8> to vector<16x16xi8>
    %545 = vector.shape_cast %542 : vector<16x16xi8> to vector<1x1x16x16xi8>
    tpu.vector_store %arg3[%c0_273, %c81, %c0_274, %c0_275], %545 {strides = array<i32>} : memref<1x120x16x16xi8, #tpu.memory_space<vmem>>, vector<1x1x16x16xi8>,
    %546 = vector.extract_strided_slice %485 {offsets = [10, 0], sizes = [16, 16], strides = [1, 1]} : vector<26x16xf32> to vector<16x16xf32>
    %547 = arith.cmpf oge, %546, %5 : vector<16x16xf32>
    %548 = arith.extui %547 : vector<16x16xi1> to vector<16x16xi8>
    %c0_276 = arith.constant 0 : index
    %c110 = arith.constant 110 : index
    %c0_277 = arith.constant 0 : index
    %c0_278 = arith.constant 0 : index
    %549 = vector.load %arg3[%c0_276, %c110, %c0_277, %c0_278] : memref<1x120x16x16xi8, #tpu.memory_space<vmem>>, vector<1x1x16x16xi8>
    %550 = vector.shape_cast %549 : vector<1x1x16x16xi8> to vector<16x16xi8>
    %551 = vector.shape_cast %548 : vector<16x16xi8> to vector<1x1x16x16xi8>
    tpu.vector_store %arg3[%c0_276, %c110, %c0_277, %c0_278], %551 {strides = array<i32>} : memref<1x120x16x16xi8, #tpu.memory_space<vmem>>, vector<1x1x16x16xi8>,
    %c0_279 = arith.constant 0 : index
    %552 = arith.index_cast %1 : i32 to index
    %c9_280 = arith.constant 9 : index
    %553 = vector.load %arg2[%c0_279, %552, %c9_280] : memref<1x26x26xf32, #tpu.memory_space<vmem>>, vector<1x26x16xf32>
    %554 = vector.shape_cast %553 : vector<1x26x16xf32> to vector<26x16xf32>
    %555 = vector.extract_strided_slice %554 {offsets = [1, 0], sizes = [16, 16], strides = [1, 1]} : vector<26x16xf32> to vector<16x16xf32>
    %556 = arith.cmpf oge, %555, %5 : vector<16x16xf32>
    %557 = arith.extui %556 : vector<16x16xi1> to vector<16x16xi8>
    %c0_281 = arith.constant 0 : index
    %c56 = arith.constant 56 : index
    %c0_282 = arith.constant 0 : index
    %c0_283 = arith.constant 0 : index
    %558 = vector.load %arg3[%c0_281, %c56, %c0_282, %c0_283] : memref<1x120x16x16xi8, #tpu.memory_space<vmem>>, vector<1x1x16x16xi8>
    %559 = vector.shape_cast %558 : vector<1x1x16x16xi8> to vector<16x16xi8>
    %560 = vector.shape_cast %557 : vector<16x16xi8> to vector<1x1x16x16xi8>
    tpu.vector_store %arg3[%c0_281, %c56, %c0_282, %c0_283], %560 {strides = array<i32>} : memref<1x120x16x16xi8, #tpu.memory_space<vmem>>, vector<1x1x16x16xi8>,
    %561 = vector.extract_strided_slice %554 {offsets = [2, 0], sizes = [16, 16], strides = [1, 1]} : vector<26x16xf32> to vector<16x16xf32>
    %562 = arith.cmpf oge, %561, %5 : vector<16x16xf32>
    %563 = arith.extui %562 : vector<16x16xi1> to vector<16x16xi8>
    %c0_284 = arith.constant 0 : index
    %c58 = arith.constant 58 : index
    %c0_285 = arith.constant 0 : index
    %c0_286 = arith.constant 0 : index
    %564 = vector.load %arg3[%c0_284, %c58, %c0_285, %c0_286] : memref<1x120x16x16xi8, #tpu.memory_space<vmem>>, vector<1x1x16x16xi8>
    %565 = vector.shape_cast %564 : vector<1x1x16x16xi8> to vector<16x16xi8>
    %566 = vector.shape_cast %563 : vector<16x16xi8> to vector<1x1x16x16xi8>
    tpu.vector_store %arg3[%c0_284, %c58, %c0_285, %c0_286], %566 {strides = array<i32>} : memref<1x120x16x16xi8, #tpu.memory_space<vmem>>, vector<1x1x16x16xi8>,
    %567 = vector.extract_strided_slice %554 {offsets = [3, 0], sizes = [16, 16], strides = [1, 1]} : vector<26x16xf32> to vector<16x16xf32>
    %568 = arith.cmpf oge, %567, %5 : vector<16x16xf32>
    %569 = arith.extui %568 : vector<16x16xi1> to vector<16x16xi8>
    %c0_287 = arith.constant 0 : index
    %c60 = arith.constant 60 : index
    %c0_288 = arith.constant 0 : index
    %c0_289 = arith.constant 0 : index
    %570 = vector.load %arg3[%c0_287, %c60, %c0_288, %c0_289] : memref<1x120x16x16xi8, #tpu.memory_space<vmem>>, vector<1x1x16x16xi8>
    %571 = vector.shape_cast %570 : vector<1x1x16x16xi8> to vector<16x16xi8>
    %572 = vector.shape_cast %569 : vector<16x16xi8> to vector<1x1x16x16xi8>
    tpu.vector_store %arg3[%c0_287, %c60, %c0_288, %c0_289], %572 {strides = array<i32>} : memref<1x120x16x16xi8, #tpu.memory_space<vmem>>, vector<1x1x16x16xi8>,
    %573 = vector.extract_strided_slice %554 {offsets = [4, 0], sizes = [16, 16], strides = [1, 1]} : vector<26x16xf32> to vector<16x16xf32>
    %574 = arith.cmpf oge, %573, %5 : vector<16x16xf32>
    %575 = arith.extui %574 : vector<16x16xi1> to vector<16x16xi8>
    %c0_290 = arith.constant 0 : index
    %c62 = arith.constant 62 : index
    %c0_291 = arith.constant 0 : index
    %c0_292 = arith.constant 0 : index
    %576 = vector.load %arg3[%c0_290, %c62, %c0_291, %c0_292] : memref<1x120x16x16xi8, #tpu.memory_space<vmem>>, vector<1x1x16x16xi8>
    %577 = vector.shape_cast %576 : vector<1x1x16x16xi8> to vector<16x16xi8>
    %578 = vector.shape_cast %575 : vector<16x16xi8> to vector<1x1x16x16xi8>
    tpu.vector_store %arg3[%c0_290, %c62, %c0_291, %c0_292], %578 {strides = array<i32>} : memref<1x120x16x16xi8, #tpu.memory_space<vmem>>, vector<1x1x16x16xi8>,
    %579 = vector.extract_strided_slice %554 {offsets = [5, 0], sizes = [16, 16], strides = [1, 1]} : vector<26x16xf32> to vector<16x16xf32>
    %580 = arith.cmpf oge, %579, %5 : vector<16x16xf32>
    %581 = arith.extui %580 : vector<16x16xi1> to vector<16x16xi8>
    %c0_293 = arith.constant 0 : index
    %c64 = arith.constant 64 : index
    %c0_294 = arith.constant 0 : index
    %c0_295 = arith.constant 0 : index
    %582 = vector.load %arg3[%c0_293, %c64, %c0_294, %c0_295] : memref<1x120x16x16xi8, #tpu.memory_space<vmem>>, vector<1x1x16x16xi8>
    %583 = vector.shape_cast %582 : vector<1x1x16x16xi8> to vector<16x16xi8>
    %584 = vector.shape_cast %581 : vector<16x16xi8> to vector<1x1x16x16xi8>
    tpu.vector_store %arg3[%c0_293, %c64, %c0_294, %c0_295], %584 {strides = array<i32>} : memref<1x120x16x16xi8, #tpu.memory_space<vmem>>, vector<1x1x16x16xi8>,
    %585 = vector.extract_strided_slice %554 {offsets = [6, 0], sizes = [16, 16], strides = [1, 1]} : vector<26x16xf32> to vector<16x16xf32>
    %586 = arith.cmpf oge, %585, %5 : vector<16x16xf32>
    %587 = arith.extui %586 : vector<16x16xi1> to vector<16x16xi8>
    %c0_296 = arith.constant 0 : index
    %c66 = arith.constant 66 : index
    %c0_297 = arith.constant 0 : index
    %c0_298 = arith.constant 0 : index
    %588 = vector.load %arg3[%c0_296, %c66, %c0_297, %c0_298] : memref<1x120x16x16xi8, #tpu.memory_space<vmem>>, vector<1x1x16x16xi8>
    %589 = vector.shape_cast %588 : vector<1x1x16x16xi8> to vector<16x16xi8>
    %590 = vector.shape_cast %587 : vector<16x16xi8> to vector<1x1x16x16xi8>
    tpu.vector_store %arg3[%c0_296, %c66, %c0_297, %c0_298], %590 {strides = array<i32>} : memref<1x120x16x16xi8, #tpu.memory_space<vmem>>, vector<1x1x16x16xi8>,
    %591 = vector.extract_strided_slice %554 {offsets = [7, 0], sizes = [16, 16], strides = [1, 1]} : vector<26x16xf32> to vector<16x16xf32>
    %592 = arith.cmpf oge, %591, %5 : vector<16x16xf32>
    %593 = arith.extui %592 : vector<16x16xi1> to vector<16x16xi8>
    %c0_299 = arith.constant 0 : index
    %c68 = arith.constant 68 : index
    %c0_300 = arith.constant 0 : index
    %c0_301 = arith.constant 0 : index
    %594 = vector.load %arg3[%c0_299, %c68, %c0_300, %c0_301] : memref<1x120x16x16xi8, #tpu.memory_space<vmem>>, vector<1x1x16x16xi8>
    %595 = vector.shape_cast %594 : vector<1x1x16x16xi8> to vector<16x16xi8>
    %596 = vector.shape_cast %593 : vector<16x16xi8> to vector<1x1x16x16xi8>
    tpu.vector_store %arg3[%c0_299, %c68, %c0_300, %c0_301], %596 {strides = array<i32>} : memref<1x120x16x16xi8, #tpu.memory_space<vmem>>, vector<1x1x16x16xi8>,
    %597 = vector.extract_strided_slice %554 {offsets = [8, 0], sizes = [16, 16], strides = [1, 1]} : vector<26x16xf32> to vector<16x16xf32>
    %598 = arith.cmpf oge, %597, %5 : vector<16x16xf32>
    %599 = arith.extui %598 : vector<16x16xi1> to vector<16x16xi8>
    %c0_302 = arith.constant 0 : index
    %c70 = arith.constant 70 : index
    %c0_303 = arith.constant 0 : index
    %c0_304 = arith.constant 0 : index
    %600 = vector.load %arg3[%c0_302, %c70, %c0_303, %c0_304] : memref<1x120x16x16xi8, #tpu.memory_space<vmem>>, vector<1x1x16x16xi8>
    %601 = vector.shape_cast %600 : vector<1x1x16x16xi8> to vector<16x16xi8>
    %602 = vector.shape_cast %599 : vector<16x16xi8> to vector<1x1x16x16xi8>
    tpu.vector_store %arg3[%c0_302, %c70, %c0_303, %c0_304], %602 {strides = array<i32>} : memref<1x120x16x16xi8, #tpu.memory_space<vmem>>, vector<1x1x16x16xi8>,
    %603 = vector.extract_strided_slice %554 {offsets = [9, 0], sizes = [16, 16], strides = [1, 1]} : vector<26x16xf32> to vector<16x16xf32>
    %604 = arith.cmpf oge, %603, %5 : vector<16x16xf32>
    %605 = arith.extui %604 : vector<16x16xi1> to vector<16x16xi8>
    %c0_305 = arith.constant 0 : index
    %c79 = arith.constant 79 : index
    %c0_306 = arith.constant 0 : index
    %c0_307 = arith.constant 0 : index
    %606 = vector.load %arg3[%c0_305, %c79, %c0_306, %c0_307] : memref<1x120x16x16xi8, #tpu.memory_space<vmem>>, vector<1x1x16x16xi8>
    %607 = vector.shape_cast %606 : vector<1x1x16x16xi8> to vector<16x16xi8>
    %608 = vector.shape_cast %605 : vector<16x16xi8> to vector<1x1x16x16xi8>
    tpu.vector_store %arg3[%c0_305, %c79, %c0_306, %c0_307], %608 {strides = array<i32>} : memref<1x120x16x16xi8, #tpu.memory_space<vmem>>, vector<1x1x16x16xi8>,
    %609 = vector.extract_strided_slice %554 {offsets = [0, 0], sizes = [16, 16], strides = [1, 1]} : vector<26x16xf32> to vector<16x16xf32>
    %610 = arith.cmpf oge, %609, %5 : vector<16x16xf32>
    %611 = arith.extui %610 : vector<16x16xi1> to vector<16x16xi8>
    %c0_308 = arith.constant 0 : index
    %c89 = arith.constant 89 : index
    %c0_309 = arith.constant 0 : index
    %c0_310 = arith.constant 0 : index
    %612 = vector.load %arg3[%c0_308, %c89, %c0_309, %c0_310] : memref<1x120x16x16xi8, #tpu.memory_space<vmem>>, vector<1x1x16x16xi8>
    %613 = vector.shape_cast %612 : vector<1x1x16x16xi8> to vector<16x16xi8>
    %614 = vector.shape_cast %611 : vector<16x16xi8> to vector<1x1x16x16xi8>
    tpu.vector_store %arg3[%c0_308, %c89, %c0_309, %c0_310], %614 {strides = array<i32>} : memref<1x120x16x16xi8, #tpu.memory_space<vmem>>, vector<1x1x16x16xi8>,
    %615 = vector.extract_strided_slice %554 {offsets = [10, 0], sizes = [16, 16], strides = [1, 1]} : vector<26x16xf32> to vector<16x16xf32>
    %616 = arith.cmpf oge, %615, %5 : vector<16x16xf32>
    %617 = arith.extui %616 : vector<16x16xi1> to vector<16x16xi8>
    %c0_311 = arith.constant 0 : index
    %c118 = arith.constant 118 : index
    %c0_312 = arith.constant 0 : index
    %c0_313 = arith.constant 0 : index
    %618 = vector.load %arg3[%c0_311, %c118, %c0_312, %c0_313] : memref<1x120x16x16xi8, #tpu.memory_space<vmem>>, vector<1x1x16x16xi8>
    %619 = vector.shape_cast %618 : vector<1x1x16x16xi8> to vector<16x16xi8>
    %620 = vector.shape_cast %617 : vector<16x16xi8> to vector<1x1x16x16xi8>
    tpu.vector_store %arg3[%c0_311, %c118, %c0_312, %c0_313], %620 {strides = array<i32>} : memref<1x120x16x16xi8, #tpu.memory_space<vmem>>, vector<1x1x16x16xi8>,
    %c0_314 = arith.constant 0 : index
    %621 = arith.index_cast %1 : i32 to index
    %c0_315 = arith.constant 0 : index
    %622 = vector.load %arg2[%c0_314, %621, %c0_315] : memref<1x26x26xf32, #tpu.memory_space<vmem>>, vector<1x26x16xf32>
    %623 = vector.shape_cast %622 : vector<1x26x16xf32> to vector<26x16xf32>
    %624 = vector.extract_strided_slice %623 {offsets = [0, 0], sizes = [16, 16], strides = [1, 1]} : vector<26x16xf32> to vector<16x16xf32>
    %625 = arith.cmpf oge, %624, %5 : vector<16x16xf32>
    %626 = arith.extui %625 : vector<16x16xi1> to vector<16x16xi8>
    %c0_316 = arith.constant 0 : index
    %c80 = arith.constant 80 : index
    %c0_317 = arith.constant 0 : index
    %c0_318 = arith.constant 0 : index
    %627 = vector.load %arg3[%c0_316, %c80, %c0_317, %c0_318] : memref<1x120x16x16xi8, #tpu.memory_space<vmem>>, vector<1x1x16x16xi8>
    %628 = vector.shape_cast %627 : vector<1x1x16x16xi8> to vector<16x16xi8>
    %629 = vector.shape_cast %626 : vector<16x16xi8> to vector<1x1x16x16xi8>
    tpu.vector_store %arg3[%c0_316, %c80, %c0_317, %c0_318], %629 {strides = array<i32>} : memref<1x120x16x16xi8, #tpu.memory_space<vmem>>, vector<1x1x16x16xi8>,
    %630 = vector.extract_strided_slice %623 {offsets = [1, 0], sizes = [16, 16], strides = [1, 1]} : vector<26x16xf32> to vector<16x16xf32>
    %631 = arith.cmpf oge, %630, %5 : vector<16x16xf32>
    %632 = arith.extui %631 : vector<16x16xi1> to vector<16x16xi8>
    %c0_319 = arith.constant 0 : index
    %c91 = arith.constant 91 : index
    %c0_320 = arith.constant 0 : index
    %c0_321 = arith.constant 0 : index
    %633 = vector.load %arg3[%c0_319, %c91, %c0_320, %c0_321] : memref<1x120x16x16xi8, #tpu.memory_space<vmem>>, vector<1x1x16x16xi8>
    %634 = vector.shape_cast %633 : vector<1x1x16x16xi8> to vector<16x16xi8>
    %635 = vector.shape_cast %632 : vector<16x16xi8> to vector<1x1x16x16xi8>
    tpu.vector_store %arg3[%c0_319, %c91, %c0_320, %c0_321], %635 {strides = array<i32>} : memref<1x120x16x16xi8, #tpu.memory_space<vmem>>, vector<1x1x16x16xi8>,
    %636 = vector.extract_strided_slice %623 {offsets = [2, 0], sizes = [16, 16], strides = [1, 1]} : vector<26x16xf32> to vector<16x16xf32>
    %637 = arith.cmpf oge, %636, %5 : vector<16x16xf32>
    %638 = arith.extui %637 : vector<16x16xi1> to vector<16x16xi8>
    %c0_322 = arith.constant 0 : index
    %c93 = arith.constant 93 : index
    %c0_323 = arith.constant 0 : index
    %c0_324 = arith.constant 0 : index
    %639 = vector.load %arg3[%c0_322, %c93, %c0_323, %c0_324] : memref<1x120x16x16xi8, #tpu.memory_space<vmem>>, vector<1x1x16x16xi8>
    %640 = vector.shape_cast %639 : vector<1x1x16x16xi8> to vector<16x16xi8>
    %641 = vector.shape_cast %638 : vector<16x16xi8> to vector<1x1x16x16xi8>
    tpu.vector_store %arg3[%c0_322, %c93, %c0_323, %c0_324], %641 {strides = array<i32>} : memref<1x120x16x16xi8, #tpu.memory_space<vmem>>, vector<1x1x16x16xi8>,
    %642 = vector.extract_strided_slice %623 {offsets = [3, 0], sizes = [16, 16], strides = [1, 1]} : vector<26x16xf32> to vector<16x16xf32>
    %643 = arith.cmpf oge, %642, %5 : vector<16x16xf32>
    %644 = arith.extui %643 : vector<16x16xi1> to vector<16x16xi8>
    %c0_325 = arith.constant 0 : index
    %c95 = arith.constant 95 : index
    %c0_326 = arith.constant 0 : index
    %c0_327 = arith.constant 0 : index
    %645 = vector.load %arg3[%c0_325, %c95, %c0_326, %c0_327] : memref<1x120x16x16xi8, #tpu.memory_space<vmem>>, vector<1x1x16x16xi8>
    %646 = vector.shape_cast %645 : vector<1x1x16x16xi8> to vector<16x16xi8>
    %647 = vector.shape_cast %644 : vector<16x16xi8> to vector<1x1x16x16xi8>
    tpu.vector_store %arg3[%c0_325, %c95, %c0_326, %c0_327], %647 {strides = array<i32>} : memref<1x120x16x16xi8, #tpu.memory_space<vmem>>, vector<1x1x16x16xi8>,
    %648 = vector.extract_strided_slice %623 {offsets = [4, 0], sizes = [16, 16], strides = [1, 1]} : vector<26x16xf32> to vector<16x16xf32>
    %649 = arith.cmpf oge, %648, %5 : vector<16x16xf32>
    %650 = arith.extui %649 : vector<16x16xi1> to vector<16x16xi8>
    %c0_328 = arith.constant 0 : index
    %c97 = arith.constant 97 : index
    %c0_329 = arith.constant 0 : index
    %c0_330 = arith.constant 0 : index
    %651 = vector.load %arg3[%c0_328, %c97, %c0_329, %c0_330] : memref<1x120x16x16xi8, #tpu.memory_space<vmem>>, vector<1x1x16x16xi8>
    %652 = vector.shape_cast %651 : vector<1x1x16x16xi8> to vector<16x16xi8>
    %653 = vector.shape_cast %650 : vector<16x16xi8> to vector<1x1x16x16xi8>
    tpu.vector_store %arg3[%c0_328, %c97, %c0_329, %c0_330], %653 {strides = array<i32>} : memref<1x120x16x16xi8, #tpu.memory_space<vmem>>, vector<1x1x16x16xi8>,
    %654 = vector.extract_strided_slice %623 {offsets = [5, 0], sizes = [16, 16], strides = [1, 1]} : vector<26x16xf32> to vector<16x16xf32>
    %655 = arith.cmpf oge, %654, %5 : vector<16x16xf32>
    %656 = arith.extui %655 : vector<16x16xi1> to vector<16x16xi8>
    %c0_331 = arith.constant 0 : index
    %c99 = arith.constant 99 : index
    %c0_332 = arith.constant 0 : index
    %c0_333 = arith.constant 0 : index
    %657 = vector.load %arg3[%c0_331, %c99, %c0_332, %c0_333] : memref<1x120x16x16xi8, #tpu.memory_space<vmem>>, vector<1x1x16x16xi8>
    %658 = vector.shape_cast %657 : vector<1x1x16x16xi8> to vector<16x16xi8>
    %659 = vector.shape_cast %656 : vector<16x16xi8> to vector<1x1x16x16xi8>
    tpu.vector_store %arg3[%c0_331, %c99, %c0_332, %c0_333], %659 {strides = array<i32>} : memref<1x120x16x16xi8, #tpu.memory_space<vmem>>, vector<1x1x16x16xi8>,
    %660 = vector.extract_strided_slice %623 {offsets = [6, 0], sizes = [16, 16], strides = [1, 1]} : vector<26x16xf32> to vector<16x16xf32>
    %661 = arith.cmpf oge, %660, %5 : vector<16x16xf32>
    %662 = arith.extui %661 : vector<16x16xi1> to vector<16x16xi8>
    %c0_334 = arith.constant 0 : index
    %c101 = arith.constant 101 : index
    %c0_335 = arith.constant 0 : index
    %c0_336 = arith.constant 0 : index
    %663 = vector.load %arg3[%c0_334, %c101, %c0_335, %c0_336] : memref<1x120x16x16xi8, #tpu.memory_space<vmem>>, vector<1x1x16x16xi8>
    %664 = vector.shape_cast %663 : vector<1x1x16x16xi8> to vector<16x16xi8>
    %665 = vector.shape_cast %662 : vector<16x16xi8> to vector<1x1x16x16xi8>
    tpu.vector_store %arg3[%c0_334, %c101, %c0_335, %c0_336], %665 {strides = array<i32>} : memref<1x120x16x16xi8, #tpu.memory_space<vmem>>, vector<1x1x16x16xi8>,
    %666 = vector.extract_strided_slice %623 {offsets = [7, 0], sizes = [16, 16], strides = [1, 1]} : vector<26x16xf32> to vector<16x16xf32>
    %667 = arith.cmpf oge, %666, %5 : vector<16x16xf32>
    %668 = arith.extui %667 : vector<16x16xi1> to vector<16x16xi8>
    %c0_337 = arith.constant 0 : index
    %c103 = arith.constant 103 : index
    %c0_338 = arith.constant 0 : index
    %c0_339 = arith.constant 0 : index
    %669 = vector.load %arg3[%c0_337, %c103, %c0_338, %c0_339] : memref<1x120x16x16xi8, #tpu.memory_space<vmem>>, vector<1x1x16x16xi8>
    %670 = vector.shape_cast %669 : vector<1x1x16x16xi8> to vector<16x16xi8>
    %671 = vector.shape_cast %668 : vector<16x16xi8> to vector<1x1x16x16xi8>
    tpu.vector_store %arg3[%c0_337, %c103, %c0_338, %c0_339], %671 {strides = array<i32>} : memref<1x120x16x16xi8, #tpu.memory_space<vmem>>, vector<1x1x16x16xi8>,
    %672 = vector.extract_strided_slice %623 {offsets = [8, 0], sizes = [16, 16], strides = [1, 1]} : vector<26x16xf32> to vector<16x16xf32>
    %673 = arith.cmpf oge, %672, %5 : vector<16x16xf32>
    %674 = arith.extui %673 : vector<16x16xi1> to vector<16x16xi8>
    %c0_340 = arith.constant 0 : index
    %c105 = arith.constant 105 : index
    %c0_341 = arith.constant 0 : index
    %c0_342 = arith.constant 0 : index
    %675 = vector.load %arg3[%c0_340, %c105, %c0_341, %c0_342] : memref<1x120x16x16xi8, #tpu.memory_space<vmem>>, vector<1x1x16x16xi8>
    %676 = vector.shape_cast %675 : vector<1x1x16x16xi8> to vector<16x16xi8>
    %677 = vector.shape_cast %674 : vector<16x16xi8> to vector<1x1x16x16xi8>
    tpu.vector_store %arg3[%c0_340, %c105, %c0_341, %c0_342], %677 {strides = array<i32>} : memref<1x120x16x16xi8, #tpu.memory_space<vmem>>, vector<1x1x16x16xi8>,
    %678 = vector.extract_strided_slice %623 {offsets = [9, 0], sizes = [16, 16], strides = [1, 1]} : vector<26x16xf32> to vector<16x16xf32>
    %679 = arith.cmpf oge, %678, %5 : vector<16x16xf32>
    %680 = arith.extui %679 : vector<16x16xi1> to vector<16x16xi8>
    %c0_343 = arith.constant 0 : index
    %c107 = arith.constant 107 : index
    %c0_344 = arith.constant 0 : index
    %c0_345 = arith.constant 0 : index
    %681 = vector.load %arg3[%c0_343, %c107, %c0_344, %c0_345] : memref<1x120x16x16xi8, #tpu.memory_space<vmem>>, vector<1x1x16x16xi8>
    %682 = vector.shape_cast %681 : vector<1x1x16x16xi8> to vector<16x16xi8>
    %683 = vector.shape_cast %680 : vector<16x16xi8> to vector<1x1x16x16xi8>
    tpu.vector_store %arg3[%c0_343, %c107, %c0_344, %c0_345], %683 {strides = array<i32>} : memref<1x120x16x16xi8, #tpu.memory_space<vmem>>, vector<1x1x16x16xi8>,
    %684 = vector.extract_strided_slice %623 {offsets = [10, 0], sizes = [16, 16], strides = [1, 1]} : vector<26x16xf32> to vector<16x16xf32>
    %685 = arith.cmpf oge, %684, %5 : vector<16x16xf32>
    %686 = arith.extui %685 : vector<16x16xi1> to vector<16x16xi8>
    %c0_346 = arith.constant 0 : index
    %c109 = arith.constant 109 : index
    %c0_347 = arith.constant 0 : index
    %c0_348 = arith.constant 0 : index
    %687 = vector.load %arg3[%c0_346, %c109, %c0_347, %c0_348] : memref<1x120x16x16xi8, #tpu.memory_space<vmem>>, vector<1x1x16x16xi8>
    %688 = vector.shape_cast %687 : vector<1x1x16x16xi8> to vector<16x16xi8>
    %689 = vector.shape_cast %686 : vector<16x16xi8> to vector<1x1x16x16xi8>
    tpu.vector_store %arg3[%c0_346, %c109, %c0_347, %c0_348], %689 {strides = array<i32>} : memref<1x120x16x16xi8, #tpu.memory_space<vmem>>, vector<1x1x16x16xi8>,
    %c0_349 = arith.constant 0 : index
    %690 = arith.index_cast %1 : i32 to index
    %c10_350 = arith.constant 10 : index
    %691 = vector.load %arg2[%c0_349, %690, %c10_350] : memref<1x26x26xf32, #tpu.memory_space<vmem>>, vector<1x26x16xf32>
    %692 = vector.shape_cast %691 : vector<1x26x16xf32> to vector<26x16xf32>
    %693 = vector.extract_strided_slice %692 {offsets = [0, 0], sizes = [16, 16], strides = [1, 1]} : vector<26x16xf32> to vector<16x16xf32>
    %694 = arith.cmpf oge, %693, %5 : vector<16x16xf32>
    %695 = arith.extui %694 : vector<16x16xi1> to vector<16x16xi8>
    %c0_351 = arith.constant 0 : index
    %c90 = arith.constant 90 : index
    %c0_352 = arith.constant 0 : index
    %c0_353 = arith.constant 0 : index
    %696 = vector.load %arg3[%c0_351, %c90, %c0_352, %c0_353] : memref<1x120x16x16xi8, #tpu.memory_space<vmem>>, vector<1x1x16x16xi8>
    %697 = vector.shape_cast %696 : vector<1x1x16x16xi8> to vector<16x16xi8>
    %698 = vector.shape_cast %695 : vector<16x16xi8> to vector<1x1x16x16xi8>
    tpu.vector_store %arg3[%c0_351, %c90, %c0_352, %c0_353], %698 {strides = array<i32>} : memref<1x120x16x16xi8, #tpu.memory_space<vmem>>, vector<1x1x16x16xi8>,
    %699 = vector.extract_strided_slice %692 {offsets = [1, 0], sizes = [16, 16], strides = [1, 1]} : vector<26x16xf32> to vector<16x16xf32>
    %700 = arith.cmpf oge, %699, %5 : vector<16x16xf32>
    %701 = arith.extui %700 : vector<16x16xi1> to vector<16x16xi8>
    %c0_354 = arith.constant 0 : index
    %c92 = arith.constant 92 : index
    %c0_355 = arith.constant 0 : index
    %c0_356 = arith.constant 0 : index
    %702 = vector.load %arg3[%c0_354, %c92, %c0_355, %c0_356] : memref<1x120x16x16xi8, #tpu.memory_space<vmem>>, vector<1x1x16x16xi8>
    %703 = vector.shape_cast %702 : vector<1x1x16x16xi8> to vector<16x16xi8>
    %704 = vector.shape_cast %701 : vector<16x16xi8> to vector<1x1x16x16xi8>
    tpu.vector_store %arg3[%c0_354, %c92, %c0_355, %c0_356], %704 {strides = array<i32>} : memref<1x120x16x16xi8, #tpu.memory_space<vmem>>, vector<1x1x16x16xi8>,
    %705 = vector.extract_strided_slice %692 {offsets = [2, 0], sizes = [16, 16], strides = [1, 1]} : vector<26x16xf32> to vector<16x16xf32>
    %706 = arith.cmpf oge, %705, %5 : vector<16x16xf32>
    %707 = arith.extui %706 : vector<16x16xi1> to vector<16x16xi8>
    %c0_357 = arith.constant 0 : index
    %c94 = arith.constant 94 : index
    %c0_358 = arith.constant 0 : index
    %c0_359 = arith.constant 0 : index
    %708 = vector.load %arg3[%c0_357, %c94, %c0_358, %c0_359] : memref<1x120x16x16xi8, #tpu.memory_space<vmem>>, vector<1x1x16x16xi8>
    %709 = vector.shape_cast %708 : vector<1x1x16x16xi8> to vector<16x16xi8>
    %710 = vector.shape_cast %707 : vector<16x16xi8> to vector<1x1x16x16xi8>
    tpu.vector_store %arg3[%c0_357, %c94, %c0_358, %c0_359], %710 {strides = array<i32>} : memref<1x120x16x16xi8, #tpu.memory_space<vmem>>, vector<1x1x16x16xi8>,
    %711 = vector.extract_strided_slice %692 {offsets = [3, 0], sizes = [16, 16], strides = [1, 1]} : vector<26x16xf32> to vector<16x16xf32>
    %712 = arith.cmpf oge, %711, %5 : vector<16x16xf32>
    %713 = arith.extui %712 : vector<16x16xi1> to vector<16x16xi8>
    %c0_360 = arith.constant 0 : index
    %c96 = arith.constant 96 : index
    %c0_361 = arith.constant 0 : index
    %c0_362 = arith.constant 0 : index
    %714 = vector.load %arg3[%c0_360, %c96, %c0_361, %c0_362] : memref<1x120x16x16xi8, #tpu.memory_space<vmem>>, vector<1x1x16x16xi8>
    %715 = vector.shape_cast %714 : vector<1x1x16x16xi8> to vector<16x16xi8>
    %716 = vector.shape_cast %713 : vector<16x16xi8> to vector<1x1x16x16xi8>
    tpu.vector_store %arg3[%c0_360, %c96, %c0_361, %c0_362], %716 {strides = array<i32>} : memref<1x120x16x16xi8, #tpu.memory_space<vmem>>, vector<1x1x16x16xi8>,
    %717 = vector.extract_strided_slice %692 {offsets = [4, 0], sizes = [16, 16], strides = [1, 1]} : vector<26x16xf32> to vector<16x16xf32>
    %718 = arith.cmpf oge, %717, %5 : vector<16x16xf32>
    %719 = arith.extui %718 : vector<16x16xi1> to vector<16x16xi8>
    %c0_363 = arith.constant 0 : index
    %c98 = arith.constant 98 : index
    %c0_364 = arith.constant 0 : index
    %c0_365 = arith.constant 0 : index
    %720 = vector.load %arg3[%c0_363, %c98, %c0_364, %c0_365] : memref<1x120x16x16xi8, #tpu.memory_space<vmem>>, vector<1x1x16x16xi8>
    %721 = vector.shape_cast %720 : vector<1x1x16x16xi8> to vector<16x16xi8>
    %722 = vector.shape_cast %719 : vector<16x16xi8> to vector<1x1x16x16xi8>
    tpu.vector_store %arg3[%c0_363, %c98, %c0_364, %c0_365], %722 {strides = array<i32>} : memref<1x120x16x16xi8, #tpu.memory_space<vmem>>, vector<1x1x16x16xi8>,
    %723 = vector.extract_strided_slice %692 {offsets = [5, 0], sizes = [16, 16], strides = [1, 1]} : vector<26x16xf32> to vector<16x16xf32>
    %724 = arith.cmpf oge, %723, %5 : vector<16x16xf32>
    %725 = arith.extui %724 : vector<16x16xi1> to vector<16x16xi8>
    %c0_366 = arith.constant 0 : index
    %c100 = arith.constant 100 : index
    %c0_367 = arith.constant 0 : index
    %c0_368 = arith.constant 0 : index
    %726 = vector.load %arg3[%c0_366, %c100, %c0_367, %c0_368] : memref<1x120x16x16xi8, #tpu.memory_space<vmem>>, vector<1x1x16x16xi8>
    %727 = vector.shape_cast %726 : vector<1x1x16x16xi8> to vector<16x16xi8>
    %728 = vector.shape_cast %725 : vector<16x16xi8> to vector<1x1x16x16xi8>
    tpu.vector_store %arg3[%c0_366, %c100, %c0_367, %c0_368], %728 {strides = array<i32>} : memref<1x120x16x16xi8, #tpu.memory_space<vmem>>, vector<1x1x16x16xi8>,
    %729 = vector.extract_strided_slice %692 {offsets = [6, 0], sizes = [16, 16], strides = [1, 1]} : vector<26x16xf32> to vector<16x16xf32>
    %730 = arith.cmpf oge, %729, %5 : vector<16x16xf32>
    %731 = arith.extui %730 : vector<16x16xi1> to vector<16x16xi8>
    %c0_369 = arith.constant 0 : index
    %c102 = arith.constant 102 : index
    %c0_370 = arith.constant 0 : index
    %c0_371 = arith.constant 0 : index
    %732 = vector.load %arg3[%c0_369, %c102, %c0_370, %c0_371] : memref<1x120x16x16xi8, #tpu.memory_space<vmem>>, vector<1x1x16x16xi8>
    %733 = vector.shape_cast %732 : vector<1x1x16x16xi8> to vector<16x16xi8>
    %734 = vector.shape_cast %731 : vector<16x16xi8> to vector<1x1x16x16xi8>
    tpu.vector_store %arg3[%c0_369, %c102, %c0_370, %c0_371], %734 {strides = array<i32>} : memref<1x120x16x16xi8, #tpu.memory_space<vmem>>, vector<1x1x16x16xi8>,
    %735 = vector.extract_strided_slice %692 {offsets = [7, 0], sizes = [16, 16], strides = [1, 1]} : vector<26x16xf32> to vector<16x16xf32>
    %736 = arith.cmpf oge, %735, %5 : vector<16x16xf32>
    %737 = arith.extui %736 : vector<16x16xi1> to vector<16x16xi8>
    %c0_372 = arith.constant 0 : index
    %c104 = arith.constant 104 : index
    %c0_373 = arith.constant 0 : index
    %c0_374 = arith.constant 0 : index
    %738 = vector.load %arg3[%c0_372, %c104, %c0_373, %c0_374] : memref<1x120x16x16xi8, #tpu.memory_space<vmem>>, vector<1x1x16x16xi8>
    %739 = vector.shape_cast %738 : vector<1x1x16x16xi8> to vector<16x16xi8>
    %740 = vector.shape_cast %737 : vector<16x16xi8> to vector<1x1x16x16xi8>
    tpu.vector_store %arg3[%c0_372, %c104, %c0_373, %c0_374], %740 {strides = array<i32>} : memref<1x120x16x16xi8, #tpu.memory_space<vmem>>, vector<1x1x16x16xi8>,
    %741 = vector.extract_strided_slice %692 {offsets = [8, 0], sizes = [16, 16], strides = [1, 1]} : vector<26x16xf32> to vector<16x16xf32>
    %742 = arith.cmpf oge, %741, %5 : vector<16x16xf32>
    %743 = arith.extui %742 : vector<16x16xi1> to vector<16x16xi8>
    %c0_375 = arith.constant 0 : index
    %c106 = arith.constant 106 : index
    %c0_376 = arith.constant 0 : index
    %c0_377 = arith.constant 0 : index
    %744 = vector.load %arg3[%c0_375, %c106, %c0_376, %c0_377] : memref<1x120x16x16xi8, #tpu.memory_space<vmem>>, vector<1x1x16x16xi8>
    %745 = vector.shape_cast %744 : vector<1x1x16x16xi8> to vector<16x16xi8>
    %746 = vector.shape_cast %743 : vector<16x16xi8> to vector<1x1x16x16xi8>
    tpu.vector_store %arg3[%c0_375, %c106, %c0_376, %c0_377], %746 {strides = array<i32>} : memref<1x120x16x16xi8, #tpu.memory_space<vmem>>, vector<1x1x16x16xi8>,
    %747 = vector.extract_strided_slice %692 {offsets = [9, 0], sizes = [16, 16], strides = [1, 1]} : vector<26x16xf32> to vector<16x16xf32>
    %748 = arith.cmpf oge, %747, %5 : vector<16x16xf32>
    %749 = arith.extui %748 : vector<16x16xi1> to vector<16x16xi8>
    %c0_378 = arith.constant 0 : index
    %c108 = arith.constant 108 : index
    %c0_379 = arith.constant 0 : index
    %c0_380 = arith.constant 0 : index
    %750 = vector.load %arg3[%c0_378, %c108, %c0_379, %c0_380] : memref<1x120x16x16xi8, #tpu.memory_space<vmem>>, vector<1x1x16x16xi8>
    %751 = vector.shape_cast %750 : vector<1x1x16x16xi8> to vector<16x16xi8>
    %752 = vector.shape_cast %749 : vector<16x16xi8> to vector<1x1x16x16xi8>
    tpu.vector_store %arg3[%c0_378, %c108, %c0_379, %c0_380], %752 {strides = array<i32>} : memref<1x120x16x16xi8, #tpu.memory_space<vmem>>, vector<1x1x16x16xi8>,
    %753 = vector.extract_strided_slice %692 {offsets = [10, 0], sizes = [16, 16], strides = [1, 1]} : vector<26x16xf32> to vector<16x16xf32>
    %754 = arith.cmpf oge, %753, %5 : vector<16x16xf32>
    %755 = arith.extui %754 : vector<16x16xi1> to vector<16x16xi8>
    %c0_381 = arith.constant 0 : index
    %c119 = arith.constant 119 : index
    %c0_382 = arith.constant 0 : index
    %c0_383 = arith.constant 0 : index
    %756 = vector.load %arg3[%c0_381, %c119, %c0_382, %c0_383] : memref<1x120x16x16xi8, #tpu.memory_space<vmem>>, vector<1x1x16x16xi8>
    %757 = vector.shape_cast %756 : vector<1x1x16x16xi8> to vector<16x16xi8>
    %758 = vector.shape_cast %755 : vector<16x16xi8> to vector<1x1x16x16xi8>
    tpu.vector_store %arg3[%c0_381, %c119, %c0_382, %c0_383], %758 {strides = array<i32>} : memref<1x120x16x16xi8, #tpu.memory_space<vmem>>, vector<1x1x16x16xi8>,
    return
  }
  func.func @transform_0(%arg0: i32, %arg1: i32) -> (i32, i32, i32) {
    %c0_i32 = arith.constant 0 : i32
    %c0_i32_0 = arith.constant 0 : i32
    %c0_i32_1 = arith.constant 0 : i32
    return %arg0, %c0_i32, %c0_i32_0 : i32, i32, i32
  }
  func.func @transform_1(%arg0: i32, %arg1: i32) -> (i32, i32, i32, i32) {
    %c0_i32 = arith.constant 0 : i32
    %c0_i32_0 = arith.constant 0 : i32
    %c0_i32_1 = arith.constant 0 : i32
    return %arg0, %c0_i32, %arg1, %c0_i32_0 : i32, i32, i32, i32
  }
}

</mosaic_0001>

<llo_original>
// kernel: tpu_custom_call.1
$region0: #{tpu_custom_call.1}
  #allocation0 [shape = 'u32[]', space=smem, size = 0x4, offset = 0x4, fixed_abs, tag = 'smem constant byte address 0x4 - core index']
  #allocation1 [shape = 'u32[144,128]{1,0:T(1,128)}', space=vmem, size = 0x12000, scoped, tag = 'internal scratch']
  %s0 = inlined_call_operand.vmem [shape: f32[2,26,26], index: 0, kind: input, shape index: {}]
  %s1 = inlined_call_operand.vmem [shape: u8[2,120,16,16], index: 1, kind: output, shape index: {}]
  %s2 = sld [smem:[#allocation0]]
  $region37: #{tpu_custom_call.1} parent=0
    _
  %s4 = ssub.s32 1, %s2
  %s5 = scalar_select 0, %s4, %s2
  loop: start=0, step=1, limit=4
  $region2: #{tpu_custom_call.1} parent=0 // loop_pre_header
    _
  $region3: #{tpu_custom_call.1} parent=0 // loop_header
    %s7 = sphi 0, %s11
    %p8 = scmp.ge.s32.totalorder %s7, 4
    %s14 = sphi 0, %s26
    %s15 = sphi 0, %s22
    %s16 = sphi 0, %s14
    %s17 = sphi 0, %s15
    %s18 = sphi 0, %s16
    %s19 = sphi 0, %s17
    %s29 = sphi 0, %s31
    %s32 = sphi 0, %s29
    %s33 = sphi 0, %s32
    %s49 = sphi 0, %s33
    %s57 = sphi 0, %s59
    %s60 = sphi 0, %s57
    %s61 = sphi 0, %s60
    %s77 = sphi 0, %s61
  $region4: #{tpu_custom_call.1} parent=0 // loop_header_branch
    %10 = sbr.rel (%p8) target = $region8
  $region5: #{tpu_custom_call.1} parent=0 // loop_body
    %s12 = ssub.s32 %s7, 1
    %s13 = ssub.s32 %s7, 2
    %s20 = sadd.s32 1, %s15
    %p21 = scmp.ge.s32.totalorder %s20, 1
    %s22 = scalar_select %p21, 0, %s20
    %s23 = sadd.s32 1, %s14
    %s24 = scalar_select %p21, %s23, %s14
    %p25 = scmp.ge.s32.totalorder %s24, 2
    %s26 = scalar_select %p25, 0, %s24
    %s27 = ssub.s32 %s14, %s26
    %p28 = scmp.eq.s32.totalorder %s27, 0
    %s30 = sadd.s32 %s29, 1
    %s31 = scalar_select %p28, %s29, %s30
    %p34 = pneg %p28
    %p35 = scmp.eq.s32.totalorder %s7, 1
    %p36 = por %p34, %p35
    %p37 = scmp.ne.s32.totalorder %s29, %s32
    %p38 = scmp.eq.s32.totalorder %s7, 0
    %p39 = por %p37, %p38
    %p40 = scmp.ne.s32.totalorder %s29, %s32
    %p41 = scmp.eq.s32.totalorder %s12, 1
    %p42 = por %p40, %p41
    %p43 = scmp.ne.s32.totalorder %s32, %s33
    %p44 = scmp.eq.s32.totalorder %s12, 0
    %p45 = por %p43, %p44
    %p46 = scmp.ne.s32.totalorder %s32, %s33
    %p47 = scmp.eq.s32.totalorder %s13, 1
    %p48 = por %p46, %p47
    %p50 = scmp.ne.s32.totalorder %s33, %s49
    %p51 = scmp.eq.s32.totalorder %s13, 0
    %p52 = por %p50, %p51
    %s53 = ssub.s32 %s14, %s26
    %s54 = ssub.s32 %s15, %s22
    %s55 = sor.u32 %s53, %s54
    %p56 = scmp.eq.s32.totalorder %s55, 0
    %s58 = sadd.s32 %s57, 1
    %s59 = scalar_select %p56, %s57, %s58
    %p62 = pneg %p56
    %p63 = scmp.eq.s32.totalorder %s7, 1
    %p64 = por %p62, %p63
    %p65 = scmp.ne.s32.totalorder %s57, %s60
    %p66 = scmp.eq.s32.totalorder %s7, 0
    %p67 = por %p65, %p66
    %p68 = scmp.ne.s32.totalorder %s57, %s60
    %p69 = scmp.eq.s32.totalorder %s12, 1
    %p70 = por %p68, %p69
    %p71 = scmp.ne.s32.totalorder %s60, %s61
    %p72 = scmp.eq.s32.totalorder %s12, 0
    %p73 = por %p71, %p72
    %p74 = scmp.ne.s32.totalorder %s60, %s61
    %p75 = scmp.eq.s32.totalorder %s13, 1
    %p76 = por %p74, %p75
    %p78 = scmp.ne.s32.totalorder %s61, %s77
    %p79 = scmp.eq.s32.totalorder %s13, 0
    %p80 = por %p78, %p79
    %p81 = scmp.le.s32.totalorder 1, %s7
    %p82 = scmp.lt.s32.totalorder %s7, 3
    %p83 = pnand %p81, %p82
    %p84 = pneg %p83
    // Predicated region
    $region9: #{tpu_custom_call.1} parent=5 // pred_check
      _
    $region10: #{tpu_custom_call.1} parent=5 // pred_check_branch
      %86 = sbr.rel (%p83) target = $region12
    $region11: #{tpu_custom_call.1} parent=5 // pred_region
      %s87 = ssub.s32 %s7, 1
    $region12: #{tpu_custom_call.1} parent=5 // pred_fallthru
      _
    %p88 = scmp.lt.s32.totalorder %s7, 2
    // Predicated region
    $region13: #{tpu_custom_call.1} parent=5 // pred_check
      %p89 = pneg %p88
    $region14: #{tpu_custom_call.1} parent=5 // pred_check_branch
      %91 = sbr.rel (%p89) target = $region16
    $region15: #{tpu_custom_call.1} parent=5 // pred_region
      // Predicated region
      $region17: #{tpu_custom_call.1} parent=15 // pred_check
        %p92 = pneg %p39
      $region18: #{tpu_custom_call.1} parent=15 // pred_check_branch
        %94 = sbr.rel (%p92) target = $region20
      $region19: #{tpu_custom_call.1} parent=15 // pred_region
        %p95 = scmp.lt.s32.totalorder %s14, 1
        %s96 = scalar_select %p95, %s14, 1
        %s97 = smul.addr %s96, 4
        %s98 = smul.addr %s97, 8
        %s99 = scalar_lea.vmem %s0, %s98
      $region20: #{tpu_custom_call.1} parent=15 // pred_fallthru
        _
    $region16: #{tpu_custom_call.1} parent=5 // pred_fallthru
      _
    %p100 = scmp.le.s32.totalorder 1, %s7
    %p101 = scmp.lt.s32.totalorder %s7, 3
    %p102 = pnand %p100, %p101
    %p103 = pneg %p102
    // Predicated region
    $region21: #{tpu_custom_call.1} parent=5 // pred_check
      _
    $region22: #{tpu_custom_call.1} parent=5 // pred_check_branch
      %105 = sbr.rel (%p102) target = $region24
    $region23: #{tpu_custom_call.1} parent=5 // pred_region
      %s106 = ssub.s32 %s7, 1
      %p107 = scmp.lt.s32.totalorder %s16, 1
      %s108 = scalar_select %p107, %s16, 1
      %s109 = smul.addr %s108, 4
      %s110 = smul.addr %s109, 8
      %s111 = scalar_lea.vmem %s0, %s110
      %p112 = pneg %p45
      %p113 = pneg %p42
      %p114 = pneg %p73
      %p115 = pneg %p70
      %s116 = smul.u32 2, %s17
      %p117 = scmp.lt.s32.totalorder %s16, 1
      %s118 = scalar_select %p117, %s16, 1
      %p119 = scmp.lt.s32.totalorder %s116, 1
      %s120 = scalar_select %p119, %s116, 1
      %s121 = smul.addr %s118, 240
      %s122 = sadd.s32 %s120, %s121
      %s123 = smul.addr %s122, 2
      %s124 = scalar_lea.vmem %s1, %s123
      %p125 = scmp.lt.s32.totalorder %s16, 1
      %s126 = scalar_select %p125, %s16, 1
      %s127 = smul.addr %s126, 4
      %s128 = smul.addr %s127, 8
      %s129 = scalar_lea.vmem %s0, %s128
      %s130 = smul.u32 2, %s17
      %p131 = scmp.lt.s32.totalorder %s16, 1
      %s132 = scalar_select %p131, %s16, 1
      %p133 = scmp.lt.s32.totalorder %s130, 1
      %s134 = scalar_select %p133, %s130, 1
      %s135 = smul.addr %s132, 240
      %s136 = sadd.s32 %s134, %s135
      %s137 = smul.addr %s136, 2
      %s138 = scalar_lea.vmem %s1, %s137
      %s139 = smul.u32 2, %s17
      %s142 = smul.u32 %s17, 16
      %s143 = sadd.s32 %s142, 5
      %s144 = scalar_lea.vmem %s129, %s143
      %v145 = vld [vmem:[%s144] sm:$0xff]
      %v146 = vld [vmem:[%s144 + $0x8] sm:$0xff]
      %s147 = scalar_lea.vmem %s129, %s142
      %v148 = vld [vmem:[%s147] sm:$0xff]
      %v149 = vld [vmem:[%s147 + $0x8] sm:$0xff]
      %v150 = vld [vmem:[%s147 + $0x10] sm:$0xff]
      %v151 = vld [vmem:[%s147 + $0x18] sm:$0x3]
      %vm154 = vcmask 1043456
      %v155 = vrot.slane %v145, 4
      %v156 = vrot.slane %v146, 4
      %v157 = vsel %vm154, %v155, %v156
      %158 = vrot.lane.b32.xlu0 %v155, 127
      %v159 = vpop.permute.xlu0 %158
      %160 = vrot.lane.b32.xlu0 %v157, 127
      %v161 = vpop.permute.xlu0 %160
      %162 = vrot.lane.b32.xlu0 %v156, 127
      %v163 = vpop.permute.xlu0 %162
      %vm167 = vcmp.ge.f32.partialorder %v148, %v159
      %vm168 = vcmp.ge.f32.partialorder %v149, %v161
      %vm169 = vcmp.ge.f32.partialorder %v150, %v163
      %vm170 = vmpackc.low %vm167, %vm167
      %vm171 = vmpackc.even %vm170, %vm170
      %vm172 = vmpackc.low %vm168, %vm168
      %vm173 = vmpackc.even %vm172, %vm172
      %vm174 = vmpackc.low %vm169, %vm169
      %vm175 = vmpackc.even %vm174, %vm174
      %v176 = vsel %vm171, 16843009, 0
      %v177 = vsel %vm173, 16843009, 0
      %v178 = vsel %vm175, 16843009, 0
      %v179 = vunpack.c.0.s8 %v176
      %v180 = vunpack.c.0.s8 %v177
      %v181 = vunpack.c.0.s8 %v178
      %v182 = vpack.c.b16 %v180, %v179
      %v183 = vpack.c.b16 %v181, %v181
      %v184 = vpack.c.b8 %v183, %v182
      %v185 = vrot.slane %v184, 1
      %186 = vrot.lane.b32.xlu0 %v185, 124
      %v187 = vpop.permute.xlu0 %186
      %vm188 = vnez %v187
      %v189 = vsel %vm188, 16843009, 0
      %v190 = vunpack.c.0.s8 %v189
      %v191 = vunpack.c.1.s8 %v189
      %v192 = vpack.c.b16 %v190, %v190
      %v193 = vpack.c.b8 %v192, %v192
      %v194 = vpack.c.b16 %v191, %v191
      %v195 = vpack.c.b8 %v194, %v194
      %vm196 = vcmask 123904
      %197 = vst.msk [vmem:[%s138] sm:$0x3] %vm196, %v193
      %198 = vst.msk [vmem:[%s138 + $0x2] sm:$0x3] %vm196, %v195
      %vm199 = vcmask 1044480
      %v200 = vrot.slane %v145, 3
      %v201 = vrot.slane %v146, 3
      %v202 = vsel %vm199, %v200, %v201
      %203 = vrot.lane.b32.xlu0 %v200, 127
      %v204 = vpop.permute.xlu0 %203
      %205 = vrot.lane.b32.xlu0 %v202, 127
      %v206 = vpop.permute.xlu0 %205
      %207 = vrot.lane.b32.xlu0 %v201, 127
      %v208 = vpop.permute.xlu0 %207
      %vm212 = vcmp.ge.f32.partialorder %v148, %v204
      %vm213 = vcmp.ge.f32.partialorder %v149, %v206
      %vm214 = vcmp.ge.f32.partialorder %v150, %v208
      %vm215 = vmpackc.low %vm212, %vm212
      %vm216 = vmpackc.even %vm215, %vm215
      %vm217 = vmpackc.low %vm213, %vm213
      %vm218 = vmpackc.even %vm217, %vm217
      %vm219 = vmpackc.low %vm214, %vm214
      %vm220 = vmpackc.even %vm219, %vm219
      %v221 = vsel %vm216, 16843009, 0
      %v222 = vsel %vm218, 16843009, 0
      %v223 = vsel %vm220, 16843009, 0
      %v224 = vunpack.c.0.s8 %v221
      %v225 = vunpack.c.0.s8 %v222
      %v226 = vunpack.c.0.s8 %v223
      %v227 = vpack.c.b16 %v225, %v224
      %v228 = vpack.c.b16 %v226, %v226
      %v229 = vpack.c.b8 %v228, %v227
      %v231 = vshrl.u32 %v229, 8
      %v233 = vrot.slane %v231, 1
      %v234 = vshll.u32 %v229, 24
      %v236 = vrot.slane %v234, 2
      %v237 = vor.u32 %v233, %v236
      %238 = vrot.lane.b32.xlu0 %v237, 124
      %v239 = vpop.permute.xlu0 %238
      %vm240 = vnez %v239
      %v241 = vsel %vm240, 16843009, 0
      %v242 = vunpack.c.0.s8 %v241
      %v243 = vunpack.c.1.s8 %v241
      %v244 = vpack.c.b16 %v242, %v242
      %v245 = vpack.c.b8 %v244, %v244
      %v246 = vpack.c.b16 %v243, %v243
      %v247 = vpack.c.b8 %v246, %v246
      %s248 = scalar_lea.vmem %s138, 12
      %249 = vst.msk [vmem:[%s248] sm:$0x3] %vm196, %v245
      %250 = vst.msk [vmem:[%s248 + $0x2] sm:$0x3] %vm196, %v247
      %vm251 = vcmask 1045504
      %v252 = vrot.slane %v145, 2
      %v253 = vrot.slane %v146, 2
      %v254 = vsel %vm251, %v252, %v253
      %255 = vrot.lane.b32.xlu0 %v252, 127
      %v256 = vpop.permute.xlu0 %255
      %257 = vrot.lane.b32.xlu0 %v254, 127
      %v258 = vpop.permute.xlu0 %257
      %259 = vrot.lane.b32.xlu0 %v253, 127
      %v260 = vpop.permute.xlu0 %259
      %vm264 = vcmp.ge.f32.partialorder %v148, %v256
      %vm265 = vcmp.ge.f32.partialorder %v149, %v258
      %vm266 = vcmp.ge.f32.partialorder %v150, %v260
      %vm267 = vmpackc.low %vm264, %vm264
      %vm268 = vmpackc.even %vm267, %vm267
      %vm269 = vmpackc.low %vm265, %vm265
      %vm270 = vmpackc.even %vm269, %vm269
      %vm271 = vmpackc.low %vm266, %vm266
      %vm272 = vmpackc.even %vm271, %vm271
      %v273 = vsel %vm268, 16843009, 0
      %v274 = vsel %vm270, 16843009, 0
      %v275 = vsel %vm272, 16843009, 0
      %v276 = vunpack.c.0.s8 %v273
      %v277 = vunpack.c.0.s8 %v274
      %v278 = vunpack.c.0.s8 %v275
      %v279 = vpack.c.b16 %v277, %v276
      %v280 = vpack.c.b16 %v278, %v278
      %v281 = vpack.c.b8 %v280, %v279
      %v283 = vshrl.u32 %v281, 16
      %v285 = vrot.slane %v283, 1
      %v286 = vshll.u32 %v281, 16
      %v288 = vrot.slane %v286, 2
      %v289 = vor.u32 %v285, %v288
      %290 = vrot.lane.b32.xlu0 %v289, 124
      %v291 = vpop.permute.xlu0 %290
      %vm292 = vnez %v291
      %v293 = vsel %vm292, 16843009, 0
      %v294 = vunpack.c.0.s8 %v293
      %v295 = vunpack.c.1.s8 %v293
      %v296 = vpack.c.b16 %v294, %v294
      %v297 = vpack.c.b8 %v296, %v296
      %v298 = vpack.c.b16 %v295, %v295
      %v299 = vpack.c.b8 %v298, %v298
      %s300 = scalar_lea.vmem %s138, 20
      %301 = vst.msk [vmem:[%s300] sm:$0x3] %vm196, %v297
      %302 = vst.msk [vmem:[%s300 + $0x2] sm:$0x3] %vm196, %v299
      %vm303 = vcmask 1042432
      %v304 = vrot.slane %v145, 5
      %v305 = vrot.slane %v146, 5
      %v306 = vsel %vm303, %v304, %v305
      %307 = vrot.lane.b32.xlu0 %v304, 127
      %v308 = vpop.permute.xlu0 %307
      %309 = vrot.lane.b32.xlu0 %v306, 127
      %v310 = vpop.permute.xlu0 %309
      %311 = vrot.lane.b32.xlu0 %v305, 127
      %v312 = vpop.permute.xlu0 %311
      %vm316 = vcmp.ge.f32.partialorder %v148, %v308
      %vm317 = vcmp.ge.f32.partialorder %v149, %v310
      %vm318 = vcmp.ge.f32.partialorder %v150, %v312
      %vm319 = vmpackc.low %vm316, %vm316
      %vm320 = vmpackc.even %vm319, %vm319
      %vm321 = vmpackc.low %vm317, %vm317
      %vm322 = vmpackc.even %vm321, %vm321
      %vm323 = vmpackc.low %vm318, %vm318
      %vm324 = vmpackc.even %vm323, %vm323
      %v325 = vsel %vm320, 16843009, 0
      %v326 = vsel %vm322, 16843009, 0
      %v327 = vsel %vm324, 16843009, 0
      %v328 = vunpack.c.0.s8 %v325
      %v329 = vunpack.c.0.s8 %v326
      %v330 = vunpack.c.0.s8 %v327
      %v331 = vpack.c.b16 %v329, %v328
      %v332 = vpack.c.b16 %v330, %v330
      %v333 = vpack.c.b8 %v332, %v331
      %v335 = vshrl.u32 %v333, 24
      %v337 = vshll.u32 %v333, 8
      %v339 = vrot.slane %v337, 1
      %v340 = vor.u32 %v335, %v339
      %341 = vrot.lane.b32.xlu0 %v340, 124
      %v342 = vpop.permute.xlu0 %341
      %vm343 = vnez %v342
      %v344 = vsel %vm343, 16843009, 0
      %v345 = vunpack.c.0.s8 %v344
      %v346 = vunpack.c.1.s8 %v344
      %v347 = vpack.c.b16 %v345, %v345
      %v348 = vpack.c.b8 %v347, %v347
      %v349 = vpack.c.b16 %v346, %v346
      %v350 = vpack.c.b8 %v349, %v349
      %s351 = scalar_lea.vmem %s138, 36
      %352 = vst.msk [vmem:[%s351] sm:$0x3] %vm196, %v348
      %353 = vst.msk [vmem:[%s351 + $0x2] sm:$0x3] %vm196, %v350
      %vm354 = vcmask 1046528
      %v355 = vrot.slane %v145, 1
      %v356 = vrot.slane %v146, 1
      %v357 = vsel %vm354, %v355, %v356
      %358 = vrot.lane.b32.xlu0 %v355, 127
      %v359 = vpop.permute.xlu0 %358
      %360 = vrot.lane.b32.xlu0 %v357, 127
      %v361 = vpop.permute.xlu0 %360
      %362 = vrot.lane.b32.xlu0 %v356, 127
      %v363 = vpop.permute.xlu0 %362
      %vm367 = vcmp.ge.f32.partialorder %v148, %v359
      %vm368 = vcmp.ge.f32.partialorder %v149, %v361
      %vm369 = vcmp.ge.f32.partialorder %v150, %v363
      %vm370 = vmpackc.low %vm367, %vm367
      %vm371 = vmpackc.even %vm370, %vm370
      %vm372 = vmpackc.low %vm368, %vm368
      %vm373 = vmpackc.even %vm372, %vm372
      %vm374 = vmpackc.low %vm369, %vm369
      %vm375 = vmpackc.even %vm374, %vm374
      %v376 = vsel %vm371, 16843009, 0
      %v377 = vsel %vm373, 16843009, 0
      %v378 = vsel %vm375, 16843009, 0
      %v379 = vunpack.c.0.s8 %v376
      %v380 = vunpack.c.0.s8 %v377
      %v381 = vunpack.c.0.s8 %v378
      %v382 = vpack.c.b16 %v380, %v379
      %v383 = vpack.c.b16 %v381, %v381
      %v384 = vpack.c.b8 %v383, %v382
      %v386 = vshrl.u32 %v384, 24
      %v388 = vrot.slane %v386, 1
      %v389 = vshll.u32 %v384, 8
      %v391 = vrot.slane %v389, 2
      %v392 = vor.u32 %v388, %v391
      %393 = vrot.lane.b32.xlu0 %v392, 124
      %v394 = vpop.permute.xlu0 %393
      %vm395 = vnez %v394
      %v396 = vsel %vm395, 16843009, 0
      %v397 = vunpack.c.0.s8 %v396
      %v398 = vunpack.c.1.s8 %v396
      %v399 = vpack.c.b16 %v397, %v397
      %v400 = vpack.c.b8 %v399, %v399
      %v401 = vpack.c.b16 %v398, %v398
      %v402 = vpack.c.b8 %v401, %v401
      %s403 = scalar_lea.vmem %s138, 80
      %404 = vst.msk [vmem:[%s403] sm:$0x3] %vm196, %v400
      %405 = vst.msk [vmem:[%s403 + $0x2] sm:$0x3] %vm196, %v402
      %vm406 = vcmask 1041408
      %v407 = vrot.slane %v145, 6
      %v408 = vrot.slane %v146, 6
      %v409 = vsel %vm406, %v407, %v408
      %410 = vrot.lane.b32.xlu0 %v407, 127
      %v411 = vpop.permute.xlu0 %410
      %412 = vrot.lane.b32.xlu0 %v409, 127
      %v413 = vpop.permute.xlu0 %412
      %414 = vrot.lane.b32.xlu0 %v408, 127
      %v415 = vpop.permute.xlu0 %414
      %vm419 = vcmp.ge.f32.partialorder %v148, %v411
      %vm420 = vcmp.ge.f32.partialorder %v149, %v413
      %vm421 = vcmp.ge.f32.partialorder %v150, %v415
      %vm422 = vmpackc.low %vm419, %vm419
      %vm423 = vmpackc.even %vm422, %vm422
      %vm424 = vmpackc.low %vm420, %vm420
      %vm425 = vmpackc.even %vm424, %vm424
      %vm426 = vmpackc.low %vm421, %vm421
      %vm427 = vmpackc.even %vm426, %vm426
      %v428 = vsel %vm423, 16843009, 0
      %v429 = vsel %vm425, 16843009, 0
      %v430 = vsel %vm427, 16843009, 0
      %v431 = vunpack.c.0.s8 %v428
      %v432 = vunpack.c.0.s8 %v429
      %v433 = vunpack.c.0.s8 %v430
      %v434 = vpack.c.b16 %v432, %v431
      %v435 = vpack.c.b16 %v433, %v433
      %v436 = vpack.c.b8 %v435, %v434
      %v438 = vshrl.u32 %v436, 16
      %v440 = vshll.u32 %v436, 16
      %v442 = vrot.slane %v440, 1
      %v443 = vor.u32 %v438, %v442
      %444 = vrot.lane.b32.xlu0 %v443, 124
      %v445 = vpop.permute.xlu0 %444
      %vm446 = vnez %v445
      %v447 = vsel %vm446, 16843009, 0
      %v448 = vunpack.c.0.s8 %v447
      %v449 = vunpack.c.1.s8 %v447
      %v450 = vpack.c.b16 %v448, %v448
      %v451 = vpack.c.b8 %v450, %v450
      %v452 = vpack.c.b16 %v449, %v449
      %v453 = vpack.c.b8 %v452, %v452
      %s454 = scalar_lea.vmem %s138, 104
      %455 = vst.msk [vmem:[%s454] sm:$0x3] %vm196, %v451
      %456 = vst.msk [vmem:[%s454 + $0x2] sm:$0x3] %vm196, %v453
      %457 = vrot.lane.b32.xlu0 %v145, 127
      %v458 = vpop.permute.xlu0 %457
      %459 = vrot.lane.b32.xlu0 %v146, 127
      %v460 = vpop.permute.xlu0 %459
      %vm463 = vcmp.ge.f32.partialorder %v149, %v458
      %vm464 = vcmp.ge.f32.partialorder %v150, %v460
      %vm465 = vmpackc.low %vm463, %vm463
      %vm466 = vmpackc.even %vm465, %vm465
      %vm467 = vmpackc.low %vm464, %vm464
      %vm468 = vmpackc.even %vm467, %vm467
      %v469 = vsel %vm466, 16843009, 0
      %v470 = vsel %vm468, 16843009, 0
      %v471 = vunpack.c.0.s8 %v469
      %v472 = vunpack.c.0.s8 %v470
      %v473 = vpack.c.b16 %v472, %v471
      %v474 = vpack.c.b8 %v473, %v473
      %475 = vrot.lane.b32.xlu0 %v474, 124
      %v476 = vpop.permute.xlu0 %475
      %vm477 = vnez %v476
      %v478 = vsel %vm477, 16843009, 0
      %v479 = vunpack.c.0.s8 %v478
      %v480 = vunpack.c.1.s8 %v478
      %v481 = vpack.c.b16 %v479, %v479
      %v482 = vpack.c.b8 %v481, %v481
      %v483 = vpack.c.b16 %v480, %v480
      %v484 = vpack.c.b8 %v483, %v483
      %s485 = scalar_lea.vmem %s138, 172
      %486 = vst.msk [vmem:[%s485] sm:$0x3] %vm196, %v482
      %487 = vst.msk [vmem:[%s485 + $0x2] sm:$0x3] %vm196, %v484
      %vm488 = vcmask 1040384
      %v489 = vrot.slane %v145, 7
      %v490 = vrot.slane %v146, 7
      %v491 = vsel %vm488, %v489, %v490
      %492 = vrot.lane.b32.xlu0 %v489, 127
      %v493 = vpop.permute.xlu0 %492
      %494 = vrot.lane.b32.xlu0 %v491, 127
      %v495 = vpop.permute.xlu0 %494
      %496 = vrot.lane.b32.xlu0 %v490, 127
      %v497 = vpop.permute.xlu0 %496
      %vm501 = vcmp.ge.f32.partialorder %v148, %v493
      %vm502 = vcmp.ge.f32.partialorder %v149, %v495
      %vm503 = vcmp.ge.f32.partialorder %v150, %v497
      %vm504 = vmpackc.low %vm501, %vm501
      %vm505 = vmpackc.even %vm504, %vm504
      %vm506 = vmpackc.low %vm502, %vm502
      %vm507 = vmpackc.even %vm506, %vm506
      %vm508 = vmpackc.low %vm503, %vm503
      %vm509 = vmpackc.even %vm508, %vm508
      %v510 = vsel %vm505, 16843009, 0
      %v511 = vsel %vm507, 16843009, 0
      %v512 = vsel %vm509, 16843009, 0
      %v513 = vunpack.c.0.s8 %v510
      %v514 = vunpack.c.0.s8 %v511
      %v515 = vunpack.c.0.s8 %v512
      %v516 = vpack.c.b16 %v514, %v513
      %v517 = vpack.c.b16 %v515, %v515
      %v518 = vpack.c.b8 %v517, %v516
      %v520 = vshrl.u32 %v518, 8
      %v522 = vshll.u32 %v518, 24
      %v524 = vrot.slane %v522, 1
      %v525 = vor.u32 %v520, %v524
      %526 = vrot.lane.b32.xlu0 %v525, 124
      %v527 = vpop.permute.xlu0 %526
      %vm528 = vnez %v527
      %v529 = vsel %vm528, 16843009, 0
      %v530 = vunpack.c.0.s8 %v529
      %v531 = vunpack.c.1.s8 %v529
      %v532 = vpack.c.b16 %v530, %v530
      %v533 = vpack.c.b8 %v532, %v532
      %v534 = vpack.c.b16 %v531, %v531
      %v535 = vpack.c.b8 %v534, %v534
      %s536 = scalar_lea.vmem %s138, 204
      %537 = vst.msk [vmem:[%s536] sm:$0x3] %vm196, %v533
      %538 = vst.msk [vmem:[%s536 + $0x2] sm:$0x3] %vm196, %v535
      %vm539 = vcmp.ge.f32.partialorder %v149, %v493
      %vm540 = vcmp.ge.f32.partialorder %v150, %v495
      %vm541 = vcmp.ge.f32.partialorder %v151, %v497
      %vm542 = vmpackc.low %vm539, %vm539
      %vm543 = vmpackc.even %vm542, %vm542
      %vm544 = vmpackc.low %vm540, %vm540
      %vm545 = vmpackc.even %vm544, %vm544
      %vm546 = vmpackc.low %vm541, %vm541
      %vm547 = vmpackc.even %vm546, %vm546
      %v548 = vsel %vm543, 16843009, 0
      %v549 = vsel %vm545, 16843009, 0
      %v550 = vsel %vm547, 16843009, 0
      %v551 = vunpack.c.0.s8 %v548
      %v552 = vunpack.c.0.s8 %v549
      %v553 = vunpack.c.0.s8 %v550
      %v554 = vpack.c.b16 %v552, %v551
      %v555 = vpack.c.b16 %v553, %v553
      %v556 = vpack.c.b8 %v555, %v554
      %v558 = vshrl.u32 %v556, 8
      %v560 = vshll.u32 %v556, 24
      %v562 = vrot.slane %v560, 1
      %v563 = vor.u32 %v558, %v562
      %564 = vrot.lane.b32.xlu0 %v563, 124
      %v565 = vpop.permute.xlu0 %564
      %vm566 = vnez %v565
      %v567 = vsel %vm566, 16843009, 0
      %v568 = vunpack.c.0.s8 %v567
      %v569 = vunpack.c.1.s8 %v567
      %v570 = vpack.c.b16 %v568, %v568
      %v571 = vpack.c.b8 %v570, %v570
      %v572 = vpack.c.b16 %v569, %v569
      %v573 = vpack.c.b8 %v572, %v572
      %s574 = scalar_lea.vmem %s138, 296
      %575 = vst.msk [vmem:[%s574] sm:$0x3] %vm196, %v571
      %576 = vst.msk [vmem:[%s574 + $0x2] sm:$0x3] %vm196, %v573
      %vm577 = vcmp.ge.f32.partialorder %v148, %v458
      %vm578 = vcmp.ge.f32.partialorder %v149, %v460
      %vm579 = vmpackc.low %vm577, %vm577
      %vm580 = vmpackc.even %vm579, %vm579
      %vm581 = vmpackc.low %vm578, %vm578
      %vm582 = vmpackc.even %vm581, %vm581
      %v583 = vsel %vm580, 16843009, 0
      %v584 = vsel %vm582, 16843009, 0
      %v585 = vunpack.c.0.s8 %v583
      %v586 = vunpack.c.0.s8 %v584
      %v587 = vpack.c.b16 %v586, %v585
      %v588 = vpack.c.b8 %v587, %v587
      %589 = vrot.lane.b32.xlu0 %v588, 124
      %v590 = vpop.permute.xlu0 %589
      %vm591 = vnez %v590
      %v592 = vsel %vm591, 16843009, 0
      %v593 = vunpack.c.0.s8 %v592
      %v594 = vunpack.c.1.s8 %v592
      %v595 = vpack.c.b16 %v593, %v593
      %v596 = vpack.c.b8 %v595, %v595
      %v597 = vpack.c.b16 %v594, %v594
      %v598 = vpack.c.b8 %v597, %v597
      %s599 = scalar_lea.vmem %s138, 336
      %600 = vst.msk [vmem:[%s599] sm:$0x3] %vm196, %v596
      %601 = vst.msk [vmem:[%s599 + $0x2] sm:$0x3] %vm196, %v598
      %vm602 = vcmp.ge.f32.partialorder %v149, %v411
      %vm603 = vcmp.ge.f32.partialorder %v150, %v413
      %vm604 = vcmp.ge.f32.partialorder %v151, %v415
      %vm605 = vmpackc.low %vm602, %vm602
      %vm606 = vmpackc.even %vm605, %vm605
      %vm607 = vmpackc.low %vm603, %vm603
      %vm608 = vmpackc.even %vm607, %vm607
      %vm609 = vmpackc.low %vm604, %vm604
      %vm610 = vmpackc.even %vm609, %vm609
      %v611 = vsel %vm606, 16843009, 0
      %v612 = vsel %vm608, 16843009, 0
      %v613 = vsel %vm610, 16843009, 0
      %v614 = vunpack.c.0.s8 %v611
      %v615 = vunpack.c.0.s8 %v612
      %v616 = vunpack.c.0.s8 %v613
      %v617 = vpack.c.b16 %v615, %v614
      %v618 = vpack.c.b16 %v616, %v616
      %v619 = vpack.c.b8 %v618, %v617
      %v621 = vshrl.u32 %v619, 16
      %v623 = vshll.u32 %v619, 16
      %v625 = vrot.slane %v623, 1
      %v626 = vor.u32 %v621, %v625
      %627 = vrot.lane.b32.xlu0 %v626, 124
      %v628 = vpop.permute.xlu0 %627
      %vm629 = vnez %v628
      %v630 = vsel %vm629, 16843009, 0
      %v631 = vunpack.c.0.s8 %v630
      %v632 = vunpack.c.1.s8 %v630
      %v633 = vpack.c.b16 %v631, %v631
      %v634 = vpack.c.b8 %v633, %v633
      %v635 = vpack.c.b16 %v632, %v632
      %v636 = vpack.c.b8 %v635, %v635
      %s637 = scalar_lea.vmem %s138, 452
      %638 = vst.msk [vmem:[%s637] sm:$0x3] %vm196, %v634
      %639 = vst.msk [vmem:[%s637 + $0x2] sm:$0x3] %vm196, %v636
      %v640 = vld [vmem:[%s147] sm:$0xff]
      %v641 = vld [vmem:[%s147 + $0x8] sm:$0xff]
      %v642 = vld [vmem:[%s147 + $0x10] sm:$0xff]
      %v643 = vld [vmem:[%s147 + $0x18] sm:$0x3]
      %vm647 = vcmp.ge.f32.partialorder %v640, %v155
      %vm648 = vcmp.ge.f32.partialorder %v641, %v157
      %vm649 = vcmp.ge.f32.partialorder %v642, %v156
      %vm650 = vmpackc.low %vm647, %vm647
      %vm651 = vmpackc.even %vm650, %vm650
      %vm652 = vmpackc.low %vm648, %vm648
      %vm653 = vmpackc.even %vm652, %vm652
      %vm654 = vmpackc.low %vm649, %vm649
      %vm655 = vmpackc.even %vm654, %vm654
      %v656 = vsel %vm651, 16843009, 0
      %v657 = vsel %vm653, 16843009, 0
      %v658 = vsel %vm655, 16843009, 0
      %v659 = vunpack.c.0.s8 %v656
      %v660 = vunpack.c.0.s8 %v657
      %v661 = vunpack.c.0.s8 %v658
      %v662 = vpack.c.b16 %v660, %v659
      %v663 = vpack.c.b16 %v661, %v661
      %v664 = vpack.c.b8 %v663, %v662
      %v665 = vrot.slane %v664, 1
      %666 = vrot.lane.b32.xlu0 %v665, 123
      %v667 = vpop.permute.xlu0 %666
      %vm668 = vnez %v667
      %v669 = vsel %vm668, 16843009, 0
      %v670 = vunpack.c.0.s8 %v669
      %v671 = vunpack.c.1.s8 %v669
      %v672 = vpack.c.b16 %v670, %v670
      %v673 = vpack.c.b8 %v672, %v672
      %v674 = vpack.c.b16 %v671, %v671
      %v675 = vpack.c.b8 %v674, %v674
      %s676 = scalar_lea.vmem %s138, 4
      %677 = vst.msk [vmem:[%s676] sm:$0x3] %vm196, %v673
      %678 = vst.msk [vmem:[%s676 + $0x2] sm:$0x3] %vm196, %v675
      %vm682 = vcmp.ge.f32.partialorder %v640, %v252
      %vm683 = vcmp.ge.f32.partialorder %v641, %v254
      %vm684 = vcmp.ge.f32.partialorder %v642, %v253
      %vm685 = vmpackc.low %vm682, %vm682
      %vm686 = vmpackc.even %vm685, %vm685
      %vm687 = vmpackc.low %vm683, %vm683
      %vm688 = vmpackc.even %vm687, %vm687
      %vm689 = vmpackc.low %vm684, %vm684
      %vm690 = vmpackc.even %vm689, %vm689
      %v691 = vsel %vm686, 16843009, 0
      %v692 = vsel %vm688, 16843009, 0
      %v693 = vsel %vm690, 16843009, 0
      %v694 = vunpack.c.0.s8 %v691
      %v695 = vunpack.c.0.s8 %v692
      %v696 = vunpack.c.0.s8 %v693
      %v697 = vpack.c.b16 %v695, %v694
      %v698 = vpack.c.b16 %v696, %v696
      %v699 = vpack.c.b8 %v698, %v697
      %v701 = vshrl.u32 %v699, 16
      %v703 = vrot.slane %v701, 1
      %v704 = vshll.u32 %v699, 16
      %v706 = vrot.slane %v704, 2
      %v707 = vor.u32 %v703, %v706
      %708 = vrot.lane.b32.xlu0 %v707, 123
      %v709 = vpop.permute.xlu0 %708
      %vm710 = vnez %v709
      %v711 = vsel %vm710, 16843009, 0
      %v712 = vunpack.c.0.s8 %v711
      %v713 = vunpack.c.1.s8 %v711
      %v714 = vpack.c.b16 %v712, %v712
      %v715 = vpack.c.b8 %v714, %v714
      %v716 = vpack.c.b16 %v713, %v713
      %v717 = vpack.c.b8 %v716, %v716
      %s718 = scalar_lea.vmem %s138, 24
      %719 = vst.msk [vmem:[%s718] sm:$0x3] %vm196, %v715
      %720 = vst.msk [vmem:[%s718 + $0x2] sm:$0x3] %vm196, %v717
      %vm724 = vcmp.ge.f32.partialorder %v640, %v304
      %vm725 = vcmp.ge.f32.partialorder %v641, %v306
      %vm726 = vcmp.ge.f32.partialorder %v642, %v305
      %vm727 = vmpackc.low %vm724, %vm724
      %vm728 = vmpackc.even %vm727, %vm727
      %vm729 = vmpackc.low %vm725, %vm725
      %vm730 = vmpackc.even %vm729, %vm729
      %vm731 = vmpackc.low %vm726, %vm726
      %vm732 = vmpackc.even %vm731, %vm731
      %v733 = vsel %vm728, 16843009, 0
      %v734 = vsel %vm730, 16843009, 0
      %v735 = vsel %vm732, 16843009, 0
      %v736 = vunpack.c.0.s8 %v733
      %v737 = vunpack.c.0.s8 %v734
      %v738 = vunpack.c.0.s8 %v735
      %v739 = vpack.c.b16 %v737, %v736
      %v740 = vpack.c.b16 %v738, %v738
      %v741 = vpack.c.b8 %v740, %v739
      %v743 = vshrl.u32 %v741, 24
      %v745 = vshll.u32 %v741, 8
      %v747 = vrot.slane %v745, 1
      %v748 = vor.u32 %v743, %v747
      %749 = vrot.lane.b32.xlu0 %v748, 123
      %v750 = vpop.permute.xlu0 %749
      %vm751 = vnez %v750
      %v752 = vsel %vm751, 16843009, 0
      %v753 = vunpack.c.0.s8 %v752
      %v754 = vunpack.c.1.s8 %v752
      %v755 = vpack.c.b16 %v753, %v753
      %v756 = vpack.c.b8 %v755, %v755
      %v757 = vpack.c.b16 %v754, %v754
      %v758 = vpack.c.b8 %v757, %v757
      %s759 = scalar_lea.vmem %s138, 40
      %760 = vst.msk [vmem:[%s759] sm:$0x3] %vm196, %v756
      %761 = vst.msk [vmem:[%s759 + $0x2] sm:$0x3] %vm196, %v758
      %vm765 = vcmp.ge.f32.partialorder %v640, %v355
      %vm766 = vcmp.ge.f32.partialorder %v641, %v357
      %vm767 = vcmp.ge.f32.partialorder %v642, %v356
      %vm768 = vmpackc.low %vm765, %vm765
      %vm769 = vmpackc.even %vm768, %vm768
      %vm770 = vmpackc.low %vm766, %vm766
      %vm771 = vmpackc.even %vm770, %vm770
      %vm772 = vmpackc.low %vm767, %vm767
      %vm773 = vmpackc.even %vm772, %vm772
      %v774 = vsel %vm769, 16843009, 0
      %v775 = vsel %vm771, 16843009, 0
      %v776 = vsel %vm773, 16843009, 0
      %v777 = vunpack.c.0.s8 %v774
      %v778 = vunpack.c.0.s8 %v775
      %v779 = vunpack.c.0.s8 %v776
      %v780 = vpack.c.b16 %v778, %v777
      %v781 = vpack.c.b16 %v779, %v779
      %v782 = vpack.c.b8 %v781, %v780
      %v784 = vshrl.u32 %v782, 24
      %v786 = vrot.slane %v784, 1
      %v787 = vshll.u32 %v782, 8
      %v789 = vrot.slane %v787, 2
      %v790 = vor.u32 %v786, %v789
      %791 = vrot.lane.b32.xlu0 %v790, 123
      %v792 = vpop.permute.xlu0 %791
      %vm793 = vnez %v792
      %v794 = vsel %vm793, 16843009, 0
      %v795 = vunpack.c.0.s8 %v794
      %v796 = vunpack.c.1.s8 %v794
      %v797 = vpack.c.b16 %v795, %v795
      %v798 = vpack.c.b8 %v797, %v797
      %v799 = vpack.c.b16 %v796, %v796
      %v800 = vpack.c.b8 %v799, %v799
      %s801 = scalar_lea.vmem %s138, 84
      %802 = vst.msk [vmem:[%s801] sm:$0x3] %vm196, %v798
      %803 = vst.msk [vmem:[%s801 + $0x2] sm:$0x3] %vm196, %v800
      %vm807 = vcmp.ge.f32.partialorder %v640, %v407
      %vm808 = vcmp.ge.f32.partialorder %v641, %v409
      %vm809 = vcmp.ge.f32.partialorder %v642, %v408
      %vm810 = vmpackc.low %vm807, %vm807
      %vm811 = vmpackc.even %vm810, %vm810
      %vm812 = vmpackc.low %vm808, %vm808
      %vm813 = vmpackc.even %vm812, %vm812
      %vm814 = vmpackc.low %vm809, %vm809
      %vm815 = vmpackc.even %vm814, %vm814
      %v816 = vsel %vm811, 16843009, 0
      %v817 = vsel %vm813, 16843009, 0
      %v818 = vsel %vm815, 16843009, 0
      %v819 = vunpack.c.0.s8 %v816
      %v820 = vunpack.c.0.s8 %v817
      %v821 = vunpack.c.0.s8 %v818
      %v822 = vpack.c.b16 %v820, %v819
      %v823 = vpack.c.b16 %v821, %v821
      %v824 = vpack.c.b8 %v823, %v822
      %v826 = vshrl.u32 %v824, 16
      %v828 = vshll.u32 %v824, 16
      %v830 = vrot.slane %v828, 1
      %v831 = vor.u32 %v826, %v830
      %832 = vrot.lane.b32.xlu0 %v831, 123
      %v833 = vpop.permute.xlu0 %832
      %vm834 = vnez %v833
      %v835 = vsel %vm834, 16843009, 0
      %v836 = vunpack.c.0.s8 %v835
      %v837 = vunpack.c.1.s8 %v835
      %v838 = vpack.c.b16 %v836, %v836
      %v839 = vpack.c.b8 %v838, %v838
      %v840 = vpack.c.b16 %v837, %v837
      %v841 = vpack.c.b8 %v840, %v840
      %s842 = scalar_lea.vmem %s138, 108
      %843 = vst.msk [vmem:[%s842] sm:$0x3] %vm196, %v839
      %844 = vst.msk [vmem:[%s842 + $0x2] sm:$0x3] %vm196, %v841
      %vm845 = vcmp.ge.f32.partialorder %v641, %v145
      %vm846 = vcmp.ge.f32.partialorder %v642, %v146
      %vm847 = vmpackc.low %vm845, %vm845
      %vm848 = vmpackc.even %vm847, %vm847
      %vm849 = vmpackc.low %vm846, %vm846
      %vm850 = vmpackc.even %vm849, %vm849
      %v851 = vsel %vm848, 16843009, 0
      %v852 = vsel %vm850, 16843009, 0
      %v853 = vunpack.c.0.s8 %v851
      %v854 = vunpack.c.0.s8 %v852
      %v855 = vpack.c.b16 %v854, %v853
      %v856 = vpack.c.b8 %v855, %v855
      %857 = vrot.lane.b32.xlu0 %v856, 123
      %v858 = vpop.permute.xlu0 %857
      %vm859 = vnez %v858
      %v860 = vsel %vm859, 16843009, 0
      %v861 = vunpack.c.0.s8 %v860
      %v862 = vunpack.c.1.s8 %v860
      %v863 = vpack.c.b16 %v861, %v861
      %v864 = vpack.c.b8 %v863, %v863
      %v865 = vpack.c.b16 %v862, %v862
      %v866 = vpack.c.b8 %v865, %v865
      %s867 = scalar_lea.vmem %s138, 176
      %868 = vst.msk [vmem:[%s867] sm:$0x3] %vm196, %v864
      %869 = vst.msk [vmem:[%s867 + $0x2] sm:$0x3] %vm196, %v866
      %vm873 = vcmp.ge.f32.partialorder %v640, %v489
      %vm874 = vcmp.ge.f32.partialorder %v641, %v491
      %vm875 = vcmp.ge.f32.partialorder %v642, %v490
      %vm876 = vmpackc.low %vm873, %vm873
      %vm877 = vmpackc.even %vm876, %vm876
      %vm878 = vmpackc.low %vm874, %vm874
      %vm879 = vmpackc.even %vm878, %vm878
      %vm880 = vmpackc.low %vm875, %vm875
      %vm881 = vmpackc.even %vm880, %vm880
      %v882 = vsel %vm877, 16843009, 0
      %v883 = vsel %vm879, 16843009, 0
      %v884 = vsel %vm881, 16843009, 0
      %v885 = vunpack.c.0.s8 %v882
      %v886 = vunpack.c.0.s8 %v883
      %v887 = vunpack.c.0.s8 %v884
      %v888 = vpack.c.b16 %v886, %v885
      %v889 = vpack.c.b16 %v887, %v887
      %v890 = vpack.c.b8 %v889, %v888
      %v892 = vshrl.u32 %v890, 8
      %v894 = vshll.u32 %v890, 24
      %v896 = vrot.slane %v894, 1
      %v897 = vor.u32 %v892, %v896
      %898 = vrot.lane.b32.xlu0 %v897, 123
      %v899 = vpop.permute.xlu0 %898
      %vm900 = vnez %v899
      %v901 = vsel %vm900, 16843009, 0
      %v902 = vunpack.c.0.s8 %v901
      %v903 = vunpack.c.1.s8 %v901
      %v904 = vpack.c.b16 %v902, %v902
      %v905 = vpack.c.b8 %v904, %v904
      %v906 = vpack.c.b16 %v903, %v903
      %v907 = vpack.c.b8 %v906, %v906
      %s908 = scalar_lea.vmem %s138, 208
      %909 = vst.msk [vmem:[%s908] sm:$0x3] %vm196, %v905
      %910 = vst.msk [vmem:[%s908 + $0x2] sm:$0x3] %vm196, %v907
      %vm911 = vcmp.ge.f32.partialorder %v641, %v489
      %vm912 = vcmp.ge.f32.partialorder %v642, %v491
      %vm913 = vcmp.ge.f32.partialorder %v643, %v490
      %vm914 = vmpackc.low %vm911, %vm911
      %vm915 = vmpackc.even %vm914, %vm914
      %vm916 = vmpackc.low %vm912, %vm912
      %vm917 = vmpackc.even %vm916, %vm916
      %vm918 = vmpackc.low %vm913, %vm913
      %vm919 = vmpackc.even %vm918, %vm918
      %v920 = vsel %vm915, 16843009, 0
      %v921 = vsel %vm917, 16843009, 0
      %v922 = vsel %vm919, 16843009, 0
      %v923 = vunpack.c.0.s8 %v920
      %v924 = vunpack.c.0.s8 %v921
      %v925 = vunpack.c.0.s8 %v922
      %v926 = vpack.c.b16 %v924, %v923
      %v927 = vpack.c.b16 %v925, %v925
      %v928 = vpack.c.b8 %v927, %v926
      %v930 = vshrl.u32 %v928, 8
      %v932 = vshll.u32 %v928, 24
      %v934 = vrot.slane %v932, 1
      %v935 = vor.u32 %v930, %v934
      %936 = vrot.lane.b32.xlu0 %v935, 123
      %v937 = vpop.permute.xlu0 %936
      %vm938 = vnez %v937
      %v939 = vsel %vm938, 16843009, 0
      %v940 = vunpack.c.0.s8 %v939
      %v941 = vunpack.c.1.s8 %v939
      %v942 = vpack.c.b16 %v940, %v940
      %v943 = vpack.c.b8 %v942, %v942
      %v944 = vpack.c.b16 %v941, %v941
      %v945 = vpack.c.b8 %v944, %v944
      %s946 = scalar_lea.vmem %s138, 300
      %947 = vst.msk [vmem:[%s946] sm:$0x3] %vm196, %v943
      %948 = vst.msk [vmem:[%s946 + $0x2] sm:$0x3] %vm196, %v945
      %vm949 = vcmp.ge.f32.partialorder %v640, %v145
      %vm950 = vcmp.ge.f32.partialorder %v641, %v146
      %vm951 = vmpackc.low %vm949, %vm949
      %vm952 = vmpackc.even %vm951, %vm951
      %vm953 = vmpackc.low %vm950, %vm950
      %vm954 = vmpackc.even %vm953, %vm953
      %v955 = vsel %vm952, 16843009, 0
      %v956 = vsel %vm954, 16843009, 0
      %v957 = vunpack.c.0.s8 %v955
      %v958 = vunpack.c.0.s8 %v956
      %v959 = vpack.c.b16 %v958, %v957
      %v960 = vpack.c.b8 %v959, %v959
      %961 = vrot.lane.b32.xlu0 %v960, 123
      %v962 = vpop.permute.xlu0 %961
      %vm963 = vnez %v962
      %v964 = vsel %vm963, 16843009, 0
      %v965 = vunpack.c.0.s8 %v964
      %v966 = vunpack.c.1.s8 %v964
      %v967 = vpack.c.b16 %v965, %v965
      %v968 = vpack.c.b8 %v967, %v967
      %v969 = vpack.c.b16 %v966, %v966
      %v970 = vpack.c.b8 %v969, %v969
      %s971 = scalar_lea.vmem %s138, 340
      %972 = vst.msk [vmem:[%s971] sm:$0x3] %vm196, %v968
      %973 = vst.msk [vmem:[%s971 + $0x2] sm:$0x3] %vm196, %v970
      %vm974 = vcmp.ge.f32.partialorder %v641, %v407
      %vm975 = vcmp.ge.f32.partialorder %v642, %v409
      %vm976 = vcmp.ge.f32.partialorder %v643, %v408
      %vm977 = vmpackc.low %vm974, %vm974
      %vm978 = vmpackc.even %vm977, %vm977
      %vm979 = vmpackc.low %vm975, %vm975
      %vm980 = vmpackc.even %vm979, %vm979
      %vm981 = vmpackc.low %vm976, %vm976
      %vm982 = vmpackc.even %vm981, %vm981
      %v983 = vsel %vm978, 16843009, 0
      %v984 = vsel %vm980, 16843009, 0
      %v985 = vsel %vm982, 16843009, 0
      %v986 = vunpack.c.0.s8 %v983
      %v987 = vunpack.c.0.s8 %v984
      %v988 = vunpack.c.0.s8 %v985
      %v989 = vpack.c.b16 %v987, %v986
      %v990 = vpack.c.b16 %v988, %v988
      %v991 = vpack.c.b8 %v990, %v989
      %v993 = vshrl.u32 %v991, 16
      %v995 = vshll.u32 %v991, 16
      %v997 = vrot.slane %v995, 1
      %v998 = vor.u32 %v993, %v997
      %999 = vrot.lane.b32.xlu0 %v998, 123
      %v1000 = vpop.permute.xlu0 %999
      %vm1001 = vnez %v1000
      %v1002 = vsel %vm1001, 16843009, 0
      %v1003 = vunpack.c.0.s8 %v1002
      %v1004 = vunpack.c.1.s8 %v1002
      %v1005 = vpack.c.b16 %v1003, %v1003
      %v1006 = vpack.c.b8 %v1005, %v1005
      %v1007 = vpack.c.b16 %v1004, %v1004
      %v1008 = vpack.c.b8 %v1007, %v1007
      %s1009 = scalar_lea.vmem %s138, 456
      %1010 = vst.msk [vmem:[%s1009] sm:$0x3] %vm196, %v1006
      %1011 = vst.msk [vmem:[%s1009 + $0x2] sm:$0x3] %vm196, %v1008
      %v1012 = vld [vmem:[%s147] sm:$0xff]
      %v1013 = vld [vmem:[%s147 + $0x8] sm:$0xff]
      %v1014 = vld [vmem:[%s147 + $0x10] sm:$0xff]
      %v1015 = vld [vmem:[%s147 + $0x18] sm:$0x3]
      %1016 = vrot.lane.b32.xlu0 %v155, 1
      %v1017 = vpop.permute.xlu0 %1016
      %1018 = vrot.lane.b32.xlu0 %v157, 1
      %v1019 = vpop.permute.xlu0 %1018
      %1020 = vrot.lane.b32.xlu0 %v156, 1
      %v1021 = vpop.permute.xlu0 %1020
      %vm1025 = vcmp.ge.f32.partialorder %v1012, %v1017
      %vm1026 = vcmp.ge.f32.partialorder %v1013, %v1019
      %vm1027 = vcmp.ge.f32.partialorder %v1014, %v1021
      %vm1028 = vmpackc.low %vm1025, %vm1025
      %vm1029 = vmpackc.even %vm1028, %vm1028
      %vm1030 = vmpackc.low %vm1026, %vm1026
      %vm1031 = vmpackc.even %vm1030, %vm1030
      %vm1032 = vmpackc.low %vm1027, %vm1027
      %vm1033 = vmpackc.even %vm1032, %vm1032
      %v1034 = vsel %vm1029, 16843009, 0
      %v1035 = vsel %vm1031, 16843009, 0
      %v1036 = vsel %vm1033, 16843009, 0
      %v1037 = vunpack.c.0.s8 %v1034
      %v1038 = vunpack.c.0.s8 %v1035
      %v1039 = vunpack.c.0.s8 %v1036
      %v1040 = vpack.c.b16 %v1038, %v1037
      %v1041 = vpack.c.b16 %v1039, %v1039
      %v1042 = vpack.c.b8 %v1041, %v1040
      %v1043 = vrot.slane %v1042, 1
      %1044 = vrot.lane.b32.xlu0 %v1043, 122
      %v1045 = vpop.permute.xlu0 %1044
      %vm1046 = vnez %v1045
      %v1047 = vsel %vm1046, 16843009, 0
      %v1048 = vunpack.c.0.s8 %v1047
      %v1049 = vunpack.c.1.s8 %v1047
      %v1050 = vpack.c.b16 %v1048, %v1048
      %v1051 = vpack.c.b8 %v1050, %v1050
      %v1052 = vpack.c.b16 %v1049, %v1049
      %v1053 = vpack.c.b8 %v1052, %v1052
      %s1054 = scalar_lea.vmem %s138, 8
      %1055 = vst.msk [vmem:[%s1054] sm:$0x3] %vm196, %v1051
      %1056 = vst.msk [vmem:[%s1054 + $0x2] sm:$0x3] %vm196, %v1053
      %1057 = vrot.lane.b32.xlu0 %v200, 1
      %v1058 = vpop.permute.xlu0 %1057
      %1059 = vrot.lane.b32.xlu0 %v202, 1
      %v1060 = vpop.permute.xlu0 %1059
      %1061 = vrot.lane.b32.xlu0 %v201, 1
      %v1062 = vpop.permute.xlu0 %1061
      %vm1066 = vcmp.ge.f32.partialorder %v1012, %v1058
      %vm1067 = vcmp.ge.f32.partialorder %v1013, %v1060
      %vm1068 = vcmp.ge.f32.partialorder %v1014, %v1062
      %vm1069 = vmpackc.low %vm1066, %vm1066
      %vm1070 = vmpackc.even %vm1069, %vm1069
      %vm1071 = vmpackc.low %vm1067, %vm1067
      %vm1072 = vmpackc.even %vm1071, %vm1071
      %vm1073 = vmpackc.low %vm1068, %vm1068
      %vm1074 = vmpackc.even %vm1073, %vm1073
      %v1075 = vsel %vm1070, 16843009, 0
      %v1076 = vsel %vm1072, 16843009, 0
      %v1077 = vsel %vm1074, 16843009, 0
      %v1078 = vunpack.c.0.s8 %v1075
      %v1079 = vunpack.c.0.s8 %v1076
      %v1080 = vunpack.c.0.s8 %v1077
      %v1081 = vpack.c.b16 %v1079, %v1078
      %v1082 = vpack.c.b16 %v1080, %v1080
      %v1083 = vpack.c.b8 %v1082, %v1081
      %v1085 = vshrl.u32 %v1083, 8
      %v1087 = vrot.slane %v1085, 1
      %v1088 = vshll.u32 %v1083, 24
      %v1090 = vrot.slane %v1088, 2
      %v1091 = vor.u32 %v1087, %v1090
      %1092 = vrot.lane.b32.xlu0 %v1091, 122
      %v1093 = vpop.permute.xlu0 %1092
      %vm1094 = vnez %v1093
      %v1095 = vsel %vm1094, 16843009, 0
      %v1096 = vunpack.c.0.s8 %v1095
      %v1097 = vunpack.c.1.s8 %v1095
      %v1098 = vpack.c.b16 %v1096, %v1096
      %v1099 = vpack.c.b8 %v1098, %v1098
      %v1100 = vpack.c.b16 %v1097, %v1097
      %v1101 = vpack.c.b8 %v1100, %v1100
      %s1102 = scalar_lea.vmem %s138, 16
      %1103 = vst.msk [vmem:[%s1102] sm:$0x3] %vm196, %v1099
      %1104 = vst.msk [vmem:[%s1102 + $0x2] sm:$0x3] %vm196, %v1101
      %1105 = vrot.lane.b32.xlu0 %v252, 1
      %v1106 = vpop.permute.xlu0 %1105
      %1107 = vrot.lane.b32.xlu0 %v254, 1
      %v1108 = vpop.permute.xlu0 %1107
      %1109 = vrot.lane.b32.xlu0 %v253, 1
      %v1110 = vpop.permute.xlu0 %1109
      %vm1114 = vcmp.ge.f32.partialorder %v1012, %v1106
      %vm1115 = vcmp.ge.f32.partialorder %v1013, %v1108
      %vm1116 = vcmp.ge.f32.partialorder %v1014, %v1110
      %vm1117 = vmpackc.low %vm1114, %vm1114
      %vm1118 = vmpackc.even %vm1117, %vm1117
      %vm1119 = vmpackc.low %vm1115, %vm1115
      %vm1120 = vmpackc.even %vm1119, %vm1119
      %vm1121 = vmpackc.low %vm1116, %vm1116
      %vm1122 = vmpackc.even %vm1121, %vm1121
      %v1123 = vsel %vm1118, 16843009, 0
      %v1124 = vsel %vm1120, 16843009, 0
      %v1125 = vsel %vm1122, 16843009, 0
      %v1126 = vunpack.c.0.s8 %v1123
      %v1127 = vunpack.c.0.s8 %v1124
      %v1128 = vunpack.c.0.s8 %v1125
      %v1129 = vpack.c.b16 %v1127, %v1126
      %v1130 = vpack.c.b16 %v1128, %v1128
      %v1131 = vpack.c.b8 %v1130, %v1129
      %v1133 = vshrl.u32 %v1131, 16
      %v1135 = vrot.slane %v1133, 1
      %v1136 = vshll.u32 %v1131, 16
      %v1138 = vrot.slane %v1136, 2
      %v1139 = vor.u32 %v1135, %v1138
      %1140 = vrot.lane.b32.xlu0 %v1139, 122
      %v1141 = vpop.permute.xlu0 %1140
      %vm1142 = vnez %v1141
      %v1143 = vsel %vm1142, 16843009, 0
      %v1144 = vunpack.c.0.s8 %v1143
      %v1145 = vunpack.c.1.s8 %v1143
      %v1146 = vpack.c.b16 %v1144, %v1144
      %v1147 = vpack.c.b8 %v1146, %v1146
      %v1148 = vpack.c.b16 %v1145, %v1145
      %v1149 = vpack.c.b8 %v1148, %v1148
      %s1150 = scalar_lea.vmem %s138, 28
      %1151 = vst.msk [vmem:[%s1150] sm:$0x3] %vm196, %v1147
      %1152 = vst.msk [vmem:[%s1150 + $0x2] sm:$0x3] %vm196, %v1149
      %1153 = vrot.lane.b32.xlu0 %v304, 1
      %v1154 = vpop.permute.xlu0 %1153
      %1155 = vrot.lane.b32.xlu0 %v306, 1
      %v1156 = vpop.permute.xlu0 %1155
      %1157 = vrot.lane.b32.xlu0 %v305, 1
      %v1158 = vpop.permute.xlu0 %1157
      %vm1162 = vcmp.ge.f32.partialorder %v1012, %v1154
      %vm1163 = vcmp.ge.f32.partialorder %v1013, %v1156
      %vm1164 = vcmp.ge.f32.partialorder %v1014, %v1158
      %vm1165 = vmpackc.low %vm1162, %vm1162
      %vm1166 = vmpackc.even %vm1165, %vm1165
      %vm1167 = vmpackc.low %vm1163, %vm1163
      %vm1168 = vmpackc.even %vm1167, %vm1167
      %vm1169 = vmpackc.low %vm1164, %vm1164
      %vm1170 = vmpackc.even %vm1169, %vm1169
      %v1171 = vsel %vm1166, 16843009, 0
      %v1172 = vsel %vm1168, 16843009, 0
      %v1173 = vsel %vm1170, 16843009, 0
      %v1174 = vunpack.c.0.s8 %v1171
      %v1175 = vunpack.c.0.s8 %v1172
      %v1176 = vunpack.c.0.s8 %v1173
      %v1177 = vpack.c.b16 %v1175, %v1174
      %v1178 = vpack.c.b16 %v1176, %v1176
      %v1179 = vpack.c.b8 %v1178, %v1177
      %v1181 = vshrl.u32 %v1179, 24
      %v1183 = vshll.u32 %v1179, 8
      %v1185 = vrot.slane %v1183, 1
      %v1186 = vor.u32 %v1181, %v1185
      %1187 = vrot.lane.b32.xlu0 %v1186, 122
      %v1188 = vpop.permute.xlu0 %1187
      %vm1189 = vnez %v1188
      %v1190 = vsel %vm1189, 16843009, 0
      %v1191 = vunpack.c.0.s8 %v1190
      %v1192 = vunpack.c.1.s8 %v1190
      %v1193 = vpack.c.b16 %v1191, %v1191
      %v1194 = vpack.c.b8 %v1193, %v1193
      %v1195 = vpack.c.b16 %v1192, %v1192
      %v1196 = vpack.c.b8 %v1195, %v1195
      %s1197 = scalar_lea.vmem %s138, 44
      %1198 = vst.msk [vmem:[%s1197] sm:$0x3] %vm196, %v1194
      %1199 = vst.msk [vmem:[%s1197 + $0x2] sm:$0x3] %vm196, %v1196
      %1200 = vrot.lane.b32.xlu0 %v355, 1
      %v1201 = vpop.permute.xlu0 %1200
      %1202 = vrot.lane.b32.xlu0 %v357, 1
      %v1203 = vpop.permute.xlu0 %1202
      %1204 = vrot.lane.b32.xlu0 %v356, 1
      %v1205 = vpop.permute.xlu0 %1204
      %vm1209 = vcmp.ge.f32.partialorder %v1012, %v1201
      %vm1210 = vcmp.ge.f32.partialorder %v1013, %v1203
      %vm1211 = vcmp.ge.f32.partialorder %v1014, %v1205
      %vm1212 = vmpackc.low %vm1209, %vm1209
      %vm1213 = vmpackc.even %vm1212, %vm1212
      %vm1214 = vmpackc.low %vm1210, %vm1210
      %vm1215 = vmpackc.even %vm1214, %vm1214
      %vm1216 = vmpackc.low %vm1211, %vm1211
      %vm1217 = vmpackc.even %vm1216, %vm1216
      %v1218 = vsel %vm1213, 16843009, 0
      %v1219 = vsel %vm1215, 16843009, 0
      %v1220 = vsel %vm1217, 16843009, 0
      %v1221 = vunpack.c.0.s8 %v1218
      %v1222 = vunpack.c.0.s8 %v1219
      %v1223 = vunpack.c.0.s8 %v1220
      %v1224 = vpack.c.b16 %v1222, %v1221
      %v1225 = vpack.c.b16 %v1223, %v1223
      %v1226 = vpack.c.b8 %v1225, %v1224
      %v1228 = vshrl.u32 %v1226, 24
      %v1230 = vrot.slane %v1228, 1
      %v1231 = vshll.u32 %v1226, 8
      %v1233 = vrot.slane %v1231, 2
      %v1234 = vor.u32 %v1230, %v1233
      %1235 = vrot.lane.b32.xlu0 %v1234, 122
      %v1236 = vpop.permute.xlu0 %1235
      %vm1237 = vnez %v1236
      %v1238 = vsel %vm1237, 16843009, 0
      %v1239 = vunpack.c.0.s8 %v1238
      %v1240 = vunpack.c.1.s8 %v1238
      %v1241 = vpack.c.b16 %v1239, %v1239
      %v1242 = vpack.c.b8 %v1241, %v1241
      %v1243 = vpack.c.b16 %v1240, %v1240
      %v1244 = vpack.c.b8 %v1243, %v1243
      %s1245 = scalar_lea.vmem %s138, 88
      %1246 = vst.msk [vmem:[%s1245] sm:$0x3] %vm196, %v1242
      %1247 = vst.msk [vmem:[%s1245 + $0x2] sm:$0x3] %vm196, %v1244
      %1248 = vrot.lane.b32.xlu0 %v407, 1
      %v1249 = vpop.permute.xlu0 %1248
      %1250 = vrot.lane.b32.xlu0 %v409, 1
      %v1251 = vpop.permute.xlu0 %1250
      %1252 = vrot.lane.b32.xlu0 %v408, 1
      %v1253 = vpop.permute.xlu0 %1252
      %vm1257 = vcmp.ge.f32.partialorder %v1012, %v1249
      %vm1258 = vcmp.ge.f32.partialorder %v1013, %v1251
      %vm1259 = vcmp.ge.f32.partialorder %v1014, %v1253
      %vm1260 = vmpackc.low %vm1257, %vm1257
      %vm1261 = vmpackc.even %vm1260, %vm1260
      %vm1262 = vmpackc.low %vm1258, %vm1258
      %vm1263 = vmpackc.even %vm1262, %vm1262
      %vm1264 = vmpackc.low %vm1259, %vm1259
      %vm1265 = vmpackc.even %vm1264, %vm1264
      %v1266 = vsel %vm1261, 16843009, 0
      %v1267 = vsel %vm1263, 16843009, 0
      %v1268 = vsel %vm1265, 16843009, 0
      %v1269 = vunpack.c.0.s8 %v1266
      %v1270 = vunpack.c.0.s8 %v1267
      %v1271 = vunpack.c.0.s8 %v1268
      %v1272 = vpack.c.b16 %v1270, %v1269
      %v1273 = vpack.c.b16 %v1271, %v1271
      %v1274 = vpack.c.b8 %v1273, %v1272
      %v1276 = vshrl.u32 %v1274, 16
      %v1278 = vshll.u32 %v1274, 16
      %v1280 = vrot.slane %v1278, 1
      %v1281 = vor.u32 %v1276, %v1280
      %1282 = vrot.lane.b32.xlu0 %v1281, 122
      %v1283 = vpop.permute.xlu0 %1282
      %vm1284 = vnez %v1283
      %v1285 = vsel %vm1284, 16843009, 0
      %v1286 = vunpack.c.0.s8 %v1285
      %v1287 = vunpack.c.1.s8 %v1285
      %v1288 = vpack.c.b16 %v1286, %v1286
      %v1289 = vpack.c.b8 %v1288, %v1288
      %v1290 = vpack.c.b16 %v1287, %v1287
      %v1291 = vpack.c.b8 %v1290, %v1290
      %s1292 = scalar_lea.vmem %s138, 112
      %1293 = vst.msk [vmem:[%s1292] sm:$0x3] %vm196, %v1289
      %1294 = vst.msk [vmem:[%s1292 + $0x2] sm:$0x3] %vm196, %v1291
      %1295 = vrot.lane.b32.xlu0 %v145, 1
      %v1296 = vpop.permute.xlu0 %1295
      %1297 = vrot.lane.b32.xlu0 %v146, 1
      %v1298 = vpop.permute.xlu0 %1297
      %vm1301 = vcmp.ge.f32.partialorder %v1013, %v1296
      %vm1302 = vcmp.ge.f32.partialorder %v1014, %v1298
      %vm1303 = vmpackc.low %vm1301, %vm1301
      %vm1304 = vmpackc.even %vm1303, %vm1303
      %vm1305 = vmpackc.low %vm1302, %vm1302
      %vm1306 = vmpackc.even %vm1305, %vm1305
      %v1307 = vsel %vm1304, 16843009, 0
      %v1308 = vsel %vm1306, 16843009, 0
      %v1309 = vunpack.c.0.s8 %v1307
      %v1310 = vunpack.c.0.s8 %v1308
      %v1311 = vpack.c.b16 %v1310, %v1309
      %v1312 = vpack.c.b8 %v1311, %v1311
      %1313 = vrot.lane.b32.xlu0 %v1312, 122
      %v1314 = vpop.permute.xlu0 %1313
      %vm1315 = vnez %v1314
      %v1316 = vsel %vm1315, 16843009, 0
      %v1317 = vunpack.c.0.s8 %v1316
      %v1318 = vunpack.c.1.s8 %v1316
      %v1319 = vpack.c.b16 %v1317, %v1317
      %v1320 = vpack.c.b8 %v1319, %v1319
      %v1321 = vpack.c.b16 %v1318, %v1318
      %v1322 = vpack.c.b8 %v1321, %v1321
      %s1323 = scalar_lea.vmem %s138, 180
      %1324 = vst.msk [vmem:[%s1323] sm:$0x3] %vm196, %v1320
      %1325 = vst.msk [vmem:[%s1323 + $0x2] sm:$0x3] %vm196, %v1322
      %1326 = vrot.lane.b32.xlu0 %v489, 1
      %v1327 = vpop.permute.xlu0 %1326
      %1328 = vrot.lane.b32.xlu0 %v491, 1
      %v1329 = vpop.permute.xlu0 %1328
      %1330 = vrot.lane.b32.xlu0 %v490, 1
      %v1331 = vpop.permute.xlu0 %1330
      %vm1335 = vcmp.ge.f32.partialorder %v1012, %v1327
      %vm1336 = vcmp.ge.f32.partialorder %v1013, %v1329
      %vm1337 = vcmp.ge.f32.partialorder %v1014, %v1331
      %vm1338 = vmpackc.low %vm1335, %vm1335
      %vm1339 = vmpackc.even %vm1338, %vm1338
      %vm1340 = vmpackc.low %vm1336, %vm1336
      %vm1341 = vmpackc.even %vm1340, %vm1340
      %vm1342 = vmpackc.low %vm1337, %vm1337
      %vm1343 = vmpackc.even %vm1342, %vm1342
      %v1344 = vsel %vm1339, 16843009, 0
      %v1345 = vsel %vm1341, 16843009, 0
      %v1346 = vsel %vm1343, 16843009, 0
      %v1347 = vunpack.c.0.s8 %v1344
      %v1348 = vunpack.c.0.s8 %v1345
      %v1349 = vunpack.c.0.s8 %v1346
      %v1350 = vpack.c.b16 %v1348, %v1347
      %v1351 = vpack.c.b16 %v1349, %v1349
      %v1352 = vpack.c.b8 %v1351, %v1350
      %v1354 = vshrl.u32 %v1352, 8
      %v1356 = vshll.u32 %v1352, 24
      %v1358 = vrot.slane %v1356, 1
      %v1359 = vor.u32 %v1354, %v1358
      %1360 = vrot.lane.b32.xlu0 %v1359, 122
      %v1361 = vpop.permute.xlu0 %1360
      %vm1362 = vnez %v1361
      %v1363 = vsel %vm1362, 16843009, 0
      %v1364 = vunpack.c.0.s8 %v1363
      %v1365 = vunpack.c.1.s8 %v1363
      %v1366 = vpack.c.b16 %v1364, %v1364
      %v1367 = vpack.c.b8 %v1366, %v1366
      %v1368 = vpack.c.b16 %v1365, %v1365
      %v1369 = vpack.c.b8 %v1368, %v1368
      %s1370 = scalar_lea.vmem %s138, 212
      %1371 = vst.msk [vmem:[%s1370] sm:$0x3] %vm196, %v1367
      %1372 = vst.msk [vmem:[%s1370 + $0x2] sm:$0x3] %vm196, %v1369
      %vm1373 = vcmp.ge.f32.partialorder %v1013, %v1327
      %vm1374 = vcmp.ge.f32.partialorder %v1014, %v1329
      %vm1375 = vcmp.ge.f32.partialorder %v1015, %v1331
      %vm1376 = vmpackc.low %vm1373, %vm1373
      %vm1377 = vmpackc.even %vm1376, %vm1376
      %vm1378 = vmpackc.low %vm1374, %vm1374
      %vm1379 = vmpackc.even %vm1378, %vm1378
      %vm1380 = vmpackc.low %vm1375, %vm1375
      %vm1381 = vmpackc.even %vm1380, %vm1380
      %v1382 = vsel %vm1377, 16843009, 0
      %v1383 = vsel %vm1379, 16843009, 0
      %v1384 = vsel %vm1381, 16843009, 0
      %v1385 = vunpack.c.0.s8 %v1382
      %v1386 = vunpack.c.0.s8 %v1383
      %v1387 = vunpack.c.0.s8 %v1384
      %v1388 = vpack.c.b16 %v1386, %v1385
      %v1389 = vpack.c.b16 %v1387, %v1387
      %v1390 = vpack.c.b8 %v1389, %v1388
      %v1392 = vshrl.u32 %v1390, 8
      %v1394 = vshll.u32 %v1390, 24
      %v1396 = vrot.slane %v1394, 1
      %v1397 = vor.u32 %v1392, %v1396
      %1398 = vrot.lane.b32.xlu0 %v1397, 122
      %v1399 = vpop.permute.xlu0 %1398
      %vm1400 = vnez %v1399
      %v1401 = vsel %vm1400, 16843009, 0
      %v1402 = vunpack.c.0.s8 %v1401
      %v1403 = vunpack.c.1.s8 %v1401
      %v1404 = vpack.c.b16 %v1402, %v1402
      %v1405 = vpack.c.b8 %v1404, %v1404
      %v1406 = vpack.c.b16 %v1403, %v1403
      %v1407 = vpack.c.b8 %v1406, %v1406
      %s1408 = scalar_lea.vmem %s138, 304
      %1409 = vst.msk [vmem:[%s1408] sm:$0x3] %vm196, %v1405
      %1410 = vst.msk [vmem:[%s1408 + $0x2] sm:$0x3] %vm196, %v1407
      %vm1411 = vcmp.ge.f32.partialorder %v1012, %v1296
      %vm1412 = vcmp.ge.f32.partialorder %v1013, %v1298
      %vm1413 = vmpackc.low %vm1411, %vm1411
      %vm1414 = vmpackc.even %vm1413, %vm1413
      %vm1415 = vmpackc.low %vm1412, %vm1412
      %vm1416 = vmpackc.even %vm1415, %vm1415
      %v1417 = vsel %vm1414, 16843009, 0
      %v1418 = vsel %vm1416, 16843009, 0
      %v1419 = vunpack.c.0.s8 %v1417
      %v1420 = vunpack.c.0.s8 %v1418
      %v1421 = vpack.c.b16 %v1420, %v1419
      %v1422 = vpack.c.b8 %v1421, %v1421
      %1423 = vrot.lane.b32.xlu0 %v1422, 122
      %v1424 = vpop.permute.xlu0 %1423
      %vm1425 = vnez %v1424
      %v1426 = vsel %vm1425, 16843009, 0
      %v1427 = vunpack.c.0.s8 %v1426
      %v1428 = vunpack.c.1.s8 %v1426
      %v1429 = vpack.c.b16 %v1427, %v1427
      %v1430 = vpack.c.b8 %v1429, %v1429
      %v1431 = vpack.c.b16 %v1428, %v1428
      %v1432 = vpack.c.b8 %v1431, %v1431
      %s1433 = scalar_lea.vmem %s138, 344
      %1434 = vst.msk [vmem:[%s1433] sm:$0x3] %vm196, %v1430
      %1435 = vst.msk [vmem:[%s1433 + $0x2] sm:$0x3] %vm196, %v1432
      %vm1436 = vcmp.ge.f32.partialorder %v1013, %v1249
      %vm1437 = vcmp.ge.f32.partialorder %v1014, %v1251
      %vm1438 = vcmp.ge.f32.partialorder %v1015, %v1253
      %vm1439 = vmpackc.low %vm1436, %vm1436
      %vm1440 = vmpackc.even %vm1439, %vm1439
      %vm1441 = vmpackc.low %vm1437, %vm1437
      %vm1442 = vmpackc.even %vm1441, %vm1441
      %vm1443 = vmpackc.low %vm1438, %vm1438
      %vm1444 = vmpackc.even %vm1443, %vm1443
      %v1445 = vsel %vm1440, 16843009, 0
      %v1446 = vsel %vm1442, 16843009, 0
      %v1447 = vsel %vm1444, 16843009, 0
      %v1448 = vunpack.c.0.s8 %v1445
      %v1449 = vunpack.c.0.s8 %v1446
      %v1450 = vunpack.c.0.s8 %v1447
      %v1451 = vpack.c.b16 %v1449, %v1448
      %v1452 = vpack.c.b16 %v1450, %v1450
      %v1453 = vpack.c.b8 %v1452, %v1451
      %v1455 = vshrl.u32 %v1453, 16
      %v1457 = vshll.u32 %v1453, 16
      %v1459 = vrot.slane %v1457, 1
      %v1460 = vor.u32 %v1455, %v1459
      %1461 = vrot.lane.b32.xlu0 %v1460, 122
      %v1462 = vpop.permute.xlu0 %1461
      %vm1463 = vnez %v1462
      %v1464 = vsel %vm1463, 16843009, 0
      %v1465 = vunpack.c.0.s8 %v1464
      %v1466 = vunpack.c.1.s8 %v1464
      %v1467 = vpack.c.b16 %v1465, %v1465
      %v1468 = vpack.c.b8 %v1467, %v1467
      %v1469 = vpack.c.b16 %v1466, %v1466
      %v1470 = vpack.c.b8 %v1469, %v1469
      %s1471 = scalar_lea.vmem %s138, 460
      %1472 = vst.msk [vmem:[%s1471] sm:$0x3] %vm196, %v1468
      %1473 = vst.msk [vmem:[%s1471 + $0x2] sm:$0x3] %vm196, %v1470
      %v1474 = vld [vmem:[%s147] sm:$0xff]
      %v1475 = vld [vmem:[%s147 + $0x8] sm:$0xff]
      %v1476 = vld [vmem:[%s147 + $0x10] sm:$0xff]
      %v1477 = vld [vmem:[%s147 + $0x18] sm:$0x3]
      %1478 = vrot.lane.b32.xlu0 %v304, 126
      %v1479 = vpop.permute.xlu0 %1478
      %1480 = vrot.lane.b32.xlu0 %v306, 126
      %v1481 = vpop.permute.xlu0 %1480
      %1482 = vrot.lane.b32.xlu0 %v305, 126
      %v1483 = vpop.permute.xlu0 %1482
      %vm1487 = vcmp.ge.f32.partialorder %v1474, %v1479
      %vm1488 = vcmp.ge.f32.partialorder %v1475, %v1481
      %vm1489 = vcmp.ge.f32.partialorder %v1476, %v1483
      %vm1490 = vmpackc.low %vm1487, %vm1487
      %vm1491 = vmpackc.even %vm1490, %vm1490
      %vm1492 = vmpackc.low %vm1488, %vm1488
      %vm1493 = vmpackc.even %vm1492, %vm1492
      %vm1494 = vmpackc.low %vm1489, %vm1489
      %vm1495 = vmpackc.even %vm1494, %vm1494
      %v1496 = vsel %vm1491, 16843009, 0
      %v1497 = vsel %vm1493, 16843009, 0
      %v1498 = vsel %vm1495, 16843009, 0
      %v1499 = vunpack.c.0.s8 %v1496
      %v1500 = vunpack.c.0.s8 %v1497
      %v1501 = vunpack.c.0.s8 %v1498
      %v1502 = vpack.c.b16 %v1500, %v1499
      %v1503 = vpack.c.b16 %v1501, %v1501
      %v1504 = vpack.c.b8 %v1503, %v1502
      %v1506 = vshrl.u32 %v1504, 24
      %v1508 = vshll.u32 %v1504, 8
      %v1510 = vrot.slane %v1508, 1
      %v1511 = vor.u32 %v1506, %v1510
      %1512 = vrot.lane.b32.xlu0 %v1511, 125
      %v1513 = vpop.permute.xlu0 %1512
      %vm1514 = vnez %v1513
      %v1515 = vsel %vm1514, 16843009, 0
      %v1516 = vunpack.c.0.s8 %v1515
      %v1517 = vunpack.c.1.s8 %v1515
      %v1518 = vpack.c.b16 %v1516, %v1516
      %v1519 = vpack.c.b8 %v1518, %v1518
      %v1520 = vpack.c.b16 %v1517, %v1517
      %v1521 = vpack.c.b8 %v1520, %v1520
      %s1522 = scalar_lea.vmem %s138, 32
      %1523 = vst.msk [vmem:[%s1522] sm:$0x3] %vm196, %v1519
      %1524 = vst.msk [vmem:[%s1522 + $0x2] sm:$0x3] %vm196, %v1521
      %1525 = vrot.lane.b32.xlu0 %v155, 126
      %v1526 = vpop.permute.xlu0 %1525
      %1527 = vrot.lane.b32.xlu0 %v157, 126
      %v1528 = vpop.permute.xlu0 %1527
      %1529 = vrot.lane.b32.xlu0 %v156, 126
      %v1530 = vpop.permute.xlu0 %1529
      %vm1534 = vcmp.ge.f32.partialorder %v1474, %v1526
      %vm1535 = vcmp.ge.f32.partialorder %v1475, %v1528
      %vm1536 = vcmp.ge.f32.partialorder %v1476, %v1530
      %vm1537 = vmpackc.low %vm1534, %vm1534
      %vm1538 = vmpackc.even %vm1537, %vm1537
      %vm1539 = vmpackc.low %vm1535, %vm1535
      %vm1540 = vmpackc.even %vm1539, %vm1539
      %vm1541 = vmpackc.low %vm1536, %vm1536
      %vm1542 = vmpackc.even %vm1541, %vm1541
      %v1543 = vsel %vm1538, 16843009, 0
      %v1544 = vsel %vm1540, 16843009, 0
      %v1545 = vsel %vm1542, 16843009, 0
      %v1546 = vunpack.c.0.s8 %v1543
      %v1547 = vunpack.c.0.s8 %v1544
      %v1548 = vunpack.c.0.s8 %v1545
      %v1549 = vpack.c.b16 %v1547, %v1546
      %v1550 = vpack.c.b16 %v1548, %v1548
      %v1551 = vpack.c.b8 %v1550, %v1549
      %v1552 = vrot.slane %v1551, 1
      %1553 = vrot.lane.b32.xlu0 %v1552, 125
      %v1554 = vpop.permute.xlu0 %1553
      %vm1555 = vnez %v1554
      %v1556 = vsel %vm1555, 16843009, 0
      %v1557 = vunpack.c.0.s8 %v1556
      %v1558 = vunpack.c.1.s8 %v1556
      %v1559 = vpack.c.b16 %v1557, %v1557
      %v1560 = vpack.c.b8 %v1559, %v1559
      %v1561 = vpack.c.b16 %v1558, %v1558
      %v1562 = vpack.c.b8 %v1561, %v1561
      %s1563 = scalar_lea.vmem %s138, 52
      %1564 = vst.msk [vmem:[%s1563] sm:$0x3] %vm196, %v1560
      %1565 = vst.msk [vmem:[%s1563 + $0x2] sm:$0x3] %vm196, %v1562
      %1566 = vrot.lane.b32.xlu0 %v200, 126
      %v1567 = vpop.permute.xlu0 %1566
      %1568 = vrot.lane.b32.xlu0 %v202, 126
      %v1569 = vpop.permute.xlu0 %1568
      %1570 = vrot.lane.b32.xlu0 %v201, 126
      %v1571 = vpop.permute.xlu0 %1570
      %vm1575 = vcmp.ge.f32.partialorder %v1474, %v1567
      %vm1576 = vcmp.ge.f32.partialorder %v1475, %v1569
      %vm1577 = vcmp.ge.f32.partialorder %v1476, %v1571
      %vm1578 = vmpackc.low %vm1575, %vm1575
      %vm1579 = vmpackc.even %vm1578, %vm1578
      %vm1580 = vmpackc.low %vm1576, %vm1576
      %vm1581 = vmpackc.even %vm1580, %vm1580
      %vm1582 = vmpackc.low %vm1577, %vm1577
      %vm1583 = vmpackc.even %vm1582, %vm1582
      %v1584 = vsel %vm1579, 16843009, 0
      %v1585 = vsel %vm1581, 16843009, 0
      %v1586 = vsel %vm1583, 16843009, 0
      %v1587 = vunpack.c.0.s8 %v1584
      %v1588 = vunpack.c.0.s8 %v1585
      %v1589 = vunpack.c.0.s8 %v1586
      %v1590 = vpack.c.b16 %v1588, %v1587
      %v1591 = vpack.c.b16 %v1589, %v1589
      %v1592 = vpack.c.b8 %v1591, %v1590
      %v1594 = vshrl.u32 %v1592, 8
      %v1596 = vrot.slane %v1594, 1
      %v1597 = vshll.u32 %v1592, 24
      %v1599 = vrot.slane %v1597, 2
      %v1600 = vor.u32 %v1596, %v1599
      %1601 = vrot.lane.b32.xlu0 %v1600, 125
      %v1602 = vpop.permute.xlu0 %1601
      %vm1603 = vnez %v1602
      %v1604 = vsel %vm1603, 16843009, 0
      %v1605 = vunpack.c.0.s8 %v1604
      %v1606 = vunpack.c.1.s8 %v1604
      %v1607 = vpack.c.b16 %v1605, %v1605
      %v1608 = vpack.c.b8 %v1607, %v1607
      %v1609 = vpack.c.b16 %v1606, %v1606
      %v1610 = vpack.c.b8 %v1609, %v1609
      %s1611 = scalar_lea.vmem %s138, 60
      %1612 = vst.msk [vmem:[%s1611] sm:$0x3] %vm196, %v1608
      %1613 = vst.msk [vmem:[%s1611 + $0x2] sm:$0x3] %vm196, %v1610
      %1614 = vrot.lane.b32.xlu0 %v252, 126
      %v1615 = vpop.permute.xlu0 %1614
      %1616 = vrot.lane.b32.xlu0 %v254, 126
      %v1617 = vpop.permute.xlu0 %1616
      %1618 = vrot.lane.b32.xlu0 %v253, 126
      %v1619 = vpop.permute.xlu0 %1618
      %vm1623 = vcmp.ge.f32.partialorder %v1474, %v1615
      %vm1624 = vcmp.ge.f32.partialorder %v1475, %v1617
      %vm1625 = vcmp.ge.f32.partialorder %v1476, %v1619
      %vm1626 = vmpackc.low %vm1623, %vm1623
      %vm1627 = vmpackc.even %vm1626, %vm1626
      %vm1628 = vmpackc.low %vm1624, %vm1624
      %vm1629 = vmpackc.even %vm1628, %vm1628
      %vm1630 = vmpackc.low %vm1625, %vm1625
      %vm1631 = vmpackc.even %vm1630, %vm1630
      %v1632 = vsel %vm1627, 16843009, 0
      %v1633 = vsel %vm1629, 16843009, 0
      %v1634 = vsel %vm1631, 16843009, 0
      %v1635 = vunpack.c.0.s8 %v1632
      %v1636 = vunpack.c.0.s8 %v1633
      %v1637 = vunpack.c.0.s8 %v1634
      %v1638 = vpack.c.b16 %v1636, %v1635
      %v1639 = vpack.c.b16 %v1637, %v1637
      %v1640 = vpack.c.b8 %v1639, %v1638
      %v1642 = vshrl.u32 %v1640, 16
      %v1644 = vrot.slane %v1642, 1
      %v1645 = vshll.u32 %v1640, 16
      %v1647 = vrot.slane %v1645, 2
      %v1648 = vor.u32 %v1644, %v1647
      %1649 = vrot.lane.b32.xlu0 %v1648, 125
      %v1650 = vpop.permute.xlu0 %1649
      %vm1651 = vnez %v1650
      %v1652 = vsel %vm1651, 16843009, 0
      %v1653 = vunpack.c.0.s8 %v1652
      %v1654 = vunpack.c.1.s8 %v1652
      %v1655 = vpack.c.b16 %v1653, %v1653
      %v1656 = vpack.c.b8 %v1655, %v1655
      %v1657 = vpack.c.b16 %v1654, %v1654
      %v1658 = vpack.c.b8 %v1657, %v1657
      %s1659 = scalar_lea.vmem %s138, 68
      %1660 = vst.msk [vmem:[%s1659] sm:$0x3] %vm196, %v1656
      %1661 = vst.msk [vmem:[%s1659 + $0x2] sm:$0x3] %vm196, %v1658
      %1662 = vrot.lane.b32.xlu0 %v355, 126
      %v1663 = vpop.permute.xlu0 %1662
      %1664 = vrot.lane.b32.xlu0 %v357, 126
      %v1665 = vpop.permute.xlu0 %1664
      %1666 = vrot.lane.b32.xlu0 %v356, 126
      %v1667 = vpop.permute.xlu0 %1666
      %vm1671 = vcmp.ge.f32.partialorder %v1474, %v1663
      %vm1672 = vcmp.ge.f32.partialorder %v1475, %v1665
      %vm1673 = vcmp.ge.f32.partialorder %v1476, %v1667
      %vm1674 = vmpackc.low %vm1671, %vm1671
      %vm1675 = vmpackc.even %vm1674, %vm1674
      %vm1676 = vmpackc.low %vm1672, %vm1672
      %vm1677 = vmpackc.even %vm1676, %vm1676
      %vm1678 = vmpackc.low %vm1673, %vm1673
      %vm1679 = vmpackc.even %vm1678, %vm1678
      %v1680 = vsel %vm1675, 16843009, 0
      %v1681 = vsel %vm1677, 16843009, 0
      %v1682 = vsel %vm1679, 16843009, 0
      %v1683 = vunpack.c.0.s8 %v1680
      %v1684 = vunpack.c.0.s8 %v1681
      %v1685 = vunpack.c.0.s8 %v1682
      %v1686 = vpack.c.b16 %v1684, %v1683
      %v1687 = vpack.c.b16 %v1685, %v1685
      %v1688 = vpack.c.b8 %v1687, %v1686
      %v1690 = vshrl.u32 %v1688, 24
      %v1692 = vrot.slane %v1690, 1
      %v1693 = vshll.u32 %v1688, 8
      %v1695 = vrot.slane %v1693, 2
      %v1696 = vor.u32 %v1692, %v1695
      %1697 = vrot.lane.b32.xlu0 %v1696, 125
      %v1698 = vpop.permute.xlu0 %1697
      %vm1699 = vnez %v1698
      %v1700 = vsel %vm1699, 16843009, 0
      %v1701 = vunpack.c.0.s8 %v1700
      %v1702 = vunpack.c.1.s8 %v1700
      %v1703 = vpack.c.b16 %v1701, %v1701
      %v1704 = vpack.c.b8 %v1703, %v1703
      %v1705 = vpack.c.b16 %v1702, %v1702
      %v1706 = vpack.c.b8 %v1705, %v1705
      %s1707 = scalar_lea.vmem %s138, 76
      %1708 = vst.msk [vmem:[%s1707] sm:$0x3] %vm196, %v1704
      %1709 = vst.msk [vmem:[%s1707 + $0x2] sm:$0x3] %vm196, %v1706
      %1710 = vrot.lane.b32.xlu0 %v407, 126
      %v1711 = vpop.permute.xlu0 %1710
      %1712 = vrot.lane.b32.xlu0 %v409, 126
      %v1713 = vpop.permute.xlu0 %1712
      %1714 = vrot.lane.b32.xlu0 %v408, 126
      %v1715 = vpop.permute.xlu0 %1714
      %vm1719 = vcmp.ge.f32.partialorder %v1474, %v1711
      %vm1720 = vcmp.ge.f32.partialorder %v1475, %v1713
      %vm1721 = vcmp.ge.f32.partialorder %v1476, %v1715
      %vm1722 = vmpackc.low %vm1719, %vm1719
      %vm1723 = vmpackc.even %vm1722, %vm1722
      %vm1724 = vmpackc.low %vm1720, %vm1720
      %vm1725 = vmpackc.even %vm1724, %vm1724
      %vm1726 = vmpackc.low %vm1721, %vm1721
      %vm1727 = vmpackc.even %vm1726, %vm1726
      %v1728 = vsel %vm1723, 16843009, 0
      %v1729 = vsel %vm1725, 16843009, 0
      %v1730 = vsel %vm1727, 16843009, 0
      %v1731 = vunpack.c.0.s8 %v1728
      %v1732 = vunpack.c.0.s8 %v1729
      %v1733 = vunpack.c.0.s8 %v1730
      %v1734 = vpack.c.b16 %v1732, %v1731
      %v1735 = vpack.c.b16 %v1733, %v1733
      %v1736 = vpack.c.b8 %v1735, %v1734
      %v1738 = vshrl.u32 %v1736, 16
      %v1740 = vshll.u32 %v1736, 16
      %v1742 = vrot.slane %v1740, 1
      %v1743 = vor.u32 %v1738, %v1742
      %1744 = vrot.lane.b32.xlu0 %v1743, 125
      %v1745 = vpop.permute.xlu0 %1744
      %vm1746 = vnez %v1745
      %v1747 = vsel %vm1746, 16843009, 0
      %v1748 = vunpack.c.0.s8 %v1747
      %v1749 = vunpack.c.1.s8 %v1747
      %v1750 = vpack.c.b16 %v1748, %v1748
      %v1751 = vpack.c.b8 %v1750, %v1750
      %v1752 = vpack.c.b16 %v1749, %v1749
      %v1753 = vpack.c.b8 %v1752, %v1752
      %s1754 = scalar_lea.vmem %s138, 100
      %1755 = vst.msk [vmem:[%s1754] sm:$0x3] %vm196, %v1751
      %1756 = vst.msk [vmem:[%s1754 + $0x2] sm:$0x3] %vm196, %v1753
      %1757 = vrot.lane.b32.xlu0 %v145, 126
      %v1758 = vpop.permute.xlu0 %1757
      %1759 = vrot.lane.b32.xlu0 %v146, 126
      %v1760 = vpop.permute.xlu0 %1759
      %vm1763 = vcmp.ge.f32.partialorder %v1475, %v1758
      %vm1764 = vcmp.ge.f32.partialorder %v1476, %v1760
      %vm1765 = vmpackc.low %vm1763, %vm1763
      %vm1766 = vmpackc.even %vm1765, %vm1765
      %vm1767 = vmpackc.low %vm1764, %vm1764
      %vm1768 = vmpackc.even %vm1767, %vm1767
      %v1769 = vsel %vm1766, 16843009, 0
      %v1770 = vsel %vm1768, 16843009, 0
      %v1771 = vunpack.c.0.s8 %v1769
      %v1772 = vunpack.c.0.s8 %v1770
      %v1773 = vpack.c.b16 %v1772, %v1771
      %v1774 = vpack.c.b8 %v1773, %v1773
      %1775 = vrot.lane.b32.xlu0 %v1774, 125
      %v1776 = vpop.permute.xlu0 %1775
      %vm1777 = vnez %v1776
      %v1778 = vsel %vm1777, 16843009, 0
      %v1779 = vunpack.c.0.s8 %v1778
      %v1780 = vunpack.c.1.s8 %v1778
      %v1781 = vpack.c.b16 %v1779, %v1779
      %v1782 = vpack.c.b8 %v1781, %v1781
      %v1783 = vpack.c.b16 %v1780, %v1780
      %v1784 = vpack.c.b8 %v1783, %v1783
      %s1785 = scalar_lea.vmem %s138, 168
      %1786 = vst.msk [vmem:[%s1785] sm:$0x3] %vm196, %v1782
      %1787 = vst.msk [vmem:[%s1785 + $0x2] sm:$0x3] %vm196, %v1784
      %1788 = vrot.lane.b32.xlu0 %v489, 126
      %v1789 = vpop.permute.xlu0 %1788
      %1790 = vrot.lane.b32.xlu0 %v491, 126
      %v1791 = vpop.permute.xlu0 %1790
      %1792 = vrot.lane.b32.xlu0 %v490, 126
      %v1793 = vpop.permute.xlu0 %1792
      %vm1797 = vcmp.ge.f32.partialorder %v1474, %v1789
      %vm1798 = vcmp.ge.f32.partialorder %v1475, %v1791
      %vm1799 = vcmp.ge.f32.partialorder %v1476, %v1793
      %vm1800 = vmpackc.low %vm1797, %vm1797
      %vm1801 = vmpackc.even %vm1800, %vm1800
      %vm1802 = vmpackc.low %vm1798, %vm1798
      %vm1803 = vmpackc.even %vm1802, %vm1802
      %vm1804 = vmpackc.low %vm1799, %vm1799
      %vm1805 = vmpackc.even %vm1804, %vm1804
      %v1806 = vsel %vm1801, 16843009, 0
      %v1807 = vsel %vm1803, 16843009, 0
      %v1808 = vsel %vm1805, 16843009, 0
      %v1809 = vunpack.c.0.s8 %v1806
      %v1810 = vunpack.c.0.s8 %v1807
      %v1811 = vunpack.c.0.s8 %v1808
      %v1812 = vpack.c.b16 %v1810, %v1809
      %v1813 = vpack.c.b16 %v1811, %v1811
      %v1814 = vpack.c.b8 %v1813, %v1812
      %v1816 = vshrl.u32 %v1814, 8
      %v1818 = vshll.u32 %v1814, 24
      %v1820 = vrot.slane %v1818, 1
      %v1821 = vor.u32 %v1816, %v1820
      %1822 = vrot.lane.b32.xlu0 %v1821, 125
      %v1823 = vpop.permute.xlu0 %1822
      %vm1824 = vnez %v1823
      %v1825 = vsel %vm1824, 16843009, 0
      %v1826 = vunpack.c.0.s8 %v1825
      %v1827 = vunpack.c.1.s8 %v1825
      %v1828 = vpack.c.b16 %v1826, %v1826
      %v1829 = vpack.c.b8 %v1828, %v1828
      %v1830 = vpack.c.b16 %v1827, %v1827
      %v1831 = vpack.c.b8 %v1830, %v1830
      %s1832 = scalar_lea.vmem %s138, 200
      %1833 = vst.msk [vmem:[%s1832] sm:$0x3] %vm196, %v1829
      %1834 = vst.msk [vmem:[%s1832 + $0x2] sm:$0x3] %vm196, %v1831
      %vm1835 = vcmp.ge.f32.partialorder %v1475, %v1789
      %vm1836 = vcmp.ge.f32.partialorder %v1476, %v1791
      %vm1837 = vcmp.ge.f32.partialorder %v1477, %v1793
      %vm1838 = vmpackc.low %vm1835, %vm1835
      %vm1839 = vmpackc.even %vm1838, %vm1838
      %vm1840 = vmpackc.low %vm1836, %vm1836
      %vm1841 = vmpackc.even %vm1840, %vm1840
      %vm1842 = vmpackc.low %vm1837, %vm1837
      %vm1843 = vmpackc.even %vm1842, %vm1842
      %v1844 = vsel %vm1839, 16843009, 0
      %v1845 = vsel %vm1841, 16843009, 0
      %v1846 = vsel %vm1843, 16843009, 0
      %v1847 = vunpack.c.0.s8 %v1844
      %v1848 = vunpack.c.0.s8 %v1845
      %v1849 = vunpack.c.0.s8 %v1846
      %v1850 = vpack.c.b16 %v1848, %v1847
      %v1851 = vpack.c.b16 %v1849, %v1849
      %v1852 = vpack.c.b8 %v1851, %v1850
      %v1854 = vshrl.u32 %v1852, 8
      %v1856 = vshll.u32 %v1852, 24
      %v1858 = vrot.slane %v1856, 1
      %v1859 = vor.u32 %v1854, %v1858
      %1860 = vrot.lane.b32.xlu0 %v1859, 125
      %v1861 = vpop.permute.xlu0 %1860
      %vm1862 = vnez %v1861
      %v1863 = vsel %vm1862, 16843009, 0
      %v1864 = vunpack.c.0.s8 %v1863
      %v1865 = vunpack.c.1.s8 %v1863
      %v1866 = vpack.c.b16 %v1864, %v1864
      %v1867 = vpack.c.b8 %v1866, %v1866
      %v1868 = vpack.c.b16 %v1865, %v1865
      %v1869 = vpack.c.b8 %v1868, %v1868
      %s1870 = scalar_lea.vmem %s138, 292
      %1871 = vst.msk [vmem:[%s1870] sm:$0x3] %vm196, %v1867
      %1872 = vst.msk [vmem:[%s1870 + $0x2] sm:$0x3] %vm196, %v1869
      %vm1873 = vcmp.ge.f32.partialorder %v1474, %v1758
      %vm1874 = vcmp.ge.f32.partialorder %v1475, %v1760
      %vm1875 = vmpackc.low %vm1873, %vm1873
      %vm1876 = vmpackc.even %vm1875, %vm1875
      %vm1877 = vmpackc.low %vm1874, %vm1874
      %vm1878 = vmpackc.even %vm1877, %vm1877
      %v1879 = vsel %vm1876, 16843009, 0
      %v1880 = vsel %vm1878, 16843009, 0
      %v1881 = vunpack.c.0.s8 %v1879
      %v1882 = vunpack.c.0.s8 %v1880
      %v1883 = vpack.c.b16 %v1882, %v1881
      %v1884 = vpack.c.b8 %v1883, %v1883
      %1885 = vrot.lane.b32.xlu0 %v1884, 125
      %v1886 = vpop.permute.xlu0 %1885
      %vm1887 = vnez %v1886
      %v1888 = vsel %vm1887, 16843009, 0
      %v1889 = vunpack.c.0.s8 %v1888
      %v1890 = vunpack.c.1.s8 %v1888
      %v1891 = vpack.c.b16 %v1889, %v1889
      %v1892 = vpack.c.b8 %v1891, %v1891
      %v1893 = vpack.c.b16 %v1890, %v1890
      %v1894 = vpack.c.b8 %v1893, %v1893
      %s1895 = scalar_lea.vmem %s138, 332
      %1896 = vst.msk [vmem:[%s1895] sm:$0x3] %vm196, %v1892
      %1897 = vst.msk [vmem:[%s1895 + $0x2] sm:$0x3] %vm196, %v1894
      %vm1898 = vcmp.ge.f32.partialorder %v1475, %v1711
      %vm1899 = vcmp.ge.f32.partialorder %v1476, %v1713
      %vm1900 = vcmp.ge.f32.partialorder %v1477, %v1715
      %vm1901 = vmpackc.low %vm1898, %vm1898
      %vm1902 = vmpackc.even %vm1901, %vm1901
      %vm1903 = vmpackc.low %vm1899, %vm1899
      %vm1904 = vmpackc.even %vm1903, %vm1903
      %vm1905 = vmpackc.low %vm1900, %vm1900
      %vm1906 = vmpackc.even %vm1905, %vm1905
      %v1907 = vsel %vm1902, 16843009, 0
      %v1908 = vsel %vm1904, 16843009, 0
      %v1909 = vsel %vm1906, 16843009, 0
      %v1910 = vunpack.c.0.s8 %v1907
      %v1911 = vunpack.c.0.s8 %v1908
      %v1912 = vunpack.c.0.s8 %v1909
      %v1913 = vpack.c.b16 %v1911, %v1910
      %v1914 = vpack.c.b16 %v1912, %v1912
      %v1915 = vpack.c.b8 %v1914, %v1913
      %v1917 = vshrl.u32 %v1915, 16
      %v1919 = vshll.u32 %v1915, 16
      %v1921 = vrot.slane %v1919, 1
      %v1922 = vor.u32 %v1917, %v1921
      %1923 = vrot.lane.b32.xlu0 %v1922, 125
      %v1924 = vpop.permute.xlu0 %1923
      %vm1925 = vnez %v1924
      %v1926 = vsel %vm1925, 16843009, 0
      %v1927 = vunpack.c.0.s8 %v1926
      %v1928 = vunpack.c.1.s8 %v1926
      %v1929 = vpack.c.b16 %v1927, %v1927
      %v1930 = vpack.c.b8 %v1929, %v1929
      %v1931 = vpack.c.b16 %v1928, %v1928
      %v1932 = vpack.c.b8 %v1931, %v1931
      %s1933 = scalar_lea.vmem %s138, 448
      %1934 = vst.msk [vmem:[%s1933] sm:$0x3] %vm196, %v1930
      %1935 = vst.msk [vmem:[%s1933 + $0x2] sm:$0x3] %vm196, %v1932
      %v1936 = vld [vmem:[%s147] sm:$0xff]
      %v1937 = vld [vmem:[%s147 + $0x8] sm:$0xff]
      %v1938 = vld [vmem:[%s147 + $0x10] sm:$0xff]
      %v1939 = vld [vmem:[%s147 + $0x18] sm:$0x3]
      %1940 = vrot.lane.b32.xlu0 %v304, 2
      %v1941 = vpop.permute.xlu0 %1940
      %1942 = vrot.lane.b32.xlu0 %v306, 2
      %v1943 = vpop.permute.xlu0 %1942
      %1944 = vrot.lane.b32.xlu0 %v305, 2
      %v1945 = vpop.permute.xlu0 %1944
      %vm1949 = vcmp.ge.f32.partialorder %v1936, %v1941
      %vm1950 = vcmp.ge.f32.partialorder %v1937, %v1943
      %vm1951 = vcmp.ge.f32.partialorder %v1938, %v1945
      %vm1952 = vmpackc.low %vm1949, %vm1949
      %vm1953 = vmpackc.even %vm1952, %vm1952
      %vm1954 = vmpackc.low %vm1950, %vm1950
      %vm1955 = vmpackc.even %vm1954, %vm1954
      %vm1956 = vmpackc.low %vm1951, %vm1951
      %vm1957 = vmpackc.even %vm1956, %vm1956
      %v1958 = vsel %vm1953, 16843009, 0
      %v1959 = vsel %vm1955, 16843009, 0
      %v1960 = vsel %vm1957, 16843009, 0
      %v1961 = vunpack.c.0.s8 %v1958
      %v1962 = vunpack.c.0.s8 %v1959
      %v1963 = vunpack.c.0.s8 %v1960
      %v1964 = vpack.c.b16 %v1962, %v1961
      %v1965 = vpack.c.b16 %v1963, %v1963
      %v1966 = vpack.c.b8 %v1965, %v1964
      %v1968 = vshrl.u32 %v1966, 24
      %v1970 = vshll.u32 %v1966, 8
      %v1972 = vrot.slane %v1970, 1
      %v1973 = vor.u32 %v1968, %v1972
      %1974 = vrot.lane.b32.xlu0 %v1973, 121
      %v1975 = vpop.permute.xlu0 %1974
      %vm1976 = vnez %v1975
      %v1977 = vsel %vm1976, 16843009, 0
      %v1978 = vunpack.c.0.s8 %v1977
      %v1979 = vunpack.c.1.s8 %v1977
      %v1980 = vpack.c.b16 %v1978, %v1978
      %v1981 = vpack.c.b8 %v1980, %v1980
      %v1982 = vpack.c.b16 %v1979, %v1979
      %v1983 = vpack.c.b8 %v1982, %v1982
      %s1984 = scalar_lea.vmem %s138, 48
      %1985 = vst.msk [vmem:[%s1984] sm:$0x3] %vm196, %v1981
      %1986 = vst.msk [vmem:[%s1984 + $0x2] sm:$0x3] %vm196, %v1983
      %1987 = vrot.lane.b32.xlu0 %v155, 2
      %v1988 = vpop.permute.xlu0 %1987
      %1989 = vrot.lane.b32.xlu0 %v157, 2
      %v1990 = vpop.permute.xlu0 %1989
      %1991 = vrot.lane.b32.xlu0 %v156, 2
      %v1992 = vpop.permute.xlu0 %1991
      %vm1996 = vcmp.ge.f32.partialorder %v1936, %v1988
      %vm1997 = vcmp.ge.f32.partialorder %v1937, %v1990
      %vm1998 = vcmp.ge.f32.partialorder %v1938, %v1992
      %vm1999 = vmpackc.low %vm1996, %vm1996
      %vm2000 = vmpackc.even %vm1999, %vm1999
      %vm2001 = vmpackc.low %vm1997, %vm1997
      %vm2002 = vmpackc.even %vm2001, %vm2001
      %vm2003 = vmpackc.low %vm1998, %vm1998
      %vm2004 = vmpackc.even %vm2003, %vm2003
      %v2005 = vsel %vm2000, 16843009, 0
      %v2006 = vsel %vm2002, 16843009, 0
      %v2007 = vsel %vm2004, 16843009, 0
      %v2008 = vunpack.c.0.s8 %v2005
      %v2009 = vunpack.c.0.s8 %v2006
      %v2010 = vunpack.c.0.s8 %v2007
      %v2011 = vpack.c.b16 %v2009, %v2008
      %v2012 = vpack.c.b16 %v2010, %v2010
      %v2013 = vpack.c.b8 %v2012, %v2011
      %v2014 = vrot.slane %v2013, 1
      %2015 = vrot.lane.b32.xlu0 %v2014, 121
      %v2016 = vpop.permute.xlu0 %2015
      %vm2017 = vnez %v2016
      %v2018 = vsel %vm2017, 16843009, 0
      %v2019 = vunpack.c.0.s8 %v2018
      %v2020 = vunpack.c.1.s8 %v2018
      %v2021 = vpack.c.b16 %v2019, %v2019
      %v2022 = vpack.c.b8 %v2021, %v2021
      %v2023 = vpack.c.b16 %v2020, %v2020
      %v2024 = vpack.c.b8 %v2023, %v2023
      %s2025 = scalar_lea.vmem %s138, 56
      %2026 = vst.msk [vmem:[%s2025] sm:$0x3] %vm196, %v2022
      %2027 = vst.msk [vmem:[%s2025 + $0x2] sm:$0x3] %vm196, %v2024
      %2028 = vrot.lane.b32.xlu0 %v200, 2
      %v2029 = vpop.permute.xlu0 %2028
      %2030 = vrot.lane.b32.xlu0 %v202, 2
      %v2031 = vpop.permute.xlu0 %2030
      %2032 = vrot.lane.b32.xlu0 %v201, 2
      %v2033 = vpop.permute.xlu0 %2032
      %vm2037 = vcmp.ge.f32.partialorder %v1936, %v2029
      %vm2038 = vcmp.ge.f32.partialorder %v1937, %v2031
      %vm2039 = vcmp.ge.f32.partialorder %v1938, %v2033
      %vm2040 = vmpackc.low %vm2037, %vm2037
      %vm2041 = vmpackc.even %vm2040, %vm2040
      %vm2042 = vmpackc.low %vm2038, %vm2038
      %vm2043 = vmpackc.even %vm2042, %vm2042
      %vm2044 = vmpackc.low %vm2039, %vm2039
      %vm2045 = vmpackc.even %vm2044, %vm2044
      %v2046 = vsel %vm2041, 16843009, 0
      %v2047 = vsel %vm2043, 16843009, 0
      %v2048 = vsel %vm2045, 16843009, 0
      %v2049 = vunpack.c.0.s8 %v2046
      %v2050 = vunpack.c.0.s8 %v2047
      %v2051 = vunpack.c.0.s8 %v2048
      %v2052 = vpack.c.b16 %v2050, %v2049
      %v2053 = vpack.c.b16 %v2051, %v2051
      %v2054 = vpack.c.b8 %v2053, %v2052
      %v2056 = vshrl.u32 %v2054, 8
      %v2058 = vrot.slane %v2056, 1
      %v2059 = vshll.u32 %v2054, 24
      %v2061 = vrot.slane %v2059, 2
      %v2062 = vor.u32 %v2058, %v2061
      %2063 = vrot.lane.b32.xlu0 %v2062, 121
      %v2064 = vpop.permute.xlu0 %2063
      %vm2065 = vnez %v2064
      %v2066 = vsel %vm2065, 16843009, 0
      %v2067 = vunpack.c.0.s8 %v2066
      %v2068 = vunpack.c.1.s8 %v2066
      %v2069 = vpack.c.b16 %v2067, %v2067
      %v2070 = vpack.c.b8 %v2069, %v2069
      %v2071 = vpack.c.b16 %v2068, %v2068
      %v2072 = vpack.c.b8 %v2071, %v2071
      %s2073 = scalar_lea.vmem %s138, 64
      %2074 = vst.msk [vmem:[%s2073] sm:$0x3] %vm196, %v2070
      %2075 = vst.msk [vmem:[%s2073 + $0x2] sm:$0x3] %vm196, %v2072
      %2076 = vrot.lane.b32.xlu0 %v252, 2
      %v2077 = vpop.permute.xlu0 %2076
      %2078 = vrot.lane.b32.xlu0 %v254, 2
      %v2079 = vpop.permute.xlu0 %2078
      %2080 = vrot.lane.b32.xlu0 %v253, 2
      %v2081 = vpop.permute.xlu0 %2080
      %vm2085 = vcmp.ge.f32.partialorder %v1936, %v2077
      %vm2086 = vcmp.ge.f32.partialorder %v1937, %v2079
      %vm2087 = vcmp.ge.f32.partialorder %v1938, %v2081
      %vm2088 = vmpackc.low %vm2085, %vm2085
      %vm2089 = vmpackc.even %vm2088, %vm2088
      %vm2090 = vmpackc.low %vm2086, %vm2086
      %vm2091 = vmpackc.even %vm2090, %vm2090
      %vm2092 = vmpackc.low %vm2087, %vm2087
      %vm2093 = vmpackc.even %vm2092, %vm2092
      %v2094 = vsel %vm2089, 16843009, 0
      %v2095 = vsel %vm2091, 16843009, 0
      %v2096 = vsel %vm2093, 16843009, 0
      %v2097 = vunpack.c.0.s8 %v2094
      %v2098 = vunpack.c.0.s8 %v2095
      %v2099 = vunpack.c.0.s8 %v2096
      %v2100 = vpack.c.b16 %v2098, %v2097
      %v2101 = vpack.c.b16 %v2099, %v2099
      %v2102 = vpack.c.b8 %v2101, %v2100
      %v2104 = vshrl.u32 %v2102, 16
      %v2106 = vrot.slane %v2104, 1
      %v2107 = vshll.u32 %v2102, 16
      %v2109 = vrot.slane %v2107, 2
      %v2110 = vor.u32 %v2106, %v2109
      %2111 = vrot.lane.b32.xlu0 %v2110, 121
      %v2112 = vpop.permute.xlu0 %2111
      %vm2113 = vnez %v2112
      %v2114 = vsel %vm2113, 16843009, 0
      %v2115 = vunpack.c.0.s8 %v2114
      %v2116 = vunpack.c.1.s8 %v2114
      %v2117 = vpack.c.b16 %v2115, %v2115
      %v2118 = vpack.c.b8 %v2117, %v2117
      %v2119 = vpack.c.b16 %v2116, %v2116
      %v2120 = vpack.c.b8 %v2119, %v2119
      %s2121 = scalar_lea.vmem %s138, 72
      %2122 = vst.msk [vmem:[%s2121] sm:$0x3] %vm196, %v2118
      %2123 = vst.msk [vmem:[%s2121 + $0x2] sm:$0x3] %vm196, %v2120
      %2124 = vrot.lane.b32.xlu0 %v355, 2
      %v2125 = vpop.permute.xlu0 %2124
      %2126 = vrot.lane.b32.xlu0 %v357, 2
      %v2127 = vpop.permute.xlu0 %2126
      %2128 = vrot.lane.b32.xlu0 %v356, 2
      %v2129 = vpop.permute.xlu0 %2128
      %vm2133 = vcmp.ge.f32.partialorder %v1936, %v2125
      %vm2134 = vcmp.ge.f32.partialorder %v1937, %v2127
      %vm2135 = vcmp.ge.f32.partialorder %v1938, %v2129
      %vm2136 = vmpackc.low %vm2133, %vm2133
      %vm2137 = vmpackc.even %vm2136, %vm2136
      %vm2138 = vmpackc.low %vm2134, %vm2134
      %vm2139 = vmpackc.even %vm2138, %vm2138
      %vm2140 = vmpackc.low %vm2135, %vm2135
      %vm2141 = vmpackc.even %vm2140, %vm2140
      %v2142 = vsel %vm2137, 16843009, 0
      %v2143 = vsel %vm2139, 16843009, 0
      %v2144 = vsel %vm2141, 16843009, 0
      %v2145 = vunpack.c.0.s8 %v2142
      %v2146 = vunpack.c.0.s8 %v2143
      %v2147 = vunpack.c.0.s8 %v2144
      %v2148 = vpack.c.b16 %v2146, %v2145
      %v2149 = vpack.c.b16 %v2147, %v2147
      %v2150 = vpack.c.b8 %v2149, %v2148
      %v2152 = vshrl.u32 %v2150, 24
      %v2154 = vrot.slane %v2152, 1
      %v2155 = vshll.u32 %v2150, 8
      %v2157 = vrot.slane %v2155, 2
      %v2158 = vor.u32 %v2154, %v2157
      %2159 = vrot.lane.b32.xlu0 %v2158, 121
      %v2160 = vpop.permute.xlu0 %2159
      %vm2161 = vnez %v2160
      %v2162 = vsel %vm2161, 16843009, 0
      %v2163 = vunpack.c.0.s8 %v2162
      %v2164 = vunpack.c.1.s8 %v2162
      %v2165 = vpack.c.b16 %v2163, %v2163
      %v2166 = vpack.c.b8 %v2165, %v2165
      %v2167 = vpack.c.b16 %v2164, %v2164
      %v2168 = vpack.c.b8 %v2167, %v2167
      %s2169 = scalar_lea.vmem %s138, 92
      %2170 = vst.msk [vmem:[%s2169] sm:$0x3] %vm196, %v2166
      %2171 = vst.msk [vmem:[%s2169 + $0x2] sm:$0x3] %vm196, %v2168
      %2172 = vrot.lane.b32.xlu0 %v407, 2
      %v2173 = vpop.permute.xlu0 %2172
      %2174 = vrot.lane.b32.xlu0 %v409, 2
      %v2175 = vpop.permute.xlu0 %2174
      %2176 = vrot.lane.b32.xlu0 %v408, 2
      %v2177 = vpop.permute.xlu0 %2176
      %vm2181 = vcmp.ge.f32.partialorder %v1936, %v2173
      %vm2182 = vcmp.ge.f32.partialorder %v1937, %v2175
      %vm2183 = vcmp.ge.f32.partialorder %v1938, %v2177
      %vm2184 = vmpackc.low %vm2181, %vm2181
      %vm2185 = vmpackc.even %vm2184, %vm2184
      %vm2186 = vmpackc.low %vm2182, %vm2182
      %vm2187 = vmpackc.even %vm2186, %vm2186
      %vm2188 = vmpackc.low %vm2183, %vm2183
      %vm2189 = vmpackc.even %vm2188, %vm2188
      %v2190 = vsel %vm2185, 16843009, 0
      %v2191 = vsel %vm2187, 16843009, 0
      %v2192 = vsel %vm2189, 16843009, 0
      %v2193 = vunpack.c.0.s8 %v2190
      %v2194 = vunpack.c.0.s8 %v2191
      %v2195 = vunpack.c.0.s8 %v2192
      %v2196 = vpack.c.b16 %v2194, %v2193
      %v2197 = vpack.c.b16 %v2195, %v2195
      %v2198 = vpack.c.b8 %v2197, %v2196
      %v2200 = vshrl.u32 %v2198, 16
      %v2202 = vshll.u32 %v2198, 16
      %v2204 = vrot.slane %v2202, 1
      %v2205 = vor.u32 %v2200, %v2204
      %2206 = vrot.lane.b32.xlu0 %v2205, 121
      %v2207 = vpop.permute.xlu0 %2206
      %vm2208 = vnez %v2207
      %v2209 = vsel %vm2208, 16843009, 0
      %v2210 = vunpack.c.0.s8 %v2209
      %v2211 = vunpack.c.1.s8 %v2209
      %v2212 = vpack.c.b16 %v2210, %v2210
      %v2213 = vpack.c.b8 %v2212, %v2212
      %v2214 = vpack.c.b16 %v2211, %v2211
      %v2215 = vpack.c.b8 %v2214, %v2214
      %s2216 = scalar_lea.vmem %s138, 116
      %2217 = vst.msk [vmem:[%s2216] sm:$0x3] %vm196, %v2213
      %2218 = vst.msk [vmem:[%s2216 + $0x2] sm:$0x3] %vm196, %v2215
      %2219 = vrot.lane.b32.xlu0 %v145, 2
      %v2220 = vpop.permute.xlu0 %2219
      %2221 = vrot.lane.b32.xlu0 %v146, 2
      %v2222 = vpop.permute.xlu0 %2221
      %vm2225 = vcmp.ge.f32.partialorder %v1937, %v2220
      %vm2226 = vcmp.ge.f32.partialorder %v1938, %v2222
      %vm2227 = vmpackc.low %vm2225, %vm2225
      %vm2228 = vmpackc.even %vm2227, %vm2227
      %vm2229 = vmpackc.low %vm2226, %vm2226
      %vm2230 = vmpackc.even %vm2229, %vm2229
      %v2231 = vsel %vm2228, 16843009, 0
      %v2232 = vsel %vm2230, 16843009, 0
      %v2233 = vunpack.c.0.s8 %v2231
      %v2234 = vunpack.c.0.s8 %v2232
      %v2235 = vpack.c.b16 %v2234, %v2233
      %v2236 = vpack.c.b8 %v2235, %v2235
      %2237 = vrot.lane.b32.xlu0 %v2236, 121
      %v2238 = vpop.permute.xlu0 %2237
      %vm2239 = vnez %v2238
      %v2240 = vsel %vm2239, 16843009, 0
      %v2241 = vunpack.c.0.s8 %v2240
      %v2242 = vunpack.c.1.s8 %v2240
      %v2243 = vpack.c.b16 %v2241, %v2241
      %v2244 = vpack.c.b8 %v2243, %v2243
      %v2245 = vpack.c.b16 %v2242, %v2242
      %v2246 = vpack.c.b8 %v2245, %v2245
      %s2247 = scalar_lea.vmem %s138, 184
      %2248 = vst.msk [vmem:[%s2247] sm:$0x3] %vm196, %v2244
      %2249 = vst.msk [vmem:[%s2247 + $0x2] sm:$0x3] %vm196, %v2246
      %2250 = vrot.lane.b32.xlu0 %v489, 2
      %v2251 = vpop.permute.xlu0 %2250
      %2252 = vrot.lane.b32.xlu0 %v491, 2
      %v2253 = vpop.permute.xlu0 %2252
      %2254 = vrot.lane.b32.xlu0 %v490, 2
      %v2255 = vpop.permute.xlu0 %2254
      %vm2259 = vcmp.ge.f32.partialorder %v1936, %v2251
      %vm2260 = vcmp.ge.f32.partialorder %v1937, %v2253
      %vm2261 = vcmp.ge.f32.partialorder %v1938, %v2255
      %vm2262 = vmpackc.low %vm2259, %vm2259
      %vm2263 = vmpackc.even %vm2262, %vm2262
      %vm2264 = vmpackc.low %vm2260, %vm2260
      %vm2265 = vmpackc.even %vm2264, %vm2264
      %vm2266 = vmpackc.low %vm2261, %vm2261
      %vm2267 = vmpackc.even %vm2266, %vm2266
      %v2268 = vsel %vm2263, 16843009, 0
      %v2269 = vsel %vm2265, 16843009, 0
      %v2270 = vsel %vm2267, 16843009, 0
      %v2271 = vunpack.c.0.s8 %v2268
      %v2272 = vunpack.c.0.s8 %v2269
      %v2273 = vunpack.c.0.s8 %v2270
      %v2274 = vpack.c.b16 %v2272, %v2271
      %v2275 = vpack.c.b16 %v2273, %v2273
      %v2276 = vpack.c.b8 %v2275, %v2274
      %v2278 = vshrl.u32 %v2276, 8
      %v2280 = vshll.u32 %v2276, 24
      %v2282 = vrot.slane %v2280, 1
      %v2283 = vor.u32 %v2278, %v2282
      %2284 = vrot.lane.b32.xlu0 %v2283, 121
      %v2285 = vpop.permute.xlu0 %2284
      %vm2286 = vnez %v2285
      %v2287 = vsel %vm2286, 16843009, 0
      %v2288 = vunpack.c.0.s8 %v2287
      %v2289 = vunpack.c.1.s8 %v2287
      %v2290 = vpack.c.b16 %v2288, %v2288
      %v2291 = vpack.c.b8 %v2290, %v2290
      %v2292 = vpack.c.b16 %v2289, %v2289
      %v2293 = vpack.c.b8 %v2292, %v2292
      %s2294 = scalar_lea.vmem %s138, 216
      %2295 = vst.msk [vmem:[%s2294] sm:$0x3] %vm196, %v2291
      %2296 = vst.msk [vmem:[%s2294 + $0x2] sm:$0x3] %vm196, %v2293
      %vm2297 = vcmp.ge.f32.partialorder %v1937, %v2251
      %vm2298 = vcmp.ge.f32.partialorder %v1938, %v2253
      %vm2299 = vcmp.ge.f32.partialorder %v1939, %v2255
      %vm2300 = vmpackc.low %vm2297, %vm2297
      %vm2301 = vmpackc.even %vm2300, %vm2300
      %vm2302 = vmpackc.low %vm2298, %vm2298
      %vm2303 = vmpackc.even %vm2302, %vm2302
      %vm2304 = vmpackc.low %vm2299, %vm2299
      %vm2305 = vmpackc.even %vm2304, %vm2304
      %v2306 = vsel %vm2301, 16843009, 0
      %v2307 = vsel %vm2303, 16843009, 0
      %v2308 = vsel %vm2305, 16843009, 0
      %v2309 = vunpack.c.0.s8 %v2306
      %v2310 = vunpack.c.0.s8 %v2307
      %v2311 = vunpack.c.0.s8 %v2308
      %v2312 = vpack.c.b16 %v2310, %v2309
      %v2313 = vpack.c.b16 %v2311, %v2311
      %v2314 = vpack.c.b8 %v2313, %v2312
      %v2316 = vshrl.u32 %v2314, 8
      %v2318 = vshll.u32 %v2314, 24
      %v2320 = vrot.slane %v2318, 1
      %v2321 = vor.u32 %v2316, %v2320
      %2322 = vrot.lane.b32.xlu0 %v2321, 121
      %v2323 = vpop.permute.xlu0 %2322
      %vm2324 = vnez %v2323
      %v2325 = vsel %vm2324, 16843009, 0
      %v2326 = vunpack.c.0.s8 %v2325
      %v2327 = vunpack.c.1.s8 %v2325
      %v2328 = vpack.c.b16 %v2326, %v2326
      %v2329 = vpack.c.b8 %v2328, %v2328
      %v2330 = vpack.c.b16 %v2327, %v2327
      %v2331 = vpack.c.b8 %v2330, %v2330
      %s2332 = scalar_lea.vmem %s138, 308
      %2333 = vst.msk [vmem:[%s2332] sm:$0x3] %vm196, %v2329
      %2334 = vst.msk [vmem:[%s2332 + $0x2] sm:$0x3] %vm196, %v2331
      %vm2335 = vcmp.ge.f32.partialorder %v1936, %v2220
      %vm2336 = vcmp.ge.f32.partialorder %v1937, %v2222
      %vm2337 = vmpackc.low %vm2335, %vm2335
      %vm2338 = vmpackc.even %vm2337, %vm2337
      %vm2339 = vmpackc.low %vm2336, %vm2336
      %vm2340 = vmpackc.even %vm2339, %vm2339
      %v2341 = vsel %vm2338, 16843009, 0
      %v2342 = vsel %vm2340, 16843009, 0
      %v2343 = vunpack.c.0.s8 %v2341
      %v2344 = vunpack.c.0.s8 %v2342
      %v2345 = vpack.c.b16 %v2344, %v2343
      %v2346 = vpack.c.b8 %v2345, %v2345
      %2347 = vrot.lane.b32.xlu0 %v2346, 121
      %v2348 = vpop.permute.xlu0 %2347
      %vm2349 = vnez %v2348
      %v2350 = vsel %vm2349, 16843009, 0
      %v2351 = vunpack.c.0.s8 %v2350
      %v2352 = vunpack.c.1.s8 %v2350
      %v2353 = vpack.c.b16 %v2351, %v2351
      %v2354 = vpack.c.b8 %v2353, %v2353
      %v2355 = vpack.c.b16 %v2352, %v2352
      %v2356 = vpack.c.b8 %v2355, %v2355
      %s2357 = scalar_lea.vmem %s138, 348
      %2358 = vst.msk [vmem:[%s2357] sm:$0x3] %vm196, %v2354
      %2359 = vst.msk [vmem:[%s2357 + $0x2] sm:$0x3] %vm196, %v2356
      %vm2360 = vcmp.ge.f32.partialorder %v1937, %v2173
      %vm2361 = vcmp.ge.f32.partialorder %v1938, %v2175
      %vm2362 = vcmp.ge.f32.partialorder %v1939, %v2177
      %vm2363 = vmpackc.low %vm2360, %vm2360
      %vm2364 = vmpackc.even %vm2363, %vm2363
      %vm2365 = vmpackc.low %vm2361, %vm2361
      %vm2366 = vmpackc.even %vm2365, %vm2365
      %vm2367 = vmpackc.low %vm2362, %vm2362
      %vm2368 = vmpackc.even %vm2367, %vm2367
      %v2369 = vsel %vm2364, 16843009, 0
      %v2370 = vsel %vm2366, 16843009, 0
      %v2371 = vsel %vm2368, 16843009, 0
      %v2372 = vunpack.c.0.s8 %v2369
      %v2373 = vunpack.c.0.s8 %v2370
      %v2374 = vunpack.c.0.s8 %v2371
      %v2375 = vpack.c.b16 %v2373, %v2372
      %v2376 = vpack.c.b16 %v2374, %v2374
      %v2377 = vpack.c.b8 %v2376, %v2375
      %v2379 = vshrl.u32 %v2377, 16
      %v2381 = vshll.u32 %v2377, 16
      %v2383 = vrot.slane %v2381, 1
      %v2384 = vor.u32 %v2379, %v2383
      %2385 = vrot.lane.b32.xlu0 %v2384, 121
      %v2386 = vpop.permute.xlu0 %2385
      %vm2387 = vnez %v2386
      %v2388 = vsel %vm2387, 16843009, 0
      %v2389 = vunpack.c.0.s8 %v2388
      %v2390 = vunpack.c.1.s8 %v2388
      %v2391 = vpack.c.b16 %v2389, %v2389
      %v2392 = vpack.c.b8 %v2391, %v2391
      %v2393 = vpack.c.b16 %v2390, %v2390
      %v2394 = vpack.c.b8 %v2393, %v2393
      %s2395 = scalar_lea.vmem %s138, 464
      %2396 = vst.msk [vmem:[%s2395] sm:$0x3] %vm196, %v2392
      %2397 = vst.msk [vmem:[%s2395 + $0x2] sm:$0x3] %vm196, %v2394
      %v2398 = vld [vmem:[%s147] sm:$0xff]
      %v2399 = vld [vmem:[%s147 + $0x8] sm:$0xff]
      %v2400 = vld [vmem:[%s147 + $0x10] sm:$0xff]
      %v2401 = vld [vmem:[%s147 + $0x18] sm:$0x3]
      %2402 = vrot.lane.b32.xlu0 %v407, 125
      %v2403 = vpop.permute.xlu0 %2402
      %2404 = vrot.lane.b32.xlu0 %v409, 125
      %v2405 = vpop.permute.xlu0 %2404
      %2406 = vrot.lane.b32.xlu0 %v408, 125
      %v2407 = vpop.permute.xlu0 %2406
      %vm2411 = vcmp.ge.f32.partialorder %v2398, %v2403
      %vm2412 = vcmp.ge.f32.partialorder %v2399, %v2405
      %vm2413 = vcmp.ge.f32.partialorder %v2400, %v2407
      %vm2414 = vmpackc.low %vm2411, %vm2411
      %vm2415 = vmpackc.even %vm2414, %vm2414
      %vm2416 = vmpackc.low %vm2412, %vm2412
      %vm2417 = vmpackc.even %vm2416, %vm2416
      %vm2418 = vmpackc.low %vm2413, %vm2413
      %vm2419 = vmpackc.even %vm2418, %vm2418
      %v2420 = vsel %vm2415, 16843009, 0
      %v2421 = vsel %vm2417, 16843009, 0
      %v2422 = vsel %vm2419, 16843009, 0
      %v2423 = vunpack.c.0.s8 %v2420
      %v2424 = vunpack.c.0.s8 %v2421
      %v2425 = vunpack.c.0.s8 %v2422
      %v2426 = vpack.c.b16 %v2424, %v2423
      %v2427 = vpack.c.b16 %v2425, %v2425
      %v2428 = vpack.c.b8 %v2427, %v2426
      %v2430 = vshrl.u32 %v2428, 16
      %v2432 = vshll.u32 %v2428, 16
      %v2434 = vrot.slane %v2432, 1
      %v2435 = vor.u32 %v2430, %v2434
      %2436 = vrot.lane.b32.xlu0 %v2435, 126
      %v2437 = vpop.permute.xlu0 %2436
      %vm2438 = vnez %v2437
      %v2439 = vsel %vm2438, 16843009, 0
      %v2440 = vunpack.c.0.s8 %v2439
      %v2441 = vunpack.c.1.s8 %v2439
      %v2442 = vpack.c.b16 %v2440, %v2440
      %v2443 = vpack.c.b8 %v2442, %v2442
      %v2444 = vpack.c.b16 %v2441, %v2441
      %v2445 = vpack.c.b8 %v2444, %v2444
      %s2446 = scalar_lea.vmem %s138, 96
      %2447 = vst.msk [vmem:[%s2446] sm:$0x3] %vm196, %v2443
      %2448 = vst.msk [vmem:[%s2446 + $0x2] sm:$0x3] %vm196, %v2445
      %2449 = vrot.lane.b32.xlu0 %v304, 125
      %v2450 = vpop.permute.xlu0 %2449
      %2451 = vrot.lane.b32.xlu0 %v306, 125
      %v2452 = vpop.permute.xlu0 %2451
      %2453 = vrot.lane.b32.xlu0 %v305, 125
      %v2454 = vpop.permute.xlu0 %2453
      %vm2458 = vcmp.ge.f32.partialorder %v2398, %v2450
      %vm2459 = vcmp.ge.f32.partialorder %v2399, %v2452
      %vm2460 = vcmp.ge.f32.partialorder %v2400, %v2454
      %vm2461 = vmpackc.low %vm2458, %vm2458
      %vm2462 = vmpackc.even %vm2461, %vm2461
      %vm2463 = vmpackc.low %vm2459, %vm2459
      %vm2464 = vmpackc.even %vm2463, %vm2463
      %vm2465 = vmpackc.low %vm2460, %vm2460
      %vm2466 = vmpackc.even %vm2465, %vm2465
      %v2467 = vsel %vm2462, 16843009, 0
      %v2468 = vsel %vm2464, 16843009, 0
      %v2469 = vsel %vm2466, 16843009, 0
      %v2470 = vunpack.c.0.s8 %v2467
      %v2471 = vunpack.c.0.s8 %v2468
      %v2472 = vunpack.c.0.s8 %v2469
      %v2473 = vpack.c.b16 %v2471, %v2470
      %v2474 = vpack.c.b16 %v2472, %v2472
      %v2475 = vpack.c.b8 %v2474, %v2473
      %v2477 = vshrl.u32 %v2475, 24
      %v2479 = vshll.u32 %v2475, 8
      %v2481 = vrot.slane %v2479, 1
      %v2482 = vor.u32 %v2477, %v2481
      %2483 = vrot.lane.b32.xlu0 %v2482, 126
      %v2484 = vpop.permute.xlu0 %2483
      %vm2485 = vnez %v2484
      %v2486 = vsel %vm2485, 16843009, 0
      %v2487 = vunpack.c.0.s8 %v2486
      %v2488 = vunpack.c.1.s8 %v2486
      %v2489 = vpack.c.b16 %v2487, %v2487
      %v2490 = vpack.c.b8 %v2489, %v2489
      %v2491 = vpack.c.b16 %v2488, %v2488
      %v2492 = vpack.c.b8 %v2491, %v2491
      %s2493 = scalar_lea.vmem %s138, 124
      %2494 = vst.msk [vmem:[%s2493] sm:$0x3] %vm196, %v2490
      %2495 = vst.msk [vmem:[%s2493 + $0x2] sm:$0x3] %vm196, %v2492
      %2496 = vrot.lane.b32.xlu0 %v155, 125
      %v2497 = vpop.permute.xlu0 %2496
      %2498 = vrot.lane.b32.xlu0 %v157, 125
      %v2499 = vpop.permute.xlu0 %2498
      %2500 = vrot.lane.b32.xlu0 %v156, 125
      %v2501 = vpop.permute.xlu0 %2500
      %vm2505 = vcmp.ge.f32.partialorder %v2398, %v2497
      %vm2506 = vcmp.ge.f32.partialorder %v2399, %v2499
      %vm2507 = vcmp.ge.f32.partialorder %v2400, %v2501
      %vm2508 = vmpackc.low %vm2505, %vm2505
      %vm2509 = vmpackc.even %vm2508, %vm2508
      %vm2510 = vmpackc.low %vm2506, %vm2506
      %vm2511 = vmpackc.even %vm2510, %vm2510
      %vm2512 = vmpackc.low %vm2507, %vm2507
      %vm2513 = vmpackc.even %vm2512, %vm2512
      %v2514 = vsel %vm2509, 16843009, 0
      %v2515 = vsel %vm2511, 16843009, 0
      %v2516 = vsel %vm2513, 16843009, 0
      %v2517 = vunpack.c.0.s8 %v2514
      %v2518 = vunpack.c.0.s8 %v2515
      %v2519 = vunpack.c.0.s8 %v2516
      %v2520 = vpack.c.b16 %v2518, %v2517
      %v2521 = vpack.c.b16 %v2519, %v2519
      %v2522 = vpack.c.b8 %v2521, %v2520
      %v2523 = vrot.slane %v2522, 1
      %2524 = vrot.lane.b32.xlu0 %v2523, 126
      %v2525 = vpop.permute.xlu0 %2524
      %vm2526 = vnez %v2525
      %v2527 = vsel %vm2526, 16843009, 0
      %v2528 = vunpack.c.0.s8 %v2527
      %v2529 = vunpack.c.1.s8 %v2527
      %v2530 = vpack.c.b16 %v2528, %v2528
      %v2531 = vpack.c.b8 %v2530, %v2530
      %v2532 = vpack.c.b16 %v2529, %v2529
      %v2533 = vpack.c.b8 %v2532, %v2532
      %s2534 = scalar_lea.vmem %s138, 132
      %2535 = vst.msk [vmem:[%s2534] sm:$0x3] %vm196, %v2531
      %2536 = vst.msk [vmem:[%s2534 + $0x2] sm:$0x3] %vm196, %v2533
      %2537 = vrot.lane.b32.xlu0 %v200, 125
      %v2538 = vpop.permute.xlu0 %2537
      %2539 = vrot.lane.b32.xlu0 %v202, 125
      %v2540 = vpop.permute.xlu0 %2539
      %2541 = vrot.lane.b32.xlu0 %v201, 125
      %v2542 = vpop.permute.xlu0 %2541
      %vm2546 = vcmp.ge.f32.partialorder %v2398, %v2538
      %vm2547 = vcmp.ge.f32.partialorder %v2399, %v2540
      %vm2548 = vcmp.ge.f32.partialorder %v2400, %v2542
      %vm2549 = vmpackc.low %vm2546, %vm2546
      %vm2550 = vmpackc.even %vm2549, %vm2549
      %vm2551 = vmpackc.low %vm2547, %vm2547
      %vm2552 = vmpackc.even %vm2551, %vm2551
      %vm2553 = vmpackc.low %vm2548, %vm2548
      %vm2554 = vmpackc.even %vm2553, %vm2553
      %v2555 = vsel %vm2550, 16843009, 0
      %v2556 = vsel %vm2552, 16843009, 0
      %v2557 = vsel %vm2554, 16843009, 0
      %v2558 = vunpack.c.0.s8 %v2555
      %v2559 = vunpack.c.0.s8 %v2556
      %v2560 = vunpack.c.0.s8 %v2557
      %v2561 = vpack.c.b16 %v2559, %v2558
      %v2562 = vpack.c.b16 %v2560, %v2560
      %v2563 = vpack.c.b8 %v2562, %v2561
      %v2565 = vshrl.u32 %v2563, 8
      %v2567 = vrot.slane %v2565, 1
      %v2568 = vshll.u32 %v2563, 24
      %v2570 = vrot.slane %v2568, 2
      %v2571 = vor.u32 %v2567, %v2570
      %2572 = vrot.lane.b32.xlu0 %v2571, 126
      %v2573 = vpop.permute.xlu0 %2572
      %vm2574 = vnez %v2573
      %v2575 = vsel %vm2574, 16843009, 0
      %v2576 = vunpack.c.0.s8 %v2575
      %v2577 = vunpack.c.1.s8 %v2575
      %v2578 = vpack.c.b16 %v2576, %v2576
      %v2579 = vpack.c.b8 %v2578, %v2578
      %v2580 = vpack.c.b16 %v2577, %v2577
      %v2581 = vpack.c.b8 %v2580, %v2580
      %s2582 = scalar_lea.vmem %s138, 140
      %2583 = vst.msk [vmem:[%s2582] sm:$0x3] %vm196, %v2579
      %2584 = vst.msk [vmem:[%s2582 + $0x2] sm:$0x3] %vm196, %v2581
      %2585 = vrot.lane.b32.xlu0 %v252, 125
      %v2586 = vpop.permute.xlu0 %2585
      %2587 = vrot.lane.b32.xlu0 %v254, 125
      %v2588 = vpop.permute.xlu0 %2587
      %2589 = vrot.lane.b32.xlu0 %v253, 125
      %v2590 = vpop.permute.xlu0 %2589
      %vm2594 = vcmp.ge.f32.partialorder %v2398, %v2586
      %vm2595 = vcmp.ge.f32.partialorder %v2399, %v2588
      %vm2596 = vcmp.ge.f32.partialorder %v2400, %v2590
      %vm2597 = vmpackc.low %vm2594, %vm2594
      %vm2598 = vmpackc.even %vm2597, %vm2597
      %vm2599 = vmpackc.low %vm2595, %vm2595
      %vm2600 = vmpackc.even %vm2599, %vm2599
      %vm2601 = vmpackc.low %vm2596, %vm2596
      %vm2602 = vmpackc.even %vm2601, %vm2601
      %v2603 = vsel %vm2598, 16843009, 0
      %v2604 = vsel %vm2600, 16843009, 0
      %v2605 = vsel %vm2602, 16843009, 0
      %v2606 = vunpack.c.0.s8 %v2603
      %v2607 = vunpack.c.0.s8 %v2604
      %v2608 = vunpack.c.0.s8 %v2605
      %v2609 = vpack.c.b16 %v2607, %v2606
      %v2610 = vpack.c.b16 %v2608, %v2608
      %v2611 = vpack.c.b8 %v2610, %v2609
      %v2613 = vshrl.u32 %v2611, 16
      %v2615 = vrot.slane %v2613, 1
      %v2616 = vshll.u32 %v2611, 16
      %v2618 = vrot.slane %v2616, 2
      %v2619 = vor.u32 %v2615, %v2618
      %2620 = vrot.lane.b32.xlu0 %v2619, 126
      %v2621 = vpop.permute.xlu0 %2620
      %vm2622 = vnez %v2621
      %v2623 = vsel %vm2622, 16843009, 0
      %v2624 = vunpack.c.0.s8 %v2623
      %v2625 = vunpack.c.1.s8 %v2623
      %v2626 = vpack.c.b16 %v2624, %v2624
      %v2627 = vpack.c.b8 %v2626, %v2626
      %v2628 = vpack.c.b16 %v2625, %v2625
      %v2629 = vpack.c.b8 %v2628, %v2628
      %s2630 = scalar_lea.vmem %s138, 148
      %2631 = vst.msk [vmem:[%s2630] sm:$0x3] %vm196, %v2627
      %2632 = vst.msk [vmem:[%s2630 + $0x2] sm:$0x3] %vm196, %v2629
      %2633 = vrot.lane.b32.xlu0 %v355, 125
      %v2634 = vpop.permute.xlu0 %2633
      %2635 = vrot.lane.b32.xlu0 %v357, 125
      %v2636 = vpop.permute.xlu0 %2635
      %2637 = vrot.lane.b32.xlu0 %v356, 125
      %v2638 = vpop.permute.xlu0 %2637
      %vm2642 = vcmp.ge.f32.partialorder %v2398, %v2634
      %vm2643 = vcmp.ge.f32.partialorder %v2399, %v2636
      %vm2644 = vcmp.ge.f32.partialorder %v2400, %v2638
      %vm2645 = vmpackc.low %vm2642, %vm2642
      %vm2646 = vmpackc.even %vm2645, %vm2645
      %vm2647 = vmpackc.low %vm2643, %vm2643
      %vm2648 = vmpackc.even %vm2647, %vm2647
      %vm2649 = vmpackc.low %vm2644, %vm2644
      %vm2650 = vmpackc.even %vm2649, %vm2649
      %v2651 = vsel %vm2646, 16843009, 0
      %v2652 = vsel %vm2648, 16843009, 0
      %v2653 = vsel %vm2650, 16843009, 0
      %v2654 = vunpack.c.0.s8 %v2651
      %v2655 = vunpack.c.0.s8 %v2652
      %v2656 = vunpack.c.0.s8 %v2653
      %v2657 = vpack.c.b16 %v2655, %v2654
      %v2658 = vpack.c.b16 %v2656, %v2656
      %v2659 = vpack.c.b8 %v2658, %v2657
      %v2661 = vshrl.u32 %v2659, 24
      %v2663 = vrot.slane %v2661, 1
      %v2664 = vshll.u32 %v2659, 8
      %v2666 = vrot.slane %v2664, 2
      %v2667 = vor.u32 %v2663, %v2666
      %2668 = vrot.lane.b32.xlu0 %v2667, 126
      %v2669 = vpop.permute.xlu0 %2668
      %vm2670 = vnez %v2669
      %v2671 = vsel %vm2670, 16843009, 0
      %v2672 = vunpack.c.0.s8 %v2671
      %v2673 = vunpack.c.1.s8 %v2671
      %v2674 = vpack.c.b16 %v2672, %v2672
      %v2675 = vpack.c.b8 %v2674, %v2674
      %v2676 = vpack.c.b16 %v2673, %v2673
      %v2677 = vpack.c.b8 %v2676, %v2676
      %s2678 = scalar_lea.vmem %s138, 156
      %2679 = vst.msk [vmem:[%s2678] sm:$0x3] %vm196, %v2675
      %2680 = vst.msk [vmem:[%s2678 + $0x2] sm:$0x3] %vm196, %v2677
      %2681 = vrot.lane.b32.xlu0 %v145, 125
      %v2682 = vpop.permute.xlu0 %2681
      %2683 = vrot.lane.b32.xlu0 %v146, 125
      %v2684 = vpop.permute.xlu0 %2683
      %vm2687 = vcmp.ge.f32.partialorder %v2399, %v2682
      %vm2688 = vcmp.ge.f32.partialorder %v2400, %v2684
      %vm2689 = vmpackc.low %vm2687, %vm2687
      %vm2690 = vmpackc.even %vm2689, %vm2689
      %vm2691 = vmpackc.low %vm2688, %vm2688
      %vm2692 = vmpackc.even %vm2691, %vm2691
      %v2693 = vsel %vm2690, 16843009, 0
      %v2694 = vsel %vm2692, 16843009, 0
      %v2695 = vunpack.c.0.s8 %v2693
      %v2696 = vunpack.c.0.s8 %v2694
      %v2697 = vpack.c.b16 %v2696, %v2695
      %v2698 = vpack.c.b8 %v2697, %v2697
      %2699 = vrot.lane.b32.xlu0 %v2698, 126
      %v2700 = vpop.permute.xlu0 %2699
      %vm2701 = vnez %v2700
      %v2702 = vsel %vm2701, 16843009, 0
      %v2703 = vunpack.c.0.s8 %v2702
      %v2704 = vunpack.c.1.s8 %v2702
      %v2705 = vpack.c.b16 %v2703, %v2703
      %v2706 = vpack.c.b8 %v2705, %v2705
      %v2707 = vpack.c.b16 %v2704, %v2704
      %v2708 = vpack.c.b8 %v2707, %v2707
      %s2709 = scalar_lea.vmem %s138, 164
      %2710 = vst.msk [vmem:[%s2709] sm:$0x3] %vm196, %v2706
      %2711 = vst.msk [vmem:[%s2709 + $0x2] sm:$0x3] %vm196, %v2708
      %2712 = vrot.lane.b32.xlu0 %v489, 125
      %v2713 = vpop.permute.xlu0 %2712
      %2714 = vrot.lane.b32.xlu0 %v491, 125
      %v2715 = vpop.permute.xlu0 %2714
      %2716 = vrot.lane.b32.xlu0 %v490, 125
      %v2717 = vpop.permute.xlu0 %2716
      %vm2721 = vcmp.ge.f32.partialorder %v2398, %v2713
      %vm2722 = vcmp.ge.f32.partialorder %v2399, %v2715
      %vm2723 = vcmp.ge.f32.partialorder %v2400, %v2717
      %vm2724 = vmpackc.low %vm2721, %vm2721
      %vm2725 = vmpackc.even %vm2724, %vm2724
      %vm2726 = vmpackc.low %vm2722, %vm2722
      %vm2727 = vmpackc.even %vm2726, %vm2726
      %vm2728 = vmpackc.low %vm2723, %vm2723
      %vm2729 = vmpackc.even %vm2728, %vm2728
      %v2730 = vsel %vm2725, 16843009, 0
      %v2731 = vsel %vm2727, 16843009, 0
      %v2732 = vsel %vm2729, 16843009, 0
      %v2733 = vunpack.c.0.s8 %v2730
      %v2734 = vunpack.c.0.s8 %v2731
      %v2735 = vunpack.c.0.s8 %v2732
      %v2736 = vpack.c.b16 %v2734, %v2733
      %v2737 = vpack.c.b16 %v2735, %v2735
      %v2738 = vpack.c.b8 %v2737, %v2736
      %v2740 = vshrl.u32 %v2738, 8
      %v2742 = vshll.u32 %v2738, 24
      %v2744 = vrot.slane %v2742, 1
      %v2745 = vor.u32 %v2740, %v2744
      %2746 = vrot.lane.b32.xlu0 %v2745, 126
      %v2747 = vpop.permute.xlu0 %2746
      %vm2748 = vnez %v2747
      %v2749 = vsel %vm2748, 16843009, 0
      %v2750 = vunpack.c.0.s8 %v2749
      %v2751 = vunpack.c.1.s8 %v2749
      %v2752 = vpack.c.b16 %v2750, %v2750
      %v2753 = vpack.c.b8 %v2752, %v2752
      %v2754 = vpack.c.b16 %v2751, %v2751
      %v2755 = vpack.c.b8 %v2754, %v2754
      %s2756 = scalar_lea.vmem %s138, 196
      %2757 = vst.msk [vmem:[%s2756] sm:$0x3] %vm196, %v2753
      %2758 = vst.msk [vmem:[%s2756 + $0x2] sm:$0x3] %vm196, %v2755
      %vm2759 = vcmp.ge.f32.partialorder %v2399, %v2713
      %vm2760 = vcmp.ge.f32.partialorder %v2400, %v2715
      %vm2761 = vcmp.ge.f32.partialorder %v2401, %v2717
      %vm2762 = vmpackc.low %vm2759, %vm2759
      %vm2763 = vmpackc.even %vm2762, %vm2762
      %vm2764 = vmpackc.low %vm2760, %vm2760
      %vm2765 = vmpackc.even %vm2764, %vm2764
      %vm2766 = vmpackc.low %vm2761, %vm2761
      %vm2767 = vmpackc.even %vm2766, %vm2766
      %v2768 = vsel %vm2763, 16843009, 0
      %v2769 = vsel %vm2765, 16843009, 0
      %v2770 = vsel %vm2767, 16843009, 0
      %v2771 = vunpack.c.0.s8 %v2768
      %v2772 = vunpack.c.0.s8 %v2769
      %v2773 = vunpack.c.0.s8 %v2770
      %v2774 = vpack.c.b16 %v2772, %v2771
      %v2775 = vpack.c.b16 %v2773, %v2773
      %v2776 = vpack.c.b8 %v2775, %v2774
      %v2778 = vshrl.u32 %v2776, 8
      %v2780 = vshll.u32 %v2776, 24
      %v2782 = vrot.slane %v2780, 1
      %v2783 = vor.u32 %v2778, %v2782
      %2784 = vrot.lane.b32.xlu0 %v2783, 126
      %v2785 = vpop.permute.xlu0 %2784
      %vm2786 = vnez %v2785
      %v2787 = vsel %vm2786, 16843009, 0
      %v2788 = vunpack.c.0.s8 %v2787
      %v2789 = vunpack.c.1.s8 %v2787
      %v2790 = vpack.c.b16 %v2788, %v2788
      %v2791 = vpack.c.b8 %v2790, %v2790
      %v2792 = vpack.c.b16 %v2789, %v2789
      %v2793 = vpack.c.b8 %v2792, %v2792
      %s2794 = scalar_lea.vmem %s138, 288
      %2795 = vst.msk [vmem:[%s2794] sm:$0x3] %vm196, %v2791
      %2796 = vst.msk [vmem:[%s2794 + $0x2] sm:$0x3] %vm196, %v2793
      %vm2797 = vcmp.ge.f32.partialorder %v2398, %v2682
      %vm2798 = vcmp.ge.f32.partialorder %v2399, %v2684
      %vm2799 = vmpackc.low %vm2797, %vm2797
      %vm2800 = vmpackc.even %vm2799, %vm2799
      %vm2801 = vmpackc.low %vm2798, %vm2798
      %vm2802 = vmpackc.even %vm2801, %vm2801
      %v2803 = vsel %vm2800, 16843009, 0
      %v2804 = vsel %vm2802, 16843009, 0
      %v2805 = vunpack.c.0.s8 %v2803
      %v2806 = vunpack.c.0.s8 %v2804
      %v2807 = vpack.c.b16 %v2806, %v2805
      %v2808 = vpack.c.b8 %v2807, %v2807
      %2809 = vrot.lane.b32.xlu0 %v2808, 126
      %v2810 = vpop.permute.xlu0 %2809
      %vm2811 = vnez %v2810
      %v2812 = vsel %vm2811, 16843009, 0
      %v2813 = vunpack.c.0.s8 %v2812
      %v2814 = vunpack.c.1.s8 %v2812
      %v2815 = vpack.c.b16 %v2813, %v2813
      %v2816 = vpack.c.b8 %v2815, %v2815
      %v2817 = vpack.c.b16 %v2814, %v2814
      %v2818 = vpack.c.b8 %v2817, %v2817
      %s2819 = scalar_lea.vmem %s138, 328
      %2820 = vst.msk [vmem:[%s2819] sm:$0x3] %vm196, %v2816
      %2821 = vst.msk [vmem:[%s2819 + $0x2] sm:$0x3] %vm196, %v2818
      %vm2822 = vcmp.ge.f32.partialorder %v2399, %v2403
      %vm2823 = vcmp.ge.f32.partialorder %v2400, %v2405
      %vm2824 = vcmp.ge.f32.partialorder %v2401, %v2407
      %vm2825 = vmpackc.low %vm2822, %vm2822
      %vm2826 = vmpackc.even %vm2825, %vm2825
      %vm2827 = vmpackc.low %vm2823, %vm2823
      %vm2828 = vmpackc.even %vm2827, %vm2827
      %vm2829 = vmpackc.low %vm2824, %vm2824
      %vm2830 = vmpackc.even %vm2829, %vm2829
      %v2831 = vsel %vm2826, 16843009, 0
      %v2832 = vsel %vm2828, 16843009, 0
      %v2833 = vsel %vm2830, 16843009, 0
      %v2834 = vunpack.c.0.s8 %v2831
      %v2835 = vunpack.c.0.s8 %v2832
      %v2836 = vunpack.c.0.s8 %v2833
      %v2837 = vpack.c.b16 %v2835, %v2834
      %v2838 = vpack.c.b16 %v2836, %v2836
      %v2839 = vpack.c.b8 %v2838, %v2837
      %v2841 = vshrl.u32 %v2839, 16
      %v2843 = vshll.u32 %v2839, 16
      %v2845 = vrot.slane %v2843, 1
      %v2846 = vor.u32 %v2841, %v2845
      %2847 = vrot.lane.b32.xlu0 %v2846, 126
      %v2848 = vpop.permute.xlu0 %2847
      %vm2849 = vnez %v2848
      %v2850 = vsel %vm2849, 16843009, 0
      %v2851 = vunpack.c.0.s8 %v2850
      %v2852 = vunpack.c.1.s8 %v2850
      %v2853 = vpack.c.b16 %v2851, %v2851
      %v2854 = vpack.c.b8 %v2853, %v2853
      %v2855 = vpack.c.b16 %v2852, %v2852
      %v2856 = vpack.c.b8 %v2855, %v2855
      %s2857 = scalar_lea.vmem %s138, 444
      %2858 = vst.msk [vmem:[%s2857] sm:$0x3] %vm196, %v2854
      %2859 = vst.msk [vmem:[%s2857 + $0x2] sm:$0x3] %vm196, %v2856
      %v2860 = vld [vmem:[%s147] sm:$0xff]
      %v2861 = vld [vmem:[%s147 + $0x8] sm:$0xff]
      %v2862 = vld [vmem:[%s147 + $0x10] sm:$0xff]
      %v2863 = vld [vmem:[%s147 + $0x18] sm:$0x3]
      %2864 = vrot.lane.b32.xlu0 %v407, 3
      %v2865 = vpop.permute.xlu0 %2864
      %2866 = vrot.lane.b32.xlu0 %v409, 3
      %v2867 = vpop.permute.xlu0 %2866
      %2868 = vrot.lane.b32.xlu0 %v408, 3
      %v2869 = vpop.permute.xlu0 %2868
      %vm2873 = vcmp.ge.f32.partialorder %v2860, %v2865
      %vm2874 = vcmp.ge.f32.partialorder %v2861, %v2867
      %vm2875 = vcmp.ge.f32.partialorder %v2862, %v2869
      %vm2876 = vmpackc.low %vm2873, %vm2873
      %vm2877 = vmpackc.even %vm2876, %vm2876
      %vm2878 = vmpackc.low %vm2874, %vm2874
      %vm2879 = vmpackc.even %vm2878, %vm2878
      %vm2880 = vmpackc.low %vm2875, %vm2875
      %vm2881 = vmpackc.even %vm2880, %vm2880
      %v2882 = vsel %vm2877, 16843009, 0
      %v2883 = vsel %vm2879, 16843009, 0
      %v2884 = vsel %vm2881, 16843009, 0
      %v2885 = vunpack.c.0.s8 %v2882
      %v2886 = vunpack.c.0.s8 %v2883
      %v2887 = vunpack.c.0.s8 %v2884
      %v2888 = vpack.c.b16 %v2886, %v2885
      %v2889 = vpack.c.b16 %v2887, %v2887
      %v2890 = vpack.c.b8 %v2889, %v2888
      %v2892 = vshrl.u32 %v2890, 16
      %v2894 = vshll.u32 %v2890, 16
      %v2896 = vrot.slane %v2894, 1
      %v2897 = vor.u32 %v2892, %v2896
      %2898 = vrot.lane.b32.xlu0 %v2897, 120
      %v2899 = vpop.permute.xlu0 %2898
      %vm2900 = vnez %v2899
      %v2901 = vsel %vm2900, 16843009, 0
      %v2902 = vunpack.c.0.s8 %v2901
      %v2903 = vunpack.c.1.s8 %v2901
      %v2904 = vpack.c.b16 %v2902, %v2902
      %v2905 = vpack.c.b8 %v2904, %v2904
      %v2906 = vpack.c.b16 %v2903, %v2903
      %v2907 = vpack.c.b8 %v2906, %v2906
      %s2908 = scalar_lea.vmem %s138, 120
      %2909 = vst.msk [vmem:[%s2908] sm:$0x3] %vm196, %v2905
      %2910 = vst.msk [vmem:[%s2908 + $0x2] sm:$0x3] %vm196, %v2907
      %2911 = vrot.lane.b32.xlu0 %v304, 3
      %v2912 = vpop.permute.xlu0 %2911
      %2913 = vrot.lane.b32.xlu0 %v306, 3
      %v2914 = vpop.permute.xlu0 %2913
      %2915 = vrot.lane.b32.xlu0 %v305, 3
      %v2916 = vpop.permute.xlu0 %2915
      %vm2920 = vcmp.ge.f32.partialorder %v2860, %v2912
      %vm2921 = vcmp.ge.f32.partialorder %v2861, %v2914
      %vm2922 = vcmp.ge.f32.partialorder %v2862, %v2916
      %vm2923 = vmpackc.low %vm2920, %vm2920
      %vm2924 = vmpackc.even %vm2923, %vm2923
      %vm2925 = vmpackc.low %vm2921, %vm2921
      %vm2926 = vmpackc.even %vm2925, %vm2925
      %vm2927 = vmpackc.low %vm2922, %vm2922
      %vm2928 = vmpackc.even %vm2927, %vm2927
      %v2929 = vsel %vm2924, 16843009, 0
      %v2930 = vsel %vm2926, 16843009, 0
      %v2931 = vsel %vm2928, 16843009, 0
      %v2932 = vunpack.c.0.s8 %v2929
      %v2933 = vunpack.c.0.s8 %v2930
      %v2934 = vunpack.c.0.s8 %v2931
      %v2935 = vpack.c.b16 %v2933, %v2932
      %v2936 = vpack.c.b16 %v2934, %v2934
      %v2937 = vpack.c.b8 %v2936, %v2935
      %v2939 = vshrl.u32 %v2937, 24
      %v2941 = vshll.u32 %v2937, 8
      %v2943 = vrot.slane %v2941, 1
      %v2944 = vor.u32 %v2939, %v2943
      %2945 = vrot.lane.b32.xlu0 %v2944, 120
      %v2946 = vpop.permute.xlu0 %2945
      %vm2947 = vnez %v2946
      %v2948 = vsel %vm2947, 16843009, 0
      %v2949 = vunpack.c.0.s8 %v2948
      %v2950 = vunpack.c.1.s8 %v2948
      %v2951 = vpack.c.b16 %v2949, %v2949
      %v2952 = vpack.c.b8 %v2951, %v2951
      %v2953 = vpack.c.b16 %v2950, %v2950
      %v2954 = vpack.c.b8 %v2953, %v2953
      %s2955 = scalar_lea.vmem %s138, 128
      %2956 = vst.msk [vmem:[%s2955] sm:$0x3] %vm196, %v2952
      %2957 = vst.msk [vmem:[%s2955 + $0x2] sm:$0x3] %vm196, %v2954
      %2958 = vrot.lane.b32.xlu0 %v155, 3
      %v2959 = vpop.permute.xlu0 %2958
      %2960 = vrot.lane.b32.xlu0 %v157, 3
      %v2961 = vpop.permute.xlu0 %2960
      %2962 = vrot.lane.b32.xlu0 %v156, 3
      %v2963 = vpop.permute.xlu0 %2962
      %vm2967 = vcmp.ge.f32.partialorder %v2860, %v2959
      %vm2968 = vcmp.ge.f32.partialorder %v2861, %v2961
      %vm2969 = vcmp.ge.f32.partialorder %v2862, %v2963
      %vm2970 = vmpackc.low %vm2967, %vm2967
      %vm2971 = vmpackc.even %vm2970, %vm2970
      %vm2972 = vmpackc.low %vm2968, %vm2968
      %vm2973 = vmpackc.even %vm2972, %vm2972
      %vm2974 = vmpackc.low %vm2969, %vm2969
      %vm2975 = vmpackc.even %vm2974, %vm2974
      %v2976 = vsel %vm2971, 16843009, 0
      %v2977 = vsel %vm2973, 16843009, 0
      %v2978 = vsel %vm2975, 16843009, 0
      %v2979 = vunpack.c.0.s8 %v2976
      %v2980 = vunpack.c.0.s8 %v2977
      %v2981 = vunpack.c.0.s8 %v2978
      %v2982 = vpack.c.b16 %v2980, %v2979
      %v2983 = vpack.c.b16 %v2981, %v2981
      %v2984 = vpack.c.b8 %v2983, %v2982
      %v2985 = vrot.slane %v2984, 1
      %2986 = vrot.lane.b32.xlu0 %v2985, 120
      %v2987 = vpop.permute.xlu0 %2986
      %vm2988 = vnez %v2987
      %v2989 = vsel %vm2988, 16843009, 0
      %v2990 = vunpack.c.0.s8 %v2989
      %v2991 = vunpack.c.1.s8 %v2989
      %v2992 = vpack.c.b16 %v2990, %v2990
      %v2993 = vpack.c.b8 %v2992, %v2992
      %v2994 = vpack.c.b16 %v2991, %v2991
      %v2995 = vpack.c.b8 %v2994, %v2994
      %s2996 = scalar_lea.vmem %s138, 136
      %2997 = vst.msk [vmem:[%s2996] sm:$0x3] %vm196, %v2993
      %2998 = vst.msk [vmem:[%s2996 + $0x2] sm:$0x3] %vm196, %v2995
      %2999 = vrot.lane.b32.xlu0 %v200, 3
      %v3000 = vpop.permute.xlu0 %2999
      %3001 = vrot.lane.b32.xlu0 %v202, 3
      %v3002 = vpop.permute.xlu0 %3001
      %3003 = vrot.lane.b32.xlu0 %v201, 3
      %v3004 = vpop.permute.xlu0 %3003
      %vm3008 = vcmp.ge.f32.partialorder %v2860, %v3000
      %vm3009 = vcmp.ge.f32.partialorder %v2861, %v3002
      %vm3010 = vcmp.ge.f32.partialorder %v2862, %v3004
      %vm3011 = vmpackc.low %vm3008, %vm3008
      %vm3012 = vmpackc.even %vm3011, %vm3011
      %vm3013 = vmpackc.low %vm3009, %vm3009
      %vm3014 = vmpackc.even %vm3013, %vm3013
      %vm3015 = vmpackc.low %vm3010, %vm3010
      %vm3016 = vmpackc.even %vm3015, %vm3015
      %v3017 = vsel %vm3012, 16843009, 0
      %v3018 = vsel %vm3014, 16843009, 0
      %v3019 = vsel %vm3016, 16843009, 0
      %v3020 = vunpack.c.0.s8 %v3017
      %v3021 = vunpack.c.0.s8 %v3018
      %v3022 = vunpack.c.0.s8 %v3019
      %v3023 = vpack.c.b16 %v3021, %v3020
      %v3024 = vpack.c.b16 %v3022, %v3022
      %v3025 = vpack.c.b8 %v3024, %v3023
      %v3027 = vshrl.u32 %v3025, 8
      %v3029 = vrot.slane %v3027, 1
      %v3030 = vshll.u32 %v3025, 24
      %v3032 = vrot.slane %v3030, 2
      %v3033 = vor.u32 %v3029, %v3032
      %3034 = vrot.lane.b32.xlu0 %v3033, 120
      %v3035 = vpop.permute.xlu0 %3034
      %vm3036 = vnez %v3035
      %v3037 = vsel %vm3036, 16843009, 0
      %v3038 = vunpack.c.0.s8 %v3037
      %v3039 = vunpack.c.1.s8 %v3037
      %v3040 = vpack.c.b16 %v3038, %v3038
      %v3041 = vpack.c.b8 %v3040, %v3040
      %v3042 = vpack.c.b16 %v3039, %v3039
      %v3043 = vpack.c.b8 %v3042, %v3042
      %s3044 = scalar_lea.vmem %s138, 144
      %3045 = vst.msk [vmem:[%s3044] sm:$0x3] %vm196, %v3041
      %3046 = vst.msk [vmem:[%s3044 + $0x2] sm:$0x3] %vm196, %v3043
      %3047 = vrot.lane.b32.xlu0 %v252, 3
      %v3048 = vpop.permute.xlu0 %3047
      %3049 = vrot.lane.b32.xlu0 %v254, 3
      %v3050 = vpop.permute.xlu0 %3049
      %3051 = vrot.lane.b32.xlu0 %v253, 3
      %v3052 = vpop.permute.xlu0 %3051
      %vm3056 = vcmp.ge.f32.partialorder %v2860, %v3048
      %vm3057 = vcmp.ge.f32.partialorder %v2861, %v3050
      %vm3058 = vcmp.ge.f32.partialorder %v2862, %v3052
      %vm3059 = vmpackc.low %vm3056, %vm3056
      %vm3060 = vmpackc.even %vm3059, %vm3059
      %vm3061 = vmpackc.low %vm3057, %vm3057
      %vm3062 = vmpackc.even %vm3061, %vm3061
      %vm3063 = vmpackc.low %vm3058, %vm3058
      %vm3064 = vmpackc.even %vm3063, %vm3063
      %v3065 = vsel %vm3060, 16843009, 0
      %v3066 = vsel %vm3062, 16843009, 0
      %v3067 = vsel %vm3064, 16843009, 0
      %v3068 = vunpack.c.0.s8 %v3065
      %v3069 = vunpack.c.0.s8 %v3066
      %v3070 = vunpack.c.0.s8 %v3067
      %v3071 = vpack.c.b16 %v3069, %v3068
      %v3072 = vpack.c.b16 %v3070, %v3070
      %v3073 = vpack.c.b8 %v3072, %v3071
      %v3075 = vshrl.u32 %v3073, 16
      %v3077 = vrot.slane %v3075, 1
      %v3078 = vshll.u32 %v3073, 16
      %v3080 = vrot.slane %v3078, 2
      %v3081 = vor.u32 %v3077, %v3080
      %3082 = vrot.lane.b32.xlu0 %v3081, 120
      %v3083 = vpop.permute.xlu0 %3082
      %vm3084 = vnez %v3083
      %v3085 = vsel %vm3084, 16843009, 0
      %v3086 = vunpack.c.0.s8 %v3085
      %v3087 = vunpack.c.1.s8 %v3085
      %v3088 = vpack.c.b16 %v3086, %v3086
      %v3089 = vpack.c.b8 %v3088, %v3088
      %v3090 = vpack.c.b16 %v3087, %v3087
      %v3091 = vpack.c.b8 %v3090, %v3090
      %s3092 = scalar_lea.vmem %s138, 152
      %3093 = vst.msk [vmem:[%s3092] sm:$0x3] %vm196, %v3089
      %3094 = vst.msk [vmem:[%s3092 + $0x2] sm:$0x3] %vm196, %v3091
      %3095 = vrot.lane.b32.xlu0 %v355, 3
      %v3096 = vpop.permute.xlu0 %3095
      %3097 = vrot.lane.b32.xlu0 %v357, 3
      %v3098 = vpop.permute.xlu0 %3097
      %3099 = vrot.lane.b32.xlu0 %v356, 3
      %v3100 = vpop.permute.xlu0 %3099
      %vm3104 = vcmp.ge.f32.partialorder %v2860, %v3096
      %vm3105 = vcmp.ge.f32.partialorder %v2861, %v3098
      %vm3106 = vcmp.ge.f32.partialorder %v2862, %v3100
      %vm3107 = vmpackc.low %vm3104, %vm3104
      %vm3108 = vmpackc.even %vm3107, %vm3107
      %vm3109 = vmpackc.low %vm3105, %vm3105
      %vm3110 = vmpackc.even %vm3109, %vm3109
      %vm3111 = vmpackc.low %vm3106, %vm3106
      %vm3112 = vmpackc.even %vm3111, %vm3111
      %v3113 = vsel %vm3108, 16843009, 0
      %v3114 = vsel %vm3110, 16843009, 0
      %v3115 = vsel %vm3112, 16843009, 0
      %v3116 = vunpack.c.0.s8 %v3113
      %v3117 = vunpack.c.0.s8 %v3114
      %v3118 = vunpack.c.0.s8 %v3115
      %v3119 = vpack.c.b16 %v3117, %v3116
      %v3120 = vpack.c.b16 %v3118, %v3118
      %v3121 = vpack.c.b8 %v3120, %v3119
      %v3123 = vshrl.u32 %v3121, 24
      %v3125 = vrot.slane %v3123, 1
      %v3126 = vshll.u32 %v3121, 8
      %v3128 = vrot.slane %v3126, 2
      %v3129 = vor.u32 %v3125, %v3128
      %3130 = vrot.lane.b32.xlu0 %v3129, 120
      %v3131 = vpop.permute.xlu0 %3130
      %vm3132 = vnez %v3131
      %v3133 = vsel %vm3132, 16843009, 0
      %v3134 = vunpack.c.0.s8 %v3133
      %v3135 = vunpack.c.1.s8 %v3133
      %v3136 = vpack.c.b16 %v3134, %v3134
      %v3137 = vpack.c.b8 %v3136, %v3136
      %v3138 = vpack.c.b16 %v3135, %v3135
      %v3139 = vpack.c.b8 %v3138, %v3138
      %s3140 = scalar_lea.vmem %s138, 160
      %3141 = vst.msk [vmem:[%s3140] sm:$0x3] %vm196, %v3137
      %3142 = vst.msk [vmem:[%s3140 + $0x2] sm:$0x3] %vm196, %v3139
      %3143 = vrot.lane.b32.xlu0 %v145, 3
      %v3144 = vpop.permute.xlu0 %3143
      %3145 = vrot.lane.b32.xlu0 %v146, 3
      %v3146 = vpop.permute.xlu0 %3145
      %vm3149 = vcmp.ge.f32.partialorder %v2861, %v3144
      %vm3150 = vcmp.ge.f32.partialorder %v2862, %v3146
      %vm3151 = vmpackc.low %vm3149, %vm3149
      %vm3152 = vmpackc.even %vm3151, %vm3151
      %vm3153 = vmpackc.low %vm3150, %vm3150
      %vm3154 = vmpackc.even %vm3153, %vm3153
      %v3155 = vsel %vm3152, 16843009, 0
      %v3156 = vsel %vm3154, 16843009, 0
      %v3157 = vunpack.c.0.s8 %v3155
      %v3158 = vunpack.c.0.s8 %v3156
      %v3159 = vpack.c.b16 %v3158, %v3157
      %v3160 = vpack.c.b8 %v3159, %v3159
      %3161 = vrot.lane.b32.xlu0 %v3160, 120
      %v3162 = vpop.permute.xlu0 %3161
      %vm3163 = vnez %v3162
      %v3164 = vsel %vm3163, 16843009, 0
      %v3165 = vunpack.c.0.s8 %v3164
      %v3166 = vunpack.c.1.s8 %v3164
      %v3167 = vpack.c.b16 %v3165, %v3165
      %v3168 = vpack.c.b8 %v3167, %v3167
      %v3169 = vpack.c.b16 %v3166, %v3166
      %v3170 = vpack.c.b8 %v3169, %v3169
      %s3171 = scalar_lea.vmem %s138, 188
      %3172 = vst.msk [vmem:[%s3171] sm:$0x3] %vm196, %v3168
      %3173 = vst.msk [vmem:[%s3171 + $0x2] sm:$0x3] %vm196, %v3170
      %3174 = vrot.lane.b32.xlu0 %v489, 3
      %v3175 = vpop.permute.xlu0 %3174
      %3176 = vrot.lane.b32.xlu0 %v491, 3
      %v3177 = vpop.permute.xlu0 %3176
      %3178 = vrot.lane.b32.xlu0 %v490, 3
      %v3179 = vpop.permute.xlu0 %3178
      %vm3183 = vcmp.ge.f32.partialorder %v2860, %v3175
      %vm3184 = vcmp.ge.f32.partialorder %v2861, %v3177
      %vm3185 = vcmp.ge.f32.partialorder %v2862, %v3179
      %vm3186 = vmpackc.low %vm3183, %vm3183
      %vm3187 = vmpackc.even %vm3186, %vm3186
      %vm3188 = vmpackc.low %vm3184, %vm3184
      %vm3189 = vmpackc.even %vm3188, %vm3188
      %vm3190 = vmpackc.low %vm3185, %vm3185
      %vm3191 = vmpackc.even %vm3190, %vm3190
      %v3192 = vsel %vm3187, 16843009, 0
      %v3193 = vsel %vm3189, 16843009, 0
      %v3194 = vsel %vm3191, 16843009, 0
      %v3195 = vunpack.c.0.s8 %v3192
      %v3196 = vunpack.c.0.s8 %v3193
      %v3197 = vunpack.c.0.s8 %v3194
      %v3198 = vpack.c.b16 %v3196, %v3195
      %v3199 = vpack.c.b16 %v3197, %v3197
      %v3200 = vpack.c.b8 %v3199, %v3198
      %v3202 = vshrl.u32 %v3200, 8
      %v3204 = vshll.u32 %v3200, 24
      %v3206 = vrot.slane %v3204, 1
      %v3207 = vor.u32 %v3202, %v3206
      %3208 = vrot.lane.b32.xlu0 %v3207, 120
      %v3209 = vpop.permute.xlu0 %3208
      %vm3210 = vnez %v3209
      %v3211 = vsel %vm3210, 16843009, 0
      %v3212 = vunpack.c.0.s8 %v3211
      %v3213 = vunpack.c.1.s8 %v3211
      %v3214 = vpack.c.b16 %v3212, %v3212
      %v3215 = vpack.c.b8 %v3214, %v3214
      %v3216 = vpack.c.b16 %v3213, %v3213
      %v3217 = vpack.c.b8 %v3216, %v3216
      %s3218 = scalar_lea.vmem %s138, 220
      %3219 = vst.msk [vmem:[%s3218] sm:$0x3] %vm196, %v3215
      %3220 = vst.msk [vmem:[%s3218 + $0x2] sm:$0x3] %vm196, %v3217
      %vm3221 = vcmp.ge.f32.partialorder %v2861, %v3175
      %vm3222 = vcmp.ge.f32.partialorder %v2862, %v3177
      %vm3223 = vcmp.ge.f32.partialorder %v2863, %v3179
      %vm3224 = vmpackc.low %vm3221, %vm3221
      %vm3225 = vmpackc.even %vm3224, %vm3224
      %vm3226 = vmpackc.low %vm3222, %vm3222
      %vm3227 = vmpackc.even %vm3226, %vm3226
      %vm3228 = vmpackc.low %vm3223, %vm3223
      %vm3229 = vmpackc.even %vm3228, %vm3228
      %v3230 = vsel %vm3225, 16843009, 0
      %v3231 = vsel %vm3227, 16843009, 0
      %v3232 = vsel %vm3229, 16843009, 0
      %v3233 = vunpack.c.0.s8 %v3230
      %v3234 = vunpack.c.0.s8 %v3231
      %v3235 = vunpack.c.0.s8 %v3232
      %v3236 = vpack.c.b16 %v3234, %v3233
      %v3237 = vpack.c.b16 %v3235, %v3235
      %v3238 = vpack.c.b8 %v3237, %v3236
      %v3240 = vshrl.u32 %v3238, 8
      %v3242 = vshll.u32 %v3238, 24
      %v3244 = vrot.slane %v3242, 1
      %v3245 = vor.u32 %v3240, %v3244
      %3246 = vrot.lane.b32.xlu0 %v3245, 120
      %v3247 = vpop.permute.xlu0 %3246
      %vm3248 = vnez %v3247
      %v3249 = vsel %vm3248, 16843009, 0
      %v3250 = vunpack.c.0.s8 %v3249
      %v3251 = vunpack.c.1.s8 %v3249
      %v3252 = vpack.c.b16 %v3250, %v3250
      %v3253 = vpack.c.b8 %v3252, %v3252
      %v3254 = vpack.c.b16 %v3251, %v3251
      %v3255 = vpack.c.b8 %v3254, %v3254
      %s3256 = scalar_lea.vmem %s138, 312
      %3257 = vst.msk [vmem:[%s3256] sm:$0x3] %vm196, %v3253
      %3258 = vst.msk [vmem:[%s3256 + $0x2] sm:$0x3] %vm196, %v3255
      %vm3259 = vcmp.ge.f32.partialorder %v2860, %v3144
      %vm3260 = vcmp.ge.f32.partialorder %v2861, %v3146
      %vm3261 = vmpackc.low %vm3259, %vm3259
      %vm3262 = vmpackc.even %vm3261, %vm3261
      %vm3263 = vmpackc.low %vm3260, %vm3260
      %vm3264 = vmpackc.even %vm3263, %vm3263
      %v3265 = vsel %vm3262, 16843009, 0
      %v3266 = vsel %vm3264, 16843009, 0
      %v3267 = vunpack.c.0.s8 %v3265
      %v3268 = vunpack.c.0.s8 %v3266
      %v3269 = vpack.c.b16 %v3268, %v3267
      %v3270 = vpack.c.b8 %v3269, %v3269
      %3271 = vrot.lane.b32.xlu0 %v3270, 120
      %v3272 = vpop.permute.xlu0 %3271
      %vm3273 = vnez %v3272
      %v3274 = vsel %vm3273, 16843009, 0
      %v3275 = vunpack.c.0.s8 %v3274
      %v3276 = vunpack.c.1.s8 %v3274
      %v3277 = vpack.c.b16 %v3275, %v3275
      %v3278 = vpack.c.b8 %v3277, %v3277
      %v3279 = vpack.c.b16 %v3276, %v3276
      %v3280 = vpack.c.b8 %v3279, %v3279
      %s3281 = scalar_lea.vmem %s138, 352
      %3282 = vst.msk [vmem:[%s3281] sm:$0x3] %vm196, %v3278
      %3283 = vst.msk [vmem:[%s3281 + $0x2] sm:$0x3] %vm196, %v3280
      %vm3284 = vcmp.ge.f32.partialorder %v2861, %v2865
      %vm3285 = vcmp.ge.f32.partialorder %v2862, %v2867
      %vm3286 = vcmp.ge.f32.partialorder %v2863, %v2869
      %vm3287 = vmpackc.low %vm3284, %vm3284
      %vm3288 = vmpackc.even %vm3287, %vm3287
      %vm3289 = vmpackc.low %vm3285, %vm3285
      %vm3290 = vmpackc.even %vm3289, %vm3289
      %vm3291 = vmpackc.low %vm3286, %vm3286
      %vm3292 = vmpackc.even %vm3291, %vm3291
      %v3293 = vsel %vm3288, 16843009, 0
      %v3294 = vsel %vm3290, 16843009, 0
      %v3295 = vsel %vm3292, 16843009, 0
      %v3296 = vunpack.c.0.s8 %v3293
      %v3297 = vunpack.c.0.s8 %v3294
      %v3298 = vunpack.c.0.s8 %v3295
      %v3299 = vpack.c.b16 %v3297, %v3296
      %v3300 = vpack.c.b16 %v3298, %v3298
      %v3301 = vpack.c.b8 %v3300, %v3299
      %v3303 = vshrl.u32 %v3301, 16
      %v3305 = vshll.u32 %v3301, 16
      %v3307 = vrot.slane %v3305, 1
      %v3308 = vor.u32 %v3303, %v3307
      %3309 = vrot.lane.b32.xlu0 %v3308, 120
      %v3310 = vpop.permute.xlu0 %3309
      %vm3311 = vnez %v3310
      %v3312 = vsel %vm3311, 16843009, 0
      %v3313 = vunpack.c.0.s8 %v3312
      %v3314 = vunpack.c.1.s8 %v3312
      %v3315 = vpack.c.b16 %v3313, %v3313
      %v3316 = vpack.c.b8 %v3315, %v3315
      %v3317 = vpack.c.b16 %v3314, %v3314
      %v3318 = vpack.c.b8 %v3317, %v3317
      %s3319 = scalar_lea.vmem %s138, 468
      %3320 = vst.msk [vmem:[%s3319] sm:$0x3] %vm196, %v3316
      %3321 = vst.msk [vmem:[%s3319 + $0x2] sm:$0x3] %vm196, %v3318
      %v3322 = vld [vmem:[%s147] sm:$0xff]
      %v3323 = vld [vmem:[%s147 + $0x8] sm:$0xff]
      %v3324 = vld [vmem:[%s147 + $0x10] sm:$0xff]
      %v3325 = vld [vmem:[%s147 + $0x18] sm:$0x3]
      %3326 = vrot.lane.b32.xlu0 %v489, 124
      %v3327 = vpop.permute.xlu0 %3326
      %3328 = vrot.lane.b32.xlu0 %v491, 124
      %v3329 = vpop.permute.xlu0 %3328
      %3330 = vrot.lane.b32.xlu0 %v490, 124
      %v3331 = vpop.permute.xlu0 %3330
      %vm3335 = vcmp.ge.f32.partialorder %v3322, %v3327
      %vm3336 = vcmp.ge.f32.partialorder %v3323, %v3329
      %vm3337 = vcmp.ge.f32.partialorder %v3324, %v3331
      %vm3338 = vmpackc.low %vm3335, %vm3335
      %vm3339 = vmpackc.even %vm3338, %vm3338
      %vm3340 = vmpackc.low %vm3336, %vm3336
      %vm3341 = vmpackc.even %vm3340, %vm3340
      %vm3342 = vmpackc.low %vm3337, %vm3337
      %vm3343 = vmpackc.even %vm3342, %vm3342
      %v3344 = vsel %vm3339, 16843009, 0
      %v3345 = vsel %vm3341, 16843009, 0
      %v3346 = vsel %vm3343, 16843009, 0
      %v3347 = vunpack.c.0.s8 %v3344
      %v3348 = vunpack.c.0.s8 %v3345
      %v3349 = vunpack.c.0.s8 %v3346
      %v3350 = vpack.c.b16 %v3348, %v3347
      %v3351 = vpack.c.b16 %v3349, %v3349
      %v3352 = vpack.c.b8 %v3351, %v3350
      %v3354 = vshrl.u32 %v3352, 8
      %v3356 = vshll.u32 %v3352, 24
      %v3358 = vrot.slane %v3356, 1
      %v3359 = vor.u32 %v3354, %v3358
      %3360 = vrot.lane.b32.xlu0 %v3359, 127
      %v3361 = vpop.permute.xlu0 %3360
      %vm3362 = vnez %v3361
      %v3363 = vsel %vm3362, 16843009, 0
      %v3364 = vunpack.c.0.s8 %v3363
      %v3365 = vunpack.c.1.s8 %v3363
      %v3366 = vpack.c.b16 %v3364, %v3364
      %v3367 = vpack.c.b8 %v3366, %v3366
      %v3368 = vpack.c.b16 %v3365, %v3365
      %v3369 = vpack.c.b8 %v3368, %v3368
      %s3370 = scalar_lea.vmem %s138, 192
      %3371 = vst.msk [vmem:[%s3370] sm:$0x3] %vm196, %v3367
      %3372 = vst.msk [vmem:[%s3370 + $0x2] sm:$0x3] %vm196, %v3369
      %3373 = vrot.lane.b32.xlu0 %v407, 124
      %v3374 = vpop.permute.xlu0 %3373
      %3375 = vrot.lane.b32.xlu0 %v409, 124
      %v3376 = vpop.permute.xlu0 %3375
      %3377 = vrot.lane.b32.xlu0 %v408, 124
      %v3378 = vpop.permute.xlu0 %3377
      %vm3382 = vcmp.ge.f32.partialorder %v3322, %v3374
      %vm3383 = vcmp.ge.f32.partialorder %v3323, %v3376
      %vm3384 = vcmp.ge.f32.partialorder %v3324, %v3378
      %vm3385 = vmpackc.low %vm3382, %vm3382
      %vm3386 = vmpackc.even %vm3385, %vm3385
      %vm3387 = vmpackc.low %vm3383, %vm3383
      %vm3388 = vmpackc.even %vm3387, %vm3387
      %vm3389 = vmpackc.low %vm3384, %vm3384
      %vm3390 = vmpackc.even %vm3389, %vm3389
      %v3391 = vsel %vm3386, 16843009, 0
      %v3392 = vsel %vm3388, 16843009, 0
      %v3393 = vsel %vm3390, 16843009, 0
      %v3394 = vunpack.c.0.s8 %v3391
      %v3395 = vunpack.c.0.s8 %v3392
      %v3396 = vunpack.c.0.s8 %v3393
      %v3397 = vpack.c.b16 %v3395, %v3394
      %v3398 = vpack.c.b16 %v3396, %v3396
      %v3399 = vpack.c.b8 %v3398, %v3397
      %v3401 = vshrl.u32 %v3399, 16
      %v3403 = vshll.u32 %v3399, 16
      %v3405 = vrot.slane %v3403, 1
      %v3406 = vor.u32 %v3401, %v3405
      %3407 = vrot.lane.b32.xlu0 %v3406, 127
      %v3408 = vpop.permute.xlu0 %3407
      %vm3409 = vnez %v3408
      %v3410 = vsel %vm3409, 16843009, 0
      %v3411 = vunpack.c.0.s8 %v3410
      %v3412 = vunpack.c.1.s8 %v3410
      %v3413 = vpack.c.b16 %v3411, %v3411
      %v3414 = vpack.c.b8 %v3413, %v3413
      %v3415 = vpack.c.b16 %v3412, %v3412
      %v3416 = vpack.c.b8 %v3415, %v3415
      %s3417 = scalar_lea.vmem %s138, 228
      %3418 = vst.msk [vmem:[%s3417] sm:$0x3] %vm196, %v3414
      %3419 = vst.msk [vmem:[%s3417 + $0x2] sm:$0x3] %vm196, %v3416
      %3420 = vrot.lane.b32.xlu0 %v304, 124
      %v3421 = vpop.permute.xlu0 %3420
      %3422 = vrot.lane.b32.xlu0 %v306, 124
      %v3423 = vpop.permute.xlu0 %3422
      %3424 = vrot.lane.b32.xlu0 %v305, 124
      %v3425 = vpop.permute.xlu0 %3424
      %vm3429 = vcmp.ge.f32.partialorder %v3322, %v3421
      %vm3430 = vcmp.ge.f32.partialorder %v3323, %v3423
      %vm3431 = vcmp.ge.f32.partialorder %v3324, %v3425
      %vm3432 = vmpackc.low %vm3429, %vm3429
      %vm3433 = vmpackc.even %vm3432, %vm3432
      %vm3434 = vmpackc.low %vm3430, %vm3430
      %vm3435 = vmpackc.even %vm3434, %vm3434
      %vm3436 = vmpackc.low %vm3431, %vm3431
      %vm3437 = vmpackc.even %vm3436, %vm3436
      %v3438 = vsel %vm3433, 16843009, 0
      %v3439 = vsel %vm3435, 16843009, 0
      %v3440 = vsel %vm3437, 16843009, 0
      %v3441 = vunpack.c.0.s8 %v3438
      %v3442 = vunpack.c.0.s8 %v3439
      %v3443 = vunpack.c.0.s8 %v3440
      %v3444 = vpack.c.b16 %v3442, %v3441
      %v3445 = vpack.c.b16 %v3443, %v3443
      %v3446 = vpack.c.b8 %v3445, %v3444
      %v3448 = vshrl.u32 %v3446, 24
      %v3450 = vshll.u32 %v3446, 8
      %v3452 = vrot.slane %v3450, 1
      %v3453 = vor.u32 %v3448, %v3452
      %3454 = vrot.lane.b32.xlu0 %v3453, 127
      %v3455 = vpop.permute.xlu0 %3454
      %vm3456 = vnez %v3455
      %v3457 = vsel %vm3456, 16843009, 0
      %v3458 = vunpack.c.0.s8 %v3457
      %v3459 = vunpack.c.1.s8 %v3457
      %v3460 = vpack.c.b16 %v3458, %v3458
      %v3461 = vpack.c.b8 %v3460, %v3460
      %v3462 = vpack.c.b16 %v3459, %v3459
      %v3463 = vpack.c.b8 %v3462, %v3462
      %s3464 = scalar_lea.vmem %s138, 236
      %3465 = vst.msk [vmem:[%s3464] sm:$0x3] %vm196, %v3461
      %3466 = vst.msk [vmem:[%s3464 + $0x2] sm:$0x3] %vm196, %v3463
      %3467 = vrot.lane.b32.xlu0 %v155, 124
      %v3468 = vpop.permute.xlu0 %3467
      %3469 = vrot.lane.b32.xlu0 %v157, 124
      %v3470 = vpop.permute.xlu0 %3469
      %3471 = vrot.lane.b32.xlu0 %v156, 124
      %v3472 = vpop.permute.xlu0 %3471
      %vm3476 = vcmp.ge.f32.partialorder %v3322, %v3468
      %vm3477 = vcmp.ge.f32.partialorder %v3323, %v3470
      %vm3478 = vcmp.ge.f32.partialorder %v3324, %v3472
      %vm3479 = vmpackc.low %vm3476, %vm3476
      %vm3480 = vmpackc.even %vm3479, %vm3479
      %vm3481 = vmpackc.low %vm3477, %vm3477
      %vm3482 = vmpackc.even %vm3481, %vm3481
      %vm3483 = vmpackc.low %vm3478, %vm3478
      %vm3484 = vmpackc.even %vm3483, %vm3483
      %v3485 = vsel %vm3480, 16843009, 0
      %v3486 = vsel %vm3482, 16843009, 0
      %v3487 = vsel %vm3484, 16843009, 0
      %v3488 = vunpack.c.0.s8 %v3485
      %v3489 = vunpack.c.0.s8 %v3486
      %v3490 = vunpack.c.0.s8 %v3487
      %v3491 = vpack.c.b16 %v3489, %v3488
      %v3492 = vpack.c.b16 %v3490, %v3490
      %v3493 = vpack.c.b8 %v3492, %v3491
      %v3494 = vrot.slane %v3493, 1
      %3495 = vrot.lane.b32.xlu0 %v3494, 127
      %v3496 = vpop.permute.xlu0 %3495
      %vm3497 = vnez %v3496
      %v3498 = vsel %vm3497, 16843009, 0
      %v3499 = vunpack.c.0.s8 %v3498
      %v3500 = vunpack.c.1.s8 %v3498
      %v3501 = vpack.c.b16 %v3499, %v3499
      %v3502 = vpack.c.b8 %v3501, %v3501
      %v3503 = vpack.c.b16 %v3500, %v3500
      %v3504 = vpack.c.b8 %v3503, %v3503
      %s3505 = scalar_lea.vmem %s138, 244
      %3506 = vst.msk [vmem:[%s3505] sm:$0x3] %vm196, %v3502
      %3507 = vst.msk [vmem:[%s3505 + $0x2] sm:$0x3] %vm196, %v3504
      %3508 = vrot.lane.b32.xlu0 %v200, 124
      %v3509 = vpop.permute.xlu0 %3508
      %3510 = vrot.lane.b32.xlu0 %v202, 124
      %v3511 = vpop.permute.xlu0 %3510
      %3512 = vrot.lane.b32.xlu0 %v201, 124
      %v3513 = vpop.permute.xlu0 %3512
      %vm3517 = vcmp.ge.f32.partialorder %v3322, %v3509
      %vm3518 = vcmp.ge.f32.partialorder %v3323, %v3511
      %vm3519 = vcmp.ge.f32.partialorder %v3324, %v3513
      %vm3520 = vmpackc.low %vm3517, %vm3517
      %vm3521 = vmpackc.even %vm3520, %vm3520
      %vm3522 = vmpackc.low %vm3518, %vm3518
      %vm3523 = vmpackc.even %vm3522, %vm3522
      %vm3524 = vmpackc.low %vm3519, %vm3519
      %vm3525 = vmpackc.even %vm3524, %vm3524
      %v3526 = vsel %vm3521, 16843009, 0
      %v3527 = vsel %vm3523, 16843009, 0
      %v3528 = vsel %vm3525, 16843009, 0
      %v3529 = vunpack.c.0.s8 %v3526
      %v3530 = vunpack.c.0.s8 %v3527
      %v3531 = vunpack.c.0.s8 %v3528
      %v3532 = vpack.c.b16 %v3530, %v3529
      %v3533 = vpack.c.b16 %v3531, %v3531
      %v3534 = vpack.c.b8 %v3533, %v3532
      %v3536 = vshrl.u32 %v3534, 8
      %v3538 = vrot.slane %v3536, 1
      %v3539 = vshll.u32 %v3534, 24
      %v3541 = vrot.slane %v3539, 2
      %v3542 = vor.u32 %v3538, %v3541
      %3543 = vrot.lane.b32.xlu0 %v3542, 127
      %v3544 = vpop.permute.xlu0 %3543
      %vm3545 = vnez %v3544
      %v3546 = vsel %vm3545, 16843009, 0
      %v3547 = vunpack.c.0.s8 %v3546
      %v3548 = vunpack.c.1.s8 %v3546
      %v3549 = vpack.c.b16 %v3547, %v3547
      %v3550 = vpack.c.b8 %v3549, %v3549
      %v3551 = vpack.c.b16 %v3548, %v3548
      %v3552 = vpack.c.b8 %v3551, %v3551
      %s3553 = scalar_lea.vmem %s138, 252
      %3554 = vst.msk [vmem:[%s3553] sm:$0x3] %vm196, %v3550
      %3555 = vst.msk [vmem:[%s3553 + $0x2] sm:$0x3] %vm196, %v3552
      %3556 = vrot.lane.b32.xlu0 %v252, 124
      %v3557 = vpop.permute.xlu0 %3556
      %3558 = vrot.lane.b32.xlu0 %v254, 124
      %v3559 = vpop.permute.xlu0 %3558
      %3560 = vrot.lane.b32.xlu0 %v253, 124
      %v3561 = vpop.permute.xlu0 %3560
      %vm3565 = vcmp.ge.f32.partialorder %v3322, %v3557
      %vm3566 = vcmp.ge.f32.partialorder %v3323, %v3559
      %vm3567 = vcmp.ge.f32.partialorder %v3324, %v3561
      %vm3568 = vmpackc.low %vm3565, %vm3565
      %vm3569 = vmpackc.even %vm3568, %vm3568
      %vm3570 = vmpackc.low %vm3566, %vm3566
      %vm3571 = vmpackc.even %vm3570, %vm3570
      %vm3572 = vmpackc.low %vm3567, %vm3567
      %vm3573 = vmpackc.even %vm3572, %vm3572
      %v3574 = vsel %vm3569, 16843009, 0
      %v3575 = vsel %vm3571, 16843009, 0
      %v3576 = vsel %vm3573, 16843009, 0
      %v3577 = vunpack.c.0.s8 %v3574
      %v3578 = vunpack.c.0.s8 %v3575
      %v3579 = vunpack.c.0.s8 %v3576
      %v3580 = vpack.c.b16 %v3578, %v3577
      %v3581 = vpack.c.b16 %v3579, %v3579
      %v3582 = vpack.c.b8 %v3581, %v3580
      %v3584 = vshrl.u32 %v3582, 16
      %v3586 = vrot.slane %v3584, 1
      %v3587 = vshll.u32 %v3582, 16
      %v3589 = vrot.slane %v3587, 2
      %v3590 = vor.u32 %v3586, %v3589
      %3591 = vrot.lane.b32.xlu0 %v3590, 127
      %v3592 = vpop.permute.xlu0 %3591
      %vm3593 = vnez %v3592
      %v3594 = vsel %vm3593, 16843009, 0
      %v3595 = vunpack.c.0.s8 %v3594
      %v3596 = vunpack.c.1.s8 %v3594
      %v3597 = vpack.c.b16 %v3595, %v3595
      %v3598 = vpack.c.b8 %v3597, %v3597
      %v3599 = vpack.c.b16 %v3596, %v3596
      %v3600 = vpack.c.b8 %v3599, %v3599
      %s3601 = scalar_lea.vmem %s138, 260
      %3602 = vst.msk [vmem:[%s3601] sm:$0x3] %vm196, %v3598
      %3603 = vst.msk [vmem:[%s3601 + $0x2] sm:$0x3] %vm196, %v3600
      %3604 = vrot.lane.b32.xlu0 %v355, 124
      %v3605 = vpop.permute.xlu0 %3604
      %3606 = vrot.lane.b32.xlu0 %v357, 124
      %v3607 = vpop.permute.xlu0 %3606
      %3608 = vrot.lane.b32.xlu0 %v356, 124
      %v3609 = vpop.permute.xlu0 %3608
      %vm3613 = vcmp.ge.f32.partialorder %v3322, %v3605
      %vm3614 = vcmp.ge.f32.partialorder %v3323, %v3607
      %vm3615 = vcmp.ge.f32.partialorder %v3324, %v3609
      %vm3616 = vmpackc.low %vm3613, %vm3613
      %vm3617 = vmpackc.even %vm3616, %vm3616
      %vm3618 = vmpackc.low %vm3614, %vm3614
      %vm3619 = vmpackc.even %vm3618, %vm3618
      %vm3620 = vmpackc.low %vm3615, %vm3615
      %vm3621 = vmpackc.even %vm3620, %vm3620
      %v3622 = vsel %vm3617, 16843009, 0
      %v3623 = vsel %vm3619, 16843009, 0
      %v3624 = vsel %vm3621, 16843009, 0
      %v3625 = vunpack.c.0.s8 %v3622
      %v3626 = vunpack.c.0.s8 %v3623
      %v3627 = vunpack.c.0.s8 %v3624
      %v3628 = vpack.c.b16 %v3626, %v3625
      %v3629 = vpack.c.b16 %v3627, %v3627
      %v3630 = vpack.c.b8 %v3629, %v3628
      %v3632 = vshrl.u32 %v3630, 24
      %v3634 = vrot.slane %v3632, 1
      %v3635 = vshll.u32 %v3630, 8
      %v3637 = vrot.slane %v3635, 2
      %v3638 = vor.u32 %v3634, %v3637
      %3639 = vrot.lane.b32.xlu0 %v3638, 127
      %v3640 = vpop.permute.xlu0 %3639
      %vm3641 = vnez %v3640
      %v3642 = vsel %vm3641, 16843009, 0
      %v3643 = vunpack.c.0.s8 %v3642
      %v3644 = vunpack.c.1.s8 %v3642
      %v3645 = vpack.c.b16 %v3643, %v3643
      %v3646 = vpack.c.b8 %v3645, %v3645
      %v3647 = vpack.c.b16 %v3644, %v3644
      %v3648 = vpack.c.b8 %v3647, %v3647
      %s3649 = scalar_lea.vmem %s138, 268
      %3650 = vst.msk [vmem:[%s3649] sm:$0x3] %vm196, %v3646
      %3651 = vst.msk [vmem:[%s3649 + $0x2] sm:$0x3] %vm196, %v3648
      %3652 = vrot.lane.b32.xlu0 %v145, 124
      %v3653 = vpop.permute.xlu0 %3652
      %3654 = vrot.lane.b32.xlu0 %v146, 124
      %v3655 = vpop.permute.xlu0 %3654
      %vm3658 = vcmp.ge.f32.partialorder %v3323, %v3653
      %vm3659 = vcmp.ge.f32.partialorder %v3324, %v3655
      %vm3660 = vmpackc.low %vm3658, %vm3658
      %vm3661 = vmpackc.even %vm3660, %vm3660
      %vm3662 = vmpackc.low %vm3659, %vm3659
      %vm3663 = vmpackc.even %vm3662, %vm3662
      %v3664 = vsel %vm3661, 16843009, 0
      %v3665 = vsel %vm3663, 16843009, 0
      %v3666 = vunpack.c.0.s8 %v3664
      %v3667 = vunpack.c.0.s8 %v3665
      %v3668 = vpack.c.b16 %v3667, %v3666
      %v3669 = vpack.c.b8 %v3668, %v3668
      %3670 = vrot.lane.b32.xlu0 %v3669, 127
      %v3671 = vpop.permute.xlu0 %3670
      %vm3672 = vnez %v3671
      %v3673 = vsel %vm3672, 16843009, 0
      %v3674 = vunpack.c.0.s8 %v3673
      %v3675 = vunpack.c.1.s8 %v3673
      %v3676 = vpack.c.b16 %v3674, %v3674
      %v3677 = vpack.c.b8 %v3676, %v3676
      %v3678 = vpack.c.b16 %v3675, %v3675
      %v3679 = vpack.c.b8 %v3678, %v3678
      %s3680 = scalar_lea.vmem %s138, 276
      %3681 = vst.msk [vmem:[%s3680] sm:$0x3] %vm196, %v3677
      %3682 = vst.msk [vmem:[%s3680 + $0x2] sm:$0x3] %vm196, %v3679
      %vm3683 = vcmp.ge.f32.partialorder %v3323, %v3327
      %vm3684 = vcmp.ge.f32.partialorder %v3324, %v3329
      %vm3685 = vcmp.ge.f32.partialorder %v3325, %v3331
      %vm3686 = vmpackc.low %vm3683, %vm3683
      %vm3687 = vmpackc.even %vm3686, %vm3686
      %vm3688 = vmpackc.low %vm3684, %vm3684
      %vm3689 = vmpackc.even %vm3688, %vm3688
      %vm3690 = vmpackc.low %vm3685, %vm3685
      %vm3691 = vmpackc.even %vm3690, %vm3690
      %v3692 = vsel %vm3687, 16843009, 0
      %v3693 = vsel %vm3689, 16843009, 0
      %v3694 = vsel %vm3691, 16843009, 0
      %v3695 = vunpack.c.0.s8 %v3692
      %v3696 = vunpack.c.0.s8 %v3693
      %v3697 = vunpack.c.0.s8 %v3694
      %v3698 = vpack.c.b16 %v3696, %v3695
      %v3699 = vpack.c.b16 %v3697, %v3697
      %v3700 = vpack.c.b8 %v3699, %v3698
      %v3702 = vshrl.u32 %v3700, 8
      %v3704 = vshll.u32 %v3700, 24
      %v3706 = vrot.slane %v3704, 1
      %v3707 = vor.u32 %v3702, %v3706
      %3708 = vrot.lane.b32.xlu0 %v3707, 127
      %v3709 = vpop.permute.xlu0 %3708
      %vm3710 = vnez %v3709
      %v3711 = vsel %vm3710, 16843009, 0
      %v3712 = vunpack.c.0.s8 %v3711
      %v3713 = vunpack.c.1.s8 %v3711
      %v3714 = vpack.c.b16 %v3712, %v3712
      %v3715 = vpack.c.b8 %v3714, %v3714
      %v3716 = vpack.c.b16 %v3713, %v3713
      %v3717 = vpack.c.b8 %v3716, %v3716
      %s3718 = scalar_lea.vmem %s138, 284
      %3719 = vst.msk [vmem:[%s3718] sm:$0x3] %vm196, %v3715
      %3720 = vst.msk [vmem:[%s3718 + $0x2] sm:$0x3] %vm196, %v3717
      %vm3721 = vcmp.ge.f32.partialorder %v3322, %v3653
      %vm3722 = vcmp.ge.f32.partialorder %v3323, %v3655
      %vm3723 = vmpackc.low %vm3721, %vm3721
      %vm3724 = vmpackc.even %vm3723, %vm3723
      %vm3725 = vmpackc.low %vm3722, %vm3722
      %vm3726 = vmpackc.even %vm3725, %vm3725
      %v3727 = vsel %vm3724, 16843009, 0
      %v3728 = vsel %vm3726, 16843009, 0
      %v3729 = vunpack.c.0.s8 %v3727
      %v3730 = vunpack.c.0.s8 %v3728
      %v3731 = vpack.c.b16 %v3730, %v3729
      %v3732 = vpack.c.b8 %v3731, %v3731
      %3733 = vrot.lane.b32.xlu0 %v3732, 127
      %v3734 = vpop.permute.xlu0 %3733
      %vm3735 = vnez %v3734
      %v3736 = vsel %vm3735, 16843009, 0
      %v3737 = vunpack.c.0.s8 %v3736
      %v3738 = vunpack.c.1.s8 %v3736
      %v3739 = vpack.c.b16 %v3737, %v3737
      %v3740 = vpack.c.b8 %v3739, %v3739
      %v3741 = vpack.c.b16 %v3738, %v3738
      %v3742 = vpack.c.b8 %v3741, %v3741
      %s3743 = scalar_lea.vmem %s138, 324
      %3744 = vst.msk [vmem:[%s3743] sm:$0x3] %vm196, %v3740
      %3745 = vst.msk [vmem:[%s3743 + $0x2] sm:$0x3] %vm196, %v3742
      %vm3746 = vcmp.ge.f32.partialorder %v3323, %v3374
      %vm3747 = vcmp.ge.f32.partialorder %v3324, %v3376
      %vm3748 = vcmp.ge.f32.partialorder %v3325, %v3378
      %vm3749 = vmpackc.low %vm3746, %vm3746
      %vm3750 = vmpackc.even %vm3749, %vm3749
      %vm3751 = vmpackc.low %vm3747, %vm3747
      %vm3752 = vmpackc.even %vm3751, %vm3751
      %vm3753 = vmpackc.low %vm3748, %vm3748
      %vm3754 = vmpackc.even %vm3753, %vm3753
      %v3755 = vsel %vm3750, 16843009, 0
      %v3756 = vsel %vm3752, 16843009, 0
      %v3757 = vsel %vm3754, 16843009, 0
      %v3758 = vunpack.c.0.s8 %v3755
      %v3759 = vunpack.c.0.s8 %v3756
      %v3760 = vunpack.c.0.s8 %v3757
      %v3761 = vpack.c.b16 %v3759, %v3758
      %v3762 = vpack.c.b16 %v3760, %v3760
      %v3763 = vpack.c.b8 %v3762, %v3761
      %v3765 = vshrl.u32 %v3763, 16
      %v3767 = vshll.u32 %v3763, 16
      %v3769 = vrot.slane %v3767, 1
      %v3770 = vor.u32 %v3765, %v3769
      %3771 = vrot.lane.b32.xlu0 %v3770, 127
      %v3772 = vpop.permute.xlu0 %3771
      %vm3773 = vnez %v3772
      %v3774 = vsel %vm3773, 16843009, 0
      %v3775 = vunpack.c.0.s8 %v3774
      %v3776 = vunpack.c.1.s8 %v3774
      %v3777 = vpack.c.b16 %v3775, %v3775
      %v3778 = vpack.c.b8 %v3777, %v3777
      %v3779 = vpack.c.b16 %v3776, %v3776
      %v3780 = vpack.c.b8 %v3779, %v3779
      %s3781 = scalar_lea.vmem %s138, 440
      %3782 = vst.msk [vmem:[%s3781] sm:$0x3] %vm196, %v3778
      %3783 = vst.msk [vmem:[%s3781 + $0x2] sm:$0x3] %vm196, %v3780
      %v3784 = vld [vmem:[%s147] sm:$0xff]
      %v3785 = vld [vmem:[%s147 + $0x8] sm:$0xff]
      %v3786 = vld [vmem:[%s147 + $0x10] sm:$0xff]
      %v3787 = vld [vmem:[%s147 + $0x18] sm:$0x3]
      %3788 = vrot.lane.b32.xlu0 %v489, 4
      %v3789 = vpop.permute.xlu0 %3788
      %3790 = vrot.lane.b32.xlu0 %v491, 4
      %v3791 = vpop.permute.xlu0 %3790
      %3792 = vrot.lane.b32.xlu0 %v490, 4
      %v3793 = vpop.permute.xlu0 %3792
      %vm3797 = vcmp.ge.f32.partialorder %v3784, %v3789
      %vm3798 = vcmp.ge.f32.partialorder %v3785, %v3791
      %vm3799 = vcmp.ge.f32.partialorder %v3786, %v3793
      %vm3800 = vmpackc.low %vm3797, %vm3797
      %vm3801 = vmpackc.even %vm3800, %vm3800
      %vm3802 = vmpackc.low %vm3798, %vm3798
      %vm3803 = vmpackc.even %vm3802, %vm3802
      %vm3804 = vmpackc.low %vm3799, %vm3799
      %vm3805 = vmpackc.even %vm3804, %vm3804
      %v3806 = vsel %vm3801, 16843009, 0
      %v3807 = vsel %vm3803, 16843009, 0
      %v3808 = vsel %vm3805, 16843009, 0
      %v3809 = vunpack.c.0.s8 %v3806
      %v3810 = vunpack.c.0.s8 %v3807
      %v3811 = vunpack.c.0.s8 %v3808
      %v3812 = vpack.c.b16 %v3810, %v3809
      %v3813 = vpack.c.b16 %v3811, %v3811
      %v3814 = vpack.c.b8 %v3813, %v3812
      %v3816 = vshrl.u32 %v3814, 8
      %v3818 = vshll.u32 %v3814, 24
      %v3820 = vrot.slane %v3818, 1
      %v3821 = vor.u32 %v3816, %v3820
      %3822 = vrot.lane.b32.xlu0 %v3821, 119
      %v3823 = vpop.permute.xlu0 %3822
      %vm3824 = vnez %v3823
      %v3825 = vsel %vm3824, 16843009, 0
      %v3826 = vunpack.c.0.s8 %v3825
      %v3827 = vunpack.c.1.s8 %v3825
      %v3828 = vpack.c.b16 %v3826, %v3826
      %v3829 = vpack.c.b8 %v3828, %v3828
      %v3830 = vpack.c.b16 %v3827, %v3827
      %v3831 = vpack.c.b8 %v3830, %v3830
      %s3832 = scalar_lea.vmem %s138, 224
      %3833 = vst.msk [vmem:[%s3832] sm:$0x3] %vm196, %v3829
      %3834 = vst.msk [vmem:[%s3832 + $0x2] sm:$0x3] %vm196, %v3831
      %3835 = vrot.lane.b32.xlu0 %v407, 4
      %v3836 = vpop.permute.xlu0 %3835
      %3837 = vrot.lane.b32.xlu0 %v409, 4
      %v3838 = vpop.permute.xlu0 %3837
      %3839 = vrot.lane.b32.xlu0 %v408, 4
      %v3840 = vpop.permute.xlu0 %3839
      %vm3844 = vcmp.ge.f32.partialorder %v3784, %v3836
      %vm3845 = vcmp.ge.f32.partialorder %v3785, %v3838
      %vm3846 = vcmp.ge.f32.partialorder %v3786, %v3840
      %vm3847 = vmpackc.low %vm3844, %vm3844
      %vm3848 = vmpackc.even %vm3847, %vm3847
      %vm3849 = vmpackc.low %vm3845, %vm3845
      %vm3850 = vmpackc.even %vm3849, %vm3849
      %vm3851 = vmpackc.low %vm3846, %vm3846
      %vm3852 = vmpackc.even %vm3851, %vm3851
      %v3853 = vsel %vm3848, 16843009, 0
      %v3854 = vsel %vm3850, 16843009, 0
      %v3855 = vsel %vm3852, 16843009, 0
      %v3856 = vunpack.c.0.s8 %v3853
      %v3857 = vunpack.c.0.s8 %v3854
      %v3858 = vunpack.c.0.s8 %v3855
      %v3859 = vpack.c.b16 %v3857, %v3856
      %v3860 = vpack.c.b16 %v3858, %v3858
      %v3861 = vpack.c.b8 %v3860, %v3859
      %v3863 = vshrl.u32 %v3861, 16
      %v3865 = vshll.u32 %v3861, 16
      %v3867 = vrot.slane %v3865, 1
      %v3868 = vor.u32 %v3863, %v3867
      %3869 = vrot.lane.b32.xlu0 %v3868, 119
      %v3870 = vpop.permute.xlu0 %3869
      %vm3871 = vnez %v3870
      %v3872 = vsel %vm3871, 16843009, 0
      %v3873 = vunpack.c.0.s8 %v3872
      %v3874 = vunpack.c.1.s8 %v3872
      %v3875 = vpack.c.b16 %v3873, %v3873
      %v3876 = vpack.c.b8 %v3875, %v3875
      %v3877 = vpack.c.b16 %v3874, %v3874
      %v3878 = vpack.c.b8 %v3877, %v3877
      %s3879 = scalar_lea.vmem %s138, 232
      %3880 = vst.msk [vmem:[%s3879] sm:$0x3] %vm196, %v3876
      %3881 = vst.msk [vmem:[%s3879 + $0x2] sm:$0x3] %vm196, %v3878
      %3882 = vrot.lane.b32.xlu0 %v304, 4
      %v3883 = vpop.permute.xlu0 %3882
      %3884 = vrot.lane.b32.xlu0 %v306, 4
      %v3885 = vpop.permute.xlu0 %3884
      %3886 = vrot.lane.b32.xlu0 %v305, 4
      %v3887 = vpop.permute.xlu0 %3886
      %vm3891 = vcmp.ge.f32.partialorder %v3784, %v3883
      %vm3892 = vcmp.ge.f32.partialorder %v3785, %v3885
      %vm3893 = vcmp.ge.f32.partialorder %v3786, %v3887
      %vm3894 = vmpackc.low %vm3891, %vm3891
      %vm3895 = vmpackc.even %vm3894, %vm3894
      %vm3896 = vmpackc.low %vm3892, %vm3892
      %vm3897 = vmpackc.even %vm3896, %vm3896
      %vm3898 = vmpackc.low %vm3893, %vm3893
      %vm3899 = vmpackc.even %vm3898, %vm3898
      %v3900 = vsel %vm3895, 16843009, 0
      %v3901 = vsel %vm3897, 16843009, 0
      %v3902 = vsel %vm3899, 16843009, 0
      %v3903 = vunpack.c.0.s8 %v3900
      %v3904 = vunpack.c.0.s8 %v3901
      %v3905 = vunpack.c.0.s8 %v3902
      %v3906 = vpack.c.b16 %v3904, %v3903
      %v3907 = vpack.c.b16 %v3905, %v3905
      %v3908 = vpack.c.b8 %v3907, %v3906
      %v3910 = vshrl.u32 %v3908, 24
      %v3912 = vshll.u32 %v3908, 8
      %v3914 = vrot.slane %v3912, 1
      %v3915 = vor.u32 %v3910, %v3914
      %3916 = vrot.lane.b32.xlu0 %v3915, 119
      %v3917 = vpop.permute.xlu0 %3916
      %vm3918 = vnez %v3917
      %v3919 = vsel %vm3918, 16843009, 0
      %v3920 = vunpack.c.0.s8 %v3919
      %v3921 = vunpack.c.1.s8 %v3919
      %v3922 = vpack.c.b16 %v3920, %v3920
      %v3923 = vpack.c.b8 %v3922, %v3922
      %v3924 = vpack.c.b16 %v3921, %v3921
      %v3925 = vpack.c.b8 %v3924, %v3924
      %s3926 = scalar_lea.vmem %s138, 240
      %3927 = vst.msk [vmem:[%s3926] sm:$0x3] %vm196, %v3923
      %3928 = vst.msk [vmem:[%s3926 + $0x2] sm:$0x3] %vm196, %v3925
      %3929 = vrot.lane.b32.xlu0 %v155, 4
      %v3930 = vpop.permute.xlu0 %3929
      %3931 = vrot.lane.b32.xlu0 %v157, 4
      %v3932 = vpop.permute.xlu0 %3931
      %3933 = vrot.lane.b32.xlu0 %v156, 4
      %v3934 = vpop.permute.xlu0 %3933
      %vm3938 = vcmp.ge.f32.partialorder %v3784, %v3930
      %vm3939 = vcmp.ge.f32.partialorder %v3785, %v3932
      %vm3940 = vcmp.ge.f32.partialorder %v3786, %v3934
      %vm3941 = vmpackc.low %vm3938, %vm3938
      %vm3942 = vmpackc.even %vm3941, %vm3941
      %vm3943 = vmpackc.low %vm3939, %vm3939
      %vm3944 = vmpackc.even %vm3943, %vm3943
      %vm3945 = vmpackc.low %vm3940, %vm3940
      %vm3946 = vmpackc.even %vm3945, %vm3945
      %v3947 = vsel %vm3942, 16843009, 0
      %v3948 = vsel %vm3944, 16843009, 0
      %v3949 = vsel %vm3946, 16843009, 0
      %v3950 = vunpack.c.0.s8 %v3947
      %v3951 = vunpack.c.0.s8 %v3948
      %v3952 = vunpack.c.0.s8 %v3949
      %v3953 = vpack.c.b16 %v3951, %v3950
      %v3954 = vpack.c.b16 %v3952, %v3952
      %v3955 = vpack.c.b8 %v3954, %v3953
      %v3956 = vrot.slane %v3955, 1
      %3957 = vrot.lane.b32.xlu0 %v3956, 119
      %v3958 = vpop.permute.xlu0 %3957
      %vm3959 = vnez %v3958
      %v3960 = vsel %vm3959, 16843009, 0
      %v3961 = vunpack.c.0.s8 %v3960
      %v3962 = vunpack.c.1.s8 %v3960
      %v3963 = vpack.c.b16 %v3961, %v3961
      %v3964 = vpack.c.b8 %v3963, %v3963
      %v3965 = vpack.c.b16 %v3962, %v3962
      %v3966 = vpack.c.b8 %v3965, %v3965
      %s3967 = scalar_lea.vmem %s138, 248
      %3968 = vst.msk [vmem:[%s3967] sm:$0x3] %vm196, %v3964
      %3969 = vst.msk [vmem:[%s3967 + $0x2] sm:$0x3] %vm196, %v3966
      %3970 = vrot.lane.b32.xlu0 %v200, 4
      %v3971 = vpop.permute.xlu0 %3970
      %3972 = vrot.lane.b32.xlu0 %v202, 4
      %v3973 = vpop.permute.xlu0 %3972
      %3974 = vrot.lane.b32.xlu0 %v201, 4
      %v3975 = vpop.permute.xlu0 %3974
      %vm3979 = vcmp.ge.f32.partialorder %v3784, %v3971
      %vm3980 = vcmp.ge.f32.partialorder %v3785, %v3973
      %vm3981 = vcmp.ge.f32.partialorder %v3786, %v3975
      %vm3982 = vmpackc.low %vm3979, %vm3979
      %vm3983 = vmpackc.even %vm3982, %vm3982
      %vm3984 = vmpackc.low %vm3980, %vm3980
      %vm3985 = vmpackc.even %vm3984, %vm3984
      %vm3986 = vmpackc.low %vm3981, %vm3981
      %vm3987 = vmpackc.even %vm3986, %vm3986
      %v3988 = vsel %vm3983, 16843009, 0
      %v3989 = vsel %vm3985, 16843009, 0
      %v3990 = vsel %vm3987, 16843009, 0
      %v3991 = vunpack.c.0.s8 %v3988
      %v3992 = vunpack.c.0.s8 %v3989
      %v3993 = vunpack.c.0.s8 %v3990
      %v3994 = vpack.c.b16 %v3992, %v3991
      %v3995 = vpack.c.b16 %v3993, %v3993
      %v3996 = vpack.c.b8 %v3995, %v3994
      %v3998 = vshrl.u32 %v3996, 8
      %v4000 = vrot.slane %v3998, 1
      %v4001 = vshll.u32 %v3996, 24
      %v4003 = vrot.slane %v4001, 2
      %v4004 = vor.u32 %v4000, %v4003
      %4005 = vrot.lane.b32.xlu0 %v4004, 119
      %v4006 = vpop.permute.xlu0 %4005
      %vm4007 = vnez %v4006
      %v4008 = vsel %vm4007, 16843009, 0
      %v4009 = vunpack.c.0.s8 %v4008
      %v4010 = vunpack.c.1.s8 %v4008
      %v4011 = vpack.c.b16 %v4009, %v4009
      %v4012 = vpack.c.b8 %v4011, %v4011
      %v4013 = vpack.c.b16 %v4010, %v4010
      %v4014 = vpack.c.b8 %v4013, %v4013
      %s4015 = scalar_lea.vmem %s138, 256
      %4016 = vst.msk [vmem:[%s4015] sm:$0x3] %vm196, %v4012
      %4017 = vst.msk [vmem:[%s4015 + $0x2] sm:$0x3] %vm196, %v4014
      %4018 = vrot.lane.b32.xlu0 %v252, 4
      %v4019 = vpop.permute.xlu0 %4018
      %4020 = vrot.lane.b32.xlu0 %v254, 4
      %v4021 = vpop.permute.xlu0 %4020
      %4022 = vrot.lane.b32.xlu0 %v253, 4
      %v4023 = vpop.permute.xlu0 %4022
      %vm4027 = vcmp.ge.f32.partialorder %v3784, %v4019
      %vm4028 = vcmp.ge.f32.partialorder %v3785, %v4021
      %vm4029 = vcmp.ge.f32.partialorder %v3786, %v4023
      %vm4030 = vmpackc.low %vm4027, %vm4027
      %vm4031 = vmpackc.even %vm4030, %vm4030
      %vm4032 = vmpackc.low %vm4028, %vm4028
      %vm4033 = vmpackc.even %vm4032, %vm4032
      %vm4034 = vmpackc.low %vm4029, %vm4029
      %vm4035 = vmpackc.even %vm4034, %vm4034
      %v4036 = vsel %vm4031, 16843009, 0
      %v4037 = vsel %vm4033, 16843009, 0
      %v4038 = vsel %vm4035, 16843009, 0
      %v4039 = vunpack.c.0.s8 %v4036
      %v4040 = vunpack.c.0.s8 %v4037
      %v4041 = vunpack.c.0.s8 %v4038
      %v4042 = vpack.c.b16 %v4040, %v4039
      %v4043 = vpack.c.b16 %v4041, %v4041
      %v4044 = vpack.c.b8 %v4043, %v4042
      %v4046 = vshrl.u32 %v4044, 16
      %v4048 = vrot.slane %v4046, 1
      %v4049 = vshll.u32 %v4044, 16
      %v4051 = vrot.slane %v4049, 2
      %v4052 = vor.u32 %v4048, %v4051
      %4053 = vrot.lane.b32.xlu0 %v4052, 119
      %v4054 = vpop.permute.xlu0 %4053
      %vm4055 = vnez %v4054
      %v4056 = vsel %vm4055, 16843009, 0
      %v4057 = vunpack.c.0.s8 %v4056
      %v4058 = vunpack.c.1.s8 %v4056
      %v4059 = vpack.c.b16 %v4057, %v4057
      %v4060 = vpack.c.b8 %v4059, %v4059
      %v4061 = vpack.c.b16 %v4058, %v4058
      %v4062 = vpack.c.b8 %v4061, %v4061
      %s4063 = scalar_lea.vmem %s138, 264
      %4064 = vst.msk [vmem:[%s4063] sm:$0x3] %vm196, %v4060
      %4065 = vst.msk [vmem:[%s4063 + $0x2] sm:$0x3] %vm196, %v4062
      %4066 = vrot.lane.b32.xlu0 %v355, 4
      %v4067 = vpop.permute.xlu0 %4066
      %4068 = vrot.lane.b32.xlu0 %v357, 4
      %v4069 = vpop.permute.xlu0 %4068
      %4070 = vrot.lane.b32.xlu0 %v356, 4
      %v4071 = vpop.permute.xlu0 %4070
      %vm4075 = vcmp.ge.f32.partialorder %v3784, %v4067
      %vm4076 = vcmp.ge.f32.partialorder %v3785, %v4069
      %vm4077 = vcmp.ge.f32.partialorder %v3786, %v4071
      %vm4078 = vmpackc.low %vm4075, %vm4075
      %vm4079 = vmpackc.even %vm4078, %vm4078
      %vm4080 = vmpackc.low %vm4076, %vm4076
      %vm4081 = vmpackc.even %vm4080, %vm4080
      %vm4082 = vmpackc.low %vm4077, %vm4077
      %vm4083 = vmpackc.even %vm4082, %vm4082
      %v4084 = vsel %vm4079, 16843009, 0
      %v4085 = vsel %vm4081, 16843009, 0
      %v4086 = vsel %vm4083, 16843009, 0
      %v4087 = vunpack.c.0.s8 %v4084
      %v4088 = vunpack.c.0.s8 %v4085
      %v4089 = vunpack.c.0.s8 %v4086
      %v4090 = vpack.c.b16 %v4088, %v4087
      %v4091 = vpack.c.b16 %v4089, %v4089
      %v4092 = vpack.c.b8 %v4091, %v4090
      %v4094 = vshrl.u32 %v4092, 24
      %v4096 = vrot.slane %v4094, 1
      %v4097 = vshll.u32 %v4092, 8
      %v4099 = vrot.slane %v4097, 2
      %v4100 = vor.u32 %v4096, %v4099
      %4101 = vrot.lane.b32.xlu0 %v4100, 119
      %v4102 = vpop.permute.xlu0 %4101
      %vm4103 = vnez %v4102
      %v4104 = vsel %vm4103, 16843009, 0
      %v4105 = vunpack.c.0.s8 %v4104
      %v4106 = vunpack.c.1.s8 %v4104
      %v4107 = vpack.c.b16 %v4105, %v4105
      %v4108 = vpack.c.b8 %v4107, %v4107
      %v4109 = vpack.c.b16 %v4106, %v4106
      %v4110 = vpack.c.b8 %v4109, %v4109
      %s4111 = scalar_lea.vmem %s138, 272
      %4112 = vst.msk [vmem:[%s4111] sm:$0x3] %vm196, %v4108
      %4113 = vst.msk [vmem:[%s4111 + $0x2] sm:$0x3] %vm196, %v4110
      %4114 = vrot.lane.b32.xlu0 %v145, 4
      %v4115 = vpop.permute.xlu0 %4114
      %4116 = vrot.lane.b32.xlu0 %v146, 4
      %v4117 = vpop.permute.xlu0 %4116
      %vm4120 = vcmp.ge.f32.partialorder %v3785, %v4115
      %vm4121 = vcmp.ge.f32.partialorder %v3786, %v4117
      %vm4122 = vmpackc.low %vm4120, %vm4120
      %vm4123 = vmpackc.even %vm4122, %vm4122
      %vm4124 = vmpackc.low %vm4121, %vm4121
      %vm4125 = vmpackc.even %vm4124, %vm4124
      %v4126 = vsel %vm4123, 16843009, 0
      %v4127 = vsel %vm4125, 16843009, 0
      %v4128 = vunpack.c.0.s8 %v4126
      %v4129 = vunpack.c.0.s8 %v4127
      %v4130 = vpack.c.b16 %v4129, %v4128
      %v4131 = vpack.c.b8 %v4130, %v4130
      %4132 = vrot.lane.b32.xlu0 %v4131, 119
      %v4133 = vpop.permute.xlu0 %4132
      %vm4134 = vnez %v4133
      %v4135 = vsel %vm4134, 16843009, 0
      %v4136 = vunpack.c.0.s8 %v4135
      %v4137 = vunpack.c.1.s8 %v4135
      %v4138 = vpack.c.b16 %v4136, %v4136
      %v4139 = vpack.c.b8 %v4138, %v4138
      %v4140 = vpack.c.b16 %v4137, %v4137
      %v4141 = vpack.c.b8 %v4140, %v4140
      %s4142 = scalar_lea.vmem %s138, 280
      %4143 = vst.msk [vmem:[%s4142] sm:$0x3] %vm196, %v4139
      %4144 = vst.msk [vmem:[%s4142 + $0x2] sm:$0x3] %vm196, %v4141
      %vm4145 = vcmp.ge.f32.partialorder %v3785, %v3789
      %vm4146 = vcmp.ge.f32.partialorder %v3786, %v3791
      %vm4147 = vcmp.ge.f32.partialorder %v3787, %v3793
      %vm4148 = vmpackc.low %vm4145, %vm4145
      %vm4149 = vmpackc.even %vm4148, %vm4148
      %vm4150 = vmpackc.low %vm4146, %vm4146
      %vm4151 = vmpackc.even %vm4150, %vm4150
      %vm4152 = vmpackc.low %vm4147, %vm4147
      %vm4153 = vmpackc.even %vm4152, %vm4152
      %v4154 = vsel %vm4149, 16843009, 0
      %v4155 = vsel %vm4151, 16843009, 0
      %v4156 = vsel %vm4153, 16843009, 0
      %v4157 = vunpack.c.0.s8 %v4154
      %v4158 = vunpack.c.0.s8 %v4155
      %v4159 = vunpack.c.0.s8 %v4156
      %v4160 = vpack.c.b16 %v4158, %v4157
      %v4161 = vpack.c.b16 %v4159, %v4159
      %v4162 = vpack.c.b8 %v4161, %v4160
      %v4164 = vshrl.u32 %v4162, 8
      %v4166 = vshll.u32 %v4162, 24
      %v4168 = vrot.slane %v4166, 1
      %v4169 = vor.u32 %v4164, %v4168
      %4170 = vrot.lane.b32.xlu0 %v4169, 119
      %v4171 = vpop.permute.xlu0 %4170
      %vm4172 = vnez %v4171
      %v4173 = vsel %vm4172, 16843009, 0
      %v4174 = vunpack.c.0.s8 %v4173
      %v4175 = vunpack.c.1.s8 %v4173
      %v4176 = vpack.c.b16 %v4174, %v4174
      %v4177 = vpack.c.b8 %v4176, %v4176
      %v4178 = vpack.c.b16 %v4175, %v4175
      %v4179 = vpack.c.b8 %v4178, %v4178
      %s4180 = scalar_lea.vmem %s138, 316
      %4181 = vst.msk [vmem:[%s4180] sm:$0x3] %vm196, %v4177
      %4182 = vst.msk [vmem:[%s4180 + $0x2] sm:$0x3] %vm196, %v4179
      %vm4183 = vcmp.ge.f32.partialorder %v3784, %v4115
      %vm4184 = vcmp.ge.f32.partialorder %v3785, %v4117
      %vm4185 = vmpackc.low %vm4183, %vm4183
      %vm4186 = vmpackc.even %vm4185, %vm4185
      %vm4187 = vmpackc.low %vm4184, %vm4184
      %vm4188 = vmpackc.even %vm4187, %vm4187
      %v4189 = vsel %vm4186, 16843009, 0
      %v4190 = vsel %vm4188, 16843009, 0
      %v4191 = vunpack.c.0.s8 %v4189
      %v4192 = vunpack.c.0.s8 %v4190
      %v4193 = vpack.c.b16 %v4192, %v4191
      %v4194 = vpack.c.b8 %v4193, %v4193
      %4195 = vrot.lane.b32.xlu0 %v4194, 119
      %v4196 = vpop.permute.xlu0 %4195
      %vm4197 = vnez %v4196
      %v4198 = vsel %vm4197, 16843009, 0
      %v4199 = vunpack.c.0.s8 %v4198
      %v4200 = vunpack.c.1.s8 %v4198
      %v4201 = vpack.c.b16 %v4199, %v4199
      %v4202 = vpack.c.b8 %v4201, %v4201
      %v4203 = vpack.c.b16 %v4200, %v4200
      %v4204 = vpack.c.b8 %v4203, %v4203
      %s4205 = scalar_lea.vmem %s138, 356
      %4206 = vst.msk [vmem:[%s4205] sm:$0x3] %vm196, %v4202
      %4207 = vst.msk [vmem:[%s4205 + $0x2] sm:$0x3] %vm196, %v4204
      %vm4208 = vcmp.ge.f32.partialorder %v3785, %v3836
      %vm4209 = vcmp.ge.f32.partialorder %v3786, %v3838
      %vm4210 = vcmp.ge.f32.partialorder %v3787, %v3840
      %vm4211 = vmpackc.low %vm4208, %vm4208
      %vm4212 = vmpackc.even %vm4211, %vm4211
      %vm4213 = vmpackc.low %vm4209, %vm4209
      %vm4214 = vmpackc.even %vm4213, %vm4213
      %vm4215 = vmpackc.low %vm4210, %vm4210
      %vm4216 = vmpackc.even %vm4215, %vm4215
      %v4217 = vsel %vm4212, 16843009, 0
      %v4218 = vsel %vm4214, 16843009, 0
      %v4219 = vsel %vm4216, 16843009, 0
      %v4220 = vunpack.c.0.s8 %v4217
      %v4221 = vunpack.c.0.s8 %v4218
      %v4222 = vunpack.c.0.s8 %v4219
      %v4223 = vpack.c.b16 %v4221, %v4220
      %v4224 = vpack.c.b16 %v4222, %v4222
      %v4225 = vpack.c.b8 %v4224, %v4223
      %v4227 = vshrl.u32 %v4225, 16
      %v4229 = vshll.u32 %v4225, 16
      %v4231 = vrot.slane %v4229, 1
      %v4232 = vor.u32 %v4227, %v4231
      %4233 = vrot.lane.b32.xlu0 %v4232, 119
      %v4234 = vpop.permute.xlu0 %4233
      %vm4235 = vnez %v4234
      %v4236 = vsel %vm4235, 16843009, 0
      %v4237 = vunpack.c.0.s8 %v4236
      %v4238 = vunpack.c.1.s8 %v4236
      %v4239 = vpack.c.b16 %v4237, %v4237
      %v4240 = vpack.c.b8 %v4239, %v4239
      %v4241 = vpack.c.b16 %v4238, %v4238
      %v4242 = vpack.c.b8 %v4241, %v4241
      %s4243 = scalar_lea.vmem %s138, 472
      %4244 = vst.msk [vmem:[%s4243] sm:$0x3] %vm196, %v4240
      %4245 = vst.msk [vmem:[%s4243 + $0x2] sm:$0x3] %vm196, %v4242
      %v4246 = vld [vmem:[%s147] sm:$0xff]
      %v4247 = vld [vmem:[%s147 + $0x8] sm:$0xff]
      %v4248 = vld [vmem:[%s147 + $0x10] sm:$0xff]
      %v4249 = vld [vmem:[%s147 + $0x18] sm:$0x3]
      %4250 = vrot.lane.b32.xlu0 %v145, 123
      %v4251 = vpop.permute.xlu0 %4250
      %4252 = vrot.lane.b32.xlu0 %v146, 123
      %v4253 = vpop.permute.xlu0 %4252
      %vm4256 = vcmp.ge.f32.partialorder %v4246, %v4251
      %vm4257 = vcmp.ge.f32.partialorder %v4247, %v4253
      %vm4258 = vmpackc.low %vm4257, %vm4256
      %vm4259 = vmpackc.even %vm4258, %vm4258
      %v4260 = vsel %vm4259, 16843009, 0
      %v4261 = vunpack.c.0.s8 %v4260
      %v4262 = vunpack.c.1.s8 %v4260
      %v4263 = vpack.c.b16 %v4261, %v4261
      %v4264 = vpack.c.b8 %v4263, %v4263
      %v4265 = vpack.c.b16 %v4262, %v4262
      %v4266 = vpack.c.b8 %v4265, %v4265
      %s4267 = scalar_lea.vmem %s138, 320
      %4268 = vst.msk [vmem:[%s4267] sm:$0x3] %vm196, %v4264
      %4269 = vst.msk [vmem:[%s4267 + $0x2] sm:$0x3] %vm196, %v4266
      %4270 = vrot.lane.b32.xlu0 %v489, 123
      %v4271 = vpop.permute.xlu0 %4270
      %4272 = vrot.lane.b32.xlu0 %v491, 123
      %v4273 = vpop.permute.xlu0 %4272
      %4274 = vrot.lane.b32.xlu0 %v490, 123
      %v4275 = vpop.permute.xlu0 %4274
      %vm4279 = vcmp.ge.f32.partialorder %v4246, %v4271
      %vm4280 = vcmp.ge.f32.partialorder %v4247, %v4273
      %vm4281 = vcmp.ge.f32.partialorder %v4248, %v4275
      %vm4282 = vmpackc.low %vm4279, %vm4279
      %vm4283 = vmpackc.even %vm4282, %vm4282
      %vm4284 = vmpackc.low %vm4280, %vm4280
      %vm4285 = vmpackc.even %vm4284, %vm4284
      %vm4286 = vmpackc.low %vm4281, %vm4281
      %vm4287 = vmpackc.even %vm4286, %vm4286
      %v4288 = vsel %vm4283, 16843009, 0
      %v4289 = vsel %vm4285, 16843009, 0
      %v4290 = vsel %vm4287, 16843009, 0
      %v4291 = vunpack.c.0.s8 %v4288
      %v4292 = vunpack.c.0.s8 %v4289
      %v4293 = vunpack.c.0.s8 %v4290
      %v4294 = vpack.c.b16 %v4292, %v4291
      %v4295 = vpack.c.b16 %v4293, %v4293
      %v4296 = vpack.c.b8 %v4295, %v4294
      %v4298 = vshrl.u32 %v4296, 8
      %v4300 = vshll.u32 %v4296, 24
      %v4302 = vrot.slane %v4300, 1
      %v4303 = vor.u32 %v4298, %v4302
      %vm4304 = vnez %v4303
      %v4305 = vsel %vm4304, 16843009, 0
      %v4306 = vunpack.c.0.s8 %v4305
      %v4307 = vunpack.c.1.s8 %v4305
      %v4308 = vpack.c.b16 %v4306, %v4306
      %v4309 = vpack.c.b8 %v4308, %v4308
      %v4310 = vpack.c.b16 %v4307, %v4307
      %v4311 = vpack.c.b8 %v4310, %v4310
      %s4312 = scalar_lea.vmem %s138, 364
      %4313 = vst.msk [vmem:[%s4312] sm:$0x3] %vm196, %v4309
      %4314 = vst.msk [vmem:[%s4312 + $0x2] sm:$0x3] %vm196, %v4311
      %4315 = vrot.lane.b32.xlu0 %v407, 123
      %v4316 = vpop.permute.xlu0 %4315
      %4317 = vrot.lane.b32.xlu0 %v409, 123
      %v4318 = vpop.permute.xlu0 %4317
      %4319 = vrot.lane.b32.xlu0 %v408, 123
      %v4320 = vpop.permute.xlu0 %4319
      %vm4324 = vcmp.ge.f32.partialorder %v4246, %v4316
      %vm4325 = vcmp.ge.f32.partialorder %v4247, %v4318
      %vm4326 = vcmp.ge.f32.partialorder %v4248, %v4320
      %vm4327 = vmpackc.low %vm4324, %vm4324
      %vm4328 = vmpackc.even %vm4327, %vm4327
      %vm4329 = vmpackc.low %vm4325, %vm4325
      %vm4330 = vmpackc.even %vm4329, %vm4329
      %vm4331 = vmpackc.low %vm4326, %vm4326
      %vm4332 = vmpackc.even %vm4331, %vm4331
      %v4333 = vsel %vm4328, 16843009, 0
      %v4334 = vsel %vm4330, 16843009, 0
      %v4335 = vsel %vm4332, 16843009, 0
      %v4336 = vunpack.c.0.s8 %v4333
      %v4337 = vunpack.c.0.s8 %v4334
      %v4338 = vunpack.c.0.s8 %v4335
      %v4339 = vpack.c.b16 %v4337, %v4336
      %v4340 = vpack.c.b16 %v4338, %v4338
      %v4341 = vpack.c.b8 %v4340, %v4339
      %v4343 = vshrl.u32 %v4341, 16
      %v4345 = vshll.u32 %v4341, 16
      %v4347 = vrot.slane %v4345, 1
      %v4348 = vor.u32 %v4343, %v4347
      %vm4349 = vnez %v4348
      %v4350 = vsel %vm4349, 16843009, 0
      %v4351 = vunpack.c.0.s8 %v4350
      %v4352 = vunpack.c.1.s8 %v4350
      %v4353 = vpack.c.b16 %v4351, %v4351
      %v4354 = vpack.c.b8 %v4353, %v4353
      %v4355 = vpack.c.b16 %v4352, %v4352
      %v4356 = vpack.c.b8 %v4355, %v4355
      %s4357 = scalar_lea.vmem %s138, 372
      %4358 = vst.msk [vmem:[%s4357] sm:$0x3] %vm196, %v4354
      %4359 = vst.msk [vmem:[%s4357 + $0x2] sm:$0x3] %vm196, %v4356
      %4360 = vrot.lane.b32.xlu0 %v304, 123
      %v4361 = vpop.permute.xlu0 %4360
      %4362 = vrot.lane.b32.xlu0 %v306, 123
      %v4363 = vpop.permute.xlu0 %4362
      %4364 = vrot.lane.b32.xlu0 %v305, 123
      %v4365 = vpop.permute.xlu0 %4364
      %vm4369 = vcmp.ge.f32.partialorder %v4246, %v4361
      %vm4370 = vcmp.ge.f32.partialorder %v4247, %v4363
      %vm4371 = vcmp.ge.f32.partialorder %v4248, %v4365
      %vm4372 = vmpackc.low %vm4369, %vm4369
      %vm4373 = vmpackc.even %vm4372, %vm4372
      %vm4374 = vmpackc.low %vm4370, %vm4370
      %vm4375 = vmpackc.even %vm4374, %vm4374
      %vm4376 = vmpackc.low %vm4371, %vm4371
      %vm4377 = vmpackc.even %vm4376, %vm4376
      %v4378 = vsel %vm4373, 16843009, 0
      %v4379 = vsel %vm4375, 16843009, 0
      %v4380 = vsel %vm4377, 16843009, 0
      %v4381 = vunpack.c.0.s8 %v4378
      %v4382 = vunpack.c.0.s8 %v4379
      %v4383 = vunpack.c.0.s8 %v4380
      %v4384 = vpack.c.b16 %v4382, %v4381
      %v4385 = vpack.c.b16 %v4383, %v4383
      %v4386 = vpack.c.b8 %v4385, %v4384
      %v4388 = vshrl.u32 %v4386, 24
      %v4390 = vshll.u32 %v4386, 8
      %v4392 = vrot.slane %v4390, 1
      %v4393 = vor.u32 %v4388, %v4392
      %vm4394 = vnez %v4393
      %v4395 = vsel %vm4394, 16843009, 0
      %v4396 = vunpack.c.0.s8 %v4395
      %v4397 = vunpack.c.1.s8 %v4395
      %v4398 = vpack.c.b16 %v4396, %v4396
      %v4399 = vpack.c.b8 %v4398, %v4398
      %v4400 = vpack.c.b16 %v4397, %v4397
      %v4401 = vpack.c.b8 %v4400, %v4400
      %s4402 = scalar_lea.vmem %s138, 380
      %4403 = vst.msk [vmem:[%s4402] sm:$0x3] %vm196, %v4399
      %4404 = vst.msk [vmem:[%s4402 + $0x2] sm:$0x3] %vm196, %v4401
      %4405 = vrot.lane.b32.xlu0 %v155, 123
      %v4406 = vpop.permute.xlu0 %4405
      %4407 = vrot.lane.b32.xlu0 %v157, 123
      %v4408 = vpop.permute.xlu0 %4407
      %4409 = vrot.lane.b32.xlu0 %v156, 123
      %v4410 = vpop.permute.xlu0 %4409
      %vm4414 = vcmp.ge.f32.partialorder %v4246, %v4406
      %vm4415 = vcmp.ge.f32.partialorder %v4247, %v4408
      %vm4416 = vcmp.ge.f32.partialorder %v4248, %v4410
      %vm4417 = vmpackc.low %vm4414, %vm4414
      %vm4418 = vmpackc.even %vm4417, %vm4417
      %vm4419 = vmpackc.low %vm4415, %vm4415
      %vm4420 = vmpackc.even %vm4419, %vm4419
      %vm4421 = vmpackc.low %vm4416, %vm4416
      %vm4422 = vmpackc.even %vm4421, %vm4421
      %v4423 = vsel %vm4418, 16843009, 0
      %v4424 = vsel %vm4420, 16843009, 0
      %v4425 = vsel %vm4422, 16843009, 0
      %v4426 = vunpack.c.0.s8 %v4423
      %v4427 = vunpack.c.0.s8 %v4424
      %v4428 = vunpack.c.0.s8 %v4425
      %v4429 = vpack.c.b16 %v4427, %v4426
      %v4430 = vpack.c.b16 %v4428, %v4428
      %v4431 = vpack.c.b8 %v4430, %v4429
      %v4432 = vrot.slane %v4431, 1
      %vm4433 = vnez %v4432
      %v4434 = vsel %vm4433, 16843009, 0
      %v4435 = vunpack.c.0.s8 %v4434
      %v4436 = vunpack.c.1.s8 %v4434
      %v4437 = vpack.c.b16 %v4435, %v4435
      %v4438 = vpack.c.b8 %v4437, %v4437
      %v4439 = vpack.c.b16 %v4436, %v4436
      %v4440 = vpack.c.b8 %v4439, %v4439
      %s4441 = scalar_lea.vmem %s138, 388
      %4442 = vst.msk [vmem:[%s4441] sm:$0x3] %vm196, %v4438
      %4443 = vst.msk [vmem:[%s4441 + $0x2] sm:$0x3] %vm196, %v4440
      %4444 = vrot.lane.b32.xlu0 %v200, 123
      %v4445 = vpop.permute.xlu0 %4444
      %4446 = vrot.lane.b32.xlu0 %v202, 123
      %v4447 = vpop.permute.xlu0 %4446
      %4448 = vrot.lane.b32.xlu0 %v201, 123
      %v4449 = vpop.permute.xlu0 %4448
      %vm4453 = vcmp.ge.f32.partialorder %v4246, %v4445
      %vm4454 = vcmp.ge.f32.partialorder %v4247, %v4447
      %vm4455 = vcmp.ge.f32.partialorder %v4248, %v4449
      %vm4456 = vmpackc.low %vm4453, %vm4453
      %vm4457 = vmpackc.even %vm4456, %vm4456
      %vm4458 = vmpackc.low %vm4454, %vm4454
      %vm4459 = vmpackc.even %vm4458, %vm4458
      %vm4460 = vmpackc.low %vm4455, %vm4455
      %vm4461 = vmpackc.even %vm4460, %vm4460
      %v4462 = vsel %vm4457, 16843009, 0
      %v4463 = vsel %vm4459, 16843009, 0
      %v4464 = vsel %vm4461, 16843009, 0
      %v4465 = vunpack.c.0.s8 %v4462
      %v4466 = vunpack.c.0.s8 %v4463
      %v4467 = vunpack.c.0.s8 %v4464
      %v4468 = vpack.c.b16 %v4466, %v4465
      %v4469 = vpack.c.b16 %v4467, %v4467
      %v4470 = vpack.c.b8 %v4469, %v4468
      %v4472 = vshrl.u32 %v4470, 8
      %v4474 = vrot.slane %v4472, 1
      %v4475 = vshll.u32 %v4470, 24
      %v4477 = vrot.slane %v4475, 2
      %v4478 = vor.u32 %v4474, %v4477
      %vm4479 = vnez %v4478
      %v4480 = vsel %vm4479, 16843009, 0
      %v4481 = vunpack.c.0.s8 %v4480
      %v4482 = vunpack.c.1.s8 %v4480
      %v4483 = vpack.c.b16 %v4481, %v4481
      %v4484 = vpack.c.b8 %v4483, %v4483
      %v4485 = vpack.c.b16 %v4482, %v4482
      %v4486 = vpack.c.b8 %v4485, %v4485
      %s4487 = scalar_lea.vmem %s138, 396
      %4488 = vst.msk [vmem:[%s4487] sm:$0x3] %vm196, %v4484
      %4489 = vst.msk [vmem:[%s4487 + $0x2] sm:$0x3] %vm196, %v4486
      %4490 = vrot.lane.b32.xlu0 %v252, 123
      %v4491 = vpop.permute.xlu0 %4490
      %4492 = vrot.lane.b32.xlu0 %v254, 123
      %v4493 = vpop.permute.xlu0 %4492
      %4494 = vrot.lane.b32.xlu0 %v253, 123
      %v4495 = vpop.permute.xlu0 %4494
      %vm4499 = vcmp.ge.f32.partialorder %v4246, %v4491
      %vm4500 = vcmp.ge.f32.partialorder %v4247, %v4493
      %vm4501 = vcmp.ge.f32.partialorder %v4248, %v4495
      %vm4502 = vmpackc.low %vm4499, %vm4499
      %vm4503 = vmpackc.even %vm4502, %vm4502
      %vm4504 = vmpackc.low %vm4500, %vm4500
      %vm4505 = vmpackc.even %vm4504, %vm4504
      %vm4506 = vmpackc.low %vm4501, %vm4501
      %vm4507 = vmpackc.even %vm4506, %vm4506
      %v4508 = vsel %vm4503, 16843009, 0
      %v4509 = vsel %vm4505, 16843009, 0
      %v4510 = vsel %vm4507, 16843009, 0
      %v4511 = vunpack.c.0.s8 %v4508
      %v4512 = vunpack.c.0.s8 %v4509
      %v4513 = vunpack.c.0.s8 %v4510
      %v4514 = vpack.c.b16 %v4512, %v4511
      %v4515 = vpack.c.b16 %v4513, %v4513
      %v4516 = vpack.c.b8 %v4515, %v4514
      %v4518 = vshrl.u32 %v4516, 16
      %v4520 = vrot.slane %v4518, 1
      %v4521 = vshll.u32 %v4516, 16
      %v4523 = vrot.slane %v4521, 2
      %v4524 = vor.u32 %v4520, %v4523
      %vm4525 = vnez %v4524
      %v4526 = vsel %vm4525, 16843009, 0
      %v4527 = vunpack.c.0.s8 %v4526
      %v4528 = vunpack.c.1.s8 %v4526
      %v4529 = vpack.c.b16 %v4527, %v4527
      %v4530 = vpack.c.b8 %v4529, %v4529
      %v4531 = vpack.c.b16 %v4528, %v4528
      %v4532 = vpack.c.b8 %v4531, %v4531
      %s4533 = scalar_lea.vmem %s138, 404
      %4534 = vst.msk [vmem:[%s4533] sm:$0x3] %vm196, %v4530
      %4535 = vst.msk [vmem:[%s4533 + $0x2] sm:$0x3] %vm196, %v4532
      %4536 = vrot.lane.b32.xlu0 %v355, 123
      %v4537 = vpop.permute.xlu0 %4536
      %4538 = vrot.lane.b32.xlu0 %v357, 123
      %v4539 = vpop.permute.xlu0 %4538
      %4540 = vrot.lane.b32.xlu0 %v356, 123
      %v4541 = vpop.permute.xlu0 %4540
      %vm4545 = vcmp.ge.f32.partialorder %v4246, %v4537
      %vm4546 = vcmp.ge.f32.partialorder %v4247, %v4539
      %vm4547 = vcmp.ge.f32.partialorder %v4248, %v4541
      %vm4548 = vmpackc.low %vm4545, %vm4545
      %vm4549 = vmpackc.even %vm4548, %vm4548
      %vm4550 = vmpackc.low %vm4546, %vm4546
      %vm4551 = vmpackc.even %vm4550, %vm4550
      %vm4552 = vmpackc.low %vm4547, %vm4547
      %vm4553 = vmpackc.even %vm4552, %vm4552
      %v4554 = vsel %vm4549, 16843009, 0
      %v4555 = vsel %vm4551, 16843009, 0
      %v4556 = vsel %vm4553, 16843009, 0
      %v4557 = vunpack.c.0.s8 %v4554
      %v4558 = vunpack.c.0.s8 %v4555
      %v4559 = vunpack.c.0.s8 %v4556
      %v4560 = vpack.c.b16 %v4558, %v4557
      %v4561 = vpack.c.b16 %v4559, %v4559
      %v4562 = vpack.c.b8 %v4561, %v4560
      %v4564 = vshrl.u32 %v4562, 24
      %v4566 = vrot.slane %v4564, 1
      %v4567 = vshll.u32 %v4562, 8
      %v4569 = vrot.slane %v4567, 2
      %v4570 = vor.u32 %v4566, %v4569
      %vm4571 = vnez %v4570
      %v4572 = vsel %vm4571, 16843009, 0
      %v4573 = vunpack.c.0.s8 %v4572
      %v4574 = vunpack.c.1.s8 %v4572
      %v4575 = vpack.c.b16 %v4573, %v4573
      %v4576 = vpack.c.b8 %v4575, %v4575
      %v4577 = vpack.c.b16 %v4574, %v4574
      %v4578 = vpack.c.b8 %v4577, %v4577
      %s4579 = scalar_lea.vmem %s138, 412
      %4580 = vst.msk [vmem:[%s4579] sm:$0x3] %vm196, %v4576
      %4581 = vst.msk [vmem:[%s4579 + $0x2] sm:$0x3] %vm196, %v4578
      %vm4582 = vcmp.ge.f32.partialorder %v4247, %v4251
      %vm4583 = vcmp.ge.f32.partialorder %v4248, %v4253
      %vm4584 = vmpackc.low %vm4583, %vm4582
      %vm4585 = vmpackc.even %vm4584, %vm4584
      %v4586 = vsel %vm4585, 16843009, 0
      %v4587 = vunpack.c.0.s8 %v4586
      %v4588 = vunpack.c.1.s8 %v4586
      %v4589 = vpack.c.b16 %v4587, %v4587
      %v4590 = vpack.c.b8 %v4589, %v4589
      %v4591 = vpack.c.b16 %v4588, %v4588
      %v4592 = vpack.c.b8 %v4591, %v4591
      %s4593 = scalar_lea.vmem %s138, 420
      %4594 = vst.msk [vmem:[%s4593] sm:$0x3] %vm196, %v4590
      %4595 = vst.msk [vmem:[%s4593 + $0x2] sm:$0x3] %vm196, %v4592
      %vm4596 = vcmp.ge.f32.partialorder %v4247, %v4271
      %vm4597 = vcmp.ge.f32.partialorder %v4248, %v4273
      %vm4598 = vcmp.ge.f32.partialorder %v4249, %v4275
      %vm4599 = vmpackc.low %vm4596, %vm4596
      %vm4600 = vmpackc.even %vm4599, %vm4599
      %vm4601 = vmpackc.low %vm4597, %vm4597
      %vm4602 = vmpackc.even %vm4601, %vm4601
      %vm4603 = vmpackc.low %vm4598, %vm4598
      %vm4604 = vmpackc.even %vm4603, %vm4603
      %v4605 = vsel %vm4600, 16843009, 0
      %v4606 = vsel %vm4602, 16843009, 0
      %v4607 = vsel %vm4604, 16843009, 0
      %v4608 = vunpack.c.0.s8 %v4605
      %v4609 = vunpack.c.0.s8 %v4606
      %v4610 = vunpack.c.0.s8 %v4607
      %v4611 = vpack.c.b16 %v4609, %v4608
      %v4612 = vpack.c.b16 %v4610, %v4610
      %v4613 = vpack.c.b8 %v4612, %v4611
      %v4615 = vshrl.u32 %v4613, 8
      %v4617 = vshll.u32 %v4613, 24
      %v4619 = vrot.slane %v4617, 1
      %v4620 = vor.u32 %v4615, %v4619
      %vm4621 = vnez %v4620
      %v4622 = vsel %vm4621, 16843009, 0
      %v4623 = vunpack.c.0.s8 %v4622
      %v4624 = vunpack.c.1.s8 %v4622
      %v4625 = vpack.c.b16 %v4623, %v4623
      %v4626 = vpack.c.b8 %v4625, %v4625
      %v4627 = vpack.c.b16 %v4624, %v4624
      %v4628 = vpack.c.b8 %v4627, %v4627
      %s4629 = scalar_lea.vmem %s138, 428
      %4630 = vst.msk [vmem:[%s4629] sm:$0x3] %vm196, %v4626
      %4631 = vst.msk [vmem:[%s4629 + $0x2] sm:$0x3] %vm196, %v4628
      %vm4632 = vcmp.ge.f32.partialorder %v4247, %v4316
      %vm4633 = vcmp.ge.f32.partialorder %v4248, %v4318
      %vm4634 = vcmp.ge.f32.partialorder %v4249, %v4320
      %vm4635 = vmpackc.low %vm4632, %vm4632
      %vm4636 = vmpackc.even %vm4635, %vm4635
      %vm4637 = vmpackc.low %vm4633, %vm4633
      %vm4638 = vmpackc.even %vm4637, %vm4637
      %vm4639 = vmpackc.low %vm4634, %vm4634
      %vm4640 = vmpackc.even %vm4639, %vm4639
      %v4641 = vsel %vm4636, 16843009, 0
      %v4642 = vsel %vm4638, 16843009, 0
      %v4643 = vsel %vm4640, 16843009, 0
      %v4644 = vunpack.c.0.s8 %v4641
      %v4645 = vunpack.c.0.s8 %v4642
      %v4646 = vunpack.c.0.s8 %v4643
      %v4647 = vpack.c.b16 %v4645, %v4644
      %v4648 = vpack.c.b16 %v4646, %v4646
      %v4649 = vpack.c.b8 %v4648, %v4647
      %v4651 = vshrl.u32 %v4649, 16
      %v4653 = vshll.u32 %v4649, 16
      %v4655 = vrot.slane %v4653, 1
      %v4656 = vor.u32 %v4651, %v4655
      %vm4657 = vnez %v4656
      %v4658 = vsel %vm4657, 16843009, 0
      %v4659 = vunpack.c.0.s8 %v4658
      %v4660 = vunpack.c.1.s8 %v4658
      %v4661 = vpack.c.b16 %v4659, %v4659
      %v4662 = vpack.c.b8 %v4661, %v4661
      %v4663 = vpack.c.b16 %v4660, %v4660
      %v4664 = vpack.c.b8 %v4663, %v4663
      %s4665 = scalar_lea.vmem %s138, 436
      %4666 = vst.msk [vmem:[%s4665] sm:$0x3] %vm196, %v4662
      %4667 = vst.msk [vmem:[%s4665 + $0x2] sm:$0x3] %vm196, %v4664
      %v4668 = vld [vmem:[%s147] sm:$0xff]
      %v4669 = vld [vmem:[%s147 + $0x8] sm:$0xff]
      %v4670 = vld [vmem:[%s147 + $0x10] sm:$0xff]
      %v4671 = vld [vmem:[%s147 + $0x18] sm:$0x3]
      %4672 = vrot.lane.b32.xlu0 %v145, 5
      %v4673 = vpop.permute.xlu0 %4672
      %4674 = vrot.lane.b32.xlu0 %v146, 5
      %v4675 = vpop.permute.xlu0 %4674
      %vm4678 = vcmp.ge.f32.partialorder %v4668, %v4673
      %vm4679 = vcmp.ge.f32.partialorder %v4669, %v4675
      %vm4680 = vmpackc.low %vm4678, %vm4678
      %vm4681 = vmpackc.even %vm4680, %vm4680
      %vm4682 = vmpackc.low %vm4679, %vm4679
      %vm4683 = vmpackc.even %vm4682, %vm4682
      %v4684 = vsel %vm4681, 16843009, 0
      %v4685 = vsel %vm4683, 16843009, 0
      %v4686 = vunpack.c.0.s8 %v4684
      %v4687 = vunpack.c.0.s8 %v4685
      %v4688 = vpack.c.b16 %v4687, %v4686
      %v4689 = vpack.c.b8 %v4688, %v4688
      %4690 = vrot.lane.b32.xlu0 %v4689, 118
      %v4691 = vpop.permute.xlu0 %4690
      %vm4692 = vnez %v4691
      %v4693 = vsel %vm4692, 16843009, 0
      %v4694 = vunpack.c.0.s8 %v4693
      %v4695 = vunpack.c.1.s8 %v4693
      %v4696 = vpack.c.b16 %v4694, %v4694
      %v4697 = vpack.c.b8 %v4696, %v4696
      %v4698 = vpack.c.b16 %v4695, %v4695
      %v4699 = vpack.c.b8 %v4698, %v4698
      %s4700 = scalar_lea.vmem %s138, 360
      %4701 = vst.msk [vmem:[%s4700] sm:$0x3] %vm196, %v4697
      %4702 = vst.msk [vmem:[%s4700 + $0x2] sm:$0x3] %vm196, %v4699
      %4703 = vrot.lane.b32.xlu0 %v489, 5
      %v4704 = vpop.permute.xlu0 %4703
      %4705 = vrot.lane.b32.xlu0 %v491, 5
      %v4706 = vpop.permute.xlu0 %4705
      %4707 = vrot.lane.b32.xlu0 %v490, 5
      %v4708 = vpop.permute.xlu0 %4707
      %vm4712 = vcmp.ge.f32.partialorder %v4668, %v4704
      %vm4713 = vcmp.ge.f32.partialorder %v4669, %v4706
      %vm4714 = vcmp.ge.f32.partialorder %v4670, %v4708
      %vm4715 = vmpackc.low %vm4712, %vm4712
      %vm4716 = vmpackc.even %vm4715, %vm4715
      %vm4717 = vmpackc.low %vm4713, %vm4713
      %vm4718 = vmpackc.even %vm4717, %vm4717
      %vm4719 = vmpackc.low %vm4714, %vm4714
      %vm4720 = vmpackc.even %vm4719, %vm4719
      %v4721 = vsel %vm4716, 16843009, 0
      %v4722 = vsel %vm4718, 16843009, 0
      %v4723 = vsel %vm4720, 16843009, 0
      %v4724 = vunpack.c.0.s8 %v4721
      %v4725 = vunpack.c.0.s8 %v4722
      %v4726 = vunpack.c.0.s8 %v4723
      %v4727 = vpack.c.b16 %v4725, %v4724
      %v4728 = vpack.c.b16 %v4726, %v4726
      %v4729 = vpack.c.b8 %v4728, %v4727
      %v4731 = vshrl.u32 %v4729, 8
      %v4733 = vshll.u32 %v4729, 24
      %v4735 = vrot.slane %v4733, 1
      %v4736 = vor.u32 %v4731, %v4735
      %4737 = vrot.lane.b32.xlu0 %v4736, 118
      %v4738 = vpop.permute.xlu0 %4737
      %vm4739 = vnez %v4738
      %v4740 = vsel %vm4739, 16843009, 0
      %v4741 = vunpack.c.0.s8 %v4740
      %v4742 = vunpack.c.1.s8 %v4740
      %v4743 = vpack.c.b16 %v4741, %v4741
      %v4744 = vpack.c.b8 %v4743, %v4743
      %v4745 = vpack.c.b16 %v4742, %v4742
      %v4746 = vpack.c.b8 %v4745, %v4745
      %s4747 = scalar_lea.vmem %s138, 368
      %4748 = vst.msk [vmem:[%s4747] sm:$0x3] %vm196, %v4744
      %4749 = vst.msk [vmem:[%s4747 + $0x2] sm:$0x3] %vm196, %v4746
      %4750 = vrot.lane.b32.xlu0 %v407, 5
      %v4751 = vpop.permute.xlu0 %4750
      %4752 = vrot.lane.b32.xlu0 %v409, 5
      %v4753 = vpop.permute.xlu0 %4752
      %4754 = vrot.lane.b32.xlu0 %v408, 5
      %v4755 = vpop.permute.xlu0 %4754
      %vm4759 = vcmp.ge.f32.partialorder %v4668, %v4751
      %vm4760 = vcmp.ge.f32.partialorder %v4669, %v4753
      %vm4761 = vcmp.ge.f32.partialorder %v4670, %v4755
      %vm4762 = vmpackc.low %vm4759, %vm4759
      %vm4763 = vmpackc.even %vm4762, %vm4762
      %vm4764 = vmpackc.low %vm4760, %vm4760
      %vm4765 = vmpackc.even %vm4764, %vm4764
      %vm4766 = vmpackc.low %vm4761, %vm4761
      %vm4767 = vmpackc.even %vm4766, %vm4766
      %v4768 = vsel %vm4763, 16843009, 0
      %v4769 = vsel %vm4765, 16843009, 0
      %v4770 = vsel %vm4767, 16843009, 0
      %v4771 = vunpack.c.0.s8 %v4768
      %v4772 = vunpack.c.0.s8 %v4769
      %v4773 = vunpack.c.0.s8 %v4770
      %v4774 = vpack.c.b16 %v4772, %v4771
      %v4775 = vpack.c.b16 %v4773, %v4773
      %v4776 = vpack.c.b8 %v4775, %v4774
      %v4778 = vshrl.u32 %v4776, 16
      %v4780 = vshll.u32 %v4776, 16
      %v4782 = vrot.slane %v4780, 1
      %v4783 = vor.u32 %v4778, %v4782
      %4784 = vrot.lane.b32.xlu0 %v4783, 118
      %v4785 = vpop.permute.xlu0 %4784
      %vm4786 = vnez %v4785
      %v4787 = vsel %vm4786, 16843009, 0
      %v4788 = vunpack.c.0.s8 %v4787
      %v4789 = vunpack.c.1.s8 %v4787
      %v4790 = vpack.c.b16 %v4788, %v4788
      %v4791 = vpack.c.b8 %v4790, %v4790
      %v4792 = vpack.c.b16 %v4789, %v4789
      %v4793 = vpack.c.b8 %v4792, %v4792
      %s4794 = scalar_lea.vmem %s138, 376
      %4795 = vst.msk [vmem:[%s4794] sm:$0x3] %vm196, %v4791
      %4796 = vst.msk [vmem:[%s4794 + $0x2] sm:$0x3] %vm196, %v4793
      %4797 = vrot.lane.b32.xlu0 %v304, 5
      %v4798 = vpop.permute.xlu0 %4797
      %4799 = vrot.lane.b32.xlu0 %v306, 5
      %v4800 = vpop.permute.xlu0 %4799
      %4801 = vrot.lane.b32.xlu0 %v305, 5
      %v4802 = vpop.permute.xlu0 %4801
      %vm4806 = vcmp.ge.f32.partialorder %v4668, %v4798
      %vm4807 = vcmp.ge.f32.partialorder %v4669, %v4800
      %vm4808 = vcmp.ge.f32.partialorder %v4670, %v4802
      %vm4809 = vmpackc.low %vm4806, %vm4806
      %vm4810 = vmpackc.even %vm4809, %vm4809
      %vm4811 = vmpackc.low %vm4807, %vm4807
      %vm4812 = vmpackc.even %vm4811, %vm4811
      %vm4813 = vmpackc.low %vm4808, %vm4808
      %vm4814 = vmpackc.even %vm4813, %vm4813
      %v4815 = vsel %vm4810, 16843009, 0
      %v4816 = vsel %vm4812, 16843009, 0
      %v4817 = vsel %vm4814, 16843009, 0
      %v4818 = vunpack.c.0.s8 %v4815
      %v4819 = vunpack.c.0.s8 %v4816
      %v4820 = vunpack.c.0.s8 %v4817
      %v4821 = vpack.c.b16 %v4819, %v4818
      %v4822 = vpack.c.b16 %v4820, %v4820
      %v4823 = vpack.c.b8 %v4822, %v4821
      %v4825 = vshrl.u32 %v4823, 24
      %v4827 = vshll.u32 %v4823, 8
      %v4829 = vrot.slane %v4827, 1
      %v4830 = vor.u32 %v4825, %v4829
      %4831 = vrot.lane.b32.xlu0 %v4830, 118
      %v4832 = vpop.permute.xlu0 %4831
      %vm4833 = vnez %v4832
      %v4834 = vsel %vm4833, 16843009, 0
      %v4835 = vunpack.c.0.s8 %v4834
      %v4836 = vunpack.c.1.s8 %v4834
      %v4837 = vpack.c.b16 %v4835, %v4835
      %v4838 = vpack.c.b8 %v4837, %v4837
      %v4839 = vpack.c.b16 %v4836, %v4836
      %v4840 = vpack.c.b8 %v4839, %v4839
      %s4841 = scalar_lea.vmem %s138, 384
      %4842 = vst.msk [vmem:[%s4841] sm:$0x3] %vm196, %v4838
      %4843 = vst.msk [vmem:[%s4841 + $0x2] sm:$0x3] %vm196, %v4840
      %4844 = vrot.lane.b32.xlu0 %v155, 5
      %v4845 = vpop.permute.xlu0 %4844
      %4846 = vrot.lane.b32.xlu0 %v157, 5
      %v4847 = vpop.permute.xlu0 %4846
      %4848 = vrot.lane.b32.xlu0 %v156, 5
      %v4849 = vpop.permute.xlu0 %4848
      %vm4853 = vcmp.ge.f32.partialorder %v4668, %v4845
      %vm4854 = vcmp.ge.f32.partialorder %v4669, %v4847
      %vm4855 = vcmp.ge.f32.partialorder %v4670, %v4849
      %vm4856 = vmpackc.low %vm4853, %vm4853
      %vm4857 = vmpackc.even %vm4856, %vm4856
      %vm4858 = vmpackc.low %vm4854, %vm4854
      %vm4859 = vmpackc.even %vm4858, %vm4858
      %vm4860 = vmpackc.low %vm4855, %vm4855
      %vm4861 = vmpackc.even %vm4860, %vm4860
      %v4862 = vsel %vm4857, 16843009, 0
      %v4863 = vsel %vm4859, 16843009, 0
      %v4864 = vsel %vm4861, 16843009, 0
      %v4865 = vunpack.c.0.s8 %v4862
      %v4866 = vunpack.c.0.s8 %v4863
      %v4867 = vunpack.c.0.s8 %v4864
      %v4868 = vpack.c.b16 %v4866, %v4865
      %v4869 = vpack.c.b16 %v4867, %v4867
      %v4870 = vpack.c.b8 %v4869, %v4868
      %v4871 = vrot.slane %v4870, 1
      %4872 = vrot.lane.b32.xlu0 %v4871, 118
      %v4873 = vpop.permute.xlu0 %4872
      %vm4874 = vnez %v4873
      %v4875 = vsel %vm4874, 16843009, 0
      %v4876 = vunpack.c.0.s8 %v4875
      %v4877 = vunpack.c.1.s8 %v4875
      %v4878 = vpack.c.b16 %v4876, %v4876
      %v4879 = vpack.c.b8 %v4878, %v4878
      %v4880 = vpack.c.b16 %v4877, %v4877
      %v4881 = vpack.c.b8 %v4880, %v4880
      %s4882 = scalar_lea.vmem %s138, 392
      %4883 = vst.msk [vmem:[%s4882] sm:$0x3] %vm196, %v4879
      %4884 = vst.msk [vmem:[%s4882 + $0x2] sm:$0x3] %vm196, %v4881
      %4885 = vrot.lane.b32.xlu0 %v200, 5
      %v4886 = vpop.permute.xlu0 %4885
      %4887 = vrot.lane.b32.xlu0 %v202, 5
      %v4888 = vpop.permute.xlu0 %4887
      %4889 = vrot.lane.b32.xlu0 %v201, 5
      %v4890 = vpop.permute.xlu0 %4889
      %vm4894 = vcmp.ge.f32.partialorder %v4668, %v4886
      %vm4895 = vcmp.ge.f32.partialorder %v4669, %v4888
      %vm4896 = vcmp.ge.f32.partialorder %v4670, %v4890
      %vm4897 = vmpackc.low %vm4894, %vm4894
      %vm4898 = vmpackc.even %vm4897, %vm4897
      %vm4899 = vmpackc.low %vm4895, %vm4895
      %vm4900 = vmpackc.even %vm4899, %vm4899
      %vm4901 = vmpackc.low %vm4896, %vm4896
      %vm4902 = vmpackc.even %vm4901, %vm4901
      %v4903 = vsel %vm4898, 16843009, 0
      %v4904 = vsel %vm4900, 16843009, 0
      %v4905 = vsel %vm4902, 16843009, 0
      %v4906 = vunpack.c.0.s8 %v4903
      %v4907 = vunpack.c.0.s8 %v4904
      %v4908 = vunpack.c.0.s8 %v4905
      %v4909 = vpack.c.b16 %v4907, %v4906
      %v4910 = vpack.c.b16 %v4908, %v4908
      %v4911 = vpack.c.b8 %v4910, %v4909
      %v4913 = vshrl.u32 %v4911, 8
      %v4915 = vrot.slane %v4913, 1
      %v4916 = vshll.u32 %v4911, 24
      %v4918 = vrot.slane %v4916, 2
      %v4919 = vor.u32 %v4915, %v4918
      %4920 = vrot.lane.b32.xlu0 %v4919, 118
      %v4921 = vpop.permute.xlu0 %4920
      %vm4922 = vnez %v4921
      %v4923 = vsel %vm4922, 16843009, 0
      %v4924 = vunpack.c.0.s8 %v4923
      %v4925 = vunpack.c.1.s8 %v4923
      %v4926 = vpack.c.b16 %v4924, %v4924
      %v4927 = vpack.c.b8 %v4926, %v4926
      %v4928 = vpack.c.b16 %v4925, %v4925
      %v4929 = vpack.c.b8 %v4928, %v4928
      %s4930 = scalar_lea.vmem %s138, 400
      %4931 = vst.msk [vmem:[%s4930] sm:$0x3] %vm196, %v4927
      %4932 = vst.msk [vmem:[%s4930 + $0x2] sm:$0x3] %vm196, %v4929
      %4933 = vrot.lane.b32.xlu0 %v252, 5
      %v4934 = vpop.permute.xlu0 %4933
      %4935 = vrot.lane.b32.xlu0 %v254, 5
      %v4936 = vpop.permute.xlu0 %4935
      %4937 = vrot.lane.b32.xlu0 %v253, 5
      %v4938 = vpop.permute.xlu0 %4937
      %vm4942 = vcmp.ge.f32.partialorder %v4668, %v4934
      %vm4943 = vcmp.ge.f32.partialorder %v4669, %v4936
      %vm4944 = vcmp.ge.f32.partialorder %v4670, %v4938
      %vm4945 = vmpackc.low %vm4942, %vm4942
      %vm4946 = vmpackc.even %vm4945, %vm4945
      %vm4947 = vmpackc.low %vm4943, %vm4943
      %vm4948 = vmpackc.even %vm4947, %vm4947
      %vm4949 = vmpackc.low %vm4944, %vm4944
      %vm4950 = vmpackc.even %vm4949, %vm4949
      %v4951 = vsel %vm4946, 16843009, 0
      %v4952 = vsel %vm4948, 16843009, 0
      %v4953 = vsel %vm4950, 16843009, 0
      %v4954 = vunpack.c.0.s8 %v4951
      %v4955 = vunpack.c.0.s8 %v4952
      %v4956 = vunpack.c.0.s8 %v4953
      %v4957 = vpack.c.b16 %v4955, %v4954
      %v4958 = vpack.c.b16 %v4956, %v4956
      %v4959 = vpack.c.b8 %v4958, %v4957
      %v4961 = vshrl.u32 %v4959, 16
      %v4963 = vrot.slane %v4961, 1
      %v4964 = vshll.u32 %v4959, 16
      %v4966 = vrot.slane %v4964, 2
      %v4967 = vor.u32 %v4963, %v4966
      %4968 = vrot.lane.b32.xlu0 %v4967, 118
      %v4969 = vpop.permute.xlu0 %4968
      %vm4970 = vnez %v4969
      %v4971 = vsel %vm4970, 16843009, 0
      %v4972 = vunpack.c.0.s8 %v4971
      %v4973 = vunpack.c.1.s8 %v4971
      %v4974 = vpack.c.b16 %v4972, %v4972
      %v4975 = vpack.c.b8 %v4974, %v4974
      %v4976 = vpack.c.b16 %v4973, %v4973
      %v4977 = vpack.c.b8 %v4976, %v4976
      %s4978 = scalar_lea.vmem %s138, 408
      %4979 = vst.msk [vmem:[%s4978] sm:$0x3] %vm196, %v4975
      %4980 = vst.msk [vmem:[%s4978 + $0x2] sm:$0x3] %vm196, %v4977
      %4981 = vrot.lane.b32.xlu0 %v355, 5
      %v4982 = vpop.permute.xlu0 %4981
      %4983 = vrot.lane.b32.xlu0 %v357, 5
      %v4984 = vpop.permute.xlu0 %4983
      %4985 = vrot.lane.b32.xlu0 %v356, 5
      %v4986 = vpop.permute.xlu0 %4985
      %vm4990 = vcmp.ge.f32.partialorder %v4668, %v4982
      %vm4991 = vcmp.ge.f32.partialorder %v4669, %v4984
      %vm4992 = vcmp.ge.f32.partialorder %v4670, %v4986
      %vm4993 = vmpackc.low %vm4990, %vm4990
      %vm4994 = vmpackc.even %vm4993, %vm4993
      %vm4995 = vmpackc.low %vm4991, %vm4991
      %vm4996 = vmpackc.even %vm4995, %vm4995
      %vm4997 = vmpackc.low %vm4992, %vm4992
      %vm4998 = vmpackc.even %vm4997, %vm4997
      %v4999 = vsel %vm4994, 16843009, 0
      %v5000 = vsel %vm4996, 16843009, 0
      %v5001 = vsel %vm4998, 16843009, 0
      %v5002 = vunpack.c.0.s8 %v4999
      %v5003 = vunpack.c.0.s8 %v5000
      %v5004 = vunpack.c.0.s8 %v5001
      %v5005 = vpack.c.b16 %v5003, %v5002
      %v5006 = vpack.c.b16 %v5004, %v5004
      %v5007 = vpack.c.b8 %v5006, %v5005
      %v5009 = vshrl.u32 %v5007, 24
      %v5011 = vrot.slane %v5009, 1
      %v5012 = vshll.u32 %v5007, 8
      %v5014 = vrot.slane %v5012, 2
      %v5015 = vor.u32 %v5011, %v5014
      %5016 = vrot.lane.b32.xlu0 %v5015, 118
      %v5017 = vpop.permute.xlu0 %5016
      %vm5018 = vnez %v5017
      %v5019 = vsel %vm5018, 16843009, 0
      %v5020 = vunpack.c.0.s8 %v5019
      %v5021 = vunpack.c.1.s8 %v5019
      %v5022 = vpack.c.b16 %v5020, %v5020
      %v5023 = vpack.c.b8 %v5022, %v5022
      %v5024 = vpack.c.b16 %v5021, %v5021
      %v5025 = vpack.c.b8 %v5024, %v5024
      %s5026 = scalar_lea.vmem %s138, 416
      %5027 = vst.msk [vmem:[%s5026] sm:$0x3] %vm196, %v5023
      %5028 = vst.msk [vmem:[%s5026 + $0x2] sm:$0x3] %vm196, %v5025
      %vm5029 = vcmp.ge.f32.partialorder %v4669, %v4673
      %vm5030 = vcmp.ge.f32.partialorder %v4670, %v4675
      %vm5031 = vmpackc.low %vm5029, %vm5029
      %vm5032 = vmpackc.even %vm5031, %vm5031
      %vm5033 = vmpackc.low %vm5030, %vm5030
      %vm5034 = vmpackc.even %vm5033, %vm5033
      %v5035 = vsel %vm5032, 16843009, 0
      %v5036 = vsel %vm5034, 16843009, 0
      %v5037 = vunpack.c.0.s8 %v5035
      %v5038 = vunpack.c.0.s8 %v5036
      %v5039 = vpack.c.b16 %v5038, %v5037
      %v5040 = vpack.c.b8 %v5039, %v5039
      %5041 = vrot.lane.b32.xlu0 %v5040, 118
      %v5042 = vpop.permute.xlu0 %5041
      %vm5043 = vnez %v5042
      %v5044 = vsel %vm5043, 16843009, 0
      %v5045 = vunpack.c.0.s8 %v5044
      %v5046 = vunpack.c.1.s8 %v5044
      %v5047 = vpack.c.b16 %v5045, %v5045
      %v5048 = vpack.c.b8 %v5047, %v5047
      %v5049 = vpack.c.b16 %v5046, %v5046
      %v5050 = vpack.c.b8 %v5049, %v5049
      %s5051 = scalar_lea.vmem %s138, 424
      %5052 = vst.msk [vmem:[%s5051] sm:$0x3] %vm196, %v5048
      %5053 = vst.msk [vmem:[%s5051 + $0x2] sm:$0x3] %vm196, %v5050
      %vm5054 = vcmp.ge.f32.partialorder %v4669, %v4704
      %vm5055 = vcmp.ge.f32.partialorder %v4670, %v4706
      %vm5056 = vcmp.ge.f32.partialorder %v4671, %v4708
      %vm5057 = vmpackc.low %vm5054, %vm5054
      %vm5058 = vmpackc.even %vm5057, %vm5057
      %vm5059 = vmpackc.low %vm5055, %vm5055
      %vm5060 = vmpackc.even %vm5059, %vm5059
      %vm5061 = vmpackc.low %vm5056, %vm5056
      %vm5062 = vmpackc.even %vm5061, %vm5061
      %v5063 = vsel %vm5058, 16843009, 0
      %v5064 = vsel %vm5060, 16843009, 0
      %v5065 = vsel %vm5062, 16843009, 0
      %v5066 = vunpack.c.0.s8 %v5063
      %v5067 = vunpack.c.0.s8 %v5064
      %v5068 = vunpack.c.0.s8 %v5065
      %v5069 = vpack.c.b16 %v5067, %v5066
      %v5070 = vpack.c.b16 %v5068, %v5068
      %v5071 = vpack.c.b8 %v5070, %v5069
      %v5073 = vshrl.u32 %v5071, 8
      %v5075 = vshll.u32 %v5071, 24
      %v5077 = vrot.slane %v5075, 1
      %v5078 = vor.u32 %v5073, %v5077
      %5079 = vrot.lane.b32.xlu0 %v5078, 118
      %v5080 = vpop.permute.xlu0 %5079
      %vm5081 = vnez %v5080
      %v5082 = vsel %vm5081, 16843009, 0
      %v5083 = vunpack.c.0.s8 %v5082
      %v5084 = vunpack.c.1.s8 %v5082
      %v5085 = vpack.c.b16 %v5083, %v5083
      %v5086 = vpack.c.b8 %v5085, %v5085
      %v5087 = vpack.c.b16 %v5084, %v5084
      %v5088 = vpack.c.b8 %v5087, %v5087
      %s5089 = scalar_lea.vmem %s138, 432
      %5090 = vst.msk [vmem:[%s5089] sm:$0x3] %vm196, %v5086
      %5091 = vst.msk [vmem:[%s5089 + $0x2] sm:$0x3] %vm196, %v5088
      %vm5092 = vcmp.ge.f32.partialorder %v4669, %v4751
      %vm5093 = vcmp.ge.f32.partialorder %v4670, %v4753
      %vm5094 = vcmp.ge.f32.partialorder %v4671, %v4755
      %vm5095 = vmpackc.low %vm5092, %vm5092
      %vm5096 = vmpackc.even %vm5095, %vm5095
      %vm5097 = vmpackc.low %vm5093, %vm5093
      %vm5098 = vmpackc.even %vm5097, %vm5097
      %vm5099 = vmpackc.low %vm5094, %vm5094
      %vm5100 = vmpackc.even %vm5099, %vm5099
      %v5101 = vsel %vm5096, 16843009, 0
      %v5102 = vsel %vm5098, 16843009, 0
      %v5103 = vsel %vm5100, 16843009, 0
      %v5104 = vunpack.c.0.s8 %v5101
      %v5105 = vunpack.c.0.s8 %v5102
      %v5106 = vunpack.c.0.s8 %v5103
      %v5107 = vpack.c.b16 %v5105, %v5104
      %v5108 = vpack.c.b16 %v5106, %v5106
      %v5109 = vpack.c.b8 %v5108, %v5107
      %v5111 = vshrl.u32 %v5109, 16
      %v5113 = vshll.u32 %v5109, 16
      %v5115 = vrot.slane %v5113, 1
      %v5116 = vor.u32 %v5111, %v5115
      %5117 = vrot.lane.b32.xlu0 %v5116, 118
      %v5118 = vpop.permute.xlu0 %5117
      %vm5119 = vnez %v5118
      %v5120 = vsel %vm5119, 16843009, 0
      %v5121 = vunpack.c.0.s8 %v5120
      %v5122 = vunpack.c.1.s8 %v5120
      %v5123 = vpack.c.b16 %v5121, %v5121
      %v5124 = vpack.c.b8 %v5123, %v5123
      %v5125 = vpack.c.b16 %v5122, %v5122
      %v5126 = vpack.c.b8 %v5125, %v5125
      %s5127 = scalar_lea.vmem %s138, 476
      %5128 = vst.msk [vmem:[%s5127] sm:$0x3] %vm196, %v5124
      %5129 = vst.msk [vmem:[%s5127 + $0x2] sm:$0x3] %vm196, %v5126
      %s5130 = smul.u32 2, %s17
      %p5131 = scmp.lt.s32.totalorder %s16, 1
      %s5132 = scalar_select %p5131, %s16, 1
      %p5133 = scmp.lt.s32.totalorder %s5130, 1
      %s5134 = scalar_select %p5133, %s5130, 1
      %s5135 = smul.addr %s5132, 240
      %s5136 = sadd.s32 %s5134, %s5135
      %s5137 = smul.addr %s5136, 2
      %s5138 = scalar_lea.vmem %s1, %s5137
      // Predicated region
      $region25: #{tpu_custom_call.1} parent=23 // pred_check
        %p5139 = pneg %p70
      $region26: #{tpu_custom_call.1} parent=23 // pred_check_branch
        %5141 = sbr.rel (%p5139) target = $region28
      $region27: #{tpu_custom_call.1} parent=23 // pred_region
        %s5142 = smul.u32 2, %s17
      $region28: #{tpu_custom_call.1} parent=23 // pred_fallthru
        _
    $region24: #{tpu_custom_call.1} parent=5 // pred_fallthru
      _
    %p5143 = scmp.le.s32.totalorder 2, %s7
    // Predicated region
    $region29: #{tpu_custom_call.1} parent=5 // pred_check
      %p5144 = pneg %p5143
    $region30: #{tpu_custom_call.1} parent=5 // pred_check_branch
      %5146 = sbr.rel (%p5144) target = $region32
    $region31: #{tpu_custom_call.1} parent=5 // pred_region
      %s5147 = ssub.s32 %s7, 2
      // Predicated region
      $region33: #{tpu_custom_call.1} parent=31 // pred_check
        %p5148 = pneg %p76
      $region34: #{tpu_custom_call.1} parent=31 // pred_check_branch
        %5150 = sbr.rel (%p5148) target = $region36
      $region35: #{tpu_custom_call.1} parent=31 // pred_region
        %s5151 = smul.u32 2, %s19
        %p5152 = scmp.lt.s32.totalorder %s18, 1
        %s5153 = scalar_select %p5152, %s18, 1
        %p5154 = scmp.lt.s32.totalorder %s5151, 1
        %s5155 = scalar_select %p5154, %s5151, 1
        %s5156 = smul.addr %s5153, 240
        %s5157 = sadd.s32 %s5155, %s5156
        %s5158 = smul.addr %s5157, 2
        %s5159 = scalar_lea.vmem %s1, %s5158
      $region36: #{tpu_custom_call.1} parent=31 // pred_fallthru
        _
    $region32: #{tpu_custom_call.1} parent=5 // pred_fallthru
      _
  $region6: #{tpu_custom_call.1} parent=0 // loop_footer
    %s11 = sadd.s32 1, %s7
  $region7: #{tpu_custom_call.1} parent=0 // loop_footer_branch
    %6 = sbr.rel target = $region3
  $region8: #{tpu_custom_call.1} parent=0 // loop_exit
    _

</llo_original>
